<compile_context>
chip_gen: v7x
topology: tpu7x:2x2x1
jax: 0.10.0
libtpu: 0.0.40
codegen_flags: <defaults>
</compile_context>

<pallas_src>
import functools

import jax
import jax.numpy as jnp
from jax.experimental import pallas as pl
from jax.experimental.pallas import tpu as pltpu

_LANE = 128
_SUBLANE = 8


def _round_up(n, m):
    return ((n + m - 1) // m) * m


def _lstm_net_kernel(x_ref,
                     wx0_ref, wh0_ref, wx1_ref, wh1_ref, wx2_ref, wh2_ref,
                     b0_ref, b1_ref, b2_ref,
                     wlin_ref, blin_ref,
                     out_ref, gx0_ref,
                     *, hidden_pad, seq_len, num_layers):
    Hp = hidden_pad
    T = seq_len
    Bp = out_ref.shape[0]
    Dp = x_ref.shape[-1]

    wx_refs = (wx0_ref, wx1_ref, wx2_ref)
    wh_refs = (wh0_ref, wh1_ref, wh2_ref)
    # Biases are pre-broadcast to (Bp, 4*Hp) by the wrapper; read once here
    # (hoisted out of the unrolled time loop -> no per-iteration broadcasts).
    biases = (b0_ref[...], b1_ref[...], b2_ref[...])

    # Time-independent layer-0 input projection for ALL timesteps with one big
    # MXU dot; result parked in a VMEM scratch and sliced per step.
    x_all = x_ref[...].reshape(T * Bp, Dp)                       # free leading-dim merge
    gx0_ref[...] = jnp.dot(x_all, wx0_ref[...],
                           preferred_element_type=jnp.float32
                           ).reshape(T, Bp, 4 * Hp)

    hs = [jnp.zeros((Bp, Hp), jnp.float32) for _ in range(num_layers)]
    cs = [jnp.zeros((Bp, Hp), jnp.float32) for _ in range(num_layers)]

    # Fully-unrolled time loop (seq_len is small & static) — all slices static.
    for t in range(T):
        for l in range(num_layers):
            if l == 0:
                gx = gx0_ref[t]                                  # (Bp, 4Hp) f32
            else:
                gx = jnp.dot(hs[l - 1].astype(jnp.bfloat16), wx_refs[l][...],
                             preferred_element_type=jnp.float32)
            gates = (gx
                     + jnp.dot(hs[l].astype(jnp.bfloat16), wh_refs[l][...],
                               preferred_element_type=jnp.float32)
                     + biases[l])
            # Gate blocks are 128-lane aligned (PyTorch order: i, f, g, o).
            i_g = jax.nn.sigmoid(gates[:, 0 * Hp:1 * Hp])
            f_g = jax.nn.sigmoid(gates[:, 1 * Hp:2 * Hp])
            g_g = jnp.tanh(gates[:, 2 * Hp:3 * Hp])
            o_g = jax.nn.sigmoid(gates[:, 3 * Hp:4 * Hp])
            cs[l] = f_g * cs[l] + i_g * g_g
            hs[l] = o_g * jnp.tanh(cs[l])

    # Final Linear on the last timestep's top-layer hidden state.
    out_ref[...] = (jnp.dot(hs[-1].astype(jnp.bfloat16), wlin_ref[...],
                            preferred_element_type=jnp.float32)
                    + blin_ref[...])


def _prepare_params(params, *, input_size, hidden_size, output_size):
    """Pad / split / cast PyTorch-layout parameters for the kernel.

    Returns (wx_list, wh_list, b_list, wlin_pad, blin_pad) where
      wx_list[l] : (Dp_l, 4*Hp) bf16   input projection, gate k in cols [k*Hp, k*Hp+H)
      wh_list[l] : (Hp,   4*Hp) bf16   recurrent projection, same gate layout
      b_list[l]  : (1, 4*Hp)    f32    b_ih + b_hh, gate-padded
      wlin_pad   : (Hp, OUTp)   bf16
      blin_pad   : (1, OUTp)    f32
    Padding is exact: all padded rows / columns are zero, so padded hidden
    units keep h = c = 0 and contribute nothing.
    """
    H = hidden_size
    Hp = _round_up(H, _LANE)
    Dp = _round_up(input_size, _LANE)
    OUTp = _round_up(output_size, _LANE)

    def pad_gate_cols(w_t, rows, rows_p):
        # (rows, 4H) -> (rows_p, 4*Hp) with gate k occupying cols [k*Hp, k*Hp+H)
        w4 = w_t.reshape(rows, 4, H)
        w4 = jnp.pad(w4, ((0, rows_p - rows), (0, 0), (0, Hp - H)))
        return w4.reshape(rows_p, 4 * Hp)

    wx_list, wh_list, b_list = [], [], []
    for l, (w_ih, w_hh, b_ih, b_hh) in enumerate(params["lstm"]):
        d_in = input_size if l == 0 else H
        d_in_p = Dp if l == 0 else Hp
        wx_list.append(
            pad_gate_cols(jnp.transpose(w_ih), d_in, d_in_p).astype(jnp.bfloat16))
        wh_list.append(
            pad_gate_cols(jnp.transpose(w_hh), H, Hp).astype(jnp.bfloat16))
        b = (b_ih + b_hh).reshape(4, H)
        b = jnp.pad(b, ((0, 0), (0, Hp - H))).reshape(1, 4 * Hp)
        b_list.append(b.astype(jnp.float32))

    w_lin, b_lin = params["linear"]
    wlin_p = jnp.pad(jnp.transpose(w_lin),
                     ((0, Hp - H), (0, OUTp - output_size))).astype(jnp.bfloat16)
    blin_p = jnp.pad(b_lin.reshape(1, -1),
                     ((0, 0), (0, OUTp - output_size))).astype(jnp.float32)
    return wx_list, wh_list, b_list, wlin_p, blin_p


@functools.partial(jax.jit,
                   static_argnames=("input_size", "hidden_size", "output_size"))
def lstm_net_forward(x, params, *, input_size, hidden_size, output_size):
    """x: (B, T, input_size) float32 -> (B, output_size) float32."""
    B, T, D_in = x.shape
    assert D_in == input_size
    num_layers = len(params["lstm"])
    assert num_layers == 3, "kernel is specialized for the module's 3 layers"

    H = hidden_size
    Hp = _round_up(H, _LANE)
    Dp = _round_up(input_size, _LANE)
    OUTp = _round_up(output_size, _LANE)
    Bp = _round_up(B, _SUBLANE)

    wx, wh, bs, wlin_p, blin_p = _prepare_params(
        params, input_size=input_size, hidden_size=hidden_size,
        output_size=output_size)

    # Pad batch to a full sublane group, features to a full lane group, go
    # time-major (per-timestep slice = leading-dim index), cast to bf16.
    x_p = jnp.pad(x, ((0, Bp - B), (0, 0), (0, Dp - D_in)))
    x_tm = jnp.transpose(x_p, (1, 0, 2)).astype(jnp.bfloat16)      # (T, Bp, Dp)

    # Pre-broadcast biases so the kernel performs zero broadcasts.
    b_bcast = [jnp.broadcast_to(b, (Bp, 4 * Hp)) for b in bs]
    blin_b = jnp.broadcast_to(blin_p, (Bp, OUTp))

    kernel = functools.partial(_lstm_net_kernel, hidden_pad=Hp, seq_len=T,
                               num_layers=num_layers)

    # Grid-less call: everything (~1-2 MB) sits in VMEM; weights are
    # single-buffered by construction.
    # TODO(synk): for large B on v7x, add a batch grid axis marked "parallel"
    # to split work across the 2 TensorCores.
    out = pl.pallas_call(
        kernel,
        out_shape=jax.ShapeDtypeStruct((Bp, OUTp), jnp.float32),
        in_specs=[pl.BlockSpec(memory_space=pltpu.MemorySpace.VMEM)
                  for _ in range(12)],
        out_specs=pl.BlockSpec(memory_space=pltpu.MemorySpace.VMEM),
        scratch_shapes=[pltpu.VMEM((T, Bp, 4 * Hp), jnp.float32)],
    )(x_tm, wx[0], wh[0], wx[1], wh[1], wx[2], wh[2],
      b_bcast[0], b_bcast[1], b_bcast[2], wlin_p, blin_b)

    return out[:B, :output_size]


def init_params(key, input_size, hidden_size, output_size, num_layers=3):
    """PyTorch-style init: every LSTM/Linear tensor ~ U(-1/sqrt(H), 1/sqrt(H)).

    Layout matches torch: w_ih (4H, d_in), w_hh (4H, H), b_ih (4H,), b_hh (4H,),
    linear weight (output, H), linear bias (output,). Gate order [i, f, g, o].
    """
    H = hidden_size
    bound = 1.0 / float(H ** 0.5)
    keys = jax.random.split(key, num_layers * 4 + 2)
    k = iter(keys)
    lstm = []
    for layer in range(num_layers):
        d_in = input_size if layer == 0 else H
        w_ih = jax.random.uniform(next(k), (4 * H, d_in), jnp.float32, -bound, bound)
        w_hh = jax.random.uniform(next(k), (4 * H, H), jnp.float32, -bound, bound)
        b_ih = jax.random.uniform(next(k), (4 * H,), jnp.float32, -bound, bound)
        b_hh = jax.random.uniform(next(k), (4 * H,), jnp.float32, -bound, bound)
        lstm.append((w_ih, w_hh, b_ih, b_hh))
    w_lin = jax.random.uniform(next(k), (output_size, H), jnp.float32, -bound, bound)
    b_lin = jax.random.uniform(next(k), (output_size,), jnp.float32, -bound, bound)
    return {"lstm": lstm, "linear": (w_lin, b_lin)}


def reference_forward(x, params, *, hidden_size):
    """Pure-JAX f32 reference of the stacked LSTM + Linear (PyTorch layout)."""
    H = hidden_size
    B, T, _ = x.shape
    n_layers = len(params["lstm"])
    h = [jnp.zeros((B, H), jnp.float32) for _ in range(n_layers)]
    c = [jnp.zeros((B, H), jnp.float32) for _ in range(n_layers)]
    for t in range(T):
        inp = x[:, t, :]
        for l, (w_ih, w_hh, b_ih, b_hh) in enumerate(params["lstm"]):
            gates = inp @ w_ih.T + h[l] @ w_hh.T + b_ih + b_hh
            i_g = jax.nn.sigmoid(gates[:, 0 * H:1 * H])
            f_g = jax.nn.sigmoid(gates[:, 1 * H:2 * H])
            g_g = jnp.tanh(gates[:, 2 * H:3 * H])
            o_g = jax.nn.sigmoid(gates[:, 3 * H:4 * H])
            c[l] = f_g * c[l] + i_g * g_g
            h[l] = o_g * jnp.tanh(c[l])
            inp = h[l]
    w_lin, b_lin = params["linear"]
    return h[-1] @ w_lin.T + b_lin


if __name__ == "__main__":
    # Small shapes consistent with the module (Sent140 GloVe embeddings are
    # 50-dim, output_size=2); hidden kept small for the smoke test.
    B, T = 2, 8
    INPUT_SIZE, HIDDEN_SIZE, OUTPUT_SIZE = 50, 32, 2

    key = jax.random.PRNGKey(0)
    k_x, k_p = jax.random.split(key)
    x = jax.random.normal(k_x, (B, T, INPUT_SIZE), jnp.float32)
    params = init_params(k_p, INPUT_SIZE, HIDDEN_SIZE, OUTPUT_SIZE)

    out = lstm_net_forward(x, params, input_size=INPUT_SIZE,
                           hidden_size=HIDDEN_SIZE, output_size=OUTPUT_SIZE)
    out = jax.block_until_ready(out)

    ref = reference_forward(x, params, hidden_size=HIDDEN_SIZE)
    assert out.shape == (B, OUTPUT_SIZE)
    # Matmul operands are bf16 in the kernel -> compare to the f32 reference
    # with a correspondingly loosened tolerance.
    assert jnp.allclose(out, ref, atol=2e-2, rtol=2e-2), (out, ref)

    print("KERNEL_OK")
</pallas_src>

<mosaic_0001>
module attributes {stable_mosaic.version = 11 : i64} {
  func.func @_lstm_net_kernel(%arg0: memref<8x8x128xbf16, #tpu.memory_space<vmem>>, %arg1: memref<128x512xbf16, #tpu.memory_space<vmem>>, %arg2: memref<128x512xbf16, #tpu.memory_space<vmem>>, %arg3: memref<128x512xbf16, #tpu.memory_space<vmem>>, %arg4: memref<128x512xbf16, #tpu.memory_space<vmem>>, %arg5: memref<128x512xbf16, #tpu.memory_space<vmem>>, %arg6: memref<128x512xbf16, #tpu.memory_space<vmem>>, %arg7: memref<8x512xf32, #tpu.memory_space<vmem>>, %arg8: memref<8x512xf32, #tpu.memory_space<vmem>>, %arg9: memref<8x512xf32, #tpu.memory_space<vmem>>, %arg10: memref<128x128xbf16, #tpu.memory_space<vmem>>, %arg11: memref<8x128xf32, #tpu.memory_space<vmem>>, %arg12: memref<8x128xf32, #tpu.memory_space<vmem>>, %arg13: memref<8x8x512xf32, #tpu.memory_space<vmem>>) attributes {dimension_semantics = [], scalar_prefetch = 0 : i64, scratch_operands = 1 : i64, tpu.core_type = #tpu.core_type<tc>} {
    %c0 = arith.constant 0 : index
    %c0_0 = arith.constant 0 : index
    %0 = vector.load %arg7[%c0, %c0_0] : memref<8x512xf32, #tpu.memory_space<vmem>>, vector<8x512xf32>
    %c0_1 = arith.constant 0 : index
    %c0_2 = arith.constant 0 : index
    %1 = vector.load %arg8[%c0_1, %c0_2] : memref<8x512xf32, #tpu.memory_space<vmem>>, vector<8x512xf32>
    %c0_3 = arith.constant 0 : index
    %c0_4 = arith.constant 0 : index
    %2 = vector.load %arg9[%c0_3, %c0_4] : memref<8x512xf32, #tpu.memory_space<vmem>>, vector<8x512xf32>
    %c0_5 = arith.constant 0 : index
    %c0_6 = arith.constant 0 : index
    %c0_7 = arith.constant 0 : index
    %3 = vector.load %arg0[%c0_5, %c0_6, %c0_7] : memref<8x8x128xbf16, #tpu.memory_space<vmem>>, vector<8x8x128xbf16>
    %4 = vector.shape_cast %3 : vector<8x8x128xbf16> to vector<64x128xbf16>
    %c0_8 = arith.constant 0 : index
    %c0_9 = arith.constant 0 : index
    %5 = vector.load %arg1[%c0_8, %c0_9] : memref<128x512xbf16, #tpu.memory_space<vmem>>, vector<128x512xbf16>
    %cst = arith.constant dense<0.000000e+00> : vector<64x512xf32>
    %6 = tpu.matmul %4, %5, %cst {dimension_numbers = #tpu.dot_dimension_numbers<[1], [0], [0], [1], [0, 0, 1, 1], [], []>} : vector<64x128xbf16>, vector<128x512xbf16>, vector<64x512xf32> -> vector<64x512xf32>
    %7 = vector.shape_cast %6 : vector<64x512xf32> to vector<8x8x512xf32>
    %c0_10 = arith.constant 0 : index
    %c0_11 = arith.constant 0 : index
    %c0_12 = arith.constant 0 : index
    %8 = vector.load %arg13[%c0_10, %c0_11, %c0_12] : memref<8x8x512xf32, #tpu.memory_space<vmem>>, vector<8x8x512xf32>
    tpu.vector_store %arg13[%c0_10, %c0_11, %c0_12], %7 {strides = array<i32>} : memref<8x8x512xf32, #tpu.memory_space<vmem>>, vector<8x8x512xf32>,
    %cst_13 = arith.constant 0.000000e+00 : f32
    %9 = vector.broadcast %cst_13 : f32 to vector<8x128xf32>
    %cst_14 = arith.constant 0.000000e+00 : f32
    %10 = vector.broadcast %cst_14 : f32 to vector<8x128xf32>
    %cst_15 = arith.constant 0.000000e+00 : f32
    %11 = vector.broadcast %cst_15 : f32 to vector<8x128xf32>
    %cst_16 = arith.constant 0.000000e+00 : f32
    %12 = vector.broadcast %cst_16 : f32 to vector<8x128xf32>
    %cst_17 = arith.constant 0.000000e+00 : f32
    %13 = vector.broadcast %cst_17 : f32 to vector<8x128xf32>
    %cst_18 = arith.constant 0.000000e+00 : f32
    %14 = vector.broadcast %cst_18 : f32 to vector<8x128xf32>
    %c0_19 = arith.constant 0 : index
    %c0_20 = arith.constant 0 : index
    %c0_21 = arith.constant 0 : index
    %15 = vector.load %arg13[%c0_19, %c0_20, %c0_21] : memref<8x8x512xf32, #tpu.memory_space<vmem>>, vector<1x8x512xf32>
    %16 = vector.shape_cast %15 : vector<1x8x512xf32> to vector<8x512xf32>
    %17 = arith.truncf %9 : vector<8x128xf32> to vector<8x128xbf16>
    %c0_22 = arith.constant 0 : index
    %c0_23 = arith.constant 0 : index
    %18 = vector.load %arg2[%c0_22, %c0_23] : memref<128x512xbf16, #tpu.memory_space<vmem>>, vector<128x512xbf16>
    %cst_24 = arith.constant dense<0.000000e+00> : vector<8x512xf32>
    %19 = tpu.matmul %17, %18, %cst_24 {dimension_numbers = #tpu.dot_dimension_numbers<[1], [0], [0], [1], [0, 0, 1, 1], [], []>} : vector<8x128xbf16>, vector<128x512xbf16>, vector<8x512xf32> -> vector<8x512xf32>
    %20 = arith.addf %16, %19 : vector<8x512xf32>
    %21 = arith.addf %20, %0 : vector<8x512xf32>
    %22 = vector.extract_strided_slice %21 {offsets = [0, 0], sizes = [8, 128], strides = [1, 1]} : vector<8x512xf32> to vector<8x128xf32>
    %23 = arith.negf %22 : vector<8x128xf32>
    %24 = math.exp %23 : vector<8x128xf32>
    %cst_25 = arith.constant 1.000000e+00 : f32
    %25 = vector.broadcast %cst_25 : f32 to vector<8x128xf32>
    %26 = arith.addf %25, %24 : vector<8x128xf32>
    %27 = arith.divf %25, %26 : vector<8x128xf32>
    %28 = vector.extract_strided_slice %21 {offsets = [0, 128], sizes = [8, 128], strides = [1, 1]} : vector<8x512xf32> to vector<8x128xf32>
    %29 = arith.negf %28 : vector<8x128xf32>
    %30 = math.exp %29 : vector<8x128xf32>
    %cst_26 = arith.constant 1.000000e+00 : f32
    %31 = vector.broadcast %cst_26 : f32 to vector<8x128xf32>
    %32 = arith.addf %31, %30 : vector<8x128xf32>
    %33 = arith.divf %31, %32 : vector<8x128xf32>
    %34 = vector.extract_strided_slice %21 {offsets = [0, 256], sizes = [8, 128], strides = [1, 1]} : vector<8x512xf32> to vector<8x128xf32>
    %35 = math.tanh %34 : vector<8x128xf32>
    %36 = vector.extract_strided_slice %21 {offsets = [0, 384], sizes = [8, 128], strides = [1, 1]} : vector<8x512xf32> to vector<8x128xf32>
    %37 = arith.negf %36 : vector<8x128xf32>
    %38 = math.exp %37 : vector<8x128xf32>
    %cst_27 = arith.constant 1.000000e+00 : f32
    %39 = vector.broadcast %cst_27 : f32 to vector<8x128xf32>
    %40 = arith.addf %39, %38 : vector<8x128xf32>
    %41 = arith.divf %39, %40 : vector<8x128xf32>
    %42 = arith.mulf %33, %12 : vector<8x128xf32>
    %43 = arith.mulf %27, %35 : vector<8x128xf32>
    %44 = arith.addf %42, %43 : vector<8x128xf32>
    %45 = math.tanh %44 : vector<8x128xf32>
    %46 = arith.mulf %41, %45 : vector<8x128xf32>
    %47 = arith.truncf %46 : vector<8x128xf32> to vector<8x128xbf16>
    %c0_28 = arith.constant 0 : index
    %c0_29 = arith.constant 0 : index
    %48 = vector.load %arg3[%c0_28, %c0_29] : memref<128x512xbf16, #tpu.memory_space<vmem>>, vector<128x512xbf16>
    %cst_30 = arith.constant dense<0.000000e+00> : vector<8x512xf32>
    %49 = tpu.matmul %47, %48, %cst_30 {dimension_numbers = #tpu.dot_dimension_numbers<[1], [0], [0], [1], [0, 0, 1, 1], [], []>} : vector<8x128xbf16>, vector<128x512xbf16>, vector<8x512xf32> -> vector<8x512xf32>
    %50 = arith.truncf %10 : vector<8x128xf32> to vector<8x128xbf16>
    %c0_31 = arith.constant 0 : index
    %c0_32 = arith.constant 0 : index
    %51 = vector.load %arg4[%c0_31, %c0_32] : memref<128x512xbf16, #tpu.memory_space<vmem>>, vector<128x512xbf16>
    %cst_33 = arith.constant dense<0.000000e+00> : vector<8x512xf32>
    %52 = tpu.matmul %50, %51, %cst_33 {dimension_numbers = #tpu.dot_dimension_numbers<[1], [0], [0], [1], [0, 0, 1, 1], [], []>} : vector<8x128xbf16>, vector<128x512xbf16>, vector<8x512xf32> -> vector<8x512xf32>
    %53 = arith.addf %49, %52 : vector<8x512xf32>
    %54 = arith.addf %53, %1 : vector<8x512xf32>
    %55 = vector.extract_strided_slice %54 {offsets = [0, 0], sizes = [8, 128], strides = [1, 1]} : vector<8x512xf32> to vector<8x128xf32>
    %56 = arith.negf %55 : vector<8x128xf32>
    %57 = math.exp %56 : vector<8x128xf32>
    %cst_34 = arith.constant 1.000000e+00 : f32
    %58 = vector.broadcast %cst_34 : f32 to vector<8x128xf32>
    %59 = arith.addf %58, %57 : vector<8x128xf32>
    %60 = arith.divf %58, %59 : vector<8x128xf32>
    %61 = vector.extract_strided_slice %54 {offsets = [0, 128], sizes = [8, 128], strides = [1, 1]} : vector<8x512xf32> to vector<8x128xf32>
    %62 = arith.negf %61 : vector<8x128xf32>
    %63 = math.exp %62 : vector<8x128xf32>
    %cst_35 = arith.constant 1.000000e+00 : f32
    %64 = vector.broadcast %cst_35 : f32 to vector<8x128xf32>
    %65 = arith.addf %64, %63 : vector<8x128xf32>
    %66 = arith.divf %64, %65 : vector<8x128xf32>
    %67 = vector.extract_strided_slice %54 {offsets = [0, 256], sizes = [8, 128], strides = [1, 1]} : vector<8x512xf32> to vector<8x128xf32>
    %68 = math.tanh %67 : vector<8x128xf32>
    %69 = vector.extract_strided_slice %54 {offsets = [0, 384], sizes = [8, 128], strides = [1, 1]} : vector<8x512xf32> to vector<8x128xf32>
    %70 = arith.negf %69 : vector<8x128xf32>
    %71 = math.exp %70 : vector<8x128xf32>
    %cst_36 = arith.constant 1.000000e+00 : f32
    %72 = vector.broadcast %cst_36 : f32 to vector<8x128xf32>
    %73 = arith.addf %72, %71 : vector<8x128xf32>
    %74 = arith.divf %72, %73 : vector<8x128xf32>
    %75 = arith.mulf %66, %13 : vector<8x128xf32>
    %76 = arith.mulf %60, %68 : vector<8x128xf32>
    %77 = arith.addf %75, %76 : vector<8x128xf32>
    %78 = math.tanh %77 : vector<8x128xf32>
    %79 = arith.mulf %74, %78 : vector<8x128xf32>
    %80 = arith.truncf %79 : vector<8x128xf32> to vector<8x128xbf16>
    %c0_37 = arith.constant 0 : index
    %c0_38 = arith.constant 0 : index
    %81 = vector.load %arg5[%c0_37, %c0_38] : memref<128x512xbf16, #tpu.memory_space<vmem>>, vector<128x512xbf16>
    %cst_39 = arith.constant dense<0.000000e+00> : vector<8x512xf32>
    %82 = tpu.matmul %80, %81, %cst_39 {dimension_numbers = #tpu.dot_dimension_numbers<[1], [0], [0], [1], [0, 0, 1, 1], [], []>} : vector<8x128xbf16>, vector<128x512xbf16>, vector<8x512xf32> -> vector<8x512xf32>
    %83 = arith.truncf %11 : vector<8x128xf32> to vector<8x128xbf16>
    %c0_40 = arith.constant 0 : index
    %c0_41 = arith.constant 0 : index
    %84 = vector.load %arg6[%c0_40, %c0_41] : memref<128x512xbf16, #tpu.memory_space<vmem>>, vector<128x512xbf16>
    %cst_42 = arith.constant dense<0.000000e+00> : vector<8x512xf32>
    %85 = tpu.matmul %83, %84, %cst_42 {dimension_numbers = #tpu.dot_dimension_numbers<[1], [0], [0], [1], [0, 0, 1, 1], [], []>} : vector<8x128xbf16>, vector<128x512xbf16>, vector<8x512xf32> -> vector<8x512xf32>
    %86 = arith.addf %82, %85 : vector<8x512xf32>
    %87 = arith.addf %86, %2 : vector<8x512xf32>
    %88 = vector.extract_strided_slice %87 {offsets = [0, 0], sizes = [8, 128], strides = [1, 1]} : vector<8x512xf32> to vector<8x128xf32>
    %89 = arith.negf %88 : vector<8x128xf32>
    %90 = math.exp %89 : vector<8x128xf32>
    %cst_43 = arith.constant 1.000000e+00 : f32
    %91 = vector.broadcast %cst_43 : f32 to vector<8x128xf32>
    %92 = arith.addf %91, %90 : vector<8x128xf32>
    %93 = arith.divf %91, %92 : vector<8x128xf32>
    %94 = vector.extract_strided_slice %87 {offsets = [0, 128], sizes = [8, 128], strides = [1, 1]} : vector<8x512xf32> to vector<8x128xf32>
    %95 = arith.negf %94 : vector<8x128xf32>
    %96 = math.exp %95 : vector<8x128xf32>
    %cst_44 = arith.constant 1.000000e+00 : f32
    %97 = vector.broadcast %cst_44 : f32 to vector<8x128xf32>
    %98 = arith.addf %97, %96 : vector<8x128xf32>
    %99 = arith.divf %97, %98 : vector<8x128xf32>
    %100 = vector.extract_strided_slice %87 {offsets = [0, 256], sizes = [8, 128], strides = [1, 1]} : vector<8x512xf32> to vector<8x128xf32>
    %101 = math.tanh %100 : vector<8x128xf32>
    %102 = vector.extract_strided_slice %87 {offsets = [0, 384], sizes = [8, 128], strides = [1, 1]} : vector<8x512xf32> to vector<8x128xf32>
    %103 = arith.negf %102 : vector<8x128xf32>
    %104 = math.exp %103 : vector<8x128xf32>
    %cst_45 = arith.constant 1.000000e+00 : f32
    %105 = vector.broadcast %cst_45 : f32 to vector<8x128xf32>
    %106 = arith.addf %105, %104 : vector<8x128xf32>
    %107 = arith.divf %105, %106 : vector<8x128xf32>
    %108 = arith.mulf %99, %14 : vector<8x128xf32>
    %109 = arith.mulf %93, %101 : vector<8x128xf32>
    %110 = arith.addf %108, %109 : vector<8x128xf32>
    %111 = math.tanh %110 : vector<8x128xf32>
    %112 = arith.mulf %107, %111 : vector<8x128xf32>
    %c1 = arith.constant 1 : index
    %c0_46 = arith.constant 0 : index
    %c0_47 = arith.constant 0 : index
    %113 = vector.load %arg13[%c1, %c0_46, %c0_47] : memref<8x8x512xf32, #tpu.memory_space<vmem>>, vector<1x8x512xf32>
    %114 = vector.shape_cast %113 : vector<1x8x512xf32> to vector<8x512xf32>
    %115 = arith.truncf %46 : vector<8x128xf32> to vector<8x128xbf16>
    %c0_48 = arith.constant 0 : index
    %c0_49 = arith.constant 0 : index
    %116 = vector.load %arg2[%c0_48, %c0_49] : memref<128x512xbf16, #tpu.memory_space<vmem>>, vector<128x512xbf16>
    %cst_50 = arith.constant dense<0.000000e+00> : vector<8x512xf32>
    %117 = tpu.matmul %115, %116, %cst_50 {dimension_numbers = #tpu.dot_dimension_numbers<[1], [0], [0], [1], [0, 0, 1, 1], [], []>} : vector<8x128xbf16>, vector<128x512xbf16>, vector<8x512xf32> -> vector<8x512xf32>
    %118 = arith.addf %114, %117 : vector<8x512xf32>
    %119 = arith.addf %118, %0 : vector<8x512xf32>
    %120 = vector.extract_strided_slice %119 {offsets = [0, 0], sizes = [8, 128], strides = [1, 1]} : vector<8x512xf32> to vector<8x128xf32>
    %121 = arith.negf %120 : vector<8x128xf32>
    %122 = math.exp %121 : vector<8x128xf32>
    %cst_51 = arith.constant 1.000000e+00 : f32
    %123 = vector.broadcast %cst_51 : f32 to vector<8x128xf32>
    %124 = arith.addf %123, %122 : vector<8x128xf32>
    %125 = arith.divf %123, %124 : vector<8x128xf32>
    %126 = vector.extract_strided_slice %119 {offsets = [0, 128], sizes = [8, 128], strides = [1, 1]} : vector<8x512xf32> to vector<8x128xf32>
    %127 = arith.negf %126 : vector<8x128xf32>
    %128 = math.exp %127 : vector<8x128xf32>
    %cst_52 = arith.constant 1.000000e+00 : f32
    %129 = vector.broadcast %cst_52 : f32 to vector<8x128xf32>
    %130 = arith.addf %129, %128 : vector<8x128xf32>
    %131 = arith.divf %129, %130 : vector<8x128xf32>
    %132 = vector.extract_strided_slice %119 {offsets = [0, 256], sizes = [8, 128], strides = [1, 1]} : vector<8x512xf32> to vector<8x128xf32>
    %133 = math.tanh %132 : vector<8x128xf32>
    %134 = vector.extract_strided_slice %119 {offsets = [0, 384], sizes = [8, 128], strides = [1, 1]} : vector<8x512xf32> to vector<8x128xf32>
    %135 = arith.negf %134 : vector<8x128xf32>
    %136 = math.exp %135 : vector<8x128xf32>
    %cst_53 = arith.constant 1.000000e+00 : f32
    %137 = vector.broadcast %cst_53 : f32 to vector<8x128xf32>
    %138 = arith.addf %137, %136 : vector<8x128xf32>
    %139 = arith.divf %137, %138 : vector<8x128xf32>
    %140 = arith.mulf %131, %44 : vector<8x128xf32>
    %141 = arith.mulf %125, %133 : vector<8x128xf32>
    %142 = arith.addf %140, %141 : vector<8x128xf32>
    %143 = math.tanh %142 : vector<8x128xf32>
    %144 = arith.mulf %139, %143 : vector<8x128xf32>
    %145 = arith.truncf %144 : vector<8x128xf32> to vector<8x128xbf16>
    %c0_54 = arith.constant 0 : index
    %c0_55 = arith.constant 0 : index
    %146 = vector.load %arg3[%c0_54, %c0_55] : memref<128x512xbf16, #tpu.memory_space<vmem>>, vector<128x512xbf16>
    %cst_56 = arith.constant dense<0.000000e+00> : vector<8x512xf32>
    %147 = tpu.matmul %145, %146, %cst_56 {dimension_numbers = #tpu.dot_dimension_numbers<[1], [0], [0], [1], [0, 0, 1, 1], [], []>} : vector<8x128xbf16>, vector<128x512xbf16>, vector<8x512xf32> -> vector<8x512xf32>
    %148 = arith.truncf %79 : vector<8x128xf32> to vector<8x128xbf16>
    %c0_57 = arith.constant 0 : index
    %c0_58 = arith.constant 0 : index
    %149 = vector.load %arg4[%c0_57, %c0_58] : memref<128x512xbf16, #tpu.memory_space<vmem>>, vector<128x512xbf16>
    %cst_59 = arith.constant dense<0.000000e+00> : vector<8x512xf32>
    %150 = tpu.matmul %148, %149, %cst_59 {dimension_numbers = #tpu.dot_dimension_numbers<[1], [0], [0], [1], [0, 0, 1, 1], [], []>} : vector<8x128xbf16>, vector<128x512xbf16>, vector<8x512xf32> -> vector<8x512xf32>
    %151 = arith.addf %147, %150 : vector<8x512xf32>
    %152 = arith.addf %151, %1 : vector<8x512xf32>
    %153 = vector.extract_strided_slice %152 {offsets = [0, 0], sizes = [8, 128], strides = [1, 1]} : vector<8x512xf32> to vector<8x128xf32>
    %154 = arith.negf %153 : vector<8x128xf32>
    %155 = math.exp %154 : vector<8x128xf32>
    %cst_60 = arith.constant 1.000000e+00 : f32
    %156 = vector.broadcast %cst_60 : f32 to vector<8x128xf32>
    %157 = arith.addf %156, %155 : vector<8x128xf32>
    %158 = arith.divf %156, %157 : vector<8x128xf32>
    %159 = vector.extract_strided_slice %152 {offsets = [0, 128], sizes = [8, 128], strides = [1, 1]} : vector<8x512xf32> to vector<8x128xf32>
    %160 = arith.negf %159 : vector<8x128xf32>
    %161 = math.exp %160 : vector<8x128xf32>
    %cst_61 = arith.constant 1.000000e+00 : f32
    %162 = vector.broadcast %cst_61 : f32 to vector<8x128xf32>
    %163 = arith.addf %162, %161 : vector<8x128xf32>
    %164 = arith.divf %162, %163 : vector<8x128xf32>
    %165 = vector.extract_strided_slice %152 {offsets = [0, 256], sizes = [8, 128], strides = [1, 1]} : vector<8x512xf32> to vector<8x128xf32>
    %166 = math.tanh %165 : vector<8x128xf32>
    %167 = vector.extract_strided_slice %152 {offsets = [0, 384], sizes = [8, 128], strides = [1, 1]} : vector<8x512xf32> to vector<8x128xf32>
    %168 = arith.negf %167 : vector<8x128xf32>
    %169 = math.exp %168 : vector<8x128xf32>
    %cst_62 = arith.constant 1.000000e+00 : f32
    %170 = vector.broadcast %cst_62 : f32 to vector<8x128xf32>
    %171 = arith.addf %170, %169 : vector<8x128xf32>
    %172 = arith.divf %170, %171 : vector<8x128xf32>
    %173 = arith.mulf %164, %77 : vector<8x128xf32>
    %174 = arith.mulf %158, %166 : vector<8x128xf32>
    %175 = arith.addf %173, %174 : vector<8x128xf32>
    %176 = math.tanh %175 : vector<8x128xf32>
    %177 = arith.mulf %172, %176 : vector<8x128xf32>
    %178 = arith.truncf %177 : vector<8x128xf32> to vector<8x128xbf16>
    %c0_63 = arith.constant 0 : index
    %c0_64 = arith.constant 0 : index
    %179 = vector.load %arg5[%c0_63, %c0_64] : memref<128x512xbf16, #tpu.memory_space<vmem>>, vector<128x512xbf16>
    %cst_65 = arith.constant dense<0.000000e+00> : vector<8x512xf32>
    %180 = tpu.matmul %178, %179, %cst_65 {dimension_numbers = #tpu.dot_dimension_numbers<[1], [0], [0], [1], [0, 0, 1, 1], [], []>} : vector<8x128xbf16>, vector<128x512xbf16>, vector<8x512xf32> -> vector<8x512xf32>
    %181 = arith.truncf %112 : vector<8x128xf32> to vector<8x128xbf16>
    %c0_66 = arith.constant 0 : index
    %c0_67 = arith.constant 0 : index
    %182 = vector.load %arg6[%c0_66, %c0_67] : memref<128x512xbf16, #tpu.memory_space<vmem>>, vector<128x512xbf16>
    %cst_68 = arith.constant dense<0.000000e+00> : vector<8x512xf32>
    %183 = tpu.matmul %181, %182, %cst_68 {dimension_numbers = #tpu.dot_dimension_numbers<[1], [0], [0], [1], [0, 0, 1, 1], [], []>} : vector<8x128xbf16>, vector<128x512xbf16>, vector<8x512xf32> -> vector<8x512xf32>
    %184 = arith.addf %180, %183 : vector<8x512xf32>
    %185 = arith.addf %184, %2 : vector<8x512xf32>
    %186 = vector.extract_strided_slice %185 {offsets = [0, 0], sizes = [8, 128], strides = [1, 1]} : vector<8x512xf32> to vector<8x128xf32>
    %187 = arith.negf %186 : vector<8x128xf32>
    %188 = math.exp %187 : vector<8x128xf32>
    %cst_69 = arith.constant 1.000000e+00 : f32
    %189 = vector.broadcast %cst_69 : f32 to vector<8x128xf32>
    %190 = arith.addf %189, %188 : vector<8x128xf32>
    %191 = arith.divf %189, %190 : vector<8x128xf32>
    %192 = vector.extract_strided_slice %185 {offsets = [0, 128], sizes = [8, 128], strides = [1, 1]} : vector<8x512xf32> to vector<8x128xf32>
    %193 = arith.negf %192 : vector<8x128xf32>
    %194 = math.exp %193 : vector<8x128xf32>
    %cst_70 = arith.constant 1.000000e+00 : f32
    %195 = vector.broadcast %cst_70 : f32 to vector<8x128xf32>
    %196 = arith.addf %195, %194 : vector<8x128xf32>
    %197 = arith.divf %195, %196 : vector<8x128xf32>
    %198 = vector.extract_strided_slice %185 {offsets = [0, 256], sizes = [8, 128], strides = [1, 1]} : vector<8x512xf32> to vector<8x128xf32>
    %199 = math.tanh %198 : vector<8x128xf32>
    %200 = vector.extract_strided_slice %185 {offsets = [0, 384], sizes = [8, 128], strides = [1, 1]} : vector<8x512xf32> to vector<8x128xf32>
    %201 = arith.negf %200 : vector<8x128xf32>
    %202 = math.exp %201 : vector<8x128xf32>
    %cst_71 = arith.constant 1.000000e+00 : f32
    %203 = vector.broadcast %cst_71 : f32 to vector<8x128xf32>
    %204 = arith.addf %203, %202 : vector<8x128xf32>
    %205 = arith.divf %203, %204 : vector<8x128xf32>
    %206 = arith.mulf %197, %110 : vector<8x128xf32>
    %207 = arith.mulf %191, %199 : vector<8x128xf32>
    %208 = arith.addf %206, %207 : vector<8x128xf32>
    %209 = math.tanh %208 : vector<8x128xf32>
    %210 = arith.mulf %205, %209 : vector<8x128xf32>
    %c2 = arith.constant 2 : index
    %c0_72 = arith.constant 0 : index
    %c0_73 = arith.constant 0 : index
    %211 = vector.load %arg13[%c2, %c0_72, %c0_73] : memref<8x8x512xf32, #tpu.memory_space<vmem>>, vector<1x8x512xf32>
    %212 = vector.shape_cast %211 : vector<1x8x512xf32> to vector<8x512xf32>
    %213 = arith.truncf %144 : vector<8x128xf32> to vector<8x128xbf16>
    %c0_74 = arith.constant 0 : index
    %c0_75 = arith.constant 0 : index
    %214 = vector.load %arg2[%c0_74, %c0_75] : memref<128x512xbf16, #tpu.memory_space<vmem>>, vector<128x512xbf16>
    %cst_76 = arith.constant dense<0.000000e+00> : vector<8x512xf32>
    %215 = tpu.matmul %213, %214, %cst_76 {dimension_numbers = #tpu.dot_dimension_numbers<[1], [0], [0], [1], [0, 0, 1, 1], [], []>} : vector<8x128xbf16>, vector<128x512xbf16>, vector<8x512xf32> -> vector<8x512xf32>
    %216 = arith.addf %212, %215 : vector<8x512xf32>
    %217 = arith.addf %216, %0 : vector<8x512xf32>
    %218 = vector.extract_strided_slice %217 {offsets = [0, 0], sizes = [8, 128], strides = [1, 1]} : vector<8x512xf32> to vector<8x128xf32>
    %219 = arith.negf %218 : vector<8x128xf32>
    %220 = math.exp %219 : vector<8x128xf32>
    %cst_77 = arith.constant 1.000000e+00 : f32
    %221 = vector.broadcast %cst_77 : f32 to vector<8x128xf32>
    %222 = arith.addf %221, %220 : vector<8x128xf32>
    %223 = arith.divf %221, %222 : vector<8x128xf32>
    %224 = vector.extract_strided_slice %217 {offsets = [0, 128], sizes = [8, 128], strides = [1, 1]} : vector<8x512xf32> to vector<8x128xf32>
    %225 = arith.negf %224 : vector<8x128xf32>
    %226 = math.exp %225 : vector<8x128xf32>
    %cst_78 = arith.constant 1.000000e+00 : f32
    %227 = vector.broadcast %cst_78 : f32 to vector<8x128xf32>
    %228 = arith.addf %227, %226 : vector<8x128xf32>
    %229 = arith.divf %227, %228 : vector<8x128xf32>
    %230 = vector.extract_strided_slice %217 {offsets = [0, 256], sizes = [8, 128], strides = [1, 1]} : vector<8x512xf32> to vector<8x128xf32>
    %231 = math.tanh %230 : vector<8x128xf32>
    %232 = vector.extract_strided_slice %217 {offsets = [0, 384], sizes = [8, 128], strides = [1, 1]} : vector<8x512xf32> to vector<8x128xf32>
    %233 = arith.negf %232 : vector<8x128xf32>
    %234 = math.exp %233 : vector<8x128xf32>
    %cst_79 = arith.constant 1.000000e+00 : f32
    %235 = vector.broadcast %cst_79 : f32 to vector<8x128xf32>
    %236 = arith.addf %235, %234 : vector<8x128xf32>
    %237 = arith.divf %235, %236 : vector<8x128xf32>
    %238 = arith.mulf %229, %142 : vector<8x128xf32>
    %239 = arith.mulf %223, %231 : vector<8x128xf32>
    %240 = arith.addf %238, %239 : vector<8x128xf32>
    %241 = math.tanh %240 : vector<8x128xf32>
    %242 = arith.mulf %237, %241 : vector<8x128xf32>
    %243 = arith.truncf %242 : vector<8x128xf32> to vector<8x128xbf16>
    %c0_80 = arith.constant 0 : index
    %c0_81 = arith.constant 0 : index
    %244 = vector.load %arg3[%c0_80, %c0_81] : memref<128x512xbf16, #tpu.memory_space<vmem>>, vector<128x512xbf16>
    %cst_82 = arith.constant dense<0.000000e+00> : vector<8x512xf32>
    %245 = tpu.matmul %243, %244, %cst_82 {dimension_numbers = #tpu.dot_dimension_numbers<[1], [0], [0], [1], [0, 0, 1, 1], [], []>} : vector<8x128xbf16>, vector<128x512xbf16>, vector<8x512xf32> -> vector<8x512xf32>
    %246 = arith.truncf %177 : vector<8x128xf32> to vector<8x128xbf16>
    %c0_83 = arith.constant 0 : index
    %c0_84 = arith.constant 0 : index
    %247 = vector.load %arg4[%c0_83, %c0_84] : memref<128x512xbf16, #tpu.memory_space<vmem>>, vector<128x512xbf16>
    %cst_85 = arith.constant dense<0.000000e+00> : vector<8x512xf32>
    %248 = tpu.matmul %246, %247, %cst_85 {dimension_numbers = #tpu.dot_dimension_numbers<[1], [0], [0], [1], [0, 0, 1, 1], [], []>} : vector<8x128xbf16>, vector<128x512xbf16>, vector<8x512xf32> -> vector<8x512xf32>
    %249 = arith.addf %245, %248 : vector<8x512xf32>
    %250 = arith.addf %249, %1 : vector<8x512xf32>
    %251 = vector.extract_strided_slice %250 {offsets = [0, 0], sizes = [8, 128], strides = [1, 1]} : vector<8x512xf32> to vector<8x128xf32>
    %252 = arith.negf %251 : vector<8x128xf32>
    %253 = math.exp %252 : vector<8x128xf32>
    %cst_86 = arith.constant 1.000000e+00 : f32
    %254 = vector.broadcast %cst_86 : f32 to vector<8x128xf32>
    %255 = arith.addf %254, %253 : vector<8x128xf32>
    %256 = arith.divf %254, %255 : vector<8x128xf32>
    %257 = vector.extract_strided_slice %250 {offsets = [0, 128], sizes = [8, 128], strides = [1, 1]} : vector<8x512xf32> to vector<8x128xf32>
    %258 = arith.negf %257 : vector<8x128xf32>
    %259 = math.exp %258 : vector<8x128xf32>
    %cst_87 = arith.constant 1.000000e+00 : f32
    %260 = vector.broadcast %cst_87 : f32 to vector<8x128xf32>
    %261 = arith.addf %260, %259 : vector<8x128xf32>
    %262 = arith.divf %260, %261 : vector<8x128xf32>
    %263 = vector.extract_strided_slice %250 {offsets = [0, 256], sizes = [8, 128], strides = [1, 1]} : vector<8x512xf32> to vector<8x128xf32>
    %264 = math.tanh %263 : vector<8x128xf32>
    %265 = vector.extract_strided_slice %250 {offsets = [0, 384], sizes = [8, 128], strides = [1, 1]} : vector<8x512xf32> to vector<8x128xf32>
    %266 = arith.negf %265 : vector<8x128xf32>
    %267 = math.exp %266 : vector<8x128xf32>
    %cst_88 = arith.constant 1.000000e+00 : f32
    %268 = vector.broadcast %cst_88 : f32 to vector<8x128xf32>
    %269 = arith.addf %268, %267 : vector<8x128xf32>
    %270 = arith.divf %268, %269 : vector<8x128xf32>
    %271 = arith.mulf %262, %175 : vector<8x128xf32>
    %272 = arith.mulf %256, %264 : vector<8x128xf32>
    %273 = arith.addf %271, %272 : vector<8x128xf32>
    %274 = math.tanh %273 : vector<8x128xf32>
    %275 = arith.mulf %270, %274 : vector<8x128xf32>
    %276 = arith.truncf %275 : vector<8x128xf32> to vector<8x128xbf16>
    %c0_89 = arith.constant 0 : index
    %c0_90 = arith.constant 0 : index
    %277 = vector.load %arg5[%c0_89, %c0_90] : memref<128x512xbf16, #tpu.memory_space<vmem>>, vector<128x512xbf16>
    %cst_91 = arith.constant dense<0.000000e+00> : vector<8x512xf32>
    %278 = tpu.matmul %276, %277, %cst_91 {dimension_numbers = #tpu.dot_dimension_numbers<[1], [0], [0], [1], [0, 0, 1, 1], [], []>} : vector<8x128xbf16>, vector<128x512xbf16>, vector<8x512xf32> -> vector<8x512xf32>
    %279 = arith.truncf %210 : vector<8x128xf32> to vector<8x128xbf16>
    %c0_92 = arith.constant 0 : index
    %c0_93 = arith.constant 0 : index
    %280 = vector.load %arg6[%c0_92, %c0_93] : memref<128x512xbf16, #tpu.memory_space<vmem>>, vector<128x512xbf16>
    %cst_94 = arith.constant dense<0.000000e+00> : vector<8x512xf32>
    %281 = tpu.matmul %279, %280, %cst_94 {dimension_numbers = #tpu.dot_dimension_numbers<[1], [0], [0], [1], [0, 0, 1, 1], [], []>} : vector<8x128xbf16>, vector<128x512xbf16>, vector<8x512xf32> -> vector<8x512xf32>
    %282 = arith.addf %278, %281 : vector<8x512xf32>
    %283 = arith.addf %282, %2 : vector<8x512xf32>
    %284 = vector.extract_strided_slice %283 {offsets = [0, 0], sizes = [8, 128], strides = [1, 1]} : vector<8x512xf32> to vector<8x128xf32>
    %285 = arith.negf %284 : vector<8x128xf32>
    %286 = math.exp %285 : vector<8x128xf32>
    %cst_95 = arith.constant 1.000000e+00 : f32
    %287 = vector.broadcast %cst_95 : f32 to vector<8x128xf32>
    %288 = arith.addf %287, %286 : vector<8x128xf32>
    %289 = arith.divf %287, %288 : vector<8x128xf32>
    %290 = vector.extract_strided_slice %283 {offsets = [0, 128], sizes = [8, 128], strides = [1, 1]} : vector<8x512xf32> to vector<8x128xf32>
    %291 = arith.negf %290 : vector<8x128xf32>
    %292 = math.exp %291 : vector<8x128xf32>
    %cst_96 = arith.constant 1.000000e+00 : f32
    %293 = vector.broadcast %cst_96 : f32 to vector<8x128xf32>
    %294 = arith.addf %293, %292 : vector<8x128xf32>
    %295 = arith.divf %293, %294 : vector<8x128xf32>
    %296 = vector.extract_strided_slice %283 {offsets = [0, 256], sizes = [8, 128], strides = [1, 1]} : vector<8x512xf32> to vector<8x128xf32>
    %297 = math.tanh %296 : vector<8x128xf32>
    %298 = vector.extract_strided_slice %283 {offsets = [0, 384], sizes = [8, 128], strides = [1, 1]} : vector<8x512xf32> to vector<8x128xf32>
    %299 = arith.negf %298 : vector<8x128xf32>
    %300 = math.exp %299 : vector<8x128xf32>
    %cst_97 = arith.constant 1.000000e+00 : f32
    %301 = vector.broadcast %cst_97 : f32 to vector<8x128xf32>
    %302 = arith.addf %301, %300 : vector<8x128xf32>
    %303 = arith.divf %301, %302 : vector<8x128xf32>
    %304 = arith.mulf %295, %208 : vector<8x128xf32>
    %305 = arith.mulf %289, %297 : vector<8x128xf32>
    %306 = arith.addf %304, %305 : vector<8x128xf32>
    %307 = math.tanh %306 : vector<8x128xf32>
    %308 = arith.mulf %303, %307 : vector<8x128xf32>
    %c3 = arith.constant 3 : index
    %c0_98 = arith.constant 0 : index
    %c0_99 = arith.constant 0 : index
    %309 = vector.load %arg13[%c3, %c0_98, %c0_99] : memref<8x8x512xf32, #tpu.memory_space<vmem>>, vector<1x8x512xf32>
    %310 = vector.shape_cast %309 : vector<1x8x512xf32> to vector<8x512xf32>
    %311 = arith.truncf %242 : vector<8x128xf32> to vector<8x128xbf16>
    %c0_100 = arith.constant 0 : index
    %c0_101 = arith.constant 0 : index
    %312 = vector.load %arg2[%c0_100, %c0_101] : memref<128x512xbf16, #tpu.memory_space<vmem>>, vector<128x512xbf16>
    %cst_102 = arith.constant dense<0.000000e+00> : vector<8x512xf32>
    %313 = tpu.matmul %311, %312, %cst_102 {dimension_numbers = #tpu.dot_dimension_numbers<[1], [0], [0], [1], [0, 0, 1, 1], [], []>} : vector<8x128xbf16>, vector<128x512xbf16>, vector<8x512xf32> -> vector<8x512xf32>
    %314 = arith.addf %310, %313 : vector<8x512xf32>
    %315 = arith.addf %314, %0 : vector<8x512xf32>
    %316 = vector.extract_strided_slice %315 {offsets = [0, 0], sizes = [8, 128], strides = [1, 1]} : vector<8x512xf32> to vector<8x128xf32>
    %317 = arith.negf %316 : vector<8x128xf32>
    %318 = math.exp %317 : vector<8x128xf32>
    %cst_103 = arith.constant 1.000000e+00 : f32
    %319 = vector.broadcast %cst_103 : f32 to vector<8x128xf32>
    %320 = arith.addf %319, %318 : vector<8x128xf32>
    %321 = arith.divf %319, %320 : vector<8x128xf32>
    %322 = vector.extract_strided_slice %315 {offsets = [0, 128], sizes = [8, 128], strides = [1, 1]} : vector<8x512xf32> to vector<8x128xf32>
    %323 = arith.negf %322 : vector<8x128xf32>
    %324 = math.exp %323 : vector<8x128xf32>
    %cst_104 = arith.constant 1.000000e+00 : f32
    %325 = vector.broadcast %cst_104 : f32 to vector<8x128xf32>
    %326 = arith.addf %325, %324 : vector<8x128xf32>
    %327 = arith.divf %325, %326 : vector<8x128xf32>
    %328 = vector.extract_strided_slice %315 {offsets = [0, 256], sizes = [8, 128], strides = [1, 1]} : vector<8x512xf32> to vector<8x128xf32>
    %329 = math.tanh %328 : vector<8x128xf32>
    %330 = vector.extract_strided_slice %315 {offsets = [0, 384], sizes = [8, 128], strides = [1, 1]} : vector<8x512xf32> to vector<8x128xf32>
    %331 = arith.negf %330 : vector<8x128xf32>
    %332 = math.exp %331 : vector<8x128xf32>
    %cst_105 = arith.constant 1.000000e+00 : f32
    %333 = vector.broadcast %cst_105 : f32 to vector<8x128xf32>
    %334 = arith.addf %333, %332 : vector<8x128xf32>
    %335 = arith.divf %333, %334 : vector<8x128xf32>
    %336 = arith.mulf %327, %240 : vector<8x128xf32>
    %337 = arith.mulf %321, %329 : vector<8x128xf32>
    %338 = arith.addf %336, %337 : vector<8x128xf32>
    %339 = math.tanh %338 : vector<8x128xf32>
    %340 = arith.mulf %335, %339 : vector<8x128xf32>
    %341 = arith.truncf %340 : vector<8x128xf32> to vector<8x128xbf16>
    %c0_106 = arith.constant 0 : index
    %c0_107 = arith.constant 0 : index
    %342 = vector.load %arg3[%c0_106, %c0_107] : memref<128x512xbf16, #tpu.memory_space<vmem>>, vector<128x512xbf16>
    %cst_108 = arith.constant dense<0.000000e+00> : vector<8x512xf32>
    %343 = tpu.matmul %341, %342, %cst_108 {dimension_numbers = #tpu.dot_dimension_numbers<[1], [0], [0], [1], [0, 0, 1, 1], [], []>} : vector<8x128xbf16>, vector<128x512xbf16>, vector<8x512xf32> -> vector<8x512xf32>
    %344 = arith.truncf %275 : vector<8x128xf32> to vector<8x128xbf16>
    %c0_109 = arith.constant 0 : index
    %c0_110 = arith.constant 0 : index
    %345 = vector.load %arg4[%c0_109, %c0_110] : memref<128x512xbf16, #tpu.memory_space<vmem>>, vector<128x512xbf16>
    %cst_111 = arith.constant dense<0.000000e+00> : vector<8x512xf32>
    %346 = tpu.matmul %344, %345, %cst_111 {dimension_numbers = #tpu.dot_dimension_numbers<[1], [0], [0], [1], [0, 0, 1, 1], [], []>} : vector<8x128xbf16>, vector<128x512xbf16>, vector<8x512xf32> -> vector<8x512xf32>
    %347 = arith.addf %343, %346 : vector<8x512xf32>
    %348 = arith.addf %347, %1 : vector<8x512xf32>
    %349 = vector.extract_strided_slice %348 {offsets = [0, 0], sizes = [8, 128], strides = [1, 1]} : vector<8x512xf32> to vector<8x128xf32>
    %350 = arith.negf %349 : vector<8x128xf32>
    %351 = math.exp %350 : vector<8x128xf32>
    %cst_112 = arith.constant 1.000000e+00 : f32
    %352 = vector.broadcast %cst_112 : f32 to vector<8x128xf32>
    %353 = arith.addf %352, %351 : vector<8x128xf32>
    %354 = arith.divf %352, %353 : vector<8x128xf32>
    %355 = vector.extract_strided_slice %348 {offsets = [0, 128], sizes = [8, 128], strides = [1, 1]} : vector<8x512xf32> to vector<8x128xf32>
    %356 = arith.negf %355 : vector<8x128xf32>
    %357 = math.exp %356 : vector<8x128xf32>
    %cst_113 = arith.constant 1.000000e+00 : f32
    %358 = vector.broadcast %cst_113 : f32 to vector<8x128xf32>
    %359 = arith.addf %358, %357 : vector<8x128xf32>
    %360 = arith.divf %358, %359 : vector<8x128xf32>
    %361 = vector.extract_strided_slice %348 {offsets = [0, 256], sizes = [8, 128], strides = [1, 1]} : vector<8x512xf32> to vector<8x128xf32>
    %362 = math.tanh %361 : vector<8x128xf32>
    %363 = vector.extract_strided_slice %348 {offsets = [0, 384], sizes = [8, 128], strides = [1, 1]} : vector<8x512xf32> to vector<8x128xf32>
    %364 = arith.negf %363 : vector<8x128xf32>
    %365 = math.exp %364 : vector<8x128xf32>
    %cst_114 = arith.constant 1.000000e+00 : f32
    %366 = vector.broadcast %cst_114 : f32 to vector<8x128xf32>
    %367 = arith.addf %366, %365 : vector<8x128xf32>
    %368 = arith.divf %366, %367 : vector<8x128xf32>
    %369 = arith.mulf %360, %273 : vector<8x128xf32>
    %370 = arith.mulf %354, %362 : vector<8x128xf32>
    %371 = arith.addf %369, %370 : vector<8x128xf32>
    %372 = math.tanh %371 : vector<8x128xf32>
    %373 = arith.mulf %368, %372 : vector<8x128xf32>
    %374 = arith.truncf %373 : vector<8x128xf32> to vector<8x128xbf16>
    %c0_115 = arith.constant 0 : index
    %c0_116 = arith.constant 0 : index
    %375 = vector.load %arg5[%c0_115, %c0_116] : memref<128x512xbf16, #tpu.memory_space<vmem>>, vector<128x512xbf16>
    %cst_117 = arith.constant dense<0.000000e+00> : vector<8x512xf32>
    %376 = tpu.matmul %374, %375, %cst_117 {dimension_numbers = #tpu.dot_dimension_numbers<[1], [0], [0], [1], [0, 0, 1, 1], [], []>} : vector<8x128xbf16>, vector<128x512xbf16>, vector<8x512xf32> -> vector<8x512xf32>
    %377 = arith.truncf %308 : vector<8x128xf32> to vector<8x128xbf16>
    %c0_118 = arith.constant 0 : index
    %c0_119 = arith.constant 0 : index
    %378 = vector.load %arg6[%c0_118, %c0_119] : memref<128x512xbf16, #tpu.memory_space<vmem>>, vector<128x512xbf16>
    %cst_120 = arith.constant dense<0.000000e+00> : vector<8x512xf32>
    %379 = tpu.matmul %377, %378, %cst_120 {dimension_numbers = #tpu.dot_dimension_numbers<[1], [0], [0], [1], [0, 0, 1, 1], [], []>} : vector<8x128xbf16>, vector<128x512xbf16>, vector<8x512xf32> -> vector<8x512xf32>
    %380 = arith.addf %376, %379 : vector<8x512xf32>
    %381 = arith.addf %380, %2 : vector<8x512xf32>
    %382 = vector.extract_strided_slice %381 {offsets = [0, 0], sizes = [8, 128], strides = [1, 1]} : vector<8x512xf32> to vector<8x128xf32>
    %383 = arith.negf %382 : vector<8x128xf32>
    %384 = math.exp %383 : vector<8x128xf32>
    %cst_121 = arith.constant 1.000000e+00 : f32
    %385 = vector.broadcast %cst_121 : f32 to vector<8x128xf32>
    %386 = arith.addf %385, %384 : vector<8x128xf32>
    %387 = arith.divf %385, %386 : vector<8x128xf32>
    %388 = vector.extract_strided_slice %381 {offsets = [0, 128], sizes = [8, 128], strides = [1, 1]} : vector<8x512xf32> to vector<8x128xf32>
    %389 = arith.negf %388 : vector<8x128xf32>
    %390 = math.exp %389 : vector<8x128xf32>
    %cst_122 = arith.constant 1.000000e+00 : f32
    %391 = vector.broadcast %cst_122 : f32 to vector<8x128xf32>
    %392 = arith.addf %391, %390 : vector<8x128xf32>
    %393 = arith.divf %391, %392 : vector<8x128xf32>
    %394 = vector.extract_strided_slice %381 {offsets = [0, 256], sizes = [8, 128], strides = [1, 1]} : vector<8x512xf32> to vector<8x128xf32>
    %395 = math.tanh %394 : vector<8x128xf32>
    %396 = vector.extract_strided_slice %381 {offsets = [0, 384], sizes = [8, 128], strides = [1, 1]} : vector<8x512xf32> to vector<8x128xf32>
    %397 = arith.negf %396 : vector<8x128xf32>
    %398 = math.exp %397 : vector<8x128xf32>
    %cst_123 = arith.constant 1.000000e+00 : f32
    %399 = vector.broadcast %cst_123 : f32 to vector<8x128xf32>
    %400 = arith.addf %399, %398 : vector<8x128xf32>
    %401 = arith.divf %399, %400 : vector<8x128xf32>
    %402 = arith.mulf %393, %306 : vector<8x128xf32>
    %403 = arith.mulf %387, %395 : vector<8x128xf32>
    %404 = arith.addf %402, %403 : vector<8x128xf32>
    %405 = math.tanh %404 : vector<8x128xf32>
    %406 = arith.mulf %401, %405 : vector<8x128xf32>
    %c4 = arith.constant 4 : index
    %c0_124 = arith.constant 0 : index
    %c0_125 = arith.constant 0 : index
    %407 = vector.load %arg13[%c4, %c0_124, %c0_125] : memref<8x8x512xf32, #tpu.memory_space<vmem>>, vector<1x8x512xf32>
    %408 = vector.shape_cast %407 : vector<1x8x512xf32> to vector<8x512xf32>
    %409 = arith.truncf %340 : vector<8x128xf32> to vector<8x128xbf16>
    %c0_126 = arith.constant 0 : index
    %c0_127 = arith.constant 0 : index
    %410 = vector.load %arg2[%c0_126, %c0_127] : memref<128x512xbf16, #tpu.memory_space<vmem>>, vector<128x512xbf16>
    %cst_128 = arith.constant dense<0.000000e+00> : vector<8x512xf32>
    %411 = tpu.matmul %409, %410, %cst_128 {dimension_numbers = #tpu.dot_dimension_numbers<[1], [0], [0], [1], [0, 0, 1, 1], [], []>} : vector<8x128xbf16>, vector<128x512xbf16>, vector<8x512xf32> -> vector<8x512xf32>
    %412 = arith.addf %408, %411 : vector<8x512xf32>
    %413 = arith.addf %412, %0 : vector<8x512xf32>
    %414 = vector.extract_strided_slice %413 {offsets = [0, 0], sizes = [8, 128], strides = [1, 1]} : vector<8x512xf32> to vector<8x128xf32>
    %415 = arith.negf %414 : vector<8x128xf32>
    %416 = math.exp %415 : vector<8x128xf32>
    %cst_129 = arith.constant 1.000000e+00 : f32
    %417 = vector.broadcast %cst_129 : f32 to vector<8x128xf32>
    %418 = arith.addf %417, %416 : vector<8x128xf32>
    %419 = arith.divf %417, %418 : vector<8x128xf32>
    %420 = vector.extract_strided_slice %413 {offsets = [0, 128], sizes = [8, 128], strides = [1, 1]} : vector<8x512xf32> to vector<8x128xf32>
    %421 = arith.negf %420 : vector<8x128xf32>
    %422 = math.exp %421 : vector<8x128xf32>
    %cst_130 = arith.constant 1.000000e+00 : f32
    %423 = vector.broadcast %cst_130 : f32 to vector<8x128xf32>
    %424 = arith.addf %423, %422 : vector<8x128xf32>
    %425 = arith.divf %423, %424 : vector<8x128xf32>
    %426 = vector.extract_strided_slice %413 {offsets = [0, 256], sizes = [8, 128], strides = [1, 1]} : vector<8x512xf32> to vector<8x128xf32>
    %427 = math.tanh %426 : vector<8x128xf32>
    %428 = vector.extract_strided_slice %413 {offsets = [0, 384], sizes = [8, 128], strides = [1, 1]} : vector<8x512xf32> to vector<8x128xf32>
    %429 = arith.negf %428 : vector<8x128xf32>
    %430 = math.exp %429 : vector<8x128xf32>
    %cst_131 = arith.constant 1.000000e+00 : f32
    %431 = vector.broadcast %cst_131 : f32 to vector<8x128xf32>
    %432 = arith.addf %431, %430 : vector<8x128xf32>
    %433 = arith.divf %431, %432 : vector<8x128xf32>
    %434 = arith.mulf %425, %338 : vector<8x128xf32>
    %435 = arith.mulf %419, %427 : vector<8x128xf32>
    %436 = arith.addf %434, %435 : vector<8x128xf32>
    %437 = math.tanh %436 : vector<8x128xf32>
    %438 = arith.mulf %433, %437 : vector<8x128xf32>
    %439 = arith.truncf %438 : vector<8x128xf32> to vector<8x128xbf16>
    %c0_132 = arith.constant 0 : index
    %c0_133 = arith.constant 0 : index
    %440 = vector.load %arg3[%c0_132, %c0_133] : memref<128x512xbf16, #tpu.memory_space<vmem>>, vector<128x512xbf16>
    %cst_134 = arith.constant dense<0.000000e+00> : vector<8x512xf32>
    %441 = tpu.matmul %439, %440, %cst_134 {dimension_numbers = #tpu.dot_dimension_numbers<[1], [0], [0], [1], [0, 0, 1, 1], [], []>} : vector<8x128xbf16>, vector<128x512xbf16>, vector<8x512xf32> -> vector<8x512xf32>
    %442 = arith.truncf %373 : vector<8x128xf32> to vector<8x128xbf16>
    %c0_135 = arith.constant 0 : index
    %c0_136 = arith.constant 0 : index
    %443 = vector.load %arg4[%c0_135, %c0_136] : memref<128x512xbf16, #tpu.memory_space<vmem>>, vector<128x512xbf16>
    %cst_137 = arith.constant dense<0.000000e+00> : vector<8x512xf32>
    %444 = tpu.matmul %442, %443, %cst_137 {dimension_numbers = #tpu.dot_dimension_numbers<[1], [0], [0], [1], [0, 0, 1, 1], [], []>} : vector<8x128xbf16>, vector<128x512xbf16>, vector<8x512xf32> -> vector<8x512xf32>
    %445 = arith.addf %441, %444 : vector<8x512xf32>
    %446 = arith.addf %445, %1 : vector<8x512xf32>
    %447 = vector.extract_strided_slice %446 {offsets = [0, 0], sizes = [8, 128], strides = [1, 1]} : vector<8x512xf32> to vector<8x128xf32>
    %448 = arith.negf %447 : vector<8x128xf32>
    %449 = math.exp %448 : vector<8x128xf32>
    %cst_138 = arith.constant 1.000000e+00 : f32
    %450 = vector.broadcast %cst_138 : f32 to vector<8x128xf32>
    %451 = arith.addf %450, %449 : vector<8x128xf32>
    %452 = arith.divf %450, %451 : vector<8x128xf32>
    %453 = vector.extract_strided_slice %446 {offsets = [0, 128], sizes = [8, 128], strides = [1, 1]} : vector<8x512xf32> to vector<8x128xf32>
    %454 = arith.negf %453 : vector<8x128xf32>
    %455 = math.exp %454 : vector<8x128xf32>
    %cst_139 = arith.constant 1.000000e+00 : f32
    %456 = vector.broadcast %cst_139 : f32 to vector<8x128xf32>
    %457 = arith.addf %456, %455 : vector<8x128xf32>
    %458 = arith.divf %456, %457 : vector<8x128xf32>
    %459 = vector.extract_strided_slice %446 {offsets = [0, 256], sizes = [8, 128], strides = [1, 1]} : vector<8x512xf32> to vector<8x128xf32>
    %460 = math.tanh %459 : vector<8x128xf32>
    %461 = vector.extract_strided_slice %446 {offsets = [0, 384], sizes = [8, 128], strides = [1, 1]} : vector<8x512xf32> to vector<8x128xf32>
    %462 = arith.negf %461 : vector<8x128xf32>
    %463 = math.exp %462 : vector<8x128xf32>
    %cst_140 = arith.constant 1.000000e+00 : f32
    %464 = vector.broadcast %cst_140 : f32 to vector<8x128xf32>
    %465 = arith.addf %464, %463 : vector<8x128xf32>
    %466 = arith.divf %464, %465 : vector<8x128xf32>
    %467 = arith.mulf %458, %371 : vector<8x128xf32>
    %468 = arith.mulf %452, %460 : vector<8x128xf32>
    %469 = arith.addf %467, %468 : vector<8x128xf32>
    %470 = math.tanh %469 : vector<8x128xf32>
    %471 = arith.mulf %466, %470 : vector<8x128xf32>
    %472 = arith.truncf %471 : vector<8x128xf32> to vector<8x128xbf16>
    %c0_141 = arith.constant 0 : index
    %c0_142 = arith.constant 0 : index
    %473 = vector.load %arg5[%c0_141, %c0_142] : memref<128x512xbf16, #tpu.memory_space<vmem>>, vector<128x512xbf16>
    %cst_143 = arith.constant dense<0.000000e+00> : vector<8x512xf32>
    %474 = tpu.matmul %472, %473, %cst_143 {dimension_numbers = #tpu.dot_dimension_numbers<[1], [0], [0], [1], [0, 0, 1, 1], [], []>} : vector<8x128xbf16>, vector<128x512xbf16>, vector<8x512xf32> -> vector<8x512xf32>
    %475 = arith.truncf %406 : vector<8x128xf32> to vector<8x128xbf16>
    %c0_144 = arith.constant 0 : index
    %c0_145 = arith.constant 0 : index
    %476 = vector.load %arg6[%c0_144, %c0_145] : memref<128x512xbf16, #tpu.memory_space<vmem>>, vector<128x512xbf16>
    %cst_146 = arith.constant dense<0.000000e+00> : vector<8x512xf32>
    %477 = tpu.matmul %475, %476, %cst_146 {dimension_numbers = #tpu.dot_dimension_numbers<[1], [0], [0], [1], [0, 0, 1, 1], [], []>} : vector<8x128xbf16>, vector<128x512xbf16>, vector<8x512xf32> -> vector<8x512xf32>
    %478 = arith.addf %474, %477 : vector<8x512xf32>
    %479 = arith.addf %478, %2 : vector<8x512xf32>
    %480 = vector.extract_strided_slice %479 {offsets = [0, 0], sizes = [8, 128], strides = [1, 1]} : vector<8x512xf32> to vector<8x128xf32>
    %481 = arith.negf %480 : vector<8x128xf32>
    %482 = math.exp %481 : vector<8x128xf32>
    %cst_147 = arith.constant 1.000000e+00 : f32
    %483 = vector.broadcast %cst_147 : f32 to vector<8x128xf32>
    %484 = arith.addf %483, %482 : vector<8x128xf32>
    %485 = arith.divf %483, %484 : vector<8x128xf32>
    %486 = vector.extract_strided_slice %479 {offsets = [0, 128], sizes = [8, 128], strides = [1, 1]} : vector<8x512xf32> to vector<8x128xf32>
    %487 = arith.negf %486 : vector<8x128xf32>
    %488 = math.exp %487 : vector<8x128xf32>
    %cst_148 = arith.constant 1.000000e+00 : f32
    %489 = vector.broadcast %cst_148 : f32 to vector<8x128xf32>
    %490 = arith.addf %489, %488 : vector<8x128xf32>
    %491 = arith.divf %489, %490 : vector<8x128xf32>
    %492 = vector.extract_strided_slice %479 {offsets = [0, 256], sizes = [8, 128], strides = [1, 1]} : vector<8x512xf32> to vector<8x128xf32>
    %493 = math.tanh %492 : vector<8x128xf32>
    %494 = vector.extract_strided_slice %479 {offsets = [0, 384], sizes = [8, 128], strides = [1, 1]} : vector<8x512xf32> to vector<8x128xf32>
    %495 = arith.negf %494 : vector<8x128xf32>
    %496 = math.exp %495 : vector<8x128xf32>
    %cst_149 = arith.constant 1.000000e+00 : f32
    %497 = vector.broadcast %cst_149 : f32 to vector<8x128xf32>
    %498 = arith.addf %497, %496 : vector<8x128xf32>
    %499 = arith.divf %497, %498 : vector<8x128xf32>
    %500 = arith.mulf %491, %404 : vector<8x128xf32>
    %501 = arith.mulf %485, %493 : vector<8x128xf32>
    %502 = arith.addf %500, %501 : vector<8x128xf32>
    %503 = math.tanh %502 : vector<8x128xf32>
    %504 = arith.mulf %499, %503 : vector<8x128xf32>
    %c5 = arith.constant 5 : index
    %c0_150 = arith.constant 0 : index
    %c0_151 = arith.constant 0 : index
    %505 = vector.load %arg13[%c5, %c0_150, %c0_151] : memref<8x8x512xf32, #tpu.memory_space<vmem>>, vector<1x8x512xf32>
    %506 = vector.shape_cast %505 : vector<1x8x512xf32> to vector<8x512xf32>
    %507 = arith.truncf %438 : vector<8x128xf32> to vector<8x128xbf16>
    %c0_152 = arith.constant 0 : index
    %c0_153 = arith.constant 0 : index
    %508 = vector.load %arg2[%c0_152, %c0_153] : memref<128x512xbf16, #tpu.memory_space<vmem>>, vector<128x512xbf16>
    %cst_154 = arith.constant dense<0.000000e+00> : vector<8x512xf32>
    %509 = tpu.matmul %507, %508, %cst_154 {dimension_numbers = #tpu.dot_dimension_numbers<[1], [0], [0], [1], [0, 0, 1, 1], [], []>} : vector<8x128xbf16>, vector<128x512xbf16>, vector<8x512xf32> -> vector<8x512xf32>
    %510 = arith.addf %506, %509 : vector<8x512xf32>
    %511 = arith.addf %510, %0 : vector<8x512xf32>
    %512 = vector.extract_strided_slice %511 {offsets = [0, 0], sizes = [8, 128], strides = [1, 1]} : vector<8x512xf32> to vector<8x128xf32>
    %513 = arith.negf %512 : vector<8x128xf32>
    %514 = math.exp %513 : vector<8x128xf32>
    %cst_155 = arith.constant 1.000000e+00 : f32
    %515 = vector.broadcast %cst_155 : f32 to vector<8x128xf32>
    %516 = arith.addf %515, %514 : vector<8x128xf32>
    %517 = arith.divf %515, %516 : vector<8x128xf32>
    %518 = vector.extract_strided_slice %511 {offsets = [0, 128], sizes = [8, 128], strides = [1, 1]} : vector<8x512xf32> to vector<8x128xf32>
    %519 = arith.negf %518 : vector<8x128xf32>
    %520 = math.exp %519 : vector<8x128xf32>
    %cst_156 = arith.constant 1.000000e+00 : f32
    %521 = vector.broadcast %cst_156 : f32 to vector<8x128xf32>
    %522 = arith.addf %521, %520 : vector<8x128xf32>
    %523 = arith.divf %521, %522 : vector<8x128xf32>
    %524 = vector.extract_strided_slice %511 {offsets = [0, 256], sizes = [8, 128], strides = [1, 1]} : vector<8x512xf32> to vector<8x128xf32>
    %525 = math.tanh %524 : vector<8x128xf32>
    %526 = vector.extract_strided_slice %511 {offsets = [0, 384], sizes = [8, 128], strides = [1, 1]} : vector<8x512xf32> to vector<8x128xf32>
    %527 = arith.negf %526 : vector<8x128xf32>
    %528 = math.exp %527 : vector<8x128xf32>
    %cst_157 = arith.constant 1.000000e+00 : f32
    %529 = vector.broadcast %cst_157 : f32 to vector<8x128xf32>
    %530 = arith.addf %529, %528 : vector<8x128xf32>
    %531 = arith.divf %529, %530 : vector<8x128xf32>
    %532 = arith.mulf %523, %436 : vector<8x128xf32>
    %533 = arith.mulf %517, %525 : vector<8x128xf32>
    %534 = arith.addf %532, %533 : vector<8x128xf32>
    %535 = math.tanh %534 : vector<8x128xf32>
    %536 = arith.mulf %531, %535 : vector<8x128xf32>
    %537 = arith.truncf %536 : vector<8x128xf32> to vector<8x128xbf16>
    %c0_158 = arith.constant 0 : index
    %c0_159 = arith.constant 0 : index
    %538 = vector.load %arg3[%c0_158, %c0_159] : memref<128x512xbf16, #tpu.memory_space<vmem>>, vector<128x512xbf16>
    %cst_160 = arith.constant dense<0.000000e+00> : vector<8x512xf32>
    %539 = tpu.matmul %537, %538, %cst_160 {dimension_numbers = #tpu.dot_dimension_numbers<[1], [0], [0], [1], [0, 0, 1, 1], [], []>} : vector<8x128xbf16>, vector<128x512xbf16>, vector<8x512xf32> -> vector<8x512xf32>
    %540 = arith.truncf %471 : vector<8x128xf32> to vector<8x128xbf16>
    %c0_161 = arith.constant 0 : index
    %c0_162 = arith.constant 0 : index
    %541 = vector.load %arg4[%c0_161, %c0_162] : memref<128x512xbf16, #tpu.memory_space<vmem>>, vector<128x512xbf16>
    %cst_163 = arith.constant dense<0.000000e+00> : vector<8x512xf32>
    %542 = tpu.matmul %540, %541, %cst_163 {dimension_numbers = #tpu.dot_dimension_numbers<[1], [0], [0], [1], [0, 0, 1, 1], [], []>} : vector<8x128xbf16>, vector<128x512xbf16>, vector<8x512xf32> -> vector<8x512xf32>
    %543 = arith.addf %539, %542 : vector<8x512xf32>
    %544 = arith.addf %543, %1 : vector<8x512xf32>
    %545 = vector.extract_strided_slice %544 {offsets = [0, 0], sizes = [8, 128], strides = [1, 1]} : vector<8x512xf32> to vector<8x128xf32>
    %546 = arith.negf %545 : vector<8x128xf32>
    %547 = math.exp %546 : vector<8x128xf32>
    %cst_164 = arith.constant 1.000000e+00 : f32
    %548 = vector.broadcast %cst_164 : f32 to vector<8x128xf32>
    %549 = arith.addf %548, %547 : vector<8x128xf32>
    %550 = arith.divf %548, %549 : vector<8x128xf32>
    %551 = vector.extract_strided_slice %544 {offsets = [0, 128], sizes = [8, 128], strides = [1, 1]} : vector<8x512xf32> to vector<8x128xf32>
    %552 = arith.negf %551 : vector<8x128xf32>
    %553 = math.exp %552 : vector<8x128xf32>
    %cst_165 = arith.constant 1.000000e+00 : f32
    %554 = vector.broadcast %cst_165 : f32 to vector<8x128xf32>
    %555 = arith.addf %554, %553 : vector<8x128xf32>
    %556 = arith.divf %554, %555 : vector<8x128xf32>
    %557 = vector.extract_strided_slice %544 {offsets = [0, 256], sizes = [8, 128], strides = [1, 1]} : vector<8x512xf32> to vector<8x128xf32>
    %558 = math.tanh %557 : vector<8x128xf32>
    %559 = vector.extract_strided_slice %544 {offsets = [0, 384], sizes = [8, 128], strides = [1, 1]} : vector<8x512xf32> to vector<8x128xf32>
    %560 = arith.negf %559 : vector<8x128xf32>
    %561 = math.exp %560 : vector<8x128xf32>
    %cst_166 = arith.constant 1.000000e+00 : f32
    %562 = vector.broadcast %cst_166 : f32 to vector<8x128xf32>
    %563 = arith.addf %562, %561 : vector<8x128xf32>
    %564 = arith.divf %562, %563 : vector<8x128xf32>
    %565 = arith.mulf %556, %469 : vector<8x128xf32>
    %566 = arith.mulf %550, %558 : vector<8x128xf32>
    %567 = arith.addf %565, %566 : vector<8x128xf32>
    %568 = math.tanh %567 : vector<8x128xf32>
    %569 = arith.mulf %564, %568 : vector<8x128xf32>
    %570 = arith.truncf %569 : vector<8x128xf32> to vector<8x128xbf16>
    %c0_167 = arith.constant 0 : index
    %c0_168 = arith.constant 0 : index
    %571 = vector.load %arg5[%c0_167, %c0_168] : memref<128x512xbf16, #tpu.memory_space<vmem>>, vector<128x512xbf16>
    %cst_169 = arith.constant dense<0.000000e+00> : vector<8x512xf32>
    %572 = tpu.matmul %570, %571, %cst_169 {dimension_numbers = #tpu.dot_dimension_numbers<[1], [0], [0], [1], [0, 0, 1, 1], [], []>} : vector<8x128xbf16>, vector<128x512xbf16>, vector<8x512xf32> -> vector<8x512xf32>
    %573 = arith.truncf %504 : vector<8x128xf32> to vector<8x128xbf16>
    %c0_170 = arith.constant 0 : index
    %c0_171 = arith.constant 0 : index
    %574 = vector.load %arg6[%c0_170, %c0_171] : memref<128x512xbf16, #tpu.memory_space<vmem>>, vector<128x512xbf16>
    %cst_172 = arith.constant dense<0.000000e+00> : vector<8x512xf32>
    %575 = tpu.matmul %573, %574, %cst_172 {dimension_numbers = #tpu.dot_dimension_numbers<[1], [0], [0], [1], [0, 0, 1, 1], [], []>} : vector<8x128xbf16>, vector<128x512xbf16>, vector<8x512xf32> -> vector<8x512xf32>
    %576 = arith.addf %572, %575 : vector<8x512xf32>
    %577 = arith.addf %576, %2 : vector<8x512xf32>
    %578 = vector.extract_strided_slice %577 {offsets = [0, 0], sizes = [8, 128], strides = [1, 1]} : vector<8x512xf32> to vector<8x128xf32>
    %579 = arith.negf %578 : vector<8x128xf32>
    %580 = math.exp %579 : vector<8x128xf32>
    %cst_173 = arith.constant 1.000000e+00 : f32
    %581 = vector.broadcast %cst_173 : f32 to vector<8x128xf32>
    %582 = arith.addf %581, %580 : vector<8x128xf32>
    %583 = arith.divf %581, %582 : vector<8x128xf32>
    %584 = vector.extract_strided_slice %577 {offsets = [0, 128], sizes = [8, 128], strides = [1, 1]} : vector<8x512xf32> to vector<8x128xf32>
    %585 = arith.negf %584 : vector<8x128xf32>
    %586 = math.exp %585 : vector<8x128xf32>
    %cst_174 = arith.constant 1.000000e+00 : f32
    %587 = vector.broadcast %cst_174 : f32 to vector<8x128xf32>
    %588 = arith.addf %587, %586 : vector<8x128xf32>
    %589 = arith.divf %587, %588 : vector<8x128xf32>
    %590 = vector.extract_strided_slice %577 {offsets = [0, 256], sizes = [8, 128], strides = [1, 1]} : vector<8x512xf32> to vector<8x128xf32>
    %591 = math.tanh %590 : vector<8x128xf32>
    %592 = vector.extract_strided_slice %577 {offsets = [0, 384], sizes = [8, 128], strides = [1, 1]} : vector<8x512xf32> to vector<8x128xf32>
    %593 = arith.negf %592 : vector<8x128xf32>
    %594 = math.exp %593 : vector<8x128xf32>
    %cst_175 = arith.constant 1.000000e+00 : f32
    %595 = vector.broadcast %cst_175 : f32 to vector<8x128xf32>
    %596 = arith.addf %595, %594 : vector<8x128xf32>
    %597 = arith.divf %595, %596 : vector<8x128xf32>
    %598 = arith.mulf %589, %502 : vector<8x128xf32>
    %599 = arith.mulf %583, %591 : vector<8x128xf32>
    %600 = arith.addf %598, %599 : vector<8x128xf32>
    %601 = math.tanh %600 : vector<8x128xf32>
    %602 = arith.mulf %597, %601 : vector<8x128xf32>
    %c6 = arith.constant 6 : index
    %c0_176 = arith.constant 0 : index
    %c0_177 = arith.constant 0 : index
    %603 = vector.load %arg13[%c6, %c0_176, %c0_177] : memref<8x8x512xf32, #tpu.memory_space<vmem>>, vector<1x8x512xf32>
    %604 = vector.shape_cast %603 : vector<1x8x512xf32> to vector<8x512xf32>
    %605 = arith.truncf %536 : vector<8x128xf32> to vector<8x128xbf16>
    %c0_178 = arith.constant 0 : index
    %c0_179 = arith.constant 0 : index
    %606 = vector.load %arg2[%c0_178, %c0_179] : memref<128x512xbf16, #tpu.memory_space<vmem>>, vector<128x512xbf16>
    %cst_180 = arith.constant dense<0.000000e+00> : vector<8x512xf32>
    %607 = tpu.matmul %605, %606, %cst_180 {dimension_numbers = #tpu.dot_dimension_numbers<[1], [0], [0], [1], [0, 0, 1, 1], [], []>} : vector<8x128xbf16>, vector<128x512xbf16>, vector<8x512xf32> -> vector<8x512xf32>
    %608 = arith.addf %604, %607 : vector<8x512xf32>
    %609 = arith.addf %608, %0 : vector<8x512xf32>
    %610 = vector.extract_strided_slice %609 {offsets = [0, 0], sizes = [8, 128], strides = [1, 1]} : vector<8x512xf32> to vector<8x128xf32>
    %611 = arith.negf %610 : vector<8x128xf32>
    %612 = math.exp %611 : vector<8x128xf32>
    %cst_181 = arith.constant 1.000000e+00 : f32
    %613 = vector.broadcast %cst_181 : f32 to vector<8x128xf32>
    %614 = arith.addf %613, %612 : vector<8x128xf32>
    %615 = arith.divf %613, %614 : vector<8x128xf32>
    %616 = vector.extract_strided_slice %609 {offsets = [0, 128], sizes = [8, 128], strides = [1, 1]} : vector<8x512xf32> to vector<8x128xf32>
    %617 = arith.negf %616 : vector<8x128xf32>
    %618 = math.exp %617 : vector<8x128xf32>
    %cst_182 = arith.constant 1.000000e+00 : f32
    %619 = vector.broadcast %cst_182 : f32 to vector<8x128xf32>
    %620 = arith.addf %619, %618 : vector<8x128xf32>
    %621 = arith.divf %619, %620 : vector<8x128xf32>
    %622 = vector.extract_strided_slice %609 {offsets = [0, 256], sizes = [8, 128], strides = [1, 1]} : vector<8x512xf32> to vector<8x128xf32>
    %623 = math.tanh %622 : vector<8x128xf32>
    %624 = vector.extract_strided_slice %609 {offsets = [0, 384], sizes = [8, 128], strides = [1, 1]} : vector<8x512xf32> to vector<8x128xf32>
    %625 = arith.negf %624 : vector<8x128xf32>
    %626 = math.exp %625 : vector<8x128xf32>
    %cst_183 = arith.constant 1.000000e+00 : f32
    %627 = vector.broadcast %cst_183 : f32 to vector<8x128xf32>
    %628 = arith.addf %627, %626 : vector<8x128xf32>
    %629 = arith.divf %627, %628 : vector<8x128xf32>
    %630 = arith.mulf %621, %534 : vector<8x128xf32>
    %631 = arith.mulf %615, %623 : vector<8x128xf32>
    %632 = arith.addf %630, %631 : vector<8x128xf32>
    %633 = math.tanh %632 : vector<8x128xf32>
    %634 = arith.mulf %629, %633 : vector<8x128xf32>
    %635 = arith.truncf %634 : vector<8x128xf32> to vector<8x128xbf16>
    %c0_184 = arith.constant 0 : index
    %c0_185 = arith.constant 0 : index
    %636 = vector.load %arg3[%c0_184, %c0_185] : memref<128x512xbf16, #tpu.memory_space<vmem>>, vector<128x512xbf16>
    %cst_186 = arith.constant dense<0.000000e+00> : vector<8x512xf32>
    %637 = tpu.matmul %635, %636, %cst_186 {dimension_numbers = #tpu.dot_dimension_numbers<[1], [0], [0], [1], [0, 0, 1, 1], [], []>} : vector<8x128xbf16>, vector<128x512xbf16>, vector<8x512xf32> -> vector<8x512xf32>
    %638 = arith.truncf %569 : vector<8x128xf32> to vector<8x128xbf16>
    %c0_187 = arith.constant 0 : index
    %c0_188 = arith.constant 0 : index
    %639 = vector.load %arg4[%c0_187, %c0_188] : memref<128x512xbf16, #tpu.memory_space<vmem>>, vector<128x512xbf16>
    %cst_189 = arith.constant dense<0.000000e+00> : vector<8x512xf32>
    %640 = tpu.matmul %638, %639, %cst_189 {dimension_numbers = #tpu.dot_dimension_numbers<[1], [0], [0], [1], [0, 0, 1, 1], [], []>} : vector<8x128xbf16>, vector<128x512xbf16>, vector<8x512xf32> -> vector<8x512xf32>
    %641 = arith.addf %637, %640 : vector<8x512xf32>
    %642 = arith.addf %641, %1 : vector<8x512xf32>
    %643 = vector.extract_strided_slice %642 {offsets = [0, 0], sizes = [8, 128], strides = [1, 1]} : vector<8x512xf32> to vector<8x128xf32>
    %644 = arith.negf %643 : vector<8x128xf32>
    %645 = math.exp %644 : vector<8x128xf32>
    %cst_190 = arith.constant 1.000000e+00 : f32
    %646 = vector.broadcast %cst_190 : f32 to vector<8x128xf32>
    %647 = arith.addf %646, %645 : vector<8x128xf32>
    %648 = arith.divf %646, %647 : vector<8x128xf32>
    %649 = vector.extract_strided_slice %642 {offsets = [0, 128], sizes = [8, 128], strides = [1, 1]} : vector<8x512xf32> to vector<8x128xf32>
    %650 = arith.negf %649 : vector<8x128xf32>
    %651 = math.exp %650 : vector<8x128xf32>
    %cst_191 = arith.constant 1.000000e+00 : f32
    %652 = vector.broadcast %cst_191 : f32 to vector<8x128xf32>
    %653 = arith.addf %652, %651 : vector<8x128xf32>
    %654 = arith.divf %652, %653 : vector<8x128xf32>
    %655 = vector.extract_strided_slice %642 {offsets = [0, 256], sizes = [8, 128], strides = [1, 1]} : vector<8x512xf32> to vector<8x128xf32>
    %656 = math.tanh %655 : vector<8x128xf32>
    %657 = vector.extract_strided_slice %642 {offsets = [0, 384], sizes = [8, 128], strides = [1, 1]} : vector<8x512xf32> to vector<8x128xf32>
    %658 = arith.negf %657 : vector<8x128xf32>
    %659 = math.exp %658 : vector<8x128xf32>
    %cst_192 = arith.constant 1.000000e+00 : f32
    %660 = vector.broadcast %cst_192 : f32 to vector<8x128xf32>
    %661 = arith.addf %660, %659 : vector<8x128xf32>
    %662 = arith.divf %660, %661 : vector<8x128xf32>
    %663 = arith.mulf %654, %567 : vector<8x128xf32>
    %664 = arith.mulf %648, %656 : vector<8x128xf32>
    %665 = arith.addf %663, %664 : vector<8x128xf32>
    %666 = math.tanh %665 : vector<8x128xf32>
    %667 = arith.mulf %662, %666 : vector<8x128xf32>
    %668 = arith.truncf %667 : vector<8x128xf32> to vector<8x128xbf16>
    %c0_193 = arith.constant 0 : index
    %c0_194 = arith.constant 0 : index
    %669 = vector.load %arg5[%c0_193, %c0_194] : memref<128x512xbf16, #tpu.memory_space<vmem>>, vector<128x512xbf16>
    %cst_195 = arith.constant dense<0.000000e+00> : vector<8x512xf32>
    %670 = tpu.matmul %668, %669, %cst_195 {dimension_numbers = #tpu.dot_dimension_numbers<[1], [0], [0], [1], [0, 0, 1, 1], [], []>} : vector<8x128xbf16>, vector<128x512xbf16>, vector<8x512xf32> -> vector<8x512xf32>
    %671 = arith.truncf %602 : vector<8x128xf32> to vector<8x128xbf16>
    %c0_196 = arith.constant 0 : index
    %c0_197 = arith.constant 0 : index
    %672 = vector.load %arg6[%c0_196, %c0_197] : memref<128x512xbf16, #tpu.memory_space<vmem>>, vector<128x512xbf16>
    %cst_198 = arith.constant dense<0.000000e+00> : vector<8x512xf32>
    %673 = tpu.matmul %671, %672, %cst_198 {dimension_numbers = #tpu.dot_dimension_numbers<[1], [0], [0], [1], [0, 0, 1, 1], [], []>} : vector<8x128xbf16>, vector<128x512xbf16>, vector<8x512xf32> -> vector<8x512xf32>
    %674 = arith.addf %670, %673 : vector<8x512xf32>
    %675 = arith.addf %674, %2 : vector<8x512xf32>
    %676 = vector.extract_strided_slice %675 {offsets = [0, 0], sizes = [8, 128], strides = [1, 1]} : vector<8x512xf32> to vector<8x128xf32>
    %677 = arith.negf %676 : vector<8x128xf32>
    %678 = math.exp %677 : vector<8x128xf32>
    %cst_199 = arith.constant 1.000000e+00 : f32
    %679 = vector.broadcast %cst_199 : f32 to vector<8x128xf32>
    %680 = arith.addf %679, %678 : vector<8x128xf32>
    %681 = arith.divf %679, %680 : vector<8x128xf32>
    %682 = vector.extract_strided_slice %675 {offsets = [0, 128], sizes = [8, 128], strides = [1, 1]} : vector<8x512xf32> to vector<8x128xf32>
    %683 = arith.negf %682 : vector<8x128xf32>
    %684 = math.exp %683 : vector<8x128xf32>
    %cst_200 = arith.constant 1.000000e+00 : f32
    %685 = vector.broadcast %cst_200 : f32 to vector<8x128xf32>
    %686 = arith.addf %685, %684 : vector<8x128xf32>
    %687 = arith.divf %685, %686 : vector<8x128xf32>
    %688 = vector.extract_strided_slice %675 {offsets = [0, 256], sizes = [8, 128], strides = [1, 1]} : vector<8x512xf32> to vector<8x128xf32>
    %689 = math.tanh %688 : vector<8x128xf32>
    %690 = vector.extract_strided_slice %675 {offsets = [0, 384], sizes = [8, 128], strides = [1, 1]} : vector<8x512xf32> to vector<8x128xf32>
    %691 = arith.negf %690 : vector<8x128xf32>
    %692 = math.exp %691 : vector<8x128xf32>
    %cst_201 = arith.constant 1.000000e+00 : f32
    %693 = vector.broadcast %cst_201 : f32 to vector<8x128xf32>
    %694 = arith.addf %693, %692 : vector<8x128xf32>
    %695 = arith.divf %693, %694 : vector<8x128xf32>
    %696 = arith.mulf %687, %600 : vector<8x128xf32>
    %697 = arith.mulf %681, %689 : vector<8x128xf32>
    %698 = arith.addf %696, %697 : vector<8x128xf32>
    %699 = math.tanh %698 : vector<8x128xf32>
    %700 = arith.mulf %695, %699 : vector<8x128xf32>
    %c7 = arith.constant 7 : index
    %c0_202 = arith.constant 0 : index
    %c0_203 = arith.constant 0 : index
    %701 = vector.load %arg13[%c7, %c0_202, %c0_203] : memref<8x8x512xf32, #tpu.memory_space<vmem>>, vector<1x8x512xf32>
    %702 = vector.shape_cast %701 : vector<1x8x512xf32> to vector<8x512xf32>
    %703 = arith.truncf %634 : vector<8x128xf32> to vector<8x128xbf16>
    %c0_204 = arith.constant 0 : index
    %c0_205 = arith.constant 0 : index
    %704 = vector.load %arg2[%c0_204, %c0_205] : memref<128x512xbf16, #tpu.memory_space<vmem>>, vector<128x512xbf16>
    %cst_206 = arith.constant dense<0.000000e+00> : vector<8x512xf32>
    %705 = tpu.matmul %703, %704, %cst_206 {dimension_numbers = #tpu.dot_dimension_numbers<[1], [0], [0], [1], [0, 0, 1, 1], [], []>} : vector<8x128xbf16>, vector<128x512xbf16>, vector<8x512xf32> -> vector<8x512xf32>
    %706 = arith.addf %702, %705 : vector<8x512xf32>
    %707 = arith.addf %706, %0 : vector<8x512xf32>
    %708 = vector.extract_strided_slice %707 {offsets = [0, 0], sizes = [8, 128], strides = [1, 1]} : vector<8x512xf32> to vector<8x128xf32>
    %709 = arith.negf %708 : vector<8x128xf32>
    %710 = math.exp %709 : vector<8x128xf32>
    %cst_207 = arith.constant 1.000000e+00 : f32
    %711 = vector.broadcast %cst_207 : f32 to vector<8x128xf32>
    %712 = arith.addf %711, %710 : vector<8x128xf32>
    %713 = arith.divf %711, %712 : vector<8x128xf32>
    %714 = vector.extract_strided_slice %707 {offsets = [0, 128], sizes = [8, 128], strides = [1, 1]} : vector<8x512xf32> to vector<8x128xf32>
    %715 = arith.negf %714 : vector<8x128xf32>
    %716 = math.exp %715 : vector<8x128xf32>
    %cst_208 = arith.constant 1.000000e+00 : f32
    %717 = vector.broadcast %cst_208 : f32 to vector<8x128xf32>
    %718 = arith.addf %717, %716 : vector<8x128xf32>
    %719 = arith.divf %717, %718 : vector<8x128xf32>
    %720 = vector.extract_strided_slice %707 {offsets = [0, 256], sizes = [8, 128], strides = [1, 1]} : vector<8x512xf32> to vector<8x128xf32>
    %721 = math.tanh %720 : vector<8x128xf32>
    %722 = vector.extract_strided_slice %707 {offsets = [0, 384], sizes = [8, 128], strides = [1, 1]} : vector<8x512xf32> to vector<8x128xf32>
    %723 = arith.negf %722 : vector<8x128xf32>
    %724 = math.exp %723 : vector<8x128xf32>
    %cst_209 = arith.constant 1.000000e+00 : f32
    %725 = vector.broadcast %cst_209 : f32 to vector<8x128xf32>
    %726 = arith.addf %725, %724 : vector<8x128xf32>
    %727 = arith.divf %725, %726 : vector<8x128xf32>
    %728 = arith.mulf %719, %632 : vector<8x128xf32>
    %729 = arith.mulf %713, %721 : vector<8x128xf32>
    %730 = arith.addf %728, %729 : vector<8x128xf32>
    %731 = math.tanh %730 : vector<8x128xf32>
    %732 = arith.mulf %727, %731 : vector<8x128xf32>
    %733 = arith.truncf %732 : vector<8x128xf32> to vector<8x128xbf16>
    %c0_210 = arith.constant 0 : index
    %c0_211 = arith.constant 0 : index
    %734 = vector.load %arg3[%c0_210, %c0_211] : memref<128x512xbf16, #tpu.memory_space<vmem>>, vector<128x512xbf16>
    %cst_212 = arith.constant dense<0.000000e+00> : vector<8x512xf32>
    %735 = tpu.matmul %733, %734, %cst_212 {dimension_numbers = #tpu.dot_dimension_numbers<[1], [0], [0], [1], [0, 0, 1, 1], [], []>} : vector<8x128xbf16>, vector<128x512xbf16>, vector<8x512xf32> -> vector<8x512xf32>
    %736 = arith.truncf %667 : vector<8x128xf32> to vector<8x128xbf16>
    %c0_213 = arith.constant 0 : index
    %c0_214 = arith.constant 0 : index
    %737 = vector.load %arg4[%c0_213, %c0_214] : memref<128x512xbf16, #tpu.memory_space<vmem>>, vector<128x512xbf16>
    %cst_215 = arith.constant dense<0.000000e+00> : vector<8x512xf32>
    %738 = tpu.matmul %736, %737, %cst_215 {dimension_numbers = #tpu.dot_dimension_numbers<[1], [0], [0], [1], [0, 0, 1, 1], [], []>} : vector<8x128xbf16>, vector<128x512xbf16>, vector<8x512xf32> -> vector<8x512xf32>
    %739 = arith.addf %735, %738 : vector<8x512xf32>
    %740 = arith.addf %739, %1 : vector<8x512xf32>
    %741 = vector.extract_strided_slice %740 {offsets = [0, 0], sizes = [8, 128], strides = [1, 1]} : vector<8x512xf32> to vector<8x128xf32>
    %742 = arith.negf %741 : vector<8x128xf32>
    %743 = math.exp %742 : vector<8x128xf32>
    %cst_216 = arith.constant 1.000000e+00 : f32
    %744 = vector.broadcast %cst_216 : f32 to vector<8x128xf32>
    %745 = arith.addf %744, %743 : vector<8x128xf32>
    %746 = arith.divf %744, %745 : vector<8x128xf32>
    %747 = vector.extract_strided_slice %740 {offsets = [0, 128], sizes = [8, 128], strides = [1, 1]} : vector<8x512xf32> to vector<8x128xf32>
    %748 = arith.negf %747 : vector<8x128xf32>
    %749 = math.exp %748 : vector<8x128xf32>
    %cst_217 = arith.constant 1.000000e+00 : f32
    %750 = vector.broadcast %cst_217 : f32 to vector<8x128xf32>
    %751 = arith.addf %750, %749 : vector<8x128xf32>
    %752 = arith.divf %750, %751 : vector<8x128xf32>
    %753 = vector.extract_strided_slice %740 {offsets = [0, 256], sizes = [8, 128], strides = [1, 1]} : vector<8x512xf32> to vector<8x128xf32>
    %754 = math.tanh %753 : vector<8x128xf32>
    %755 = vector.extract_strided_slice %740 {offsets = [0, 384], sizes = [8, 128], strides = [1, 1]} : vector<8x512xf32> to vector<8x128xf32>
    %756 = arith.negf %755 : vector<8x128xf32>
    %757 = math.exp %756 : vector<8x128xf32>
    %cst_218 = arith.constant 1.000000e+00 : f32
    %758 = vector.broadcast %cst_218 : f32 to vector<8x128xf32>
    %759 = arith.addf %758, %757 : vector<8x128xf32>
    %760 = arith.divf %758, %759 : vector<8x128xf32>
    %761 = arith.mulf %752, %665 : vector<8x128xf32>
    %762 = arith.mulf %746, %754 : vector<8x128xf32>
    %763 = arith.addf %761, %762 : vector<8x128xf32>
    %764 = math.tanh %763 : vector<8x128xf32>
    %765 = arith.mulf %760, %764 : vector<8x128xf32>
    %766 = arith.truncf %765 : vector<8x128xf32> to vector<8x128xbf16>
    %c0_219 = arith.constant 0 : index
    %c0_220 = arith.constant 0 : index
    %767 = vector.load %arg5[%c0_219, %c0_220] : memref<128x512xbf16, #tpu.memory_space<vmem>>, vector<128x512xbf16>
    %cst_221 = arith.constant dense<0.000000e+00> : vector<8x512xf32>
    %768 = tpu.matmul %766, %767, %cst_221 {dimension_numbers = #tpu.dot_dimension_numbers<[1], [0], [0], [1], [0, 0, 1, 1], [], []>} : vector<8x128xbf16>, vector<128x512xbf16>, vector<8x512xf32> -> vector<8x512xf32>
    %769 = arith.truncf %700 : vector<8x128xf32> to vector<8x128xbf16>
    %c0_222 = arith.constant 0 : index
    %c0_223 = arith.constant 0 : index
    %770 = vector.load %arg6[%c0_222, %c0_223] : memref<128x512xbf16, #tpu.memory_space<vmem>>, vector<128x512xbf16>
    %cst_224 = arith.constant dense<0.000000e+00> : vector<8x512xf32>
    %771 = tpu.matmul %769, %770, %cst_224 {dimension_numbers = #tpu.dot_dimension_numbers<[1], [0], [0], [1], [0, 0, 1, 1], [], []>} : vector<8x128xbf16>, vector<128x512xbf16>, vector<8x512xf32> -> vector<8x512xf32>
    %772 = arith.addf %768, %771 : vector<8x512xf32>
    %773 = arith.addf %772, %2 : vector<8x512xf32>
    %774 = vector.extract_strided_slice %773 {offsets = [0, 0], sizes = [8, 128], strides = [1, 1]} : vector<8x512xf32> to vector<8x128xf32>
    %775 = arith.negf %774 : vector<8x128xf32>
    %776 = math.exp %775 : vector<8x128xf32>
    %cst_225 = arith.constant 1.000000e+00 : f32
    %777 = vector.broadcast %cst_225 : f32 to vector<8x128xf32>
    %778 = arith.addf %777, %776 : vector<8x128xf32>
    %779 = arith.divf %777, %778 : vector<8x128xf32>
    %780 = vector.extract_strided_slice %773 {offsets = [0, 128], sizes = [8, 128], strides = [1, 1]} : vector<8x512xf32> to vector<8x128xf32>
    %781 = arith.negf %780 : vector<8x128xf32>
    %782 = math.exp %781 : vector<8x128xf32>
    %cst_226 = arith.constant 1.000000e+00 : f32
    %783 = vector.broadcast %cst_226 : f32 to vector<8x128xf32>
    %784 = arith.addf %783, %782 : vector<8x128xf32>
    %785 = arith.divf %783, %784 : vector<8x128xf32>
    %786 = vector.extract_strided_slice %773 {offsets = [0, 256], sizes = [8, 128], strides = [1, 1]} : vector<8x512xf32> to vector<8x128xf32>
    %787 = math.tanh %786 : vector<8x128xf32>
    %788 = vector.extract_strided_slice %773 {offsets = [0, 384], sizes = [8, 128], strides = [1, 1]} : vector<8x512xf32> to vector<8x128xf32>
    %789 = arith.negf %788 : vector<8x128xf32>
    %790 = math.exp %789 : vector<8x128xf32>
    %cst_227 = arith.constant 1.000000e+00 : f32
    %791 = vector.broadcast %cst_227 : f32 to vector<8x128xf32>
    %792 = arith.addf %791, %790 : vector<8x128xf32>
    %793 = arith.divf %791, %792 : vector<8x128xf32>
    %794 = arith.mulf %785, %698 : vector<8x128xf32>
    %795 = arith.mulf %779, %787 : vector<8x128xf32>
    %796 = arith.addf %794, %795 : vector<8x128xf32>
    %797 = math.tanh %796 : vector<8x128xf32>
    %798 = arith.mulf %793, %797 : vector<8x128xf32>
    %799 = arith.truncf %798 : vector<8x128xf32> to vector<8x128xbf16>
    %c0_228 = arith.constant 0 : index
    %c0_229 = arith.constant 0 : index
    %800 = vector.load %arg10[%c0_228, %c0_229] : memref<128x128xbf16, #tpu.memory_space<vmem>>, vector<128x128xbf16>
    %cst_230 = arith.constant dense<0.000000e+00> : vector<8x128xf32>
    %801 = tpu.matmul %799, %800, %cst_230 {dimension_numbers = #tpu.dot_dimension_numbers<[1], [0], [0], [1], [0, 0, 1, 1], [], []>} : vector<8x128xbf16>, vector<128x128xbf16>, vector<8x128xf32> -> vector<8x128xf32>
    %c0_231 = arith.constant 0 : index
    %c0_232 = arith.constant 0 : index
    %802 = vector.load %arg11[%c0_231, %c0_232] : memref<8x128xf32, #tpu.memory_space<vmem>>, vector<8x128xf32>
    %803 = arith.addf %801, %802 : vector<8x128xf32>
    %c0_233 = arith.constant 0 : index
    %c0_234 = arith.constant 0 : index
    %804 = vector.load %arg12[%c0_233, %c0_234] : memref<8x128xf32, #tpu.memory_space<vmem>>, vector<8x128xf32>
    tpu.vector_store %arg12[%c0_233, %c0_234], %803 {strides = array<i32>} : memref<8x128xf32, #tpu.memory_space<vmem>>, vector<8x128xf32>,
    return
  }
}

</mosaic_0001>

<llo_original>
// kernel: lstm_net_forward.1
$region0: #{lstm_net_forward.1}
  #allocation0 [shape = 'u32[]', space=smem, size = 0x4, offset = 0x4, fixed_abs, tag = 'smem constant byte address 0x4 - core index']
  #allocation1 [shape = 'u32[144,128]{1,0:T(1,128)}', space=vmem, size = 0x12000, scoped, tag = 'internal scratch']
  #allocation2 [shape = 'f32[8,8,512]{2,1,0:T(8,128)}', space=vmem, size = 0x20000, scoped, tag = 'scratch operand']
  %s0 = inlined_call_operand.vmem [shape: bf16[8,8,128], index: 0, kind: input, shape index: {}]
  %s1 = inlined_call_operand.vmem [shape: bf16[128,512], index: 1, kind: input, shape index: {}]
  %s2 = inlined_call_operand.vmem [shape: bf16[128,512], index: 2, kind: input, shape index: {}]
  %s3 = inlined_call_operand.vmem [shape: bf16[128,512], index: 3, kind: input, shape index: {}]
  %s4 = inlined_call_operand.vmem [shape: bf16[128,512], index: 4, kind: input, shape index: {}]
  %s5 = inlined_call_operand.vmem [shape: bf16[128,512], index: 5, kind: input, shape index: {}]
  %s6 = inlined_call_operand.vmem [shape: bf16[128,512], index: 6, kind: input, shape index: {}]
  %s7 = inlined_call_operand.vmem [shape: f32[8,512], index: 7, kind: input, shape index: {}]
  %s8 = inlined_call_operand.vmem [shape: f32[8,512], index: 8, kind: input, shape index: {}]
  %s9 = inlined_call_operand.vmem [shape: f32[8,512], index: 9, kind: input, shape index: {}]
  %s10 = inlined_call_operand.vmem [shape: bf16[128,128], index: 10, kind: input, shape index: {}]
  %s11 = inlined_call_operand.vmem [shape: f32[8,128], index: 11, kind: input, shape index: {}]
  %s12 = inlined_call_operand.vmem [shape: f32[8,128], index: 12, kind: output, shape index: {}]
  %s13 = sld [smem:[#allocation0]]
  $region58: #{lstm_net_forward.1} parent=0
    _
  %s15 = ssub.s32 1, %s13
  %s16 = scalar_select 0, %s15, %s13
  // Predicated region
  $region2: #{lstm_net_forward.1} parent=0 // pred_check
    _
  $region3: #{lstm_net_forward.1} parent=0 // pred_check_branch
    %18 = sbr.rel (0) target = $region5
  $region4: #{lstm_net_forward.1} parent=0 // pred_region
    _
  $region5: #{lstm_net_forward.1} parent=0 // pred_fallthru
    _
  // Predicated region
  $region6: #{lstm_net_forward.1} parent=0 // pred_check
    _
  $region7: #{lstm_net_forward.1} parent=0 // pred_check_branch
    %20 = sbr.rel (0) target = $region9
  $region8: #{lstm_net_forward.1} parent=0 // pred_region
    _
  $region9: #{lstm_net_forward.1} parent=0 // pred_fallthru
    _
  // Predicated region
  $region10: #{lstm_net_forward.1} parent=0 // pred_check
    _
  $region11: #{lstm_net_forward.1} parent=0 // pred_check_branch
    %22 = sbr.rel (0) target = $region13
  $region12: #{lstm_net_forward.1} parent=0 // pred_region
    _
  $region13: #{lstm_net_forward.1} parent=0 // pred_fallthru
    _
  // Predicated region
  $region14: #{lstm_net_forward.1} parent=0 // pred_check
    _
  $region15: #{lstm_net_forward.1} parent=0 // pred_check_branch
    %24 = sbr.rel (0) target = $region17
  $region16: #{lstm_net_forward.1} parent=0 // pred_region
    _
  $region17: #{lstm_net_forward.1} parent=0 // pred_fallthru
    _
  // Predicated region
  $region18: #{lstm_net_forward.1} parent=0 // pred_check
    _
  $region19: #{lstm_net_forward.1} parent=0 // pred_check_branch
    %26 = sbr.rel (0) target = $region21
  $region20: #{lstm_net_forward.1} parent=0 // pred_region
    _
  $region21: #{lstm_net_forward.1} parent=0 // pred_fallthru
    _
  // Predicated region
  $region22: #{lstm_net_forward.1} parent=0 // pred_check
    _
  $region23: #{lstm_net_forward.1} parent=0 // pred_check_branch
    %28 = sbr.rel (0) target = $region25
  $region24: #{lstm_net_forward.1} parent=0 // pred_region
    _
  $region25: #{lstm_net_forward.1} parent=0 // pred_fallthru
    _
  // Predicated region
  $region26: #{lstm_net_forward.1} parent=0 // pred_check
    _
  $region27: #{lstm_net_forward.1} parent=0 // pred_check_branch
    %30 = sbr.rel (0) target = $region29
  $region28: #{lstm_net_forward.1} parent=0 // pred_region
    _
  $region29: #{lstm_net_forward.1} parent=0 // pred_fallthru
    _
  // Predicated region
  $region30: #{lstm_net_forward.1} parent=0 // pred_check
    _
  $region31: #{lstm_net_forward.1} parent=0 // pred_check_branch
    %32 = sbr.rel (0) target = $region33
  $region32: #{lstm_net_forward.1} parent=0 // pred_region
    _
  $region33: #{lstm_net_forward.1} parent=0 // pred_fallthru
    _
  // Predicated region
  $region34: #{lstm_net_forward.1} parent=0 // pred_check
    _
  $region35: #{lstm_net_forward.1} parent=0 // pred_check_branch
    %34 = sbr.rel (0) target = $region37
  $region36: #{lstm_net_forward.1} parent=0 // pred_region
    _
  $region37: #{lstm_net_forward.1} parent=0 // pred_fallthru
    _
  // Predicated region
  $region38: #{lstm_net_forward.1} parent=0 // pred_check
    _
  $region39: #{lstm_net_forward.1} parent=0 // pred_check_branch
    %36 = sbr.rel (0) target = $region41
  $region40: #{lstm_net_forward.1} parent=0 // pred_region
    _
  $region41: #{lstm_net_forward.1} parent=0 // pred_fallthru
    _
  // Predicated region
  $region42: #{lstm_net_forward.1} parent=0 // pred_check
    _
  $region43: #{lstm_net_forward.1} parent=0 // pred_check_branch
    %38 = sbr.rel (0) target = $region45
  $region44: #{lstm_net_forward.1} parent=0 // pred_region
    _
  $region45: #{lstm_net_forward.1} parent=0 // pred_fallthru
    _
  // Predicated region
  $region46: #{lstm_net_forward.1} parent=0 // pred_check
    _
  $region47: #{lstm_net_forward.1} parent=0 // pred_check_branch
    %40 = sbr.rel (0) target = $region49
  $region48: #{lstm_net_forward.1} parent=0 // pred_region
    _
  $region49: #{lstm_net_forward.1} parent=0 // pred_fallthru
    _
  %v42 = vld [vmem:[%s7] sm:$0xff]
  %v43 = vld [vmem:[%s7 + $0x8] sm:$0xff]
  %v44 = vld [vmem:[%s7 + $0x10] sm:$0xff]
  %v45 = vld [vmem:[%s7 + $0x18] sm:$0xff]
  %v46 = vld [vmem:[%s8] sm:$0xff]
  %v47 = vld [vmem:[%s8 + $0x8] sm:$0xff]
  %v48 = vld [vmem:[%s8 + $0x10] sm:$0xff]
  %v49 = vld [vmem:[%s8 + $0x18] sm:$0xff]
  %v50 = vld [vmem:[%s9] sm:$0xff]
  %v51 = vld [vmem:[%s9 + $0x8] sm:$0xff]
  %v52 = vld [vmem:[%s9 + $0x10] sm:$0xff]
  %v53 = vld [vmem:[%s9 + $0x18] sm:$0xff]
  %v54 = vld [vmem:[%s0] sm:$0xf]
  %v55 = vld [vmem:[%s0 + $0x4] sm:$0xf]
  %v56 = vld [vmem:[%s0 + $0x8] sm:$0xf]
  %v57 = vld [vmem:[%s0 + $0xc] sm:$0xf]
  %v58 = vld [vmem:[%s0 + $0x10] sm:$0xf]
  %v59 = vld [vmem:[%s0 + $0x14] sm:$0xf]
  %v60 = vld [vmem:[%s0 + $0x18] sm:$0xf]
  %v61 = vld [vmem:[%s0 + $0x1c] sm:$0xf]
  %v62 = vld [vmem:[%s1] sm:$0xff]
  %v63 = vld [vmem:[%s1 + $0x8] sm:$0xff]
  %v64 = vld [vmem:[%s1 + $0x10] sm:$0xff]
  %v65 = vld [vmem:[%s1 + $0x18] sm:$0xff]
  %v66 = vld [vmem:[%s1 + $0x20] sm:$0xff]
  %v67 = vld [vmem:[%s1 + $0x28] sm:$0xff]
  %v68 = vld [vmem:[%s1 + $0x30] sm:$0xff]
  %v69 = vld [vmem:[%s1 + $0x38] sm:$0xff]
  %v70 = vld [vmem:[%s1 + $0x40] sm:$0xff]
  %v71 = vld [vmem:[%s1 + $0x48] sm:$0xff]
  %v72 = vld [vmem:[%s1 + $0x50] sm:$0xff]
  %v73 = vld [vmem:[%s1 + $0x58] sm:$0xff]
  %v74 = vld [vmem:[%s1 + $0x60] sm:$0xff]
  %v75 = vld [vmem:[%s1 + $0x68] sm:$0xff]
  %v76 = vld [vmem:[%s1 + $0x70] sm:$0xff]
  %v77 = vld [vmem:[%s1 + $0x78] sm:$0xff]
  %v78 = vld [vmem:[%s1 + $0x80] sm:$0xff]
  %v79 = vld [vmem:[%s1 + $0x88] sm:$0xff]
  %v80 = vld [vmem:[%s1 + $0x90] sm:$0xff]
  %v81 = vld [vmem:[%s1 + $0x98] sm:$0xff]
  %v82 = vld [vmem:[%s1 + $0xa0] sm:$0xff]
  %v83 = vld [vmem:[%s1 + $0xa8] sm:$0xff]
  %v84 = vld [vmem:[%s1 + $0xb0] sm:$0xff]
  %v85 = vld [vmem:[%s1 + $0xb8] sm:$0xff]
  %v86 = vld [vmem:[%s1 + $0xc0] sm:$0xff]
  %v87 = vld [vmem:[%s1 + $0xc8] sm:$0xff]
  %v88 = vld [vmem:[%s1 + $0xd0] sm:$0xff]
  %v89 = vld [vmem:[%s1 + $0xd8] sm:$0xff]
  %v90 = vld [vmem:[%s1 + $0xe0] sm:$0xff]
  %v91 = vld [vmem:[%s1 + $0xe8] sm:$0xff]
  %v92 = vld [vmem:[%s1 + $0xf0] sm:$0xff]
  %v93 = vld [vmem:[%s1 + $0xf8] sm:$0xff]
  %v102 = vunpack.c.l.b16 %v54
  %v103 = vunpack.c.l.b16 %v55
  %v104 = vunpack.c.l.b16 %v56
  %v105 = vunpack.c.l.b16 %v57
  %v106 = vunpack.c.l.b16 %v58
  %v107 = vunpack.c.l.b16 %v59
  %v108 = vunpack.c.l.b16 %v60
  %v109 = vunpack.c.l.b16 %v61
  %v110 = vpack.c.b16 %v103, %v102
  %v111 = vpack.c.b16 %v105, %v104
  %v112 = vpack.c.b16 %v107, %v106
  %v113 = vpack.c.b16 %v109, %v108
  %v150 = vunpack.c.l.b16 %v62
  %v151 = vunpack.c.h.b16 %v62
  %v152 = vunpack.c.l.b16 %v63
  %v153 = vunpack.c.h.b16 %v63
  %v154 = vunpack.c.l.b16 %v64
  %v155 = vunpack.c.h.b16 %v64
  %v156 = vunpack.c.l.b16 %v65
  %v157 = vunpack.c.h.b16 %v65
  %v158 = vunpack.c.l.b16 %v66
  %v159 = vunpack.c.h.b16 %v66
  %v160 = vunpack.c.l.b16 %v67
  %v161 = vunpack.c.h.b16 %v67
  %v162 = vunpack.c.l.b16 %v68
  %v163 = vunpack.c.h.b16 %v68
  %v164 = vunpack.c.l.b16 %v69
  %v165 = vunpack.c.h.b16 %v69
  %v166 = vunpack.c.l.b16 %v70
  %v167 = vunpack.c.h.b16 %v70
  %v168 = vunpack.c.l.b16 %v71
  %v169 = vunpack.c.h.b16 %v71
  %v170 = vunpack.c.l.b16 %v72
  %v171 = vunpack.c.h.b16 %v72
  %v172 = vunpack.c.l.b16 %v73
  %v173 = vunpack.c.h.b16 %v73
  %v174 = vunpack.c.l.b16 %v74
  %v175 = vunpack.c.h.b16 %v74
  %v176 = vunpack.c.l.b16 %v75
  %v177 = vunpack.c.h.b16 %v75
  %v178 = vunpack.c.l.b16 %v76
  %v179 = vunpack.c.h.b16 %v76
  %v180 = vunpack.c.l.b16 %v77
  %v181 = vunpack.c.h.b16 %v77
  %v182 = vunpack.c.l.b16 %v78
  %v183 = vunpack.c.h.b16 %v78
  %v184 = vunpack.c.l.b16 %v79
  %v185 = vunpack.c.h.b16 %v79
  %v186 = vunpack.c.l.b16 %v80
  %v187 = vunpack.c.h.b16 %v80
  %v188 = vunpack.c.l.b16 %v81
  %v189 = vunpack.c.h.b16 %v81
  %v190 = vunpack.c.l.b16 %v82
  %v191 = vunpack.c.h.b16 %v82
  %v192 = vunpack.c.l.b16 %v83
  %v193 = vunpack.c.h.b16 %v83
  %v194 = vunpack.c.l.b16 %v84
  %v195 = vunpack.c.h.b16 %v84
  %v196 = vunpack.c.l.b16 %v85
  %v197 = vunpack.c.h.b16 %v85
  %v198 = vunpack.c.l.b16 %v86
  %v199 = vunpack.c.h.b16 %v86
  %v200 = vunpack.c.l.b16 %v87
  %v201 = vunpack.c.h.b16 %v87
  %v202 = vunpack.c.l.b16 %v88
  %v203 = vunpack.c.h.b16 %v88
  %v204 = vunpack.c.l.b16 %v89
  %v205 = vunpack.c.h.b16 %v89
  %v206 = vunpack.c.l.b16 %v90
  %v207 = vunpack.c.h.b16 %v90
  %v208 = vunpack.c.l.b16 %v91
  %v209 = vunpack.c.h.b16 %v91
  %v210 = vunpack.c.l.b16 %v92
  %v211 = vunpack.c.h.b16 %v92
  %v212 = vunpack.c.l.b16 %v93
  %v213 = vunpack.c.h.b16 %v93
  %v214 = vpack.c.b16 %v154, %v150
  %v215 = vpack.c.b16 %v155, %v151
  %v216 = vpack.c.b16 %v156, %v152
  %v217 = vpack.c.b16 %v157, %v153
  %v218 = vpack.c.b16 %v162, %v158
  %v219 = vpack.c.b16 %v163, %v159
  %v220 = vpack.c.b16 %v164, %v160
  %v221 = vpack.c.b16 %v165, %v161
  %v222 = vpack.c.b16 %v170, %v166
  %v223 = vpack.c.b16 %v171, %v167
  %v224 = vpack.c.b16 %v172, %v168
  %v225 = vpack.c.b16 %v173, %v169
  %v226 = vpack.c.b16 %v178, %v174
  %v227 = vpack.c.b16 %v179, %v175
  %v228 = vpack.c.b16 %v180, %v176
  %v229 = vpack.c.b16 %v181, %v177
  %v230 = vpack.c.b16 %v186, %v182
  %v231 = vpack.c.b16 %v187, %v183
  %v232 = vpack.c.b16 %v188, %v184
  %v233 = vpack.c.b16 %v189, %v185
  %v234 = vpack.c.b16 %v194, %v190
  %v235 = vpack.c.b16 %v195, %v191
  %v236 = vpack.c.b16 %v196, %v192
  %v237 = vpack.c.b16 %v197, %v193
  %v238 = vpack.c.b16 %v202, %v198
  %v239 = vpack.c.b16 %v203, %v199
  %v240 = vpack.c.b16 %v204, %v200
  %v241 = vpack.c.b16 %v205, %v201
  %v242 = vpack.c.b16 %v210, %v206
  %v243 = vpack.c.b16 %v211, %v207
  %v244 = vpack.c.b16 %v212, %v208
  %v245 = vpack.c.b16 %v213, %v209
  %278 = vmatprep.subr.bf16.mxu0 %v215
  %279 = vmatpush1.bf16.msra.mxu0 %v214
  %280 = vmatprep.subr.bf16.mxu0 %v219
  %281 = vmatpush1.bf16.msra.mxu0 %v218
  %282 = vmatprep.subr.bf16.mxu0 %v223
  %283 = vmatpush1.bf16.msra.mxu0 %v222
  %284 = vmatprep.subr.bf16.mxu0 %v227
  %285 = vmatpush1.bf16.msra.mxu0 %v226
  %286 = vmatprep.subr.bf16.mxu0 %v231
  %287 = vmatpush1.bf16.msra.mxu0 %v230
  %288 = vmatprep.subr.bf16.mxu0 %v235
  %289 = vmatpush1.bf16.msra.mxu0 %v234
  %290 = vmatprep.subr.bf16.mxu0 %v239
  %291 = vmatpush1.bf16.msra.mxu0 %v238
  %292 = vmatprep.subr.bf16.mxu0 %v243
  %293 = vmatpush1.bf16.msra.mxu0 %v242
  %294 = vmatprep.subr.bf16.mxu0 0
  %295 = vmatpush1.bf16.msra.mxu0 0
  %296 = vmatprep.subr.bf16.mxu0 0
  %297 = vmatpush1.bf16.msra.mxu0 0
  %298 = vmatprep.subr.bf16.mxu0 0
  %299 = vmatpush1.bf16.msra.mxu0 0
  %300 = vmatprep.subr.bf16.mxu0 0
  %301 = vmatpush1.bf16.msra.mxu0 0
  %302 = vmatprep.subr.bf16.mxu0 0
  %303 = vmatpush1.bf16.msra.mxu0 0
  %304 = vmatprep.subr.bf16.mxu0 0
  %305 = vmatpush1.bf16.msra.mxu0 0
  %306 = vmatprep.subr.bf16.mxu0 0
  %307 = vmatpush1.bf16.msra.mxu0 0
  %308 = vmatprep.subr.bf16.mxu0 0
  %309 = vmatpush1.bf16.msra.mxu0 0
  %310 = vmatprep.mubr.bf16.mxu0 0
  %311 = vmatmul.mubr.bf16.gmra.mrb[0].mxu0 %v110
  %v312 = vpop.f32.mrb[0].mxu0
  %v313 = vadd.f32 0.0, %v312
  %v314 = vpop.f32.mrb[0].mxu0
  %v315 = vadd.f32 0.0, %v314
  %v316 = vpop.f32.mrb[0].mxu0
  %v317 = vadd.f32 0.0, %v316
  %v318 = vpop.f32.mrb[0].mxu0
  %v319 = vadd.f32 0.0, %v318
  %320 = vmatprep.mubr.bf16.mxu0 0
  %321 = vmatmul.mubr.bf16.gmra.mrb[0].mxu0 %v111
  %v322 = vpop.f32.mrb[0].mxu0
  %v323 = vadd.f32 0.0, %v322
  %v324 = vpop.f32.mrb[0].mxu0
  %v325 = vadd.f32 0.0, %v324
  %v326 = vpop.f32.mrb[0].mxu0
  %v327 = vadd.f32 0.0, %v326
  %v328 = vpop.f32.mrb[0].mxu0
  %v329 = vadd.f32 0.0, %v328
  %330 = vmatprep.mubr.bf16.mxu0 0
  %331 = vmatmul.mubr.bf16.gmra.mrb[0].mxu0 %v112
  %v332 = vpop.f32.mrb[0].mxu0
  %v333 = vadd.f32 0.0, %v332
  %v334 = vpop.f32.mrb[0].mxu0
  %v335 = vadd.f32 0.0, %v334
  %v336 = vpop.f32.mrb[0].mxu0
  %v337 = vadd.f32 0.0, %v336
  %v338 = vpop.f32.mrb[0].mxu0
  %v339 = vadd.f32 0.0, %v338
  %340 = vmatprep.mubr.bf16.mxu0 0
  %341 = vmatmul.mubr.bf16.gmra.mrb[0].mxu0 %v113
  %v342 = vpop.f32.mrb[0].mxu0
  %v343 = vadd.f32 0.0, %v342
  %v344 = vpop.f32.mrb[0].mxu0
  %v345 = vadd.f32 0.0, %v344
  %v346 = vpop.f32.mrb[0].mxu0
  %v347 = vadd.f32 0.0, %v346
  %v348 = vpop.f32.mrb[0].mxu0
  %v349 = vadd.f32 0.0, %v348
  %350 = vdwg.mxu0
  %351 = vmatprep.subr.bf16.mxu0 %v217
  %352 = vmatpush1.bf16.msra.mxu0 %v216
  %353 = vmatprep.subr.bf16.mxu0 %v221
  %354 = vmatpush1.bf16.msra.mxu0 %v220
  %355 = vmatprep.subr.bf16.mxu0 %v225
  %356 = vmatpush1.bf16.msra.mxu0 %v224
  %357 = vmatprep.subr.bf16.mxu0 %v229
  %358 = vmatpush1.bf16.msra.mxu0 %v228
  %359 = vmatprep.subr.bf16.mxu0 %v233
  %360 = vmatpush1.bf16.msra.mxu0 %v232
  %361 = vmatprep.subr.bf16.mxu0 %v237
  %362 = vmatpush1.bf16.msra.mxu0 %v236
  %363 = vmatprep.subr.bf16.mxu0 %v241
  %364 = vmatpush1.bf16.msra.mxu0 %v240
  %365 = vmatprep.subr.bf16.mxu0 %v245
  %366 = vmatpush1.bf16.msra.mxu0 %v244
  %367 = vmatprep.subr.bf16.mxu0 0
  %368 = vmatpush1.bf16.msra.mxu0 0
  %369 = vmatprep.subr.bf16.mxu0 0
  %370 = vmatpush1.bf16.msra.mxu0 0
  %371 = vmatprep.subr.bf16.mxu0 0
  %372 = vmatpush1.bf16.msra.mxu0 0
  %373 = vmatprep.subr.bf16.mxu0 0
  %374 = vmatpush1.bf16.msra.mxu0 0
  %375 = vmatprep.subr.bf16.mxu0 0
  %376 = vmatpush1.bf16.msra.mxu0 0
  %377 = vmatprep.subr.bf16.mxu0 0
  %378 = vmatpush1.bf16.msra.mxu0 0
  %379 = vmatprep.subr.bf16.mxu0 0
  %380 = vmatpush1.bf16.msra.mxu0 0
  %381 = vmatprep.subr.bf16.mxu0 0
  %382 = vmatpush1.bf16.msra.mxu0 0
  %383 = vmatprep.mubr.bf16.mxu0 0
  %384 = vmatmul.mubr.bf16.gmra.mrb[0].mxu0 %v110
  %v385 = vpop.f32.mrb[0].mxu0
  %v386 = vadd.f32 0.0, %v385
  %v387 = vpop.f32.mrb[0].mxu0
  %v388 = vadd.f32 0.0, %v387
  %v389 = vpop.f32.mrb[0].mxu0
  %v390 = vadd.f32 0.0, %v389
  %v391 = vpop.f32.mrb[0].mxu0
  %v392 = vadd.f32 0.0, %v391
  %393 = vmatprep.mubr.bf16.mxu0 0
  %394 = vmatmul.mubr.bf16.gmra.mrb[0].mxu0 %v111
  %v395 = vpop.f32.mrb[0].mxu0
  %v396 = vadd.f32 0.0, %v395
  %v397 = vpop.f32.mrb[0].mxu0
  %v398 = vadd.f32 0.0, %v397
  %v399 = vpop.f32.mrb[0].mxu0
  %v400 = vadd.f32 0.0, %v399
  %v401 = vpop.f32.mrb[0].mxu0
  %v402 = vadd.f32 0.0, %v401
  %403 = vmatprep.mubr.bf16.mxu0 0
  %404 = vmatmul.mubr.bf16.gmra.mrb[0].mxu0 %v112
  %v405 = vpop.f32.mrb[0].mxu0
  %v406 = vadd.f32 0.0, %v405
  %v407 = vpop.f32.mrb[0].mxu0
  %v408 = vadd.f32 0.0, %v407
  %v409 = vpop.f32.mrb[0].mxu0
  %v410 = vadd.f32 0.0, %v409
  %v411 = vpop.f32.mrb[0].mxu0
  %v412 = vadd.f32 0.0, %v411
  %413 = vmatprep.mubr.bf16.mxu0 0
  %414 = vmatmul.mubr.bf16.gmra.mrb[0].mxu0 %v113
  %v415 = vpop.f32.mrb[0].mxu0
  %v416 = vadd.f32 0.0, %v415
  %v417 = vpop.f32.mrb[0].mxu0
  %v418 = vadd.f32 0.0, %v417
  %v419 = vpop.f32.mrb[0].mxu0
  %v420 = vadd.f32 0.0, %v419
  %v421 = vpop.f32.mrb[0].mxu0
  %v422 = vadd.f32 0.0, %v421
  %423 = vdwg.mxu0
  %424 = vst [vmem:[#allocation2] sm:$0xff] %v313
  %425 = vst [vmem:[#allocation2 + $0x8] sm:$0xff] %v315
  %426 = vst [vmem:[#allocation2 + $0x10] sm:$0xff] %v386
  %427 = vst [vmem:[#allocation2 + $0x18] sm:$0xff] %v388
  %428 = vst [vmem:[#allocation2 + $0x20] sm:$0xff] %v317
  %429 = vst [vmem:[#allocation2 + $0x28] sm:$0xff] %v319
  %430 = vst [vmem:[#allocation2 + $0x30] sm:$0xff] %v390
  %431 = vst [vmem:[#allocation2 + $0x38] sm:$0xff] %v392
  %432 = vst [vmem:[#allocation2 + $0x40] sm:$0xff] %v323
  %433 = vst [vmem:[#allocation2 + $0x48] sm:$0xff] %v325
  %434 = vst [vmem:[#allocation2 + $0x50] sm:$0xff] %v396
  %435 = vst [vmem:[#allocation2 + $0x58] sm:$0xff] %v398
  %436 = vst [vmem:[#allocation2 + $0x60] sm:$0xff] %v327
  %437 = vst [vmem:[#allocation2 + $0x68] sm:$0xff] %v329
  %438 = vst [vmem:[#allocation2 + $0x70] sm:$0xff] %v400
  %439 = vst [vmem:[#allocation2 + $0x78] sm:$0xff] %v402
  %440 = vst [vmem:[#allocation2 + $0x80] sm:$0xff] %v333
  %441 = vst [vmem:[#allocation2 + $0x88] sm:$0xff] %v335
  %442 = vst [vmem:[#allocation2 + $0x90] sm:$0xff] %v406
  %443 = vst [vmem:[#allocation2 + $0x98] sm:$0xff] %v408
  %444 = vst [vmem:[#allocation2 + $0xa0] sm:$0xff] %v337
  %445 = vst [vmem:[#allocation2 + $0xa8] sm:$0xff] %v339
  %446 = vst [vmem:[#allocation2 + $0xb0] sm:$0xff] %v410
  %447 = vst [vmem:[#allocation2 + $0xb8] sm:$0xff] %v412
  %448 = vst [vmem:[#allocation2 + $0xc0] sm:$0xff] %v343
  %449 = vst [vmem:[#allocation2 + $0xc8] sm:$0xff] %v345
  %450 = vst [vmem:[#allocation2 + $0xd0] sm:$0xff] %v416
  %451 = vst [vmem:[#allocation2 + $0xd8] sm:$0xff] %v418
  %452 = vst [vmem:[#allocation2 + $0xe0] sm:$0xff] %v347
  %453 = vst [vmem:[#allocation2 + $0xe8] sm:$0xff] %v349
  %454 = vst [vmem:[#allocation2 + $0xf0] sm:$0xff] %v420
  %455 = vst [vmem:[#allocation2 + $0xf8] sm:$0xff] %v422
  %v456 = vld [vmem:[#allocation2] sm:$0xff]
  %v457 = vld [vmem:[#allocation2 + $0x8] sm:$0xff]
  %v458 = vld [vmem:[#allocation2 + $0x10] sm:$0xff]
  %v459 = vld [vmem:[#allocation2 + $0x18] sm:$0xff]
  %v460 = vld [vmem:[%s2] sm:$0xff]
  %v461 = vld [vmem:[%s2 + $0x8] sm:$0xff]
  %v462 = vld [vmem:[%s2 + $0x10] sm:$0xff]
  %v463 = vld [vmem:[%s2 + $0x18] sm:$0xff]
  %v464 = vld [vmem:[%s2 + $0x20] sm:$0xff]
  %v465 = vld [vmem:[%s2 + $0x28] sm:$0xff]
  %v466 = vld [vmem:[%s2 + $0x30] sm:$0xff]
  %v467 = vld [vmem:[%s2 + $0x38] sm:$0xff]
  %v468 = vld [vmem:[%s2 + $0x40] sm:$0xff]
  %v469 = vld [vmem:[%s2 + $0x48] sm:$0xff]
  %v470 = vld [vmem:[%s2 + $0x50] sm:$0xff]
  %v471 = vld [vmem:[%s2 + $0x58] sm:$0xff]
  %v472 = vld [vmem:[%s2 + $0x60] sm:$0xff]
  %v473 = vld [vmem:[%s2 + $0x68] sm:$0xff]
  %v474 = vld [vmem:[%s2 + $0x70] sm:$0xff]
  %v475 = vld [vmem:[%s2 + $0x78] sm:$0xff]
  %v476 = vld [vmem:[%s2 + $0x80] sm:$0xff]
  %v477 = vld [vmem:[%s2 + $0x88] sm:$0xff]
  %v478 = vld [vmem:[%s2 + $0x90] sm:$0xff]
  %v479 = vld [vmem:[%s2 + $0x98] sm:$0xff]
  %v480 = vld [vmem:[%s2 + $0xa0] sm:$0xff]
  %v481 = vld [vmem:[%s2 + $0xa8] sm:$0xff]
  %v482 = vld [vmem:[%s2 + $0xb0] sm:$0xff]
  %v483 = vld [vmem:[%s2 + $0xb8] sm:$0xff]
  %v484 = vld [vmem:[%s2 + $0xc0] sm:$0xff]
  %v485 = vld [vmem:[%s2 + $0xc8] sm:$0xff]
  %v486 = vld [vmem:[%s2 + $0xd0] sm:$0xff]
  %v487 = vld [vmem:[%s2 + $0xd8] sm:$0xff]
  %v488 = vld [vmem:[%s2 + $0xe0] sm:$0xff]
  %v489 = vld [vmem:[%s2 + $0xe8] sm:$0xff]
  %v490 = vld [vmem:[%s2 + $0xf0] sm:$0xff]
  %v491 = vld [vmem:[%s2 + $0xf8] sm:$0xff]
  %v524 = vunpack.c.l.b16 %v460
  %v525 = vunpack.c.h.b16 %v460
  %v526 = vunpack.c.l.b16 %v461
  %v527 = vunpack.c.h.b16 %v461
  %v528 = vunpack.c.l.b16 %v462
  %v529 = vunpack.c.h.b16 %v462
  %v530 = vunpack.c.l.b16 %v463
  %v531 = vunpack.c.h.b16 %v463
  %v532 = vunpack.c.l.b16 %v464
  %v533 = vunpack.c.h.b16 %v464
  %v534 = vunpack.c.l.b16 %v465
  %v535 = vunpack.c.h.b16 %v465
  %v536 = vunpack.c.l.b16 %v466
  %v537 = vunpack.c.h.b16 %v466
  %v538 = vunpack.c.l.b16 %v467
  %v539 = vunpack.c.h.b16 %v467
  %v540 = vunpack.c.l.b16 %v468
  %v541 = vunpack.c.h.b16 %v468
  %v542 = vunpack.c.l.b16 %v469
  %v543 = vunpack.c.h.b16 %v469
  %v544 = vunpack.c.l.b16 %v470
  %v545 = vunpack.c.h.b16 %v470
  %v546 = vunpack.c.l.b16 %v471
  %v547 = vunpack.c.h.b16 %v471
  %v548 = vunpack.c.l.b16 %v472
  %v549 = vunpack.c.h.b16 %v472
  %v550 = vunpack.c.l.b16 %v473
  %v551 = vunpack.c.h.b16 %v473
  %v552 = vunpack.c.l.b16 %v474
  %v553 = vunpack.c.h.b16 %v474
  %v554 = vunpack.c.l.b16 %v475
  %v555 = vunpack.c.h.b16 %v475
  %v556 = vunpack.c.l.b16 %v476
  %v557 = vunpack.c.h.b16 %v476
  %v558 = vunpack.c.l.b16 %v477
  %v559 = vunpack.c.h.b16 %v477
  %v560 = vunpack.c.l.b16 %v478
  %v561 = vunpack.c.h.b16 %v478
  %v562 = vunpack.c.l.b16 %v479
  %v563 = vunpack.c.h.b16 %v479
  %v564 = vunpack.c.l.b16 %v480
  %v565 = vunpack.c.h.b16 %v480
  %v566 = vunpack.c.l.b16 %v481
  %v567 = vunpack.c.h.b16 %v481
  %v568 = vunpack.c.l.b16 %v482
  %v569 = vunpack.c.h.b16 %v482
  %v570 = vunpack.c.l.b16 %v483
  %v571 = vunpack.c.h.b16 %v483
  %v572 = vunpack.c.l.b16 %v484
  %v573 = vunpack.c.h.b16 %v484
  %v574 = vunpack.c.l.b16 %v485
  %v575 = vunpack.c.h.b16 %v485
  %v576 = vunpack.c.l.b16 %v486
  %v577 = vunpack.c.h.b16 %v486
  %v578 = vunpack.c.l.b16 %v487
  %v579 = vunpack.c.h.b16 %v487
  %v580 = vunpack.c.l.b16 %v488
  %v581 = vunpack.c.h.b16 %v488
  %v582 = vunpack.c.l.b16 %v489
  %v583 = vunpack.c.h.b16 %v489
  %v584 = vunpack.c.l.b16 %v490
  %v585 = vunpack.c.h.b16 %v490
  %v586 = vunpack.c.l.b16 %v491
  %v587 = vunpack.c.h.b16 %v491
  %v588 = vpack.c.b16 %v528, %v524
  %v589 = vpack.c.b16 %v529, %v525
  %v590 = vpack.c.b16 %v530, %v526
  %v591 = vpack.c.b16 %v531, %v527
  %v592 = vpack.c.b16 %v536, %v532
  %v593 = vpack.c.b16 %v537, %v533
  %v594 = vpack.c.b16 %v538, %v534
  %v595 = vpack.c.b16 %v539, %v535
  %v596 = vpack.c.b16 %v544, %v540
  %v597 = vpack.c.b16 %v545, %v541
  %v598 = vpack.c.b16 %v546, %v542
  %v599 = vpack.c.b16 %v547, %v543
  %v600 = vpack.c.b16 %v552, %v548
  %v601 = vpack.c.b16 %v553, %v549
  %v602 = vpack.c.b16 %v554, %v550
  %v603 = vpack.c.b16 %v555, %v551
  %v604 = vpack.c.b16 %v560, %v556
  %v605 = vpack.c.b16 %v561, %v557
  %v606 = vpack.c.b16 %v562, %v558
  %v607 = vpack.c.b16 %v563, %v559
  %v608 = vpack.c.b16 %v568, %v564
  %v609 = vpack.c.b16 %v569, %v565
  %v610 = vpack.c.b16 %v570, %v566
  %v611 = vpack.c.b16 %v571, %v567
  %v612 = vpack.c.b16 %v576, %v572
  %v613 = vpack.c.b16 %v577, %v573
  %v614 = vpack.c.b16 %v578, %v574
  %v615 = vpack.c.b16 %v579, %v575
  %v616 = vpack.c.b16 %v584, %v580
  %v617 = vpack.c.b16 %v585, %v581
  %v618 = vpack.c.b16 %v586, %v582
  %v619 = vpack.c.b16 %v587, %v583
  %652 = vmatprep.subr.bf16.mxu0 %v589
  %653 = vmatpush1.bf16.msra.mxu0 %v588
  %654 = vmatprep.subr.bf16.mxu0 %v593
  %655 = vmatpush1.bf16.msra.mxu0 %v592
  %656 = vmatprep.subr.bf16.mxu0 %v597
  %657 = vmatpush1.bf16.msra.mxu0 %v596
  %658 = vmatprep.subr.bf16.mxu0 %v601
  %659 = vmatpush1.bf16.msra.mxu0 %v600
  %660 = vmatprep.subr.bf16.mxu0 %v605
  %661 = vmatpush1.bf16.msra.mxu0 %v604
  %662 = vmatprep.subr.bf16.mxu0 %v609
  %663 = vmatpush1.bf16.msra.mxu0 %v608
  %664 = vmatprep.subr.bf16.mxu0 %v613
  %665 = vmatpush1.bf16.msra.mxu0 %v612
  %666 = vmatprep.subr.bf16.mxu0 %v617
  %667 = vmatpush1.bf16.msra.mxu0 %v616
  %668 = vmatprep.subr.bf16.mxu0 0
  %669 = vmatpush1.bf16.msra.mxu0 0
  %670 = vmatprep.subr.bf16.mxu0 0
  %671 = vmatpush1.bf16.msra.mxu0 0
  %672 = vmatprep.subr.bf16.mxu0 0
  %673 = vmatpush1.bf16.msra.mxu0 0
  %674 = vmatprep.subr.bf16.mxu0 0
  %675 = vmatpush1.bf16.msra.mxu0 0
  %676 = vmatprep.subr.bf16.mxu0 0
  %677 = vmatpush1.bf16.msra.mxu0 0
  %678 = vmatprep.subr.bf16.mxu0 0
  %679 = vmatpush1.bf16.msra.mxu0 0
  %680 = vmatprep.subr.bf16.mxu0 0
  %681 = vmatpush1.bf16.msra.mxu0 0
  %682 = vmatprep.subr.bf16.mxu0 0
  %683 = vmatpush1.bf16.msra.mxu0 0
  %684 = vmatprep.mubr.bf16.mxu0 0
  %685 = vmatmul.mubr.bf16.gmra.mrb[0].mxu0 0
  %v686 = vpop.f32.mrb[0].mxu0
  %v687 = vadd.f32 0.0, %v686
  %v688 = vpop.f32.mrb[0].mxu0
  %v689 = vadd.f32 0.0, %v688
  %v690 = vpop.f32.mrb[0].mxu0
  %v691 = vpop.f32.mrb[0].mxu0
  %692 = vdwg.mxu0
  %693 = vmatprep.subr.bf16.mxu0 %v591
  %694 = vmatpush1.bf16.msra.mxu0 %v590
  %695 = vmatprep.subr.bf16.mxu0 %v595
  %696 = vmatpush1.bf16.msra.mxu0 %v594
  %697 = vmatprep.subr.bf16.mxu0 %v599
  %698 = vmatpush1.bf16.msra.mxu0 %v598
  %699 = vmatprep.subr.bf16.mxu0 %v603
  %700 = vmatpush1.bf16.msra.mxu0 %v602
  %701 = vmatprep.subr.bf16.mxu0 %v607
  %702 = vmatpush1.bf16.msra.mxu0 %v606
  %703 = vmatprep.subr.bf16.mxu0 %v611
  %704 = vmatpush1.bf16.msra.mxu0 %v610
  %705 = vmatprep.subr.bf16.mxu0 %v615
  %706 = vmatpush1.bf16.msra.mxu0 %v614
  %707 = vmatprep.subr.bf16.mxu0 %v619
  %708 = vmatpush1.bf16.msra.mxu0 %v618
  %709 = vmatprep.subr.bf16.mxu0 0
  %710 = vmatpush1.bf16.msra.mxu0 0
  %711 = vmatprep.subr.bf16.mxu0 0
  %712 = vmatpush1.bf16.msra.mxu0 0
  %713 = vmatprep.subr.bf16.mxu0 0
  %714 = vmatpush1.bf16.msra.mxu0 0
  %715 = vmatprep.subr.bf16.mxu0 0
  %716 = vmatpush1.bf16.msra.mxu0 0
  %717 = vmatprep.subr.bf16.mxu0 0
  %718 = vmatpush1.bf16.msra.mxu0 0
  %719 = vmatprep.subr.bf16.mxu0 0
  %720 = vmatpush1.bf16.msra.mxu0 0
  %721 = vmatprep.subr.bf16.mxu0 0
  %722 = vmatpush1.bf16.msra.mxu0 0
  %723 = vmatprep.subr.bf16.mxu0 0
  %724 = vmatpush1.bf16.msra.mxu0 0
  %725 = vmatprep.mubr.bf16.mxu0 0
  %726 = vmatmul.mubr.bf16.gmra.mrb[0].mxu0 0
  %v727 = vpop.f32.mrb[0].mxu0
  %v728 = vadd.f32 0.0, %v727
  %v729 = vpop.f32.mrb[0].mxu0
  %v730 = vadd.f32 0.0, %v729
  %v731 = vpop.f32.mrb[0].mxu0
  %v732 = vpop.f32.mrb[0].mxu0
  %733 = vdwg.mxu0
  %v734 = vadd.f32 %v456, %v687
  %v735 = vadd.f32 %v457, %v689
  %v736 = vadd.f32 %v458, %v728
  %v737 = vadd.f32 %v459, %v730
  %v738 = vadd.f32 %v734, %v42
  %v739 = vadd.f32 %v735, %v43
  %v740 = vadd.f32 %v736, %v44
  %v741 = vadd.f32 %v737, %v45
  %v742 = vxor.u32 %v738, 2147483648
  %v743 = vmul.f32 %v742, 1.442695
  %v744 = vpow.pop %v743
  %v745 = vadd.f32 %v744, 1.0
  %v746 = vrcp.pop %v745
  %v747 = vmul.f32 1.0, %v746
  %v748 = vxor.u32 %v739, 2147483648
  %v749 = vmul.f32 %v748, 1.442695
  %v750 = vpow.pop %v749
  %v751 = vadd.f32 %v750, 1.0
  %v752 = vrcp.pop %v751
  %v753 = vmul.f32 1.0, %v752
  %v754 = vtanh.pop %v740
  %v755 = vxor.u32 %v741, 2147483648
  %v756 = vmul.f32 %v755, 1.442695
  %v757 = vpow.pop %v756
  %v758 = vadd.f32 %v757, 1.0
  %v759 = vrcp.pop %v758
  %v760 = vmul.f32 1.0, %v759
  %v761 = vmul.f32 %v753, 0.0
  %v762 = vmul.f32 %v747, %v754
  %v763 = vadd.f32 %v761, %v762
  %v764 = vtanh.pop %v763
  %v765 = vmul.f32 %v760, %v764
  %v766 = vpack.c.bf16 %v765, %v765
  %v767 = vld [vmem:[%s3] sm:$0xff]
  %v768 = vld [vmem:[%s3 + $0x8] sm:$0xff]
  %v769 = vld [vmem:[%s3 + $0x10] sm:$0xff]
  %v770 = vld [vmem:[%s3 + $0x18] sm:$0xff]
  %v771 = vld [vmem:[%s3 + $0x20] sm:$0xff]
  %v772 = vld [vmem:[%s3 + $0x28] sm:$0xff]
  %v773 = vld [vmem:[%s3 + $0x30] sm:$0xff]
  %v774 = vld [vmem:[%s3 + $0x38] sm:$0xff]
  %v775 = vld [vmem:[%s3 + $0x40] sm:$0xff]
  %v776 = vld [vmem:[%s3 + $0x48] sm:$0xff]
  %v777 = vld [vmem:[%s3 + $0x50] sm:$0xff]
  %v778 = vld [vmem:[%s3 + $0x58] sm:$0xff]
  %v779 = vld [vmem:[%s3 + $0x60] sm:$0xff]
  %v780 = vld [vmem:[%s3 + $0x68] sm:$0xff]
  %v781 = vld [vmem:[%s3 + $0x70] sm:$0xff]
  %v782 = vld [vmem:[%s3 + $0x78] sm:$0xff]
  %v783 = vld [vmem:[%s3 + $0x80] sm:$0xff]
  %v784 = vld [vmem:[%s3 + $0x88] sm:$0xff]
  %v785 = vld [vmem:[%s3 + $0x90] sm:$0xff]
  %v786 = vld [vmem:[%s3 + $0x98] sm:$0xff]
  %v787 = vld [vmem:[%s3 + $0xa0] sm:$0xff]
  %v788 = vld [vmem:[%s3 + $0xa8] sm:$0xff]
  %v789 = vld [vmem:[%s3 + $0xb0] sm:$0xff]
  %v790 = vld [vmem:[%s3 + $0xb8] sm:$0xff]
  %v791 = vld [vmem:[%s3 + $0xc0] sm:$0xff]
  %v792 = vld [vmem:[%s3 + $0xc8] sm:$0xff]
  %v793 = vld [vmem:[%s3 + $0xd0] sm:$0xff]
  %v794 = vld [vmem:[%s3 + $0xd8] sm:$0xff]
  %v795 = vld [vmem:[%s3 + $0xe0] sm:$0xff]
  %v796 = vld [vmem:[%s3 + $0xe8] sm:$0xff]
  %v797 = vld [vmem:[%s3 + $0xf0] sm:$0xff]
  %v798 = vld [vmem:[%s3 + $0xf8] sm:$0xff]
  %v799 = vld [vmem:[%s4] sm:$0xff]
  %v800 = vld [vmem:[%s4 + $0x8] sm:$0xff]
  %v801 = vld [vmem:[%s4 + $0x10] sm:$0xff]
  %v802 = vld [vmem:[%s4 + $0x18] sm:$0xff]
  %v803 = vld [vmem:[%s4 + $0x20] sm:$0xff]
  %v804 = vld [vmem:[%s4 + $0x28] sm:$0xff]
  %v805 = vld [vmem:[%s4 + $0x30] sm:$0xff]
  %v806 = vld [vmem:[%s4 + $0x38] sm:$0xff]
  %v807 = vld [vmem:[%s4 + $0x40] sm:$0xff]
  %v808 = vld [vmem:[%s4 + $0x48] sm:$0xff]
  %v809 = vld [vmem:[%s4 + $0x50] sm:$0xff]
  %v810 = vld [vmem:[%s4 + $0x58] sm:$0xff]
  %v811 = vld [vmem:[%s4 + $0x60] sm:$0xff]
  %v812 = vld [vmem:[%s4 + $0x68] sm:$0xff]
  %v813 = vld [vmem:[%s4 + $0x70] sm:$0xff]
  %v814 = vld [vmem:[%s4 + $0x78] sm:$0xff]
  %v815 = vld [vmem:[%s4 + $0x80] sm:$0xff]
  %v816 = vld [vmem:[%s4 + $0x88] sm:$0xff]
  %v817 = vld [vmem:[%s4 + $0x90] sm:$0xff]
  %v818 = vld [vmem:[%s4 + $0x98] sm:$0xff]
  %v819 = vld [vmem:[%s4 + $0xa0] sm:$0xff]
  %v820 = vld [vmem:[%s4 + $0xa8] sm:$0xff]
  %v821 = vld [vmem:[%s4 + $0xb0] sm:$0xff]
  %v822 = vld [vmem:[%s4 + $0xb8] sm:$0xff]
  %v823 = vld [vmem:[%s4 + $0xc0] sm:$0xff]
  %v824 = vld [vmem:[%s4 + $0xc8] sm:$0xff]
  %v825 = vld [vmem:[%s4 + $0xd0] sm:$0xff]
  %v826 = vld [vmem:[%s4 + $0xd8] sm:$0xff]
  %v827 = vld [vmem:[%s4 + $0xe0] sm:$0xff]
  %v828 = vld [vmem:[%s4 + $0xe8] sm:$0xff]
  %v829 = vld [vmem:[%s4 + $0xf0] sm:$0xff]
  %v830 = vld [vmem:[%s4 + $0xf8] sm:$0xff]
  %v863 = vunpack.c.l.b16 %v799
  %v864 = vunpack.c.h.b16 %v799
  %v865 = vunpack.c.l.b16 %v800
  %v866 = vunpack.c.h.b16 %v800
  %v867 = vunpack.c.l.b16 %v801
  %v868 = vunpack.c.h.b16 %v801
  %v869 = vunpack.c.l.b16 %v802
  %v870 = vunpack.c.h.b16 %v802
  %v871 = vunpack.c.l.b16 %v803
  %v872 = vunpack.c.h.b16 %v803
  %v873 = vunpack.c.l.b16 %v804
  %v874 = vunpack.c.h.b16 %v804
  %v875 = vunpack.c.l.b16 %v805
  %v876 = vunpack.c.h.b16 %v805
  %v877 = vunpack.c.l.b16 %v806
  %v878 = vunpack.c.h.b16 %v806
  %v879 = vunpack.c.l.b16 %v807
  %v880 = vunpack.c.h.b16 %v807
  %v881 = vunpack.c.l.b16 %v808
  %v882 = vunpack.c.h.b16 %v808
  %v883 = vunpack.c.l.b16 %v809
  %v884 = vunpack.c.h.b16 %v809
  %v885 = vunpack.c.l.b16 %v810
  %v886 = vunpack.c.h.b16 %v810
  %v887 = vunpack.c.l.b16 %v811
  %v888 = vunpack.c.h.b16 %v811
  %v889 = vunpack.c.l.b16 %v812
  %v890 = vunpack.c.h.b16 %v812
  %v891 = vunpack.c.l.b16 %v813
  %v892 = vunpack.c.h.b16 %v813
  %v893 = vunpack.c.l.b16 %v814
  %v894 = vunpack.c.h.b16 %v814
  %v895 = vunpack.c.l.b16 %v815
  %v896 = vunpack.c.h.b16 %v815
  %v897 = vunpack.c.l.b16 %v816
  %v898 = vunpack.c.h.b16 %v816
  %v899 = vunpack.c.l.b16 %v817
  %v900 = vunpack.c.h.b16 %v817
  %v901 = vunpack.c.l.b16 %v818
  %v902 = vunpack.c.h.b16 %v818
  %v903 = vunpack.c.l.b16 %v819
  %v904 = vunpack.c.h.b16 %v819
  %v905 = vunpack.c.l.b16 %v820
  %v906 = vunpack.c.h.b16 %v820
  %v907 = vunpack.c.l.b16 %v821
  %v908 = vunpack.c.h.b16 %v821
  %v909 = vunpack.c.l.b16 %v822
  %v910 = vunpack.c.h.b16 %v822
  %v911 = vunpack.c.l.b16 %v823
  %v912 = vunpack.c.h.b16 %v823
  %v913 = vunpack.c.l.b16 %v824
  %v914 = vunpack.c.h.b16 %v824
  %v915 = vunpack.c.l.b16 %v825
  %v916 = vunpack.c.h.b16 %v825
  %v917 = vunpack.c.l.b16 %v826
  %v918 = vunpack.c.h.b16 %v826
  %v919 = vunpack.c.l.b16 %v827
  %v920 = vunpack.c.h.b16 %v827
  %v921 = vunpack.c.l.b16 %v828
  %v922 = vunpack.c.h.b16 %v828
  %v923 = vunpack.c.l.b16 %v829
  %v924 = vunpack.c.h.b16 %v829
  %v925 = vunpack.c.l.b16 %v830
  %v926 = vunpack.c.h.b16 %v830
  %v927 = vpack.c.b16 %v867, %v863
  %v928 = vpack.c.b16 %v868, %v864
  %v929 = vpack.c.b16 %v869, %v865
  %v930 = vpack.c.b16 %v870, %v866
  %v931 = vpack.c.b16 %v875, %v871
  %v932 = vpack.c.b16 %v876, %v872
  %v933 = vpack.c.b16 %v877, %v873
  %v934 = vpack.c.b16 %v878, %v874
  %v935 = vpack.c.b16 %v883, %v879
  %v936 = vpack.c.b16 %v884, %v880
  %v937 = vpack.c.b16 %v885, %v881
  %v938 = vpack.c.b16 %v886, %v882
  %v939 = vpack.c.b16 %v891, %v887
  %v940 = vpack.c.b16 %v892, %v888
  %v941 = vpack.c.b16 %v893, %v889
  %v942 = vpack.c.b16 %v894, %v890
  %v943 = vpack.c.b16 %v899, %v895
  %v944 = vpack.c.b16 %v900, %v896
  %v945 = vpack.c.b16 %v901, %v897
  %v946 = vpack.c.b16 %v902, %v898
  %v947 = vpack.c.b16 %v907, %v903
  %v948 = vpack.c.b16 %v908, %v904
  %v949 = vpack.c.b16 %v909, %v905
  %v950 = vpack.c.b16 %v910, %v906
  %v951 = vpack.c.b16 %v915, %v911
  %v952 = vpack.c.b16 %v916, %v912
  %v953 = vpack.c.b16 %v917, %v913
  %v954 = vpack.c.b16 %v918, %v914
  %v955 = vpack.c.b16 %v923, %v919
  %v956 = vpack.c.b16 %v924, %v920
  %v957 = vpack.c.b16 %v925, %v921
  %v958 = vpack.c.b16 %v926, %v922
  %991 = vmatprep.subr.bf16.mxu0 %v928
  %992 = vmatpush1.bf16.msra.mxu0 %v927
  %993 = vmatprep.subr.bf16.mxu0 %v932
  %994 = vmatpush1.bf16.msra.mxu0 %v931
  %995 = vmatprep.subr.bf16.mxu0 %v936
  %996 = vmatpush1.bf16.msra.mxu0 %v935
  %997 = vmatprep.subr.bf16.mxu0 %v940
  %998 = vmatpush1.bf16.msra.mxu0 %v939
  %999 = vmatprep.subr.bf16.mxu0 %v944
  %1000 = vmatpush1.bf16.msra.mxu0 %v943
  %1001 = vmatprep.subr.bf16.mxu0 %v948
  %1002 = vmatpush1.bf16.msra.mxu0 %v947
  %1003 = vmatprep.subr.bf16.mxu0 %v952
  %1004 = vmatpush1.bf16.msra.mxu0 %v951
  %1005 = vmatprep.subr.bf16.mxu0 %v956
  %1006 = vmatpush1.bf16.msra.mxu0 %v955
  %1007 = vmatprep.subr.bf16.mxu0 0
  %1008 = vmatpush1.bf16.msra.mxu0 0
  %1009 = vmatprep.subr.bf16.mxu0 0
  %1010 = vmatpush1.bf16.msra.mxu0 0
  %1011 = vmatprep.subr.bf16.mxu0 0
  %1012 = vmatpush1.bf16.msra.mxu0 0
  %1013 = vmatprep.subr.bf16.mxu0 0
  %1014 = vmatpush1.bf16.msra.mxu0 0
  %1015 = vmatprep.subr.bf16.mxu0 0
  %1016 = vmatpush1.bf16.msra.mxu0 0
  %1017 = vmatprep.subr.bf16.mxu0 0
  %1018 = vmatpush1.bf16.msra.mxu0 0
  %1019 = vmatprep.subr.bf16.mxu0 0
  %1020 = vmatpush1.bf16.msra.mxu0 0
  %1021 = vmatprep.subr.bf16.mxu0 0
  %1022 = vmatpush1.bf16.msra.mxu0 0
  %1023 = vmatprep.mubr.bf16.mxu0 0
  %1024 = vmatmul.mubr.bf16.gmra.mrb[0].mxu0 0
  %v1025 = vpop.f32.mrb[0].mxu0
  %v1026 = vadd.f32 0.0, %v1025
  %v1027 = vpop.f32.mrb[0].mxu0
  %v1028 = vadd.f32 0.0, %v1027
  %v1029 = vpop.f32.mrb[0].mxu0
  %v1030 = vpop.f32.mrb[0].mxu0
  %1031 = vdwg.mxu0
  %1032 = vmatprep.subr.bf16.mxu0 %v930
  %1033 = vmatpush1.bf16.msra.mxu0 %v929
  %1034 = vmatprep.subr.bf16.mxu0 %v934
  %1035 = vmatpush1.bf16.msra.mxu0 %v933
  %1036 = vmatprep.subr.bf16.mxu0 %v938
  %1037 = vmatpush1.bf16.msra.mxu0 %v937
  %1038 = vmatprep.subr.bf16.mxu0 %v942
  %1039 = vmatpush1.bf16.msra.mxu0 %v941
  %1040 = vmatprep.subr.bf16.mxu0 %v946
  %1041 = vmatpush1.bf16.msra.mxu0 %v945
  %1042 = vmatprep.subr.bf16.mxu0 %v950
  %1043 = vmatpush1.bf16.msra.mxu0 %v949
  %1044 = vmatprep.subr.bf16.mxu0 %v954
  %1045 = vmatpush1.bf16.msra.mxu0 %v953
  %1046 = vmatprep.subr.bf16.mxu0 %v958
  %1047 = vmatpush1.bf16.msra.mxu0 %v957
  %1048 = vmatprep.subr.bf16.mxu0 0
  %1049 = vmatpush1.bf16.msra.mxu0 0
  %1050 = vmatprep.subr.bf16.mxu0 0
  %1051 = vmatpush1.bf16.msra.mxu0 0
  %1052 = vmatprep.subr.bf16.mxu0 0
  %1053 = vmatpush1.bf16.msra.mxu0 0
  %1054 = vmatprep.subr.bf16.mxu0 0
  %1055 = vmatpush1.bf16.msra.mxu0 0
  %1056 = vmatprep.subr.bf16.mxu0 0
  %1057 = vmatpush1.bf16.msra.mxu0 0
  %1058 = vmatprep.subr.bf16.mxu0 0
  %1059 = vmatpush1.bf16.msra.mxu0 0
  %1060 = vmatprep.subr.bf16.mxu0 0
  %1061 = vmatpush1.bf16.msra.mxu0 0
  %1062 = vmatprep.subr.bf16.mxu0 0
  %1063 = vmatpush1.bf16.msra.mxu0 0
  %1064 = vmatprep.mubr.bf16.mxu0 0
  %1065 = vmatmul.mubr.bf16.gmra.mrb[0].mxu0 0
  %v1066 = vpop.f32.mrb[0].mxu0
  %v1067 = vadd.f32 0.0, %v1066
  %v1068 = vpop.f32.mrb[0].mxu0
  %v1069 = vadd.f32 0.0, %v1068
  %v1070 = vpop.f32.mrb[0].mxu0
  %v1071 = vpop.f32.mrb[0].mxu0
  %1072 = vdwg.mxu0
  %v1105 = vunpack.c.l.b16 %v767
  %v1106 = vunpack.c.h.b16 %v767
  %v1107 = vunpack.c.l.b16 %v768
  %v1108 = vunpack.c.h.b16 %v768
  %v1109 = vunpack.c.l.b16 %v769
  %v1110 = vunpack.c.h.b16 %v769
  %v1111 = vunpack.c.l.b16 %v770
  %v1112 = vunpack.c.h.b16 %v770
  %v1113 = vunpack.c.l.b16 %v771
  %v1114 = vunpack.c.h.b16 %v771
  %v1115 = vunpack.c.l.b16 %v772
  %v1116 = vunpack.c.h.b16 %v772
  %v1117 = vunpack.c.l.b16 %v773
  %v1118 = vunpack.c.h.b16 %v773
  %v1119 = vunpack.c.l.b16 %v774
  %v1120 = vunpack.c.h.b16 %v774
  %v1121 = vunpack.c.l.b16 %v775
  %v1122 = vunpack.c.h.b16 %v775
  %v1123 = vunpack.c.l.b16 %v776
  %v1124 = vunpack.c.h.b16 %v776
  %v1125 = vunpack.c.l.b16 %v777
  %v1126 = vunpack.c.h.b16 %v777
  %v1127 = vunpack.c.l.b16 %v778
  %v1128 = vunpack.c.h.b16 %v778
  %v1129 = vunpack.c.l.b16 %v779
  %v1130 = vunpack.c.h.b16 %v779
  %v1131 = vunpack.c.l.b16 %v780
  %v1132 = vunpack.c.h.b16 %v780
  %v1133 = vunpack.c.l.b16 %v781
  %v1134 = vunpack.c.h.b16 %v781
  %v1135 = vunpack.c.l.b16 %v782
  %v1136 = vunpack.c.h.b16 %v782
  %v1137 = vunpack.c.l.b16 %v783
  %v1138 = vunpack.c.h.b16 %v783
  %v1139 = vunpack.c.l.b16 %v784
  %v1140 = vunpack.c.h.b16 %v784
  %v1141 = vunpack.c.l.b16 %v785
  %v1142 = vunpack.c.h.b16 %v785
  %v1143 = vunpack.c.l.b16 %v786
  %v1144 = vunpack.c.h.b16 %v786
  %v1145 = vunpack.c.l.b16 %v787
  %v1146 = vunpack.c.h.b16 %v787
  %v1147 = vunpack.c.l.b16 %v788
  %v1148 = vunpack.c.h.b16 %v788
  %v1149 = vunpack.c.l.b16 %v789
  %v1150 = vunpack.c.h.b16 %v789
  %v1151 = vunpack.c.l.b16 %v790
  %v1152 = vunpack.c.h.b16 %v790
  %v1153 = vunpack.c.l.b16 %v791
  %v1154 = vunpack.c.h.b16 %v791
  %v1155 = vunpack.c.l.b16 %v792
  %v1156 = vunpack.c.h.b16 %v792
  %v1157 = vunpack.c.l.b16 %v793
  %v1158 = vunpack.c.h.b16 %v793
  %v1159 = vunpack.c.l.b16 %v794
  %v1160 = vunpack.c.h.b16 %v794
  %v1161 = vunpack.c.l.b16 %v795
  %v1162 = vunpack.c.h.b16 %v795
  %v1163 = vunpack.c.l.b16 %v796
  %v1164 = vunpack.c.h.b16 %v796
  %v1165 = vunpack.c.l.b16 %v797
  %v1166 = vunpack.c.h.b16 %v797
  %v1167 = vunpack.c.l.b16 %v798
  %v1168 = vunpack.c.h.b16 %v798
  %v1169 = vpack.c.b16 %v1109, %v1105
  %v1170 = vpack.c.b16 %v1110, %v1106
  %v1171 = vpack.c.b16 %v1111, %v1107
  %v1172 = vpack.c.b16 %v1112, %v1108
  %v1173 = vpack.c.b16 %v1117, %v1113
  %v1174 = vpack.c.b16 %v1118, %v1114
  %v1175 = vpack.c.b16 %v1119, %v1115
  %v1176 = vpack.c.b16 %v1120, %v1116
  %v1177 = vpack.c.b16 %v1125, %v1121
  %v1178 = vpack.c.b16 %v1126, %v1122
  %v1179 = vpack.c.b16 %v1127, %v1123
  %v1180 = vpack.c.b16 %v1128, %v1124
  %v1181 = vpack.c.b16 %v1133, %v1129
  %v1182 = vpack.c.b16 %v1134, %v1130
  %v1183 = vpack.c.b16 %v1135, %v1131
  %v1184 = vpack.c.b16 %v1136, %v1132
  %v1185 = vpack.c.b16 %v1141, %v1137
  %v1186 = vpack.c.b16 %v1142, %v1138
  %v1187 = vpack.c.b16 %v1143, %v1139
  %v1188 = vpack.c.b16 %v1144, %v1140
  %v1189 = vpack.c.b16 %v1149, %v1145
  %v1190 = vpack.c.b16 %v1150, %v1146
  %v1191 = vpack.c.b16 %v1151, %v1147
  %v1192 = vpack.c.b16 %v1152, %v1148
  %v1193 = vpack.c.b16 %v1157, %v1153
  %v1194 = vpack.c.b16 %v1158, %v1154
  %v1195 = vpack.c.b16 %v1159, %v1155
  %v1196 = vpack.c.b16 %v1160, %v1156
  %v1197 = vpack.c.b16 %v1165, %v1161
  %v1198 = vpack.c.b16 %v1166, %v1162
  %v1199 = vpack.c.b16 %v1167, %v1163
  %v1200 = vpack.c.b16 %v1168, %v1164
  %1233 = vmatprep.subr.bf16.mxu0 %v1170
  %1234 = vmatpush1.bf16.msra.mxu0 %v1169
  %1235 = vmatprep.subr.bf16.mxu0 %v1174
  %1236 = vmatpush1.bf16.msra.mxu0 %v1173
  %1237 = vmatprep.subr.bf16.mxu0 %v1178
  %1238 = vmatpush1.bf16.msra.mxu0 %v1177
  %1239 = vmatprep.subr.bf16.mxu0 %v1182
  %1240 = vmatpush1.bf16.msra.mxu0 %v1181
  %1241 = vmatprep.subr.bf16.mxu0 %v1186
  %1242 = vmatpush1.bf16.msra.mxu0 %v1185
  %1243 = vmatprep.subr.bf16.mxu0 %v1190
  %1244 = vmatpush1.bf16.msra.mxu0 %v1189
  %1245 = vmatprep.subr.bf16.mxu0 %v1194
  %1246 = vmatpush1.bf16.msra.mxu0 %v1193
  %1247 = vmatprep.subr.bf16.mxu0 %v1198
  %1248 = vmatpush1.bf16.msra.mxu0 %v1197
  %1249 = vmatprep.subr.bf16.mxu0 0
  %1250 = vmatpush1.bf16.msra.mxu0 0
  %1251 = vmatprep.subr.bf16.mxu0 0
  %1252 = vmatpush1.bf16.msra.mxu0 0
  %1253 = vmatprep.subr.bf16.mxu0 0
  %1254 = vmatpush1.bf16.msra.mxu0 0
  %1255 = vmatprep.subr.bf16.mxu0 0
  %1256 = vmatpush1.bf16.msra.mxu0 0
  %1257 = vmatprep.subr.bf16.mxu0 0
  %1258 = vmatpush1.bf16.msra.mxu0 0
  %1259 = vmatprep.subr.bf16.mxu0 0
  %1260 = vmatpush1.bf16.msra.mxu0 0
  %1261 = vmatprep.subr.bf16.mxu0 0
  %1262 = vmatpush1.bf16.msra.mxu0 0
  %1263 = vmatprep.subr.bf16.mxu0 0
  %1264 = vmatpush1.bf16.msra.mxu0 0
  %1265 = vmatprep.mubr.bf16.mxu0 0
  %1266 = vmatmul.mubr.bf16.gmra.mrb[0].mxu0 %v766
  %v1267 = vpop.f32.mrb[0].mxu0
  %v1268 = vadd.f32 %v1026, %v1267
  %v1269 = vpop.f32.mrb[0].mxu0
  %v1270 = vadd.f32 %v1028, %v1269
  %v1271 = vpop.f32.mrb[0].mxu0
  %v1272 = vpop.f32.mrb[0].mxu0
  %1273 = vdwg.mxu0
  %1274 = vmatprep.subr.bf16.mxu0 %v1172
  %1275 = vmatpush1.bf16.msra.mxu0 %v1171
  %1276 = vmatprep.subr.bf16.mxu0 %v1176
  %1277 = vmatpush1.bf16.msra.mxu0 %v1175
  %1278 = vmatprep.subr.bf16.mxu0 %v1180
  %1279 = vmatpush1.bf16.msra.mxu0 %v1179
  %1280 = vmatprep.subr.bf16.mxu0 %v1184
  %1281 = vmatpush1.bf16.msra.mxu0 %v1183
  %1282 = vmatprep.subr.bf16.mxu0 %v1188
  %1283 = vmatpush1.bf16.msra.mxu0 %v1187
  %1284 = vmatprep.subr.bf16.mxu0 %v1192
  %1285 = vmatpush1.bf16.msra.mxu0 %v1191
  %1286 = vmatprep.subr.bf16.mxu0 %v1196
  %1287 = vmatpush1.bf16.msra.mxu0 %v1195
  %1288 = vmatprep.subr.bf16.mxu0 %v1200
  %1289 = vmatpush1.bf16.msra.mxu0 %v1199
  %1290 = vmatprep.subr.bf16.mxu0 0
  %1291 = vmatpush1.bf16.msra.mxu0 0
  %1292 = vmatprep.subr.bf16.mxu0 0
  %1293 = vmatpush1.bf16.msra.mxu0 0
  %1294 = vmatprep.subr.bf16.mxu0 0
  %1295 = vmatpush1.bf16.msra.mxu0 0
  %1296 = vmatprep.subr.bf16.mxu0 0
  %1297 = vmatpush1.bf16.msra.mxu0 0
  %1298 = vmatprep.subr.bf16.mxu0 0
  %1299 = vmatpush1.bf16.msra.mxu0 0
  %1300 = vmatprep.subr.bf16.mxu0 0
  %1301 = vmatpush1.bf16.msra.mxu0 0
  %1302 = vmatprep.subr.bf16.mxu0 0
  %1303 = vmatpush1.bf16.msra.mxu0 0
  %1304 = vmatprep.subr.bf16.mxu0 0
  %1305 = vmatpush1.bf16.msra.mxu0 0
  %1306 = vmatprep.mubr.bf16.mxu0 0
  %1307 = vmatmul.mubr.bf16.gmra.mrb[0].mxu0 %v766
  %v1308 = vpop.f32.mrb[0].mxu0
  %v1309 = vadd.f32 %v1067, %v1308
  %v1310 = vpop.f32.mrb[0].mxu0
  %v1311 = vadd.f32 %v1069, %v1310
  %v1312 = vpop.f32.mrb[0].mxu0
  %v1313 = vpop.f32.mrb[0].mxu0
  %1314 = vdwg.mxu0
  %v1315 = vadd.f32 %v1268, %v46
  %v1316 = vadd.f32 %v1270, %v47
  %v1317 = vadd.f32 %v1309, %v48
  %v1318 = vadd.f32 %v1311, %v49
  %v1319 = vxor.u32 %v1315, 2147483648
  %v1320 = vmul.f32 %v1319, 1.442695
  %v1321 = vpow.pop %v1320
  %v1322 = vadd.f32 %v1321, 1.0
  %v1323 = vrcp.pop %v1322
  %v1324 = vmul.f32 1.0, %v1323
  %v1325 = vxor.u32 %v1316, 2147483648
  %v1326 = vmul.f32 %v1325, 1.442695
  %v1327 = vpow.pop %v1326
  %v1328 = vadd.f32 %v1327, 1.0
  %v1329 = vrcp.pop %v1328
  %v1330 = vmul.f32 1.0, %v1329
  %v1331 = vtanh.pop %v1317
  %v1332 = vxor.u32 %v1318, 2147483648
  %v1333 = vmul.f32 %v1332, 1.442695
  %v1334 = vpow.pop %v1333
  %v1335 = vadd.f32 %v1334, 1.0
  %v1336 = vrcp.pop %v1335
  %v1337 = vmul.f32 1.0, %v1336
  %v1338 = vmul.f32 %v1330, 0.0
  %v1339 = vmul.f32 %v1324, %v1331
  %v1340 = vadd.f32 %v1338, %v1339
  %v1341 = vtanh.pop %v1340
  %v1342 = vmul.f32 %v1337, %v1341
  %v1343 = vpack.c.bf16 %v1342, %v1342
  %v1344 = vld [vmem:[%s5] sm:$0xff]
  %v1345 = vld [vmem:[%s5 + $0x8] sm:$0xff]
  %v1346 = vld [vmem:[%s5 + $0x10] sm:$0xff]
  %v1347 = vld [vmem:[%s5 + $0x18] sm:$0xff]
  %v1348 = vld [vmem:[%s5 + $0x20] sm:$0xff]
  %v1349 = vld [vmem:[%s5 + $0x28] sm:$0xff]
  %v1350 = vld [vmem:[%s5 + $0x30] sm:$0xff]
  %v1351 = vld [vmem:[%s5 + $0x38] sm:$0xff]
  %v1352 = vld [vmem:[%s5 + $0x40] sm:$0xff]
  %v1353 = vld [vmem:[%s5 + $0x48] sm:$0xff]
  %v1354 = vld [vmem:[%s5 + $0x50] sm:$0xff]
  %v1355 = vld [vmem:[%s5 + $0x58] sm:$0xff]
  %v1356 = vld [vmem:[%s5 + $0x60] sm:$0xff]
  %v1357 = vld [vmem:[%s5 + $0x68] sm:$0xff]
  %v1358 = vld [vmem:[%s5 + $0x70] sm:$0xff]
  %v1359 = vld [vmem:[%s5 + $0x78] sm:$0xff]
  %v1360 = vld [vmem:[%s5 + $0x80] sm:$0xff]
  %v1361 = vld [vmem:[%s5 + $0x88] sm:$0xff]
  %v1362 = vld [vmem:[%s5 + $0x90] sm:$0xff]
  %v1363 = vld [vmem:[%s5 + $0x98] sm:$0xff]
  %v1364 = vld [vmem:[%s5 + $0xa0] sm:$0xff]
  %v1365 = vld [vmem:[%s5 + $0xa8] sm:$0xff]
  %v1366 = vld [vmem:[%s5 + $0xb0] sm:$0xff]
  %v1367 = vld [vmem:[%s5 + $0xb8] sm:$0xff]
  %v1368 = vld [vmem:[%s5 + $0xc0] sm:$0xff]
  %v1369 = vld [vmem:[%s5 + $0xc8] sm:$0xff]
  %v1370 = vld [vmem:[%s5 + $0xd0] sm:$0xff]
  %v1371 = vld [vmem:[%s5 + $0xd8] sm:$0xff]
  %v1372 = vld [vmem:[%s5 + $0xe0] sm:$0xff]
  %v1373 = vld [vmem:[%s5 + $0xe8] sm:$0xff]
  %v1374 = vld [vmem:[%s5 + $0xf0] sm:$0xff]
  %v1375 = vld [vmem:[%s5 + $0xf8] sm:$0xff]
  %v1376 = vld [vmem:[%s6] sm:$0xff]
  %v1377 = vld [vmem:[%s6 + $0x8] sm:$0xff]
  %v1378 = vld [vmem:[%s6 + $0x10] sm:$0xff]
  %v1379 = vld [vmem:[%s6 + $0x18] sm:$0xff]
  %v1380 = vld [vmem:[%s6 + $0x20] sm:$0xff]
  %v1381 = vld [vmem:[%s6 + $0x28] sm:$0xff]
  %v1382 = vld [vmem:[%s6 + $0x30] sm:$0xff]
  %v1383 = vld [vmem:[%s6 + $0x38] sm:$0xff]
  %v1384 = vld [vmem:[%s6 + $0x40] sm:$0xff]
  %v1385 = vld [vmem:[%s6 + $0x48] sm:$0xff]
  %v1386 = vld [vmem:[%s6 + $0x50] sm:$0xff]
  %v1387 = vld [vmem:[%s6 + $0x58] sm:$0xff]
  %v1388 = vld [vmem:[%s6 + $0x60] sm:$0xff]
  %v1389 = vld [vmem:[%s6 + $0x68] sm:$0xff]
  %v1390 = vld [vmem:[%s6 + $0x70] sm:$0xff]
  %v1391 = vld [vmem:[%s6 + $0x78] sm:$0xff]
  %v1392 = vld [vmem:[%s6 + $0x80] sm:$0xff]
  %v1393 = vld [vmem:[%s6 + $0x88] sm:$0xff]
  %v1394 = vld [vmem:[%s6 + $0x90] sm:$0xff]
  %v1395 = vld [vmem:[%s6 + $0x98] sm:$0xff]
  %v1396 = vld [vmem:[%s6 + $0xa0] sm:$0xff]
  %v1397 = vld [vmem:[%s6 + $0xa8] sm:$0xff]
  %v1398 = vld [vmem:[%s6 + $0xb0] sm:$0xff]
  %v1399 = vld [vmem:[%s6 + $0xb8] sm:$0xff]
  %v1400 = vld [vmem:[%s6 + $0xc0] sm:$0xff]
  %v1401 = vld [vmem:[%s6 + $0xc8] sm:$0xff]
  %v1402 = vld [vmem:[%s6 + $0xd0] sm:$0xff]
  %v1403 = vld [vmem:[%s6 + $0xd8] sm:$0xff]
  %v1404 = vld [vmem:[%s6 + $0xe0] sm:$0xff]
  %v1405 = vld [vmem:[%s6 + $0xe8] sm:$0xff]
  %v1406 = vld [vmem:[%s6 + $0xf0] sm:$0xff]
  %v1407 = vld [vmem:[%s6 + $0xf8] sm:$0xff]
  %v1440 = vunpack.c.l.b16 %v1376
  %v1441 = vunpack.c.h.b16 %v1376
  %v1442 = vunpack.c.l.b16 %v1377
  %v1443 = vunpack.c.h.b16 %v1377
  %v1444 = vunpack.c.l.b16 %v1378
  %v1445 = vunpack.c.h.b16 %v1378
  %v1446 = vunpack.c.l.b16 %v1379
  %v1447 = vunpack.c.h.b16 %v1379
  %v1448 = vunpack.c.l.b16 %v1380
  %v1449 = vunpack.c.h.b16 %v1380
  %v1450 = vunpack.c.l.b16 %v1381
  %v1451 = vunpack.c.h.b16 %v1381
  %v1452 = vunpack.c.l.b16 %v1382
  %v1453 = vunpack.c.h.b16 %v1382
  %v1454 = vunpack.c.l.b16 %v1383
  %v1455 = vunpack.c.h.b16 %v1383
  %v1456 = vunpack.c.l.b16 %v1384
  %v1457 = vunpack.c.h.b16 %v1384
  %v1458 = vunpack.c.l.b16 %v1385
  %v1459 = vunpack.c.h.b16 %v1385
  %v1460 = vunpack.c.l.b16 %v1386
  %v1461 = vunpack.c.h.b16 %v1386
  %v1462 = vunpack.c.l.b16 %v1387
  %v1463 = vunpack.c.h.b16 %v1387
  %v1464 = vunpack.c.l.b16 %v1388
  %v1465 = vunpack.c.h.b16 %v1388
  %v1466 = vunpack.c.l.b16 %v1389
  %v1467 = vunpack.c.h.b16 %v1389
  %v1468 = vunpack.c.l.b16 %v1390
  %v1469 = vunpack.c.h.b16 %v1390
  %v1470 = vunpack.c.l.b16 %v1391
  %v1471 = vunpack.c.h.b16 %v1391
  %v1472 = vunpack.c.l.b16 %v1392
  %v1473 = vunpack.c.h.b16 %v1392
  %v1474 = vunpack.c.l.b16 %v1393
  %v1475 = vunpack.c.h.b16 %v1393
  %v1476 = vunpack.c.l.b16 %v1394
  %v1477 = vunpack.c.h.b16 %v1394
  %v1478 = vunpack.c.l.b16 %v1395
  %v1479 = vunpack.c.h.b16 %v1395
  %v1480 = vunpack.c.l.b16 %v1396
  %v1481 = vunpack.c.h.b16 %v1396
  %v1482 = vunpack.c.l.b16 %v1397
  %v1483 = vunpack.c.h.b16 %v1397
  %v1484 = vunpack.c.l.b16 %v1398
  %v1485 = vunpack.c.h.b16 %v1398
  %v1486 = vunpack.c.l.b16 %v1399
  %v1487 = vunpack.c.h.b16 %v1399
  %v1488 = vunpack.c.l.b16 %v1400
  %v1489 = vunpack.c.h.b16 %v1400
  %v1490 = vunpack.c.l.b16 %v1401
  %v1491 = vunpack.c.h.b16 %v1401
  %v1492 = vunpack.c.l.b16 %v1402
  %v1493 = vunpack.c.h.b16 %v1402
  %v1494 = vunpack.c.l.b16 %v1403
  %v1495 = vunpack.c.h.b16 %v1403
  %v1496 = vunpack.c.l.b16 %v1404
  %v1497 = vunpack.c.h.b16 %v1404
  %v1498 = vunpack.c.l.b16 %v1405
  %v1499 = vunpack.c.h.b16 %v1405
  %v1500 = vunpack.c.l.b16 %v1406
  %v1501 = vunpack.c.h.b16 %v1406
  %v1502 = vunpack.c.l.b16 %v1407
  %v1503 = vunpack.c.h.b16 %v1407
  %v1504 = vpack.c.b16 %v1444, %v1440
  %v1505 = vpack.c.b16 %v1445, %v1441
  %v1506 = vpack.c.b16 %v1446, %v1442
  %v1507 = vpack.c.b16 %v1447, %v1443
  %v1508 = vpack.c.b16 %v1452, %v1448
  %v1509 = vpack.c.b16 %v1453, %v1449
  %v1510 = vpack.c.b16 %v1454, %v1450
  %v1511 = vpack.c.b16 %v1455, %v1451
  %v1512 = vpack.c.b16 %v1460, %v1456
  %v1513 = vpack.c.b16 %v1461, %v1457
  %v1514 = vpack.c.b16 %v1462, %v1458
  %v1515 = vpack.c.b16 %v1463, %v1459
  %v1516 = vpack.c.b16 %v1468, %v1464
  %v1517 = vpack.c.b16 %v1469, %v1465
  %v1518 = vpack.c.b16 %v1470, %v1466
  %v1519 = vpack.c.b16 %v1471, %v1467
  %v1520 = vpack.c.b16 %v1476, %v1472
  %v1521 = vpack.c.b16 %v1477, %v1473
  %v1522 = vpack.c.b16 %v1478, %v1474
  %v1523 = vpack.c.b16 %v1479, %v1475
  %v1524 = vpack.c.b16 %v1484, %v1480
  %v1525 = vpack.c.b16 %v1485, %v1481
  %v1526 = vpack.c.b16 %v1486, %v1482
  %v1527 = vpack.c.b16 %v1487, %v1483
  %v1528 = vpack.c.b16 %v1492, %v1488
  %v1529 = vpack.c.b16 %v1493, %v1489
  %v1530 = vpack.c.b16 %v1494, %v1490
  %v1531 = vpack.c.b16 %v1495, %v1491
  %v1532 = vpack.c.b16 %v1500, %v1496
  %v1533 = vpack.c.b16 %v1501, %v1497
  %v1534 = vpack.c.b16 %v1502, %v1498
  %v1535 = vpack.c.b16 %v1503, %v1499
  %1568 = vmatprep.subr.bf16.mxu0 %v1505
  %1569 = vmatpush1.bf16.msra.mxu0 %v1504
  %1570 = vmatprep.subr.bf16.mxu0 %v1509
  %1571 = vmatpush1.bf16.msra.mxu0 %v1508
  %1572 = vmatprep.subr.bf16.mxu0 %v1513
  %1573 = vmatpush1.bf16.msra.mxu0 %v1512
  %1574 = vmatprep.subr.bf16.mxu0 %v1517
  %1575 = vmatpush1.bf16.msra.mxu0 %v1516
  %1576 = vmatprep.subr.bf16.mxu0 %v1521
  %1577 = vmatpush1.bf16.msra.mxu0 %v1520
  %1578 = vmatprep.subr.bf16.mxu0 %v1525
  %1579 = vmatpush1.bf16.msra.mxu0 %v1524
  %1580 = vmatprep.subr.bf16.mxu0 %v1529
  %1581 = vmatpush1.bf16.msra.mxu0 %v1528
  %1582 = vmatprep.subr.bf16.mxu0 %v1533
  %1583 = vmatpush1.bf16.msra.mxu0 %v1532
  %1584 = vmatprep.subr.bf16.mxu0 0
  %1585 = vmatpush1.bf16.msra.mxu0 0
  %1586 = vmatprep.subr.bf16.mxu0 0
  %1587 = vmatpush1.bf16.msra.mxu0 0
  %1588 = vmatprep.subr.bf16.mxu0 0
  %1589 = vmatpush1.bf16.msra.mxu0 0
  %1590 = vmatprep.subr.bf16.mxu0 0
  %1591 = vmatpush1.bf16.msra.mxu0 0
  %1592 = vmatprep.subr.bf16.mxu0 0
  %1593 = vmatpush1.bf16.msra.mxu0 0
  %1594 = vmatprep.subr.bf16.mxu0 0
  %1595 = vmatpush1.bf16.msra.mxu0 0
  %1596 = vmatprep.subr.bf16.mxu0 0
  %1597 = vmatpush1.bf16.msra.mxu0 0
  %1598 = vmatprep.subr.bf16.mxu0 0
  %1599 = vmatpush1.bf16.msra.mxu0 0
  %1600 = vmatprep.mubr.bf16.mxu0 0
  %1601 = vmatmul.mubr.bf16.gmra.mrb[0].mxu0 0
  %v1602 = vpop.f32.mrb[0].mxu0
  %v1603 = vadd.f32 0.0, %v1602
  %v1604 = vpop.f32.mrb[0].mxu0
  %v1605 = vadd.f32 0.0, %v1604
  %v1606 = vpop.f32.mrb[0].mxu0
  %v1607 = vpop.f32.mrb[0].mxu0
  %1608 = vdwg.mxu0
  %1609 = vmatprep.subr.bf16.mxu0 %v1507
  %1610 = vmatpush1.bf16.msra.mxu0 %v1506
  %1611 = vmatprep.subr.bf16.mxu0 %v1511
  %1612 = vmatpush1.bf16.msra.mxu0 %v1510
  %1613 = vmatprep.subr.bf16.mxu0 %v1515
  %1614 = vmatpush1.bf16.msra.mxu0 %v1514
  %1615 = vmatprep.subr.bf16.mxu0 %v1519
  %1616 = vmatpush1.bf16.msra.mxu0 %v1518
  %1617 = vmatprep.subr.bf16.mxu0 %v1523
  %1618 = vmatpush1.bf16.msra.mxu0 %v1522
  %1619 = vmatprep.subr.bf16.mxu0 %v1527
  %1620 = vmatpush1.bf16.msra.mxu0 %v1526
  %1621 = vmatprep.subr.bf16.mxu0 %v1531
  %1622 = vmatpush1.bf16.msra.mxu0 %v1530
  %1623 = vmatprep.subr.bf16.mxu0 %v1535
  %1624 = vmatpush1.bf16.msra.mxu0 %v1534
  %1625 = vmatprep.subr.bf16.mxu0 0
  %1626 = vmatpush1.bf16.msra.mxu0 0
  %1627 = vmatprep.subr.bf16.mxu0 0
  %1628 = vmatpush1.bf16.msra.mxu0 0
  %1629 = vmatprep.subr.bf16.mxu0 0
  %1630 = vmatpush1.bf16.msra.mxu0 0
  %1631 = vmatprep.subr.bf16.mxu0 0
  %1632 = vmatpush1.bf16.msra.mxu0 0
  %1633 = vmatprep.subr.bf16.mxu0 0
  %1634 = vmatpush1.bf16.msra.mxu0 0
  %1635 = vmatprep.subr.bf16.mxu0 0
  %1636 = vmatpush1.bf16.msra.mxu0 0
  %1637 = vmatprep.subr.bf16.mxu0 0
  %1638 = vmatpush1.bf16.msra.mxu0 0
  %1639 = vmatprep.subr.bf16.mxu0 0
  %1640 = vmatpush1.bf16.msra.mxu0 0
  %1641 = vmatprep.mubr.bf16.mxu0 0
  %1642 = vmatmul.mubr.bf16.gmra.mrb[0].mxu0 0
  %v1643 = vpop.f32.mrb[0].mxu0
  %v1644 = vadd.f32 0.0, %v1643
  %v1645 = vpop.f32.mrb[0].mxu0
  %v1646 = vadd.f32 0.0, %v1645
  %v1647 = vpop.f32.mrb[0].mxu0
  %v1648 = vpop.f32.mrb[0].mxu0
  %1649 = vdwg.mxu0
  %v1682 = vunpack.c.l.b16 %v1344
  %v1683 = vunpack.c.h.b16 %v1344
  %v1684 = vunpack.c.l.b16 %v1345
  %v1685 = vunpack.c.h.b16 %v1345
  %v1686 = vunpack.c.l.b16 %v1346
  %v1687 = vunpack.c.h.b16 %v1346
  %v1688 = vunpack.c.l.b16 %v1347
  %v1689 = vunpack.c.h.b16 %v1347
  %v1690 = vunpack.c.l.b16 %v1348
  %v1691 = vunpack.c.h.b16 %v1348
  %v1692 = vunpack.c.l.b16 %v1349
  %v1693 = vunpack.c.h.b16 %v1349
  %v1694 = vunpack.c.l.b16 %v1350
  %v1695 = vunpack.c.h.b16 %v1350
  %v1696 = vunpack.c.l.b16 %v1351
  %v1697 = vunpack.c.h.b16 %v1351
  %v1698 = vunpack.c.l.b16 %v1352
  %v1699 = vunpack.c.h.b16 %v1352
  %v1700 = vunpack.c.l.b16 %v1353
  %v1701 = vunpack.c.h.b16 %v1353
  %v1702 = vunpack.c.l.b16 %v1354
  %v1703 = vunpack.c.h.b16 %v1354
  %v1704 = vunpack.c.l.b16 %v1355
  %v1705 = vunpack.c.h.b16 %v1355
  %v1706 = vunpack.c.l.b16 %v1356
  %v1707 = vunpack.c.h.b16 %v1356
  %v1708 = vunpack.c.l.b16 %v1357
  %v1709 = vunpack.c.h.b16 %v1357
  %v1710 = vunpack.c.l.b16 %v1358
  %v1711 = vunpack.c.h.b16 %v1358
  %v1712 = vunpack.c.l.b16 %v1359
  %v1713 = vunpack.c.h.b16 %v1359
  %v1714 = vunpack.c.l.b16 %v1360
  %v1715 = vunpack.c.h.b16 %v1360
  %v1716 = vunpack.c.l.b16 %v1361
  %v1717 = vunpack.c.h.b16 %v1361
  %v1718 = vunpack.c.l.b16 %v1362
  %v1719 = vunpack.c.h.b16 %v1362
  %v1720 = vunpack.c.l.b16 %v1363
  %v1721 = vunpack.c.h.b16 %v1363
  %v1722 = vunpack.c.l.b16 %v1364
  %v1723 = vunpack.c.h.b16 %v1364
  %v1724 = vunpack.c.l.b16 %v1365
  %v1725 = vunpack.c.h.b16 %v1365
  %v1726 = vunpack.c.l.b16 %v1366
  %v1727 = vunpack.c.h.b16 %v1366
  %v1728 = vunpack.c.l.b16 %v1367
  %v1729 = vunpack.c.h.b16 %v1367
  %v1730 = vunpack.c.l.b16 %v1368
  %v1731 = vunpack.c.h.b16 %v1368
  %v1732 = vunpack.c.l.b16 %v1369
  %v1733 = vunpack.c.h.b16 %v1369
  %v1734 = vunpack.c.l.b16 %v1370
  %v1735 = vunpack.c.h.b16 %v1370
  %v1736 = vunpack.c.l.b16 %v1371
  %v1737 = vunpack.c.h.b16 %v1371
  %v1738 = vunpack.c.l.b16 %v1372
  %v1739 = vunpack.c.h.b16 %v1372
  %v1740 = vunpack.c.l.b16 %v1373
  %v1741 = vunpack.c.h.b16 %v1373
  %v1742 = vunpack.c.l.b16 %v1374
  %v1743 = vunpack.c.h.b16 %v1374
  %v1744 = vunpack.c.l.b16 %v1375
  %v1745 = vunpack.c.h.b16 %v1375
  %v1746 = vpack.c.b16 %v1686, %v1682
  %v1747 = vpack.c.b16 %v1687, %v1683
  %v1748 = vpack.c.b16 %v1688, %v1684
  %v1749 = vpack.c.b16 %v1689, %v1685
  %v1750 = vpack.c.b16 %v1694, %v1690
  %v1751 = vpack.c.b16 %v1695, %v1691
  %v1752 = vpack.c.b16 %v1696, %v1692
  %v1753 = vpack.c.b16 %v1697, %v1693
  %v1754 = vpack.c.b16 %v1702, %v1698
  %v1755 = vpack.c.b16 %v1703, %v1699
  %v1756 = vpack.c.b16 %v1704, %v1700
  %v1757 = vpack.c.b16 %v1705, %v1701
  %v1758 = vpack.c.b16 %v1710, %v1706
  %v1759 = vpack.c.b16 %v1711, %v1707
  %v1760 = vpack.c.b16 %v1712, %v1708
  %v1761 = vpack.c.b16 %v1713, %v1709
  %v1762 = vpack.c.b16 %v1718, %v1714
  %v1763 = vpack.c.b16 %v1719, %v1715
  %v1764 = vpack.c.b16 %v1720, %v1716
  %v1765 = vpack.c.b16 %v1721, %v1717
  %v1766 = vpack.c.b16 %v1726, %v1722
  %v1767 = vpack.c.b16 %v1727, %v1723
  %v1768 = vpack.c.b16 %v1728, %v1724
  %v1769 = vpack.c.b16 %v1729, %v1725
  %v1770 = vpack.c.b16 %v1734, %v1730
  %v1771 = vpack.c.b16 %v1735, %v1731
  %v1772 = vpack.c.b16 %v1736, %v1732
  %v1773 = vpack.c.b16 %v1737, %v1733
  %v1774 = vpack.c.b16 %v1742, %v1738
  %v1775 = vpack.c.b16 %v1743, %v1739
  %v1776 = vpack.c.b16 %v1744, %v1740
  %v1777 = vpack.c.b16 %v1745, %v1741
  %1810 = vmatprep.subr.bf16.mxu0 %v1747
  %1811 = vmatpush1.bf16.msra.mxu0 %v1746
  %1812 = vmatprep.subr.bf16.mxu0 %v1751
  %1813 = vmatpush1.bf16.msra.mxu0 %v1750
  %1814 = vmatprep.subr.bf16.mxu0 %v1755
  %1815 = vmatpush1.bf16.msra.mxu0 %v1754
  %1816 = vmatprep.subr.bf16.mxu0 %v1759
  %1817 = vmatpush1.bf16.msra.mxu0 %v1758
  %1818 = vmatprep.subr.bf16.mxu0 %v1763
  %1819 = vmatpush1.bf16.msra.mxu0 %v1762
  %1820 = vmatprep.subr.bf16.mxu0 %v1767
  %1821 = vmatpush1.bf16.msra.mxu0 %v1766
  %1822 = vmatprep.subr.bf16.mxu0 %v1771
  %1823 = vmatpush1.bf16.msra.mxu0 %v1770
  %1824 = vmatprep.subr.bf16.mxu0 %v1775
  %1825 = vmatpush1.bf16.msra.mxu0 %v1774
  %1826 = vmatprep.subr.bf16.mxu0 0
  %1827 = vmatpush1.bf16.msra.mxu0 0
  %1828 = vmatprep.subr.bf16.mxu0 0
  %1829 = vmatpush1.bf16.msra.mxu0 0
  %1830 = vmatprep.subr.bf16.mxu0 0
  %1831 = vmatpush1.bf16.msra.mxu0 0
  %1832 = vmatprep.subr.bf16.mxu0 0
  %1833 = vmatpush1.bf16.msra.mxu0 0
  %1834 = vmatprep.subr.bf16.mxu0 0
  %1835 = vmatpush1.bf16.msra.mxu0 0
  %1836 = vmatprep.subr.bf16.mxu0 0
  %1837 = vmatpush1.bf16.msra.mxu0 0
  %1838 = vmatprep.subr.bf16.mxu0 0
  %1839 = vmatpush1.bf16.msra.mxu0 0
  %1840 = vmatprep.subr.bf16.mxu0 0
  %1841 = vmatpush1.bf16.msra.mxu0 0
  %1842 = vmatprep.mubr.bf16.mxu0 0
  %1843 = vmatmul.mubr.bf16.gmra.mrb[0].mxu0 %v1343
  %v1844 = vpop.f32.mrb[0].mxu0
  %v1845 = vadd.f32 %v1603, %v1844
  %v1846 = vpop.f32.mrb[0].mxu0
  %v1847 = vadd.f32 %v1605, %v1846
  %v1848 = vpop.f32.mrb[0].mxu0
  %v1849 = vpop.f32.mrb[0].mxu0
  %1850 = vdwg.mxu0
  %1851 = vmatprep.subr.bf16.mxu0 %v1749
  %1852 = vmatpush1.bf16.msra.mxu0 %v1748
  %1853 = vmatprep.subr.bf16.mxu0 %v1753
  %1854 = vmatpush1.bf16.msra.mxu0 %v1752
  %1855 = vmatprep.subr.bf16.mxu0 %v1757
  %1856 = vmatpush1.bf16.msra.mxu0 %v1756
  %1857 = vmatprep.subr.bf16.mxu0 %v1761
  %1858 = vmatpush1.bf16.msra.mxu0 %v1760
  %1859 = vmatprep.subr.bf16.mxu0 %v1765
  %1860 = vmatpush1.bf16.msra.mxu0 %v1764
  %1861 = vmatprep.subr.bf16.mxu0 %v1769
  %1862 = vmatpush1.bf16.msra.mxu0 %v1768
  %1863 = vmatprep.subr.bf16.mxu0 %v1773
  %1864 = vmatpush1.bf16.msra.mxu0 %v1772
  %1865 = vmatprep.subr.bf16.mxu0 %v1777
  %1866 = vmatpush1.bf16.msra.mxu0 %v1776
  %1867 = vmatprep.subr.bf16.mxu0 0
  %1868 = vmatpush1.bf16.msra.mxu0 0
  %1869 = vmatprep.subr.bf16.mxu0 0
  %1870 = vmatpush1.bf16.msra.mxu0 0
  %1871 = vmatprep.subr.bf16.mxu0 0
  %1872 = vmatpush1.bf16.msra.mxu0 0
  %1873 = vmatprep.subr.bf16.mxu0 0
  %1874 = vmatpush1.bf16.msra.mxu0 0
  %1875 = vmatprep.subr.bf16.mxu0 0
  %1876 = vmatpush1.bf16.msra.mxu0 0
  %1877 = vmatprep.subr.bf16.mxu0 0
  %1878 = vmatpush1.bf16.msra.mxu0 0
  %1879 = vmatprep.subr.bf16.mxu0 0
  %1880 = vmatpush1.bf16.msra.mxu0 0
  %1881 = vmatprep.subr.bf16.mxu0 0
  %1882 = vmatpush1.bf16.msra.mxu0 0
  %1883 = vmatprep.mubr.bf16.mxu0 0
  %1884 = vmatmul.mubr.bf16.gmra.mrb[0].mxu0 %v1343
  %v1885 = vpop.f32.mrb[0].mxu0
  %v1886 = vadd.f32 %v1644, %v1885
  %v1887 = vpop.f32.mrb[0].mxu0
  %v1888 = vadd.f32 %v1646, %v1887
  %v1889 = vpop.f32.mrb[0].mxu0
  %v1890 = vpop.f32.mrb[0].mxu0
  %1891 = vdwg.mxu0
  %v1892 = vadd.f32 %v1845, %v50
  %v1893 = vadd.f32 %v1847, %v51
  %v1894 = vadd.f32 %v1886, %v52
  %v1895 = vadd.f32 %v1888, %v53
  %v1896 = vxor.u32 %v1892, 2147483648
  %v1897 = vmul.f32 %v1896, 1.442695
  %v1898 = vpow.pop %v1897
  %v1899 = vadd.f32 %v1898, 1.0
  %v1900 = vrcp.pop %v1899
  %v1901 = vmul.f32 1.0, %v1900
  %v1902 = vxor.u32 %v1893, 2147483648
  %v1903 = vmul.f32 %v1902, 1.442695
  %v1904 = vpow.pop %v1903
  %v1905 = vadd.f32 %v1904, 1.0
  %v1906 = vrcp.pop %v1905
  %v1907 = vmul.f32 1.0, %v1906
  %v1908 = vtanh.pop %v1894
  %v1909 = vxor.u32 %v1895, 2147483648
  %v1910 = vmul.f32 %v1909, 1.442695
  %v1911 = vpow.pop %v1910
  %v1912 = vadd.f32 %v1911, 1.0
  %v1913 = vrcp.pop %v1912
  %v1914 = vmul.f32 1.0, %v1913
  %v1915 = vmul.f32 %v1907, 0.0
  %v1916 = vmul.f32 %v1901, %v1908
  %v1917 = vadd.f32 %v1915, %v1916
  %v1918 = vtanh.pop %v1917
  %v1919 = vmul.f32 %v1914, %v1918
  %s1920 = scalar_lea.vmem [#allocation2], 32
  %v1921 = vld [vmem:[%s1920] sm:$0xff]
  %v1922 = vld [vmem:[%s1920 + $0x8] sm:$0xff]
  %v1923 = vld [vmem:[%s1920 + $0x10] sm:$0xff]
  %v1924 = vld [vmem:[%s1920 + $0x18] sm:$0xff]
  %1925 = vmatprep.subr.bf16.mxu0 %v589
  %1926 = vmatpush1.bf16.msra.mxu0 %v588
  %1927 = vmatprep.subr.bf16.mxu0 %v593
  %1928 = vmatpush1.bf16.msra.mxu0 %v592
  %1929 = vmatprep.subr.bf16.mxu0 %v597
  %1930 = vmatpush1.bf16.msra.mxu0 %v596
  %1931 = vmatprep.subr.bf16.mxu0 %v601
  %1932 = vmatpush1.bf16.msra.mxu0 %v600
  %1933 = vmatprep.subr.bf16.mxu0 %v605
  %1934 = vmatpush1.bf16.msra.mxu0 %v604
  %1935 = vmatprep.subr.bf16.mxu0 %v609
  %1936 = vmatpush1.bf16.msra.mxu0 %v608
  %1937 = vmatprep.subr.bf16.mxu0 %v613
  %1938 = vmatpush1.bf16.msra.mxu0 %v612
  %1939 = vmatprep.subr.bf16.mxu0 %v617
  %1940 = vmatpush1.bf16.msra.mxu0 %v616
  %1941 = vmatprep.subr.bf16.mxu0 0
  %1942 = vmatpush1.bf16.msra.mxu0 0
  %1943 = vmatprep.subr.bf16.mxu0 0
  %1944 = vmatpush1.bf16.msra.mxu0 0
  %1945 = vmatprep.subr.bf16.mxu0 0
  %1946 = vmatpush1.bf16.msra.mxu0 0
  %1947 = vmatprep.subr.bf16.mxu0 0
  %1948 = vmatpush1.bf16.msra.mxu0 0
  %1949 = vmatprep.subr.bf16.mxu0 0
  %1950 = vmatpush1.bf16.msra.mxu0 0
  %1951 = vmatprep.subr.bf16.mxu0 0
  %1952 = vmatpush1.bf16.msra.mxu0 0
  %1953 = vmatprep.subr.bf16.mxu0 0
  %1954 = vmatpush1.bf16.msra.mxu0 0
  %1955 = vmatprep.subr.bf16.mxu0 0
  %1956 = vmatpush1.bf16.msra.mxu0 0
  %1957 = vmatprep.mubr.bf16.mxu0 0
  %1958 = vmatmul.mubr.bf16.gmra.mrb[0].mxu0 %v766
  %v1959 = vpop.f32.mrb[0].mxu0
  %v1960 = vadd.f32 0.0, %v1959
  %v1961 = vpop.f32.mrb[0].mxu0
  %v1962 = vadd.f32 0.0, %v1961
  %v1963 = vpop.f32.mrb[0].mxu0
  %v1964 = vpop.f32.mrb[0].mxu0
  %1965 = vdwg.mxu0
  %1966 = vmatprep.subr.bf16.mxu0 %v591
  %1967 = vmatpush1.bf16.msra.mxu0 %v590
  %1968 = vmatprep.subr.bf16.mxu0 %v595
  %1969 = vmatpush1.bf16.msra.mxu0 %v594
  %1970 = vmatprep.subr.bf16.mxu0 %v599
  %1971 = vmatpush1.bf16.msra.mxu0 %v598
  %1972 = vmatprep.subr.bf16.mxu0 %v603
  %1973 = vmatpush1.bf16.msra.mxu0 %v602
  %1974 = vmatprep.subr.bf16.mxu0 %v607
  %1975 = vmatpush1.bf16.msra.mxu0 %v606
  %1976 = vmatprep.subr.bf16.mxu0 %v611
  %1977 = vmatpush1.bf16.msra.mxu0 %v610
  %1978 = vmatprep.subr.bf16.mxu0 %v615
  %1979 = vmatpush1.bf16.msra.mxu0 %v614
  %1980 = vmatprep.subr.bf16.mxu0 %v619
  %1981 = vmatpush1.bf16.msra.mxu0 %v618
  %1982 = vmatprep.subr.bf16.mxu0 0
  %1983 = vmatpush1.bf16.msra.mxu0 0
  %1984 = vmatprep.subr.bf16.mxu0 0
  %1985 = vmatpush1.bf16.msra.mxu0 0
  %1986 = vmatprep.subr.bf16.mxu0 0
  %1987 = vmatpush1.bf16.msra.mxu0 0
  %1988 = vmatprep.subr.bf16.mxu0 0
  %1989 = vmatpush1.bf16.msra.mxu0 0
  %1990 = vmatprep.subr.bf16.mxu0 0
  %1991 = vmatpush1.bf16.msra.mxu0 0
  %1992 = vmatprep.subr.bf16.mxu0 0
  %1993 = vmatpush1.bf16.msra.mxu0 0
  %1994 = vmatprep.subr.bf16.mxu0 0
  %1995 = vmatpush1.bf16.msra.mxu0 0
  %1996 = vmatprep.subr.bf16.mxu0 0
  %1997 = vmatpush1.bf16.msra.mxu0 0
  %1998 = vmatprep.mubr.bf16.mxu0 0
  %1999 = vmatmul.mubr.bf16.gmra.mrb[0].mxu0 %v766
  %v2000 = vpop.f32.mrb[0].mxu0
  %v2001 = vadd.f32 0.0, %v2000
  %v2002 = vpop.f32.mrb[0].mxu0
  %v2003 = vadd.f32 0.0, %v2002
  %v2004 = vpop.f32.mrb[0].mxu0
  %v2005 = vpop.f32.mrb[0].mxu0
  %2006 = vdwg.mxu0
  %v2007 = vadd.f32 %v1921, %v1960
  %v2008 = vadd.f32 %v1922, %v1962
  %v2009 = vadd.f32 %v1923, %v2001
  %v2010 = vadd.f32 %v1924, %v2003
  %v2011 = vadd.f32 %v2007, %v42
  %v2012 = vadd.f32 %v2008, %v43
  %v2013 = vadd.f32 %v2009, %v44
  %v2014 = vadd.f32 %v2010, %v45
  %v2015 = vxor.u32 %v2011, 2147483648
  %v2016 = vmul.f32 %v2015, 1.442695
  %v2017 = vpow.pop %v2016
  %v2018 = vadd.f32 %v2017, 1.0
  %v2019 = vrcp.pop %v2018
  %v2020 = vmul.f32 1.0, %v2019
  %v2021 = vxor.u32 %v2012, 2147483648
  %v2022 = vmul.f32 %v2021, 1.442695
  %v2023 = vpow.pop %v2022
  %v2024 = vadd.f32 %v2023, 1.0
  %v2025 = vrcp.pop %v2024
  %v2026 = vmul.f32 1.0, %v2025
  %v2027 = vtanh.pop %v2013
  %v2028 = vxor.u32 %v2014, 2147483648
  %v2029 = vmul.f32 %v2028, 1.442695
  %v2030 = vpow.pop %v2029
  %v2031 = vadd.f32 %v2030, 1.0
  %v2032 = vrcp.pop %v2031
  %v2033 = vmul.f32 1.0, %v2032
  %v2034 = vmul.f32 %v2026, %v763
  %v2035 = vmul.f32 %v2020, %v2027
  %v2036 = vadd.f32 %v2034, %v2035
  %v2037 = vtanh.pop %v2036
  %v2038 = vmul.f32 %v2033, %v2037
  %v2039 = vpack.c.bf16 %v2038, %v2038
  %2040 = vmatprep.subr.bf16.mxu0 %v928
  %2041 = vmatpush1.bf16.msra.mxu0 %v927
  %2042 = vmatprep.subr.bf16.mxu0 %v932
  %2043 = vmatpush1.bf16.msra.mxu0 %v931
  %2044 = vmatprep.subr.bf16.mxu0 %v936
  %2045 = vmatpush1.bf16.msra.mxu0 %v935
  %2046 = vmatprep.subr.bf16.mxu0 %v940
  %2047 = vmatpush1.bf16.msra.mxu0 %v939
  %2048 = vmatprep.subr.bf16.mxu0 %v944
  %2049 = vmatpush1.bf16.msra.mxu0 %v943
  %2050 = vmatprep.subr.bf16.mxu0 %v948
  %2051 = vmatpush1.bf16.msra.mxu0 %v947
  %2052 = vmatprep.subr.bf16.mxu0 %v952
  %2053 = vmatpush1.bf16.msra.mxu0 %v951
  %2054 = vmatprep.subr.bf16.mxu0 %v956
  %2055 = vmatpush1.bf16.msra.mxu0 %v955
  %2056 = vmatprep.subr.bf16.mxu0 0
  %2057 = vmatpush1.bf16.msra.mxu0 0
  %2058 = vmatprep.subr.bf16.mxu0 0
  %2059 = vmatpush1.bf16.msra.mxu0 0
  %2060 = vmatprep.subr.bf16.mxu0 0
  %2061 = vmatpush1.bf16.msra.mxu0 0
  %2062 = vmatprep.subr.bf16.mxu0 0
  %2063 = vmatpush1.bf16.msra.mxu0 0
  %2064 = vmatprep.subr.bf16.mxu0 0
  %2065 = vmatpush1.bf16.msra.mxu0 0
  %2066 = vmatprep.subr.bf16.mxu0 0
  %2067 = vmatpush1.bf16.msra.mxu0 0
  %2068 = vmatprep.subr.bf16.mxu0 0
  %2069 = vmatpush1.bf16.msra.mxu0 0
  %2070 = vmatprep.subr.bf16.mxu0 0
  %2071 = vmatpush1.bf16.msra.mxu0 0
  %2072 = vmatprep.mubr.bf16.mxu0 0
  %2073 = vmatmul.mubr.bf16.gmra.mrb[0].mxu0 %v1343
  %v2074 = vpop.f32.mrb[0].mxu0
  %v2075 = vadd.f32 0.0, %v2074
  %v2076 = vpop.f32.mrb[0].mxu0
  %v2077 = vadd.f32 0.0, %v2076
  %v2078 = vpop.f32.mrb[0].mxu0
  %v2079 = vpop.f32.mrb[0].mxu0
  %2080 = vdwg.mxu0
  %2081 = vmatprep.subr.bf16.mxu0 %v930
  %2082 = vmatpush1.bf16.msra.mxu0 %v929
  %2083 = vmatprep.subr.bf16.mxu0 %v934
  %2084 = vmatpush1.bf16.msra.mxu0 %v933
  %2085 = vmatprep.subr.bf16.mxu0 %v938
  %2086 = vmatpush1.bf16.msra.mxu0 %v937
  %2087 = vmatprep.subr.bf16.mxu0 %v942
  %2088 = vmatpush1.bf16.msra.mxu0 %v941
  %2089 = vmatprep.subr.bf16.mxu0 %v946
  %2090 = vmatpush1.bf16.msra.mxu0 %v945
  %2091 = vmatprep.subr.bf16.mxu0 %v950
  %2092 = vmatpush1.bf16.msra.mxu0 %v949
  %2093 = vmatprep.subr.bf16.mxu0 %v954
  %2094 = vmatpush1.bf16.msra.mxu0 %v953
  %2095 = vmatprep.subr.bf16.mxu0 %v958
  %2096 = vmatpush1.bf16.msra.mxu0 %v957
  %2097 = vmatprep.subr.bf16.mxu0 0
  %2098 = vmatpush1.bf16.msra.mxu0 0
  %2099 = vmatprep.subr.bf16.mxu0 0
  %2100 = vmatpush1.bf16.msra.mxu0 0
  %2101 = vmatprep.subr.bf16.mxu0 0
  %2102 = vmatpush1.bf16.msra.mxu0 0
  %2103 = vmatprep.subr.bf16.mxu0 0
  %2104 = vmatpush1.bf16.msra.mxu0 0
  %2105 = vmatprep.subr.bf16.mxu0 0
  %2106 = vmatpush1.bf16.msra.mxu0 0
  %2107 = vmatprep.subr.bf16.mxu0 0
  %2108 = vmatpush1.bf16.msra.mxu0 0
  %2109 = vmatprep.subr.bf16.mxu0 0
  %2110 = vmatpush1.bf16.msra.mxu0 0
  %2111 = vmatprep.subr.bf16.mxu0 0
  %2112 = vmatpush1.bf16.msra.mxu0 0
  %2113 = vmatprep.mubr.bf16.mxu0 0
  %2114 = vmatmul.mubr.bf16.gmra.mrb[0].mxu0 %v1343
  %v2115 = vpop.f32.mrb[0].mxu0
  %v2116 = vadd.f32 0.0, %v2115
  %v2117 = vpop.f32.mrb[0].mxu0
  %v2118 = vadd.f32 0.0, %v2117
  %v2119 = vpop.f32.mrb[0].mxu0
  %v2120 = vpop.f32.mrb[0].mxu0
  %2121 = vdwg.mxu0
  %2122 = vmatprep.subr.bf16.mxu0 %v1170
  %2123 = vmatpush1.bf16.msra.mxu0 %v1169
  %2124 = vmatprep.subr.bf16.mxu0 %v1174
  %2125 = vmatpush1.bf16.msra.mxu0 %v1173
  %2126 = vmatprep.subr.bf16.mxu0 %v1178
  %2127 = vmatpush1.bf16.msra.mxu0 %v1177
  %2128 = vmatprep.subr.bf16.mxu0 %v1182
  %2129 = vmatpush1.bf16.msra.mxu0 %v1181
  %2130 = vmatprep.subr.bf16.mxu0 %v1186
  %2131 = vmatpush1.bf16.msra.mxu0 %v1185
  %2132 = vmatprep.subr.bf16.mxu0 %v1190
  %2133 = vmatpush1.bf16.msra.mxu0 %v1189
  %2134 = vmatprep.subr.bf16.mxu0 %v1194
  %2135 = vmatpush1.bf16.msra.mxu0 %v1193
  %2136 = vmatprep.subr.bf16.mxu0 %v1198
  %2137 = vmatpush1.bf16.msra.mxu0 %v1197
  %2138 = vmatprep.subr.bf16.mxu0 0
  %2139 = vmatpush1.bf16.msra.mxu0 0
  %2140 = vmatprep.subr.bf16.mxu0 0
  %2141 = vmatpush1.bf16.msra.mxu0 0
  %2142 = vmatprep.subr.bf16.mxu0 0
  %2143 = vmatpush1.bf16.msra.mxu0 0
  %2144 = vmatprep.subr.bf16.mxu0 0
  %2145 = vmatpush1.bf16.msra.mxu0 0
  %2146 = vmatprep.subr.bf16.mxu0 0
  %2147 = vmatpush1.bf16.msra.mxu0 0
  %2148 = vmatprep.subr.bf16.mxu0 0
  %2149 = vmatpush1.bf16.msra.mxu0 0
  %2150 = vmatprep.subr.bf16.mxu0 0
  %2151 = vmatpush1.bf16.msra.mxu0 0
  %2152 = vmatprep.subr.bf16.mxu0 0
  %2153 = vmatpush1.bf16.msra.mxu0 0
  %2154 = vmatprep.mubr.bf16.mxu0 0
  %2155 = vmatmul.mubr.bf16.gmra.mrb[0].mxu0 %v2039
  %v2156 = vpop.f32.mrb[0].mxu0
  %v2157 = vadd.f32 %v2075, %v2156
  %v2158 = vpop.f32.mrb[0].mxu0
  %v2159 = vadd.f32 %v2077, %v2158
  %v2160 = vpop.f32.mrb[0].mxu0
  %v2161 = vpop.f32.mrb[0].mxu0
  %2162 = vdwg.mxu0
  %2163 = vmatprep.subr.bf16.mxu0 %v1172
  %2164 = vmatpush1.bf16.msra.mxu0 %v1171
  %2165 = vmatprep.subr.bf16.mxu0 %v1176
  %2166 = vmatpush1.bf16.msra.mxu0 %v1175
  %2167 = vmatprep.subr.bf16.mxu0 %v1180
  %2168 = vmatpush1.bf16.msra.mxu0 %v1179
  %2169 = vmatprep.subr.bf16.mxu0 %v1184
  %2170 = vmatpush1.bf16.msra.mxu0 %v1183
  %2171 = vmatprep.subr.bf16.mxu0 %v1188
  %2172 = vmatpush1.bf16.msra.mxu0 %v1187
  %2173 = vmatprep.subr.bf16.mxu0 %v1192
  %2174 = vmatpush1.bf16.msra.mxu0 %v1191
  %2175 = vmatprep.subr.bf16.mxu0 %v1196
  %2176 = vmatpush1.bf16.msra.mxu0 %v1195
  %2177 = vmatprep.subr.bf16.mxu0 %v1200
  %2178 = vmatpush1.bf16.msra.mxu0 %v1199
  %2179 = vmatprep.subr.bf16.mxu0 0
  %2180 = vmatpush1.bf16.msra.mxu0 0
  %2181 = vmatprep.subr.bf16.mxu0 0
  %2182 = vmatpush1.bf16.msra.mxu0 0
  %2183 = vmatprep.subr.bf16.mxu0 0
  %2184 = vmatpush1.bf16.msra.mxu0 0
  %2185 = vmatprep.subr.bf16.mxu0 0
  %2186 = vmatpush1.bf16.msra.mxu0 0
  %2187 = vmatprep.subr.bf16.mxu0 0
  %2188 = vmatpush1.bf16.msra.mxu0 0
  %2189 = vmatprep.subr.bf16.mxu0 0
  %2190 = vmatpush1.bf16.msra.mxu0 0
  %2191 = vmatprep.subr.bf16.mxu0 0
  %2192 = vmatpush1.bf16.msra.mxu0 0
  %2193 = vmatprep.subr.bf16.mxu0 0
  %2194 = vmatpush1.bf16.msra.mxu0 0
  %2195 = vmatprep.mubr.bf16.mxu0 0
  %2196 = vmatmul.mubr.bf16.gmra.mrb[0].mxu0 %v2039
  %v2197 = vpop.f32.mrb[0].mxu0
  %v2198 = vadd.f32 %v2116, %v2197
  %v2199 = vpop.f32.mrb[0].mxu0
  %v2200 = vadd.f32 %v2118, %v2199
  %v2201 = vpop.f32.mrb[0].mxu0
  %v2202 = vpop.f32.mrb[0].mxu0
  %2203 = vdwg.mxu0
  %v2204 = vadd.f32 %v2157, %v46
  %v2205 = vadd.f32 %v2159, %v47
  %v2206 = vadd.f32 %v2198, %v48
  %v2207 = vadd.f32 %v2200, %v49
  %v2208 = vxor.u32 %v2204, 2147483648
  %v2209 = vmul.f32 %v2208, 1.442695
  %v2210 = vpow.pop %v2209
  %v2211 = vadd.f32 %v2210, 1.0
  %v2212 = vrcp.pop %v2211
  %v2213 = vmul.f32 1.0, %v2212
  %v2214 = vxor.u32 %v2205, 2147483648
  %v2215 = vmul.f32 %v2214, 1.442695
  %v2216 = vpow.pop %v2215
  %v2217 = vadd.f32 %v2216, 1.0
  %v2218 = vrcp.pop %v2217
  %v2219 = vmul.f32 1.0, %v2218
  %v2220 = vtanh.pop %v2206
  %v2221 = vxor.u32 %v2207, 2147483648
  %v2222 = vmul.f32 %v2221, 1.442695
  %v2223 = vpow.pop %v2222
  %v2224 = vadd.f32 %v2223, 1.0
  %v2225 = vrcp.pop %v2224
  %v2226 = vmul.f32 1.0, %v2225
  %v2227 = vmul.f32 %v2219, %v1340
  %v2228 = vmul.f32 %v2213, %v2220
  %v2229 = vadd.f32 %v2227, %v2228
  %v2230 = vtanh.pop %v2229
  %v2231 = vmul.f32 %v2226, %v2230
  %v2232 = vpack.c.bf16 %v2231, %v2231
  %v2233 = vpack.c.bf16 %v1919, %v1919
  %2234 = vmatprep.subr.bf16.mxu0 %v1505
  %2235 = vmatpush1.bf16.msra.mxu0 %v1504
  %2236 = vmatprep.subr.bf16.mxu0 %v1509
  %2237 = vmatpush1.bf16.msra.mxu0 %v1508
  %2238 = vmatprep.subr.bf16.mxu0 %v1513
  %2239 = vmatpush1.bf16.msra.mxu0 %v1512
  %2240 = vmatprep.subr.bf16.mxu0 %v1517
  %2241 = vmatpush1.bf16.msra.mxu0 %v1516
  %2242 = vmatprep.subr.bf16.mxu0 %v1521
  %2243 = vmatpush1.bf16.msra.mxu0 %v1520
  %2244 = vmatprep.subr.bf16.mxu0 %v1525
  %2245 = vmatpush1.bf16.msra.mxu0 %v1524
  %2246 = vmatprep.subr.bf16.mxu0 %v1529
  %2247 = vmatpush1.bf16.msra.mxu0 %v1528
  %2248 = vmatprep.subr.bf16.mxu0 %v1533
  %2249 = vmatpush1.bf16.msra.mxu0 %v1532
  %2250 = vmatprep.subr.bf16.mxu0 0
  %2251 = vmatpush1.bf16.msra.mxu0 0
  %2252 = vmatprep.subr.bf16.mxu0 0
  %2253 = vmatpush1.bf16.msra.mxu0 0
  %2254 = vmatprep.subr.bf16.mxu0 0
  %2255 = vmatpush1.bf16.msra.mxu0 0
  %2256 = vmatprep.subr.bf16.mxu0 0
  %2257 = vmatpush1.bf16.msra.mxu0 0
  %2258 = vmatprep.subr.bf16.mxu0 0
  %2259 = vmatpush1.bf16.msra.mxu0 0
  %2260 = vmatprep.subr.bf16.mxu0 0
  %2261 = vmatpush1.bf16.msra.mxu0 0
  %2262 = vmatprep.subr.bf16.mxu0 0
  %2263 = vmatpush1.bf16.msra.mxu0 0
  %2264 = vmatprep.subr.bf16.mxu0 0
  %2265 = vmatpush1.bf16.msra.mxu0 0
  %2266 = vmatprep.mubr.bf16.mxu0 0
  %2267 = vmatmul.mubr.bf16.gmra.mrb[0].mxu0 %v2233
  %v2268 = vpop.f32.mrb[0].mxu0
  %v2269 = vadd.f32 0.0, %v2268
  %v2270 = vpop.f32.mrb[0].mxu0
  %v2271 = vadd.f32 0.0, %v2270
  %v2272 = vpop.f32.mrb[0].mxu0
  %v2273 = vpop.f32.mrb[0].mxu0
  %2274 = vdwg.mxu0
  %2275 = vmatprep.subr.bf16.mxu0 %v1507
  %2276 = vmatpush1.bf16.msra.mxu0 %v1506
  %2277 = vmatprep.subr.bf16.mxu0 %v1511
  %2278 = vmatpush1.bf16.msra.mxu0 %v1510
  %2279 = vmatprep.subr.bf16.mxu0 %v1515
  %2280 = vmatpush1.bf16.msra.mxu0 %v1514
  %2281 = vmatprep.subr.bf16.mxu0 %v1519
  %2282 = vmatpush1.bf16.msra.mxu0 %v1518
  %2283 = vmatprep.subr.bf16.mxu0 %v1523
  %2284 = vmatpush1.bf16.msra.mxu0 %v1522
  %2285 = vmatprep.subr.bf16.mxu0 %v1527
  %2286 = vmatpush1.bf16.msra.mxu0 %v1526
  %2287 = vmatprep.subr.bf16.mxu0 %v1531
  %2288 = vmatpush1.bf16.msra.mxu0 %v1530
  %2289 = vmatprep.subr.bf16.mxu0 %v1535
  %2290 = vmatpush1.bf16.msra.mxu0 %v1534
  %2291 = vmatprep.subr.bf16.mxu0 0
  %2292 = vmatpush1.bf16.msra.mxu0 0
  %2293 = vmatprep.subr.bf16.mxu0 0
  %2294 = vmatpush1.bf16.msra.mxu0 0
  %2295 = vmatprep.subr.bf16.mxu0 0
  %2296 = vmatpush1.bf16.msra.mxu0 0
  %2297 = vmatprep.subr.bf16.mxu0 0
  %2298 = vmatpush1.bf16.msra.mxu0 0
  %2299 = vmatprep.subr.bf16.mxu0 0
  %2300 = vmatpush1.bf16.msra.mxu0 0
  %2301 = vmatprep.subr.bf16.mxu0 0
  %2302 = vmatpush1.bf16.msra.mxu0 0
  %2303 = vmatprep.subr.bf16.mxu0 0
  %2304 = vmatpush1.bf16.msra.mxu0 0
  %2305 = vmatprep.subr.bf16.mxu0 0
  %2306 = vmatpush1.bf16.msra.mxu0 0
  %2307 = vmatprep.mubr.bf16.mxu0 0
  %2308 = vmatmul.mubr.bf16.gmra.mrb[0].mxu0 %v2233
  %v2309 = vpop.f32.mrb[0].mxu0
  %v2310 = vadd.f32 0.0, %v2309
  %v2311 = vpop.f32.mrb[0].mxu0
  %v2312 = vadd.f32 0.0, %v2311
  %v2313 = vpop.f32.mrb[0].mxu0
  %v2314 = vpop.f32.mrb[0].mxu0
  %2315 = vdwg.mxu0
  %2316 = vmatprep.subr.bf16.mxu0 %v1747
  %2317 = vmatpush1.bf16.msra.mxu0 %v1746
  %2318 = vmatprep.subr.bf16.mxu0 %v1751
  %2319 = vmatpush1.bf16.msra.mxu0 %v1750
  %2320 = vmatprep.subr.bf16.mxu0 %v1755
  %2321 = vmatpush1.bf16.msra.mxu0 %v1754
  %2322 = vmatprep.subr.bf16.mxu0 %v1759
  %2323 = vmatpush1.bf16.msra.mxu0 %v1758
  %2324 = vmatprep.subr.bf16.mxu0 %v1763
  %2325 = vmatpush1.bf16.msra.mxu0 %v1762
  %2326 = vmatprep.subr.bf16.mxu0 %v1767
  %2327 = vmatpush1.bf16.msra.mxu0 %v1766
  %2328 = vmatprep.subr.bf16.mxu0 %v1771
  %2329 = vmatpush1.bf16.msra.mxu0 %v1770
  %2330 = vmatprep.subr.bf16.mxu0 %v1775
  %2331 = vmatpush1.bf16.msra.mxu0 %v1774
  %2332 = vmatprep.subr.bf16.mxu0 0
  %2333 = vmatpush1.bf16.msra.mxu0 0
  %2334 = vmatprep.subr.bf16.mxu0 0
  %2335 = vmatpush1.bf16.msra.mxu0 0
  %2336 = vmatprep.subr.bf16.mxu0 0
  %2337 = vmatpush1.bf16.msra.mxu0 0
  %2338 = vmatprep.subr.bf16.mxu0 0
  %2339 = vmatpush1.bf16.msra.mxu0 0
  %2340 = vmatprep.subr.bf16.mxu0 0
  %2341 = vmatpush1.bf16.msra.mxu0 0
  %2342 = vmatprep.subr.bf16.mxu0 0
  %2343 = vmatpush1.bf16.msra.mxu0 0
  %2344 = vmatprep.subr.bf16.mxu0 0
  %2345 = vmatpush1.bf16.msra.mxu0 0
  %2346 = vmatprep.subr.bf16.mxu0 0
  %2347 = vmatpush1.bf16.msra.mxu0 0
  %2348 = vmatprep.mubr.bf16.mxu0 0
  %2349 = vmatmul.mubr.bf16.gmra.mrb[0].mxu0 %v2232
  %v2350 = vpop.f32.mrb[0].mxu0
  %v2351 = vadd.f32 %v2269, %v2350
  %v2352 = vpop.f32.mrb[0].mxu0
  %v2353 = vadd.f32 %v2271, %v2352
  %v2354 = vpop.f32.mrb[0].mxu0
  %v2355 = vpop.f32.mrb[0].mxu0
  %2356 = vdwg.mxu0
  %2357 = vmatprep.subr.bf16.mxu0 %v1749
  %2358 = vmatpush1.bf16.msra.mxu0 %v1748
  %2359 = vmatprep.subr.bf16.mxu0 %v1753
  %2360 = vmatpush1.bf16.msra.mxu0 %v1752
  %2361 = vmatprep.subr.bf16.mxu0 %v1757
  %2362 = vmatpush1.bf16.msra.mxu0 %v1756
  %2363 = vmatprep.subr.bf16.mxu0 %v1761
  %2364 = vmatpush1.bf16.msra.mxu0 %v1760
  %2365 = vmatprep.subr.bf16.mxu0 %v1765
  %2366 = vmatpush1.bf16.msra.mxu0 %v1764
  %2367 = vmatprep.subr.bf16.mxu0 %v1769
  %2368 = vmatpush1.bf16.msra.mxu0 %v1768
  %2369 = vmatprep.subr.bf16.mxu0 %v1773
  %2370 = vmatpush1.bf16.msra.mxu0 %v1772
  %2371 = vmatprep.subr.bf16.mxu0 %v1777
  %2372 = vmatpush1.bf16.msra.mxu0 %v1776
  %2373 = vmatprep.subr.bf16.mxu0 0
  %2374 = vmatpush1.bf16.msra.mxu0 0
  %2375 = vmatprep.subr.bf16.mxu0 0
  %2376 = vmatpush1.bf16.msra.mxu0 0
  %2377 = vmatprep.subr.bf16.mxu0 0
  %2378 = vmatpush1.bf16.msra.mxu0 0
  %2379 = vmatprep.subr.bf16.mxu0 0
  %2380 = vmatpush1.bf16.msra.mxu0 0
  %2381 = vmatprep.subr.bf16.mxu0 0
  %2382 = vmatpush1.bf16.msra.mxu0 0
  %2383 = vmatprep.subr.bf16.mxu0 0
  %2384 = vmatpush1.bf16.msra.mxu0 0
  %2385 = vmatprep.subr.bf16.mxu0 0
  %2386 = vmatpush1.bf16.msra.mxu0 0
  %2387 = vmatprep.subr.bf16.mxu0 0
  %2388 = vmatpush1.bf16.msra.mxu0 0
  %2389 = vmatprep.mubr.bf16.mxu0 0
  %2390 = vmatmul.mubr.bf16.gmra.mrb[0].mxu0 %v2232
  %v2391 = vpop.f32.mrb[0].mxu0
  %v2392 = vadd.f32 %v2310, %v2391
  %v2393 = vpop.f32.mrb[0].mxu0
  %v2394 = vadd.f32 %v2312, %v2393
  %v2395 = vpop.f32.mrb[0].mxu0
  %v2396 = vpop.f32.mrb[0].mxu0
  %2397 = vdwg.mxu0
  %v2398 = vadd.f32 %v2351, %v50
  %v2399 = vadd.f32 %v2353, %v51
  %v2400 = vadd.f32 %v2392, %v52
  %v2401 = vadd.f32 %v2394, %v53
  %v2402 = vxor.u32 %v2398, 2147483648
  %v2403 = vmul.f32 %v2402, 1.442695
  %v2404 = vpow.pop %v2403
  %v2405 = vadd.f32 %v2404, 1.0
  %v2406 = vrcp.pop %v2405
  %v2407 = vmul.f32 1.0, %v2406
  %v2408 = vxor.u32 %v2399, 2147483648
  %v2409 = vmul.f32 %v2408, 1.442695
  %v2410 = vpow.pop %v2409
  %v2411 = vadd.f32 %v2410, 1.0
  %v2412 = vrcp.pop %v2411
  %v2413 = vmul.f32 1.0, %v2412
  %v2414 = vtanh.pop %v2400
  %v2415 = vxor.u32 %v2401, 2147483648
  %v2416 = vmul.f32 %v2415, 1.442695
  %v2417 = vpow.pop %v2416
  %v2418 = vadd.f32 %v2417, 1.0
  %v2419 = vrcp.pop %v2418
  %v2420 = vmul.f32 1.0, %v2419
  %v2421 = vmul.f32 %v2413, %v1917
  %v2422 = vmul.f32 %v2407, %v2414
  %v2423 = vadd.f32 %v2421, %v2422
  %v2424 = vtanh.pop %v2423
  %v2425 = vmul.f32 %v2420, %v2424
  %s2426 = scalar_lea.vmem [#allocation2], 64
  %v2427 = vld [vmem:[%s2426] sm:$0xff]
  %v2428 = vld [vmem:[%s2426 + $0x8] sm:$0xff]
  %v2429 = vld [vmem:[%s2426 + $0x10] sm:$0xff]
  %v2430 = vld [vmem:[%s2426 + $0x18] sm:$0xff]
  %2431 = vmatprep.subr.bf16.mxu0 %v589
  %2432 = vmatpush1.bf16.msra.mxu0 %v588
  %2433 = vmatprep.subr.bf16.mxu0 %v593
  %2434 = vmatpush1.bf16.msra.mxu0 %v592
  %2435 = vmatprep.subr.bf16.mxu0 %v597
  %2436 = vmatpush1.bf16.msra.mxu0 %v596
  %2437 = vmatprep.subr.bf16.mxu0 %v601
  %2438 = vmatpush1.bf16.msra.mxu0 %v600
  %2439 = vmatprep.subr.bf16.mxu0 %v605
  %2440 = vmatpush1.bf16.msra.mxu0 %v604
  %2441 = vmatprep.subr.bf16.mxu0 %v609
  %2442 = vmatpush1.bf16.msra.mxu0 %v608
  %2443 = vmatprep.subr.bf16.mxu0 %v613
  %2444 = vmatpush1.bf16.msra.mxu0 %v612
  %2445 = vmatprep.subr.bf16.mxu0 %v617
  %2446 = vmatpush1.bf16.msra.mxu0 %v616
  %2447 = vmatprep.subr.bf16.mxu0 0
  %2448 = vmatpush1.bf16.msra.mxu0 0
  %2449 = vmatprep.subr.bf16.mxu0 0
  %2450 = vmatpush1.bf16.msra.mxu0 0
  %2451 = vmatprep.subr.bf16.mxu0 0
  %2452 = vmatpush1.bf16.msra.mxu0 0
  %2453 = vmatprep.subr.bf16.mxu0 0
  %2454 = vmatpush1.bf16.msra.mxu0 0
  %2455 = vmatprep.subr.bf16.mxu0 0
  %2456 = vmatpush1.bf16.msra.mxu0 0
  %2457 = vmatprep.subr.bf16.mxu0 0
  %2458 = vmatpush1.bf16.msra.mxu0 0
  %2459 = vmatprep.subr.bf16.mxu0 0
  %2460 = vmatpush1.bf16.msra.mxu0 0
  %2461 = vmatprep.subr.bf16.mxu0 0
  %2462 = vmatpush1.bf16.msra.mxu0 0
  %2463 = vmatprep.mubr.bf16.mxu0 0
  %2464 = vmatmul.mubr.bf16.gmra.mrb[0].mxu0 %v2039
  %v2465 = vpop.f32.mrb[0].mxu0
  %v2466 = vadd.f32 0.0, %v2465
  %v2467 = vpop.f32.mrb[0].mxu0
  %v2468 = vadd.f32 0.0, %v2467
  %v2469 = vpop.f32.mrb[0].mxu0
  %v2470 = vpop.f32.mrb[0].mxu0
  %2471 = vdwg.mxu0
  %2472 = vmatprep.subr.bf16.mxu0 %v591
  %2473 = vmatpush1.bf16.msra.mxu0 %v590
  %2474 = vmatprep.subr.bf16.mxu0 %v595
  %2475 = vmatpush1.bf16.msra.mxu0 %v594
  %2476 = vmatprep.subr.bf16.mxu0 %v599
  %2477 = vmatpush1.bf16.msra.mxu0 %v598
  %2478 = vmatprep.subr.bf16.mxu0 %v603
  %2479 = vmatpush1.bf16.msra.mxu0 %v602
  %2480 = vmatprep.subr.bf16.mxu0 %v607
  %2481 = vmatpush1.bf16.msra.mxu0 %v606
  %2482 = vmatprep.subr.bf16.mxu0 %v611
  %2483 = vmatpush1.bf16.msra.mxu0 %v610
  %2484 = vmatprep.subr.bf16.mxu0 %v615
  %2485 = vmatpush1.bf16.msra.mxu0 %v614
  %2486 = vmatprep.subr.bf16.mxu0 %v619
  %2487 = vmatpush1.bf16.msra.mxu0 %v618
  %2488 = vmatprep.subr.bf16.mxu0 0
  %2489 = vmatpush1.bf16.msra.mxu0 0
  %2490 = vmatprep.subr.bf16.mxu0 0
  %2491 = vmatpush1.bf16.msra.mxu0 0
  %2492 = vmatprep.subr.bf16.mxu0 0
  %2493 = vmatpush1.bf16.msra.mxu0 0
  %2494 = vmatprep.subr.bf16.mxu0 0
  %2495 = vmatpush1.bf16.msra.mxu0 0
  %2496 = vmatprep.subr.bf16.mxu0 0
  %2497 = vmatpush1.bf16.msra.mxu0 0
  %2498 = vmatprep.subr.bf16.mxu0 0
  %2499 = vmatpush1.bf16.msra.mxu0 0
  %2500 = vmatprep.subr.bf16.mxu0 0
  %2501 = vmatpush1.bf16.msra.mxu0 0
  %2502 = vmatprep.subr.bf16.mxu0 0
  %2503 = vmatpush1.bf16.msra.mxu0 0
  %2504 = vmatprep.mubr.bf16.mxu0 0
  %2505 = vmatmul.mubr.bf16.gmra.mrb[0].mxu0 %v2039
  %v2506 = vpop.f32.mrb[0].mxu0
  %v2507 = vadd.f32 0.0, %v2506
  %v2508 = vpop.f32.mrb[0].mxu0
  %v2509 = vadd.f32 0.0, %v2508
  %v2510 = vpop.f32.mrb[0].mxu0
  %v2511 = vpop.f32.mrb[0].mxu0
  %2512 = vdwg.mxu0
  %v2513 = vadd.f32 %v2427, %v2466
  %v2514 = vadd.f32 %v2428, %v2468
  %v2515 = vadd.f32 %v2429, %v2507
  %v2516 = vadd.f32 %v2430, %v2509
  %v2517 = vadd.f32 %v2513, %v42
  %v2518 = vadd.f32 %v2514, %v43
  %v2519 = vadd.f32 %v2515, %v44
  %v2520 = vadd.f32 %v2516, %v45
  %v2521 = vxor.u32 %v2517, 2147483648
  %v2522 = vmul.f32 %v2521, 1.442695
  %v2523 = vpow.pop %v2522
  %v2524 = vadd.f32 %v2523, 1.0
  %v2525 = vrcp.pop %v2524
  %v2526 = vmul.f32 1.0, %v2525
  %v2527 = vxor.u32 %v2518, 2147483648
  %v2528 = vmul.f32 %v2527, 1.442695
  %v2529 = vpow.pop %v2528
  %v2530 = vadd.f32 %v2529, 1.0
  %v2531 = vrcp.pop %v2530
  %v2532 = vmul.f32 1.0, %v2531
  %v2533 = vtanh.pop %v2519
  %v2534 = vxor.u32 %v2520, 2147483648
  %v2535 = vmul.f32 %v2534, 1.442695
  %v2536 = vpow.pop %v2535
  %v2537 = vadd.f32 %v2536, 1.0
  %v2538 = vrcp.pop %v2537
  %v2539 = vmul.f32 1.0, %v2538
  %v2540 = vmul.f32 %v2532, %v2036
  %v2541 = vmul.f32 %v2526, %v2533
  %v2542 = vadd.f32 %v2540, %v2541
  %v2543 = vtanh.pop %v2542
  %v2544 = vmul.f32 %v2539, %v2543
  %v2545 = vpack.c.bf16 %v2544, %v2544
  %2546 = vmatprep.subr.bf16.mxu0 %v928
  %2547 = vmatpush1.bf16.msra.mxu0 %v927
  %2548 = vmatprep.subr.bf16.mxu0 %v932
  %2549 = vmatpush1.bf16.msra.mxu0 %v931
  %2550 = vmatprep.subr.bf16.mxu0 %v936
  %2551 = vmatpush1.bf16.msra.mxu0 %v935
  %2552 = vmatprep.subr.bf16.mxu0 %v940
  %2553 = vmatpush1.bf16.msra.mxu0 %v939
  %2554 = vmatprep.subr.bf16.mxu0 %v944
  %2555 = vmatpush1.bf16.msra.mxu0 %v943
  %2556 = vmatprep.subr.bf16.mxu0 %v948
  %2557 = vmatpush1.bf16.msra.mxu0 %v947
  %2558 = vmatprep.subr.bf16.mxu0 %v952
  %2559 = vmatpush1.bf16.msra.mxu0 %v951
  %2560 = vmatprep.subr.bf16.mxu0 %v956
  %2561 = vmatpush1.bf16.msra.mxu0 %v955
  %2562 = vmatprep.subr.bf16.mxu0 0
  %2563 = vmatpush1.bf16.msra.mxu0 0
  %2564 = vmatprep.subr.bf16.mxu0 0
  %2565 = vmatpush1.bf16.msra.mxu0 0
  %2566 = vmatprep.subr.bf16.mxu0 0
  %2567 = vmatpush1.bf16.msra.mxu0 0
  %2568 = vmatprep.subr.bf16.mxu0 0
  %2569 = vmatpush1.bf16.msra.mxu0 0
  %2570 = vmatprep.subr.bf16.mxu0 0
  %2571 = vmatpush1.bf16.msra.mxu0 0
  %2572 = vmatprep.subr.bf16.mxu0 0
  %2573 = vmatpush1.bf16.msra.mxu0 0
  %2574 = vmatprep.subr.bf16.mxu0 0
  %2575 = vmatpush1.bf16.msra.mxu0 0
  %2576 = vmatprep.subr.bf16.mxu0 0
  %2577 = vmatpush1.bf16.msra.mxu0 0
  %2578 = vmatprep.mubr.bf16.mxu0 0
  %2579 = vmatmul.mubr.bf16.gmra.mrb[0].mxu0 %v2232
  %v2580 = vpop.f32.mrb[0].mxu0
  %v2581 = vadd.f32 0.0, %v2580
  %v2582 = vpop.f32.mrb[0].mxu0
  %v2583 = vadd.f32 0.0, %v2582
  %v2584 = vpop.f32.mrb[0].mxu0
  %v2585 = vpop.f32.mrb[0].mxu0
  %2586 = vdwg.mxu0
  %2587 = vmatprep.subr.bf16.mxu0 %v930
  %2588 = vmatpush1.bf16.msra.mxu0 %v929
  %2589 = vmatprep.subr.bf16.mxu0 %v934
  %2590 = vmatpush1.bf16.msra.mxu0 %v933
  %2591 = vmatprep.subr.bf16.mxu0 %v938
  %2592 = vmatpush1.bf16.msra.mxu0 %v937
  %2593 = vmatprep.subr.bf16.mxu0 %v942
  %2594 = vmatpush1.bf16.msra.mxu0 %v941
  %2595 = vmatprep.subr.bf16.mxu0 %v946
  %2596 = vmatpush1.bf16.msra.mxu0 %v945
  %2597 = vmatprep.subr.bf16.mxu0 %v950
  %2598 = vmatpush1.bf16.msra.mxu0 %v949
  %2599 = vmatprep.subr.bf16.mxu0 %v954
  %2600 = vmatpush1.bf16.msra.mxu0 %v953
  %2601 = vmatprep.subr.bf16.mxu0 %v958
  %2602 = vmatpush1.bf16.msra.mxu0 %v957
  %2603 = vmatprep.subr.bf16.mxu0 0
  %2604 = vmatpush1.bf16.msra.mxu0 0
  %2605 = vmatprep.subr.bf16.mxu0 0
  %2606 = vmatpush1.bf16.msra.mxu0 0
  %2607 = vmatprep.subr.bf16.mxu0 0
  %2608 = vmatpush1.bf16.msra.mxu0 0
  %2609 = vmatprep.subr.bf16.mxu0 0
  %2610 = vmatpush1.bf16.msra.mxu0 0
  %2611 = vmatprep.subr.bf16.mxu0 0
  %2612 = vmatpush1.bf16.msra.mxu0 0
  %2613 = vmatprep.subr.bf16.mxu0 0
  %2614 = vmatpush1.bf16.msra.mxu0 0
  %2615 = vmatprep.subr.bf16.mxu0 0
  %2616 = vmatpush1.bf16.msra.mxu0 0
  %2617 = vmatprep.subr.bf16.mxu0 0
  %2618 = vmatpush1.bf16.msra.mxu0 0
  %2619 = vmatprep.mubr.bf16.mxu0 0
  %2620 = vmatmul.mubr.bf16.gmra.mrb[0].mxu0 %v2232
  %v2621 = vpop.f32.mrb[0].mxu0
  %v2622 = vadd.f32 0.0, %v2621
  %v2623 = vpop.f32.mrb[0].mxu0
  %v2624 = vadd.f32 0.0, %v2623
  %v2625 = vpop.f32.mrb[0].mxu0
  %v2626 = vpop.f32.mrb[0].mxu0
  %2627 = vdwg.mxu0
  %2628 = vmatprep.subr.bf16.mxu0 %v1170
  %2629 = vmatpush1.bf16.msra.mxu0 %v1169
  %2630 = vmatprep.subr.bf16.mxu0 %v1174
  %2631 = vmatpush1.bf16.msra.mxu0 %v1173
  %2632 = vmatprep.subr.bf16.mxu0 %v1178
  %2633 = vmatpush1.bf16.msra.mxu0 %v1177
  %2634 = vmatprep.subr.bf16.mxu0 %v1182
  %2635 = vmatpush1.bf16.msra.mxu0 %v1181
  %2636 = vmatprep.subr.bf16.mxu0 %v1186
  %2637 = vmatpush1.bf16.msra.mxu0 %v1185
  %2638 = vmatprep.subr.bf16.mxu0 %v1190
  %2639 = vmatpush1.bf16.msra.mxu0 %v1189
  %2640 = vmatprep.subr.bf16.mxu0 %v1194
  %2641 = vmatpush1.bf16.msra.mxu0 %v1193
  %2642 = vmatprep.subr.bf16.mxu0 %v1198
  %2643 = vmatpush1.bf16.msra.mxu0 %v1197
  %2644 = vmatprep.subr.bf16.mxu0 0
  %2645 = vmatpush1.bf16.msra.mxu0 0
  %2646 = vmatprep.subr.bf16.mxu0 0
  %2647 = vmatpush1.bf16.msra.mxu0 0
  %2648 = vmatprep.subr.bf16.mxu0 0
  %2649 = vmatpush1.bf16.msra.mxu0 0
  %2650 = vmatprep.subr.bf16.mxu0 0
  %2651 = vmatpush1.bf16.msra.mxu0 0
  %2652 = vmatprep.subr.bf16.mxu0 0
  %2653 = vmatpush1.bf16.msra.mxu0 0
  %2654 = vmatprep.subr.bf16.mxu0 0
  %2655 = vmatpush1.bf16.msra.mxu0 0
  %2656 = vmatprep.subr.bf16.mxu0 0
  %2657 = vmatpush1.bf16.msra.mxu0 0
  %2658 = vmatprep.subr.bf16.mxu0 0
  %2659 = vmatpush1.bf16.msra.mxu0 0
  %2660 = vmatprep.mubr.bf16.mxu0 0
  %2661 = vmatmul.mubr.bf16.gmra.mrb[0].mxu0 %v2545
  %v2662 = vpop.f32.mrb[0].mxu0
  %v2663 = vadd.f32 %v2581, %v2662
  %v2664 = vpop.f32.mrb[0].mxu0
  %v2665 = vadd.f32 %v2583, %v2664
  %v2666 = vpop.f32.mrb[0].mxu0
  %v2667 = vpop.f32.mrb[0].mxu0
  %2668 = vdwg.mxu0
  %2669 = vmatprep.subr.bf16.mxu0 %v1172
  %2670 = vmatpush1.bf16.msra.mxu0 %v1171
  %2671 = vmatprep.subr.bf16.mxu0 %v1176
  %2672 = vmatpush1.bf16.msra.mxu0 %v1175
  %2673 = vmatprep.subr.bf16.mxu0 %v1180
  %2674 = vmatpush1.bf16.msra.mxu0 %v1179
  %2675 = vmatprep.subr.bf16.mxu0 %v1184
  %2676 = vmatpush1.bf16.msra.mxu0 %v1183
  %2677 = vmatprep.subr.bf16.mxu0 %v1188
  %2678 = vmatpush1.bf16.msra.mxu0 %v1187
  %2679 = vmatprep.subr.bf16.mxu0 %v1192
  %2680 = vmatpush1.bf16.msra.mxu0 %v1191
  %2681 = vmatprep.subr.bf16.mxu0 %v1196
  %2682 = vmatpush1.bf16.msra.mxu0 %v1195
  %2683 = vmatprep.subr.bf16.mxu0 %v1200
  %2684 = vmatpush1.bf16.msra.mxu0 %v1199
  %2685 = vmatprep.subr.bf16.mxu0 0
  %2686 = vmatpush1.bf16.msra.mxu0 0
  %2687 = vmatprep.subr.bf16.mxu0 0
  %2688 = vmatpush1.bf16.msra.mxu0 0
  %2689 = vmatprep.subr.bf16.mxu0 0
  %2690 = vmatpush1.bf16.msra.mxu0 0
  %2691 = vmatprep.subr.bf16.mxu0 0
  %2692 = vmatpush1.bf16.msra.mxu0 0
  %2693 = vmatprep.subr.bf16.mxu0 0
  %2694 = vmatpush1.bf16.msra.mxu0 0
  %2695 = vmatprep.subr.bf16.mxu0 0
  %2696 = vmatpush1.bf16.msra.mxu0 0
  %2697 = vmatprep.subr.bf16.mxu0 0
  %2698 = vmatpush1.bf16.msra.mxu0 0
  %2699 = vmatprep.subr.bf16.mxu0 0
  %2700 = vmatpush1.bf16.msra.mxu0 0
  %2701 = vmatprep.mubr.bf16.mxu0 0
  %2702 = vmatmul.mubr.bf16.gmra.mrb[0].mxu0 %v2545
  %v2703 = vpop.f32.mrb[0].mxu0
  %v2704 = vadd.f32 %v2622, %v2703
  %v2705 = vpop.f32.mrb[0].mxu0
  %v2706 = vadd.f32 %v2624, %v2705
  %v2707 = vpop.f32.mrb[0].mxu0
  %v2708 = vpop.f32.mrb[0].mxu0
  %2709 = vdwg.mxu0
  %v2710 = vadd.f32 %v2663, %v46
  %v2711 = vadd.f32 %v2665, %v47
  %v2712 = vadd.f32 %v2704, %v48
  %v2713 = vadd.f32 %v2706, %v49
  %v2714 = vxor.u32 %v2710, 2147483648
  %v2715 = vmul.f32 %v2714, 1.442695
  %v2716 = vpow.pop %v2715
  %v2717 = vadd.f32 %v2716, 1.0
  %v2718 = vrcp.pop %v2717
  %v2719 = vmul.f32 1.0, %v2718
  %v2720 = vxor.u32 %v2711, 2147483648
  %v2721 = vmul.f32 %v2720, 1.442695
  %v2722 = vpow.pop %v2721
  %v2723 = vadd.f32 %v2722, 1.0
  %v2724 = vrcp.pop %v2723
  %v2725 = vmul.f32 1.0, %v2724
  %v2726 = vtanh.pop %v2712
  %v2727 = vxor.u32 %v2713, 2147483648
  %v2728 = vmul.f32 %v2727, 1.442695
  %v2729 = vpow.pop %v2728
  %v2730 = vadd.f32 %v2729, 1.0
  %v2731 = vrcp.pop %v2730
  %v2732 = vmul.f32 1.0, %v2731
  %v2733 = vmul.f32 %v2725, %v2229
  %v2734 = vmul.f32 %v2719, %v2726
  %v2735 = vadd.f32 %v2733, %v2734
  %v2736 = vtanh.pop %v2735
  %v2737 = vmul.f32 %v2732, %v2736
  %v2738 = vpack.c.bf16 %v2737, %v2737
  %v2739 = vpack.c.bf16 %v2425, %v2425
  %2740 = vmatprep.subr.bf16.mxu0 %v1505
  %2741 = vmatpush1.bf16.msra.mxu0 %v1504
  %2742 = vmatprep.subr.bf16.mxu0 %v1509
  %2743 = vmatpush1.bf16.msra.mxu0 %v1508
  %2744 = vmatprep.subr.bf16.mxu0 %v1513
  %2745 = vmatpush1.bf16.msra.mxu0 %v1512
  %2746 = vmatprep.subr.bf16.mxu0 %v1517
  %2747 = vmatpush1.bf16.msra.mxu0 %v1516
  %2748 = vmatprep.subr.bf16.mxu0 %v1521
  %2749 = vmatpush1.bf16.msra.mxu0 %v1520
  %2750 = vmatprep.subr.bf16.mxu0 %v1525
  %2751 = vmatpush1.bf16.msra.mxu0 %v1524
  %2752 = vmatprep.subr.bf16.mxu0 %v1529
  %2753 = vmatpush1.bf16.msra.mxu0 %v1528
  %2754 = vmatprep.subr.bf16.mxu0 %v1533
  %2755 = vmatpush1.bf16.msra.mxu0 %v1532
  %2756 = vmatprep.subr.bf16.mxu0 0
  %2757 = vmatpush1.bf16.msra.mxu0 0
  %2758 = vmatprep.subr.bf16.mxu0 0
  %2759 = vmatpush1.bf16.msra.mxu0 0
  %2760 = vmatprep.subr.bf16.mxu0 0
  %2761 = vmatpush1.bf16.msra.mxu0 0
  %2762 = vmatprep.subr.bf16.mxu0 0
  %2763 = vmatpush1.bf16.msra.mxu0 0
  %2764 = vmatprep.subr.bf16.mxu0 0
  %2765 = vmatpush1.bf16.msra.mxu0 0
  %2766 = vmatprep.subr.bf16.mxu0 0
  %2767 = vmatpush1.bf16.msra.mxu0 0
  %2768 = vmatprep.subr.bf16.mxu0 0
  %2769 = vmatpush1.bf16.msra.mxu0 0
  %2770 = vmatprep.subr.bf16.mxu0 0
  %2771 = vmatpush1.bf16.msra.mxu0 0
  %2772 = vmatprep.mubr.bf16.mxu0 0
  %2773 = vmatmul.mubr.bf16.gmra.mrb[0].mxu0 %v2739
  %v2774 = vpop.f32.mrb[0].mxu0
  %v2775 = vadd.f32 0.0, %v2774
  %v2776 = vpop.f32.mrb[0].mxu0
  %v2777 = vadd.f32 0.0, %v2776
  %v2778 = vpop.f32.mrb[0].mxu0
  %v2779 = vpop.f32.mrb[0].mxu0
  %2780 = vdwg.mxu0
  %2781 = vmatprep.subr.bf16.mxu0 %v1507
  %2782 = vmatpush1.bf16.msra.mxu0 %v1506
  %2783 = vmatprep.subr.bf16.mxu0 %v1511
  %2784 = vmatpush1.bf16.msra.mxu0 %v1510
  %2785 = vmatprep.subr.bf16.mxu0 %v1515
  %2786 = vmatpush1.bf16.msra.mxu0 %v1514
  %2787 = vmatprep.subr.bf16.mxu0 %v1519
  %2788 = vmatpush1.bf16.msra.mxu0 %v1518
  %2789 = vmatprep.subr.bf16.mxu0 %v1523
  %2790 = vmatpush1.bf16.msra.mxu0 %v1522
  %2791 = vmatprep.subr.bf16.mxu0 %v1527
  %2792 = vmatpush1.bf16.msra.mxu0 %v1526
  %2793 = vmatprep.subr.bf16.mxu0 %v1531
  %2794 = vmatpush1.bf16.msra.mxu0 %v1530
  %2795 = vmatprep.subr.bf16.mxu0 %v1535
  %2796 = vmatpush1.bf16.msra.mxu0 %v1534
  %2797 = vmatprep.subr.bf16.mxu0 0
  %2798 = vmatpush1.bf16.msra.mxu0 0
  %2799 = vmatprep.subr.bf16.mxu0 0
  %2800 = vmatpush1.bf16.msra.mxu0 0
  %2801 = vmatprep.subr.bf16.mxu0 0
  %2802 = vmatpush1.bf16.msra.mxu0 0
  %2803 = vmatprep.subr.bf16.mxu0 0
  %2804 = vmatpush1.bf16.msra.mxu0 0
  %2805 = vmatprep.subr.bf16.mxu0 0
  %2806 = vmatpush1.bf16.msra.mxu0 0
  %2807 = vmatprep.subr.bf16.mxu0 0
  %2808 = vmatpush1.bf16.msra.mxu0 0
  %2809 = vmatprep.subr.bf16.mxu0 0
  %2810 = vmatpush1.bf16.msra.mxu0 0
  %2811 = vmatprep.subr.bf16.mxu0 0
  %2812 = vmatpush1.bf16.msra.mxu0 0
  %2813 = vmatprep.mubr.bf16.mxu0 0
  %2814 = vmatmul.mubr.bf16.gmra.mrb[0].mxu0 %v2739
  %v2815 = vpop.f32.mrb[0].mxu0
  %v2816 = vadd.f32 0.0, %v2815
  %v2817 = vpop.f32.mrb[0].mxu0
  %v2818 = vadd.f32 0.0, %v2817
  %v2819 = vpop.f32.mrb[0].mxu0
  %v2820 = vpop.f32.mrb[0].mxu0
  %2821 = vdwg.mxu0
  %2822 = vmatprep.subr.bf16.mxu0 %v1747
  %2823 = vmatpush1.bf16.msra.mxu0 %v1746
  %2824 = vmatprep.subr.bf16.mxu0 %v1751
  %2825 = vmatpush1.bf16.msra.mxu0 %v1750
  %2826 = vmatprep.subr.bf16.mxu0 %v1755
  %2827 = vmatpush1.bf16.msra.mxu0 %v1754
  %2828 = vmatprep.subr.bf16.mxu0 %v1759
  %2829 = vmatpush1.bf16.msra.mxu0 %v1758
  %2830 = vmatprep.subr.bf16.mxu0 %v1763
  %2831 = vmatpush1.bf16.msra.mxu0 %v1762
  %2832 = vmatprep.subr.bf16.mxu0 %v1767
  %2833 = vmatpush1.bf16.msra.mxu0 %v1766
  %2834 = vmatprep.subr.bf16.mxu0 %v1771
  %2835 = vmatpush1.bf16.msra.mxu0 %v1770
  %2836 = vmatprep.subr.bf16.mxu0 %v1775
  %2837 = vmatpush1.bf16.msra.mxu0 %v1774
  %2838 = vmatprep.subr.bf16.mxu0 0
  %2839 = vmatpush1.bf16.msra.mxu0 0
  %2840 = vmatprep.subr.bf16.mxu0 0
  %2841 = vmatpush1.bf16.msra.mxu0 0
  %2842 = vmatprep.subr.bf16.mxu0 0
  %2843 = vmatpush1.bf16.msra.mxu0 0
  %2844 = vmatprep.subr.bf16.mxu0 0
  %2845 = vmatpush1.bf16.msra.mxu0 0
  %2846 = vmatprep.subr.bf16.mxu0 0
  %2847 = vmatpush1.bf16.msra.mxu0 0
  %2848 = vmatprep.subr.bf16.mxu0 0
  %2849 = vmatpush1.bf16.msra.mxu0 0
  %2850 = vmatprep.subr.bf16.mxu0 0
  %2851 = vmatpush1.bf16.msra.mxu0 0
  %2852 = vmatprep.subr.bf16.mxu0 0
  %2853 = vmatpush1.bf16.msra.mxu0 0
  %2854 = vmatprep.mubr.bf16.mxu0 0
  %2855 = vmatmul.mubr.bf16.gmra.mrb[0].mxu0 %v2738
  %v2856 = vpop.f32.mrb[0].mxu0
  %v2857 = vadd.f32 %v2775, %v2856
  %v2858 = vpop.f32.mrb[0].mxu0
  %v2859 = vadd.f32 %v2777, %v2858
  %v2860 = vpop.f32.mrb[0].mxu0
  %v2861 = vpop.f32.mrb[0].mxu0
  %2862 = vdwg.mxu0
  %2863 = vmatprep.subr.bf16.mxu0 %v1749
  %2864 = vmatpush1.bf16.msra.mxu0 %v1748
  %2865 = vmatprep.subr.bf16.mxu0 %v1753
  %2866 = vmatpush1.bf16.msra.mxu0 %v1752
  %2867 = vmatprep.subr.bf16.mxu0 %v1757
  %2868 = vmatpush1.bf16.msra.mxu0 %v1756
  %2869 = vmatprep.subr.bf16.mxu0 %v1761
  %2870 = vmatpush1.bf16.msra.mxu0 %v1760
  %2871 = vmatprep.subr.bf16.mxu0 %v1765
  %2872 = vmatpush1.bf16.msra.mxu0 %v1764
  %2873 = vmatprep.subr.bf16.mxu0 %v1769
  %2874 = vmatpush1.bf16.msra.mxu0 %v1768
  %2875 = vmatprep.subr.bf16.mxu0 %v1773
  %2876 = vmatpush1.bf16.msra.mxu0 %v1772
  %2877 = vmatprep.subr.bf16.mxu0 %v1777
  %2878 = vmatpush1.bf16.msra.mxu0 %v1776
  %2879 = vmatprep.subr.bf16.mxu0 0
  %2880 = vmatpush1.bf16.msra.mxu0 0
  %2881 = vmatprep.subr.bf16.mxu0 0
  %2882 = vmatpush1.bf16.msra.mxu0 0
  %2883 = vmatprep.subr.bf16.mxu0 0
  %2884 = vmatpush1.bf16.msra.mxu0 0
  %2885 = vmatprep.subr.bf16.mxu0 0
  %2886 = vmatpush1.bf16.msra.mxu0 0
  %2887 = vmatprep.subr.bf16.mxu0 0
  %2888 = vmatpush1.bf16.msra.mxu0 0
  %2889 = vmatprep.subr.bf16.mxu0 0
  %2890 = vmatpush1.bf16.msra.mxu0 0
  %2891 = vmatprep.subr.bf16.mxu0 0
  %2892 = vmatpush1.bf16.msra.mxu0 0
  %2893 = vmatprep.subr.bf16.mxu0 0
  %2894 = vmatpush1.bf16.msra.mxu0 0
  %2895 = vmatprep.mubr.bf16.mxu0 0
  %2896 = vmatmul.mubr.bf16.gmra.mrb[0].mxu0 %v2738
  %v2897 = vpop.f32.mrb[0].mxu0
  %v2898 = vadd.f32 %v2816, %v2897
  %v2899 = vpop.f32.mrb[0].mxu0
  %v2900 = vadd.f32 %v2818, %v2899
  %v2901 = vpop.f32.mrb[0].mxu0
  %v2902 = vpop.f32.mrb[0].mxu0
  %2903 = vdwg.mxu0
  %v2904 = vadd.f32 %v2857, %v50
  %v2905 = vadd.f32 %v2859, %v51
  %v2906 = vadd.f32 %v2898, %v52
  %v2907 = vadd.f32 %v2900, %v53
  %v2908 = vxor.u32 %v2904, 2147483648
  %v2909 = vmul.f32 %v2908, 1.442695
  %v2910 = vpow.pop %v2909
  %v2911 = vadd.f32 %v2910, 1.0
  %v2912 = vrcp.pop %v2911
  %v2913 = vmul.f32 1.0, %v2912
  %v2914 = vxor.u32 %v2905, 2147483648
  %v2915 = vmul.f32 %v2914, 1.442695
  %v2916 = vpow.pop %v2915
  %v2917 = vadd.f32 %v2916, 1.0
  %v2918 = vrcp.pop %v2917
  %v2919 = vmul.f32 1.0, %v2918
  %v2920 = vtanh.pop %v2906
  %v2921 = vxor.u32 %v2907, 2147483648
  %v2922 = vmul.f32 %v2921, 1.442695
  %v2923 = vpow.pop %v2922
  %v2924 = vadd.f32 %v2923, 1.0
  %v2925 = vrcp.pop %v2924
  %v2926 = vmul.f32 1.0, %v2925
  %v2927 = vmul.f32 %v2919, %v2423
  %v2928 = vmul.f32 %v2913, %v2920
  %v2929 = vadd.f32 %v2927, %v2928
  %v2930 = vtanh.pop %v2929
  %v2931 = vmul.f32 %v2926, %v2930
  %s2932 = scalar_lea.vmem [#allocation2], 96
  %v2933 = vld [vmem:[%s2932] sm:$0xff]
  %v2934 = vld [vmem:[%s2932 + $0x8] sm:$0xff]
  %v2935 = vld [vmem:[%s2932 + $0x10] sm:$0xff]
  %v2936 = vld [vmem:[%s2932 + $0x18] sm:$0xff]
  %2937 = vmatprep.subr.bf16.mxu0 %v589
  %2938 = vmatpush1.bf16.msra.mxu0 %v588
  %2939 = vmatprep.subr.bf16.mxu0 %v593
  %2940 = vmatpush1.bf16.msra.mxu0 %v592
  %2941 = vmatprep.subr.bf16.mxu0 %v597
  %2942 = vmatpush1.bf16.msra.mxu0 %v596
  %2943 = vmatprep.subr.bf16.mxu0 %v601
  %2944 = vmatpush1.bf16.msra.mxu0 %v600
  %2945 = vmatprep.subr.bf16.mxu0 %v605
  %2946 = vmatpush1.bf16.msra.mxu0 %v604
  %2947 = vmatprep.subr.bf16.mxu0 %v609
  %2948 = vmatpush1.bf16.msra.mxu0 %v608
  %2949 = vmatprep.subr.bf16.mxu0 %v613
  %2950 = vmatpush1.bf16.msra.mxu0 %v612
  %2951 = vmatprep.subr.bf16.mxu0 %v617
  %2952 = vmatpush1.bf16.msra.mxu0 %v616
  %2953 = vmatprep.subr.bf16.mxu0 0
  %2954 = vmatpush1.bf16.msra.mxu0 0
  %2955 = vmatprep.subr.bf16.mxu0 0
  %2956 = vmatpush1.bf16.msra.mxu0 0
  %2957 = vmatprep.subr.bf16.mxu0 0
  %2958 = vmatpush1.bf16.msra.mxu0 0
  %2959 = vmatprep.subr.bf16.mxu0 0
  %2960 = vmatpush1.bf16.msra.mxu0 0
  %2961 = vmatprep.subr.bf16.mxu0 0
  %2962 = vmatpush1.bf16.msra.mxu0 0
  %2963 = vmatprep.subr.bf16.mxu0 0
  %2964 = vmatpush1.bf16.msra.mxu0 0
  %2965 = vmatprep.subr.bf16.mxu0 0
  %2966 = vmatpush1.bf16.msra.mxu0 0
  %2967 = vmatprep.subr.bf16.mxu0 0
  %2968 = vmatpush1.bf16.msra.mxu0 0
  %2969 = vmatprep.mubr.bf16.mxu0 0
  %2970 = vmatmul.mubr.bf16.gmra.mrb[0].mxu0 %v2545
  %v2971 = vpop.f32.mrb[0].mxu0
  %v2972 = vadd.f32 0.0, %v2971
  %v2973 = vpop.f32.mrb[0].mxu0
  %v2974 = vadd.f32 0.0, %v2973
  %v2975 = vpop.f32.mrb[0].mxu0
  %v2976 = vpop.f32.mrb[0].mxu0
  %2977 = vdwg.mxu0
  %2978 = vmatprep.subr.bf16.mxu0 %v591
  %2979 = vmatpush1.bf16.msra.mxu0 %v590
  %2980 = vmatprep.subr.bf16.mxu0 %v595
  %2981 = vmatpush1.bf16.msra.mxu0 %v594
  %2982 = vmatprep.subr.bf16.mxu0 %v599
  %2983 = vmatpush1.bf16.msra.mxu0 %v598
  %2984 = vmatprep.subr.bf16.mxu0 %v603
  %2985 = vmatpush1.bf16.msra.mxu0 %v602
  %2986 = vmatprep.subr.bf16.mxu0 %v607
  %2987 = vmatpush1.bf16.msra.mxu0 %v606
  %2988 = vmatprep.subr.bf16.mxu0 %v611
  %2989 = vmatpush1.bf16.msra.mxu0 %v610
  %2990 = vmatprep.subr.bf16.mxu0 %v615
  %2991 = vmatpush1.bf16.msra.mxu0 %v614
  %2992 = vmatprep.subr.bf16.mxu0 %v619
  %2993 = vmatpush1.bf16.msra.mxu0 %v618
  %2994 = vmatprep.subr.bf16.mxu0 0
  %2995 = vmatpush1.bf16.msra.mxu0 0
  %2996 = vmatprep.subr.bf16.mxu0 0
  %2997 = vmatpush1.bf16.msra.mxu0 0
  %2998 = vmatprep.subr.bf16.mxu0 0
  %2999 = vmatpush1.bf16.msra.mxu0 0
  %3000 = vmatprep.subr.bf16.mxu0 0
  %3001 = vmatpush1.bf16.msra.mxu0 0
  %3002 = vmatprep.subr.bf16.mxu0 0
  %3003 = vmatpush1.bf16.msra.mxu0 0
  %3004 = vmatprep.subr.bf16.mxu0 0
  %3005 = vmatpush1.bf16.msra.mxu0 0
  %3006 = vmatprep.subr.bf16.mxu0 0
  %3007 = vmatpush1.bf16.msra.mxu0 0
  %3008 = vmatprep.subr.bf16.mxu0 0
  %3009 = vmatpush1.bf16.msra.mxu0 0
  %3010 = vmatprep.mubr.bf16.mxu0 0
  %3011 = vmatmul.mubr.bf16.gmra.mrb[0].mxu0 %v2545
  %v3012 = vpop.f32.mrb[0].mxu0
  %v3013 = vadd.f32 0.0, %v3012
  %v3014 = vpop.f32.mrb[0].mxu0
  %v3015 = vadd.f32 0.0, %v3014
  %v3016 = vpop.f32.mrb[0].mxu0
  %v3017 = vpop.f32.mrb[0].mxu0
  %3018 = vdwg.mxu0
  %v3019 = vadd.f32 %v2933, %v2972
  %v3020 = vadd.f32 %v2934, %v2974
  %v3021 = vadd.f32 %v2935, %v3013
  %v3022 = vadd.f32 %v2936, %v3015
  %v3023 = vadd.f32 %v3019, %v42
  %v3024 = vadd.f32 %v3020, %v43
  %v3025 = vadd.f32 %v3021, %v44
  %v3026 = vadd.f32 %v3022, %v45
  %v3027 = vxor.u32 %v3023, 2147483648
  %v3028 = vmul.f32 %v3027, 1.442695
  %v3029 = vpow.pop %v3028
  %v3030 = vadd.f32 %v3029, 1.0
  %v3031 = vrcp.pop %v3030
  %v3032 = vmul.f32 1.0, %v3031
  %v3033 = vxor.u32 %v3024, 2147483648
  %v3034 = vmul.f32 %v3033, 1.442695
  %v3035 = vpow.pop %v3034
  %v3036 = vadd.f32 %v3035, 1.0
  %v3037 = vrcp.pop %v3036
  %v3038 = vmul.f32 1.0, %v3037
  %v3039 = vtanh.pop %v3025
  %v3040 = vxor.u32 %v3026, 2147483648
  %v3041 = vmul.f32 %v3040, 1.442695
  %v3042 = vpow.pop %v3041
  %v3043 = vadd.f32 %v3042, 1.0
  %v3044 = vrcp.pop %v3043
  %v3045 = vmul.f32 1.0, %v3044
  %v3046 = vmul.f32 %v3038, %v2542
  %v3047 = vmul.f32 %v3032, %v3039
  %v3048 = vadd.f32 %v3046, %v3047
  %v3049 = vtanh.pop %v3048
  %v3050 = vmul.f32 %v3045, %v3049
  %v3051 = vpack.c.bf16 %v3050, %v3050
  %3052 = vmatprep.subr.bf16.mxu0 %v928
  %3053 = vmatpush1.bf16.msra.mxu0 %v927
  %3054 = vmatprep.subr.bf16.mxu0 %v932
  %3055 = vmatpush1.bf16.msra.mxu0 %v931
  %3056 = vmatprep.subr.bf16.mxu0 %v936
  %3057 = vmatpush1.bf16.msra.mxu0 %v935
  %3058 = vmatprep.subr.bf16.mxu0 %v940
  %3059 = vmatpush1.bf16.msra.mxu0 %v939
  %3060 = vmatprep.subr.bf16.mxu0 %v944
  %3061 = vmatpush1.bf16.msra.mxu0 %v943
  %3062 = vmatprep.subr.bf16.mxu0 %v948
  %3063 = vmatpush1.bf16.msra.mxu0 %v947
  %3064 = vmatprep.subr.bf16.mxu0 %v952
  %3065 = vmatpush1.bf16.msra.mxu0 %v951
  %3066 = vmatprep.subr.bf16.mxu0 %v956
  %3067 = vmatpush1.bf16.msra.mxu0 %v955
  %3068 = vmatprep.subr.bf16.mxu0 0
  %3069 = vmatpush1.bf16.msra.mxu0 0
  %3070 = vmatprep.subr.bf16.mxu0 0
  %3071 = vmatpush1.bf16.msra.mxu0 0
  %3072 = vmatprep.subr.bf16.mxu0 0
  %3073 = vmatpush1.bf16.msra.mxu0 0
  %3074 = vmatprep.subr.bf16.mxu0 0
  %3075 = vmatpush1.bf16.msra.mxu0 0
  %3076 = vmatprep.subr.bf16.mxu0 0
  %3077 = vmatpush1.bf16.msra.mxu0 0
  %3078 = vmatprep.subr.bf16.mxu0 0
  %3079 = vmatpush1.bf16.msra.mxu0 0
  %3080 = vmatprep.subr.bf16.mxu0 0
  %3081 = vmatpush1.bf16.msra.mxu0 0
  %3082 = vmatprep.subr.bf16.mxu0 0
  %3083 = vmatpush1.bf16.msra.mxu0 0
  %3084 = vmatprep.mubr.bf16.mxu0 0
  %3085 = vmatmul.mubr.bf16.gmra.mrb[0].mxu0 %v2738
  %v3086 = vpop.f32.mrb[0].mxu0
  %v3087 = vadd.f32 0.0, %v3086
  %v3088 = vpop.f32.mrb[0].mxu0
  %v3089 = vadd.f32 0.0, %v3088
  %v3090 = vpop.f32.mrb[0].mxu0
  %v3091 = vpop.f32.mrb[0].mxu0
  %3092 = vdwg.mxu0
  %3093 = vmatprep.subr.bf16.mxu0 %v930
  %3094 = vmatpush1.bf16.msra.mxu0 %v929
  %3095 = vmatprep.subr.bf16.mxu0 %v934
  %3096 = vmatpush1.bf16.msra.mxu0 %v933
  %3097 = vmatprep.subr.bf16.mxu0 %v938
  %3098 = vmatpush1.bf16.msra.mxu0 %v937
  %3099 = vmatprep.subr.bf16.mxu0 %v942
  %3100 = vmatpush1.bf16.msra.mxu0 %v941
  %3101 = vmatprep.subr.bf16.mxu0 %v946
  %3102 = vmatpush1.bf16.msra.mxu0 %v945
  %3103 = vmatprep.subr.bf16.mxu0 %v950
  %3104 = vmatpush1.bf16.msra.mxu0 %v949
  %3105 = vmatprep.subr.bf16.mxu0 %v954
  %3106 = vmatpush1.bf16.msra.mxu0 %v953
  %3107 = vmatprep.subr.bf16.mxu0 %v958
  %3108 = vmatpush1.bf16.msra.mxu0 %v957
  %3109 = vmatprep.subr.bf16.mxu0 0
  %3110 = vmatpush1.bf16.msra.mxu0 0
  %3111 = vmatprep.subr.bf16.mxu0 0
  %3112 = vmatpush1.bf16.msra.mxu0 0
  %3113 = vmatprep.subr.bf16.mxu0 0
  %3114 = vmatpush1.bf16.msra.mxu0 0
  %3115 = vmatprep.subr.bf16.mxu0 0
  %3116 = vmatpush1.bf16.msra.mxu0 0
  %3117 = vmatprep.subr.bf16.mxu0 0
  %3118 = vmatpush1.bf16.msra.mxu0 0
  %3119 = vmatprep.subr.bf16.mxu0 0
  %3120 = vmatpush1.bf16.msra.mxu0 0
  %3121 = vmatprep.subr.bf16.mxu0 0
  %3122 = vmatpush1.bf16.msra.mxu0 0
  %3123 = vmatprep.subr.bf16.mxu0 0
  %3124 = vmatpush1.bf16.msra.mxu0 0
  %3125 = vmatprep.mubr.bf16.mxu0 0
  %3126 = vmatmul.mubr.bf16.gmra.mrb[0].mxu0 %v2738
  %v3127 = vpop.f32.mrb[0].mxu0
  %v3128 = vadd.f32 0.0, %v3127
  %v3129 = vpop.f32.mrb[0].mxu0
  %v3130 = vadd.f32 0.0, %v3129
  %v3131 = vpop.f32.mrb[0].mxu0
  %v3132 = vpop.f32.mrb[0].mxu0
  %3133 = vdwg.mxu0
  %3134 = vmatprep.subr.bf16.mxu0 %v1170
  %3135 = vmatpush1.bf16.msra.mxu0 %v1169
  %3136 = vmatprep.subr.bf16.mxu0 %v1174
  %3137 = vmatpush1.bf16.msra.mxu0 %v1173
  %3138 = vmatprep.subr.bf16.mxu0 %v1178
  %3139 = vmatpush1.bf16.msra.mxu0 %v1177
  %3140 = vmatprep.subr.bf16.mxu0 %v1182
  %3141 = vmatpush1.bf16.msra.mxu0 %v1181
  %3142 = vmatprep.subr.bf16.mxu0 %v1186
  %3143 = vmatpush1.bf16.msra.mxu0 %v1185
  %3144 = vmatprep.subr.bf16.mxu0 %v1190
  %3145 = vmatpush1.bf16.msra.mxu0 %v1189
  %3146 = vmatprep.subr.bf16.mxu0 %v1194
  %3147 = vmatpush1.bf16.msra.mxu0 %v1193
  %3148 = vmatprep.subr.bf16.mxu0 %v1198
  %3149 = vmatpush1.bf16.msra.mxu0 %v1197
  %3150 = vmatprep.subr.bf16.mxu0 0
  %3151 = vmatpush1.bf16.msra.mxu0 0
  %3152 = vmatprep.subr.bf16.mxu0 0
  %3153 = vmatpush1.bf16.msra.mxu0 0
  %3154 = vmatprep.subr.bf16.mxu0 0
  %3155 = vmatpush1.bf16.msra.mxu0 0
  %3156 = vmatprep.subr.bf16.mxu0 0
  %3157 = vmatpush1.bf16.msra.mxu0 0
  %3158 = vmatprep.subr.bf16.mxu0 0
  %3159 = vmatpush1.bf16.msra.mxu0 0
  %3160 = vmatprep.subr.bf16.mxu0 0
  %3161 = vmatpush1.bf16.msra.mxu0 0
  %3162 = vmatprep.subr.bf16.mxu0 0
  %3163 = vmatpush1.bf16.msra.mxu0 0
  %3164 = vmatprep.subr.bf16.mxu0 0
  %3165 = vmatpush1.bf16.msra.mxu0 0
  %3166 = vmatprep.mubr.bf16.mxu0 0
  %3167 = vmatmul.mubr.bf16.gmra.mrb[0].mxu0 %v3051
  %v3168 = vpop.f32.mrb[0].mxu0
  %v3169 = vadd.f32 %v3087, %v3168
  %v3170 = vpop.f32.mrb[0].mxu0
  %v3171 = vadd.f32 %v3089, %v3170
  %v3172 = vpop.f32.mrb[0].mxu0
  %v3173 = vpop.f32.mrb[0].mxu0
  %3174 = vdwg.mxu0
  %3175 = vmatprep.subr.bf16.mxu0 %v1172
  %3176 = vmatpush1.bf16.msra.mxu0 %v1171
  %3177 = vmatprep.subr.bf16.mxu0 %v1176
  %3178 = vmatpush1.bf16.msra.mxu0 %v1175
  %3179 = vmatprep.subr.bf16.mxu0 %v1180
  %3180 = vmatpush1.bf16.msra.mxu0 %v1179
  %3181 = vmatprep.subr.bf16.mxu0 %v1184
  %3182 = vmatpush1.bf16.msra.mxu0 %v1183
  %3183 = vmatprep.subr.bf16.mxu0 %v1188
  %3184 = vmatpush1.bf16.msra.mxu0 %v1187
  %3185 = vmatprep.subr.bf16.mxu0 %v1192
  %3186 = vmatpush1.bf16.msra.mxu0 %v1191
  %3187 = vmatprep.subr.bf16.mxu0 %v1196
  %3188 = vmatpush1.bf16.msra.mxu0 %v1195
  %3189 = vmatprep.subr.bf16.mxu0 %v1200
  %3190 = vmatpush1.bf16.msra.mxu0 %v1199
  %3191 = vmatprep.subr.bf16.mxu0 0
  %3192 = vmatpush1.bf16.msra.mxu0 0
  %3193 = vmatprep.subr.bf16.mxu0 0
  %3194 = vmatpush1.bf16.msra.mxu0 0
  %3195 = vmatprep.subr.bf16.mxu0 0
  %3196 = vmatpush1.bf16.msra.mxu0 0
  %3197 = vmatprep.subr.bf16.mxu0 0
  %3198 = vmatpush1.bf16.msra.mxu0 0
  %3199 = vmatprep.subr.bf16.mxu0 0
  %3200 = vmatpush1.bf16.msra.mxu0 0
  %3201 = vmatprep.subr.bf16.mxu0 0
  %3202 = vmatpush1.bf16.msra.mxu0 0
  %3203 = vmatprep.subr.bf16.mxu0 0
  %3204 = vmatpush1.bf16.msra.mxu0 0
  %3205 = vmatprep.subr.bf16.mxu0 0
  %3206 = vmatpush1.bf16.msra.mxu0 0
  %3207 = vmatprep.mubr.bf16.mxu0 0
  %3208 = vmatmul.mubr.bf16.gmra.mrb[0].mxu0 %v3051
  %v3209 = vpop.f32.mrb[0].mxu0
  %v3210 = vadd.f32 %v3128, %v3209
  %v3211 = vpop.f32.mrb[0].mxu0
  %v3212 = vadd.f32 %v3130, %v3211
  %v3213 = vpop.f32.mrb[0].mxu0
  %v3214 = vpop.f32.mrb[0].mxu0
  %3215 = vdwg.mxu0
  %v3216 = vadd.f32 %v3169, %v46
  %v3217 = vadd.f32 %v3171, %v47
  %v3218 = vadd.f32 %v3210, %v48
  %v3219 = vadd.f32 %v3212, %v49
  %v3220 = vxor.u32 %v3216, 2147483648
  %v3221 = vmul.f32 %v3220, 1.442695
  %v3222 = vpow.pop %v3221
  %v3223 = vadd.f32 %v3222, 1.0
  %v3224 = vrcp.pop %v3223
  %v3225 = vmul.f32 1.0, %v3224
  %v3226 = vxor.u32 %v3217, 2147483648
  %v3227 = vmul.f32 %v3226, 1.442695
  %v3228 = vpow.pop %v3227
  %v3229 = vadd.f32 %v3228, 1.0
  %v3230 = vrcp.pop %v3229
  %v3231 = vmul.f32 1.0, %v3230
  %v3232 = vtanh.pop %v3218
  %v3233 = vxor.u32 %v3219, 2147483648
  %v3234 = vmul.f32 %v3233, 1.442695
  %v3235 = vpow.pop %v3234
  %v3236 = vadd.f32 %v3235, 1.0
  %v3237 = vrcp.pop %v3236
  %v3238 = vmul.f32 1.0, %v3237
  %v3239 = vmul.f32 %v3231, %v2735
  %v3240 = vmul.f32 %v3225, %v3232
  %v3241 = vadd.f32 %v3239, %v3240
  %v3242 = vtanh.pop %v3241
  %v3243 = vmul.f32 %v3238, %v3242
  %v3244 = vpack.c.bf16 %v3243, %v3243
  %v3245 = vpack.c.bf16 %v2931, %v2931
  %3246 = vmatprep.subr.bf16.mxu0 %v1505
  %3247 = vmatpush1.bf16.msra.mxu0 %v1504
  %3248 = vmatprep.subr.bf16.mxu0 %v1509
  %3249 = vmatpush1.bf16.msra.mxu0 %v1508
  %3250 = vmatprep.subr.bf16.mxu0 %v1513
  %3251 = vmatpush1.bf16.msra.mxu0 %v1512
  %3252 = vmatprep.subr.bf16.mxu0 %v1517
  %3253 = vmatpush1.bf16.msra.mxu0 %v1516
  %3254 = vmatprep.subr.bf16.mxu0 %v1521
  %3255 = vmatpush1.bf16.msra.mxu0 %v1520
  %3256 = vmatprep.subr.bf16.mxu0 %v1525
  %3257 = vmatpush1.bf16.msra.mxu0 %v1524
  %3258 = vmatprep.subr.bf16.mxu0 %v1529
  %3259 = vmatpush1.bf16.msra.mxu0 %v1528
  %3260 = vmatprep.subr.bf16.mxu0 %v1533
  %3261 = vmatpush1.bf16.msra.mxu0 %v1532
  %3262 = vmatprep.subr.bf16.mxu0 0
  %3263 = vmatpush1.bf16.msra.mxu0 0
  %3264 = vmatprep.subr.bf16.mxu0 0
  %3265 = vmatpush1.bf16.msra.mxu0 0
  %3266 = vmatprep.subr.bf16.mxu0 0
  %3267 = vmatpush1.bf16.msra.mxu0 0
  %3268 = vmatprep.subr.bf16.mxu0 0
  %3269 = vmatpush1.bf16.msra.mxu0 0
  %3270 = vmatprep.subr.bf16.mxu0 0
  %3271 = vmatpush1.bf16.msra.mxu0 0
  %3272 = vmatprep.subr.bf16.mxu0 0
  %3273 = vmatpush1.bf16.msra.mxu0 0
  %3274 = vmatprep.subr.bf16.mxu0 0
  %3275 = vmatpush1.bf16.msra.mxu0 0
  %3276 = vmatprep.subr.bf16.mxu0 0
  %3277 = vmatpush1.bf16.msra.mxu0 0
  %3278 = vmatprep.mubr.bf16.mxu0 0
  %3279 = vmatmul.mubr.bf16.gmra.mrb[0].mxu0 %v3245
  %v3280 = vpop.f32.mrb[0].mxu0
  %v3281 = vadd.f32 0.0, %v3280
  %v3282 = vpop.f32.mrb[0].mxu0
  %v3283 = vadd.f32 0.0, %v3282
  %v3284 = vpop.f32.mrb[0].mxu0
  %v3285 = vpop.f32.mrb[0].mxu0
  %3286 = vdwg.mxu0
  %3287 = vmatprep.subr.bf16.mxu0 %v1507
  %3288 = vmatpush1.bf16.msra.mxu0 %v1506
  %3289 = vmatprep.subr.bf16.mxu0 %v1511
  %3290 = vmatpush1.bf16.msra.mxu0 %v1510
  %3291 = vmatprep.subr.bf16.mxu0 %v1515
  %3292 = vmatpush1.bf16.msra.mxu0 %v1514
  %3293 = vmatprep.subr.bf16.mxu0 %v1519
  %3294 = vmatpush1.bf16.msra.mxu0 %v1518
  %3295 = vmatprep.subr.bf16.mxu0 %v1523
  %3296 = vmatpush1.bf16.msra.mxu0 %v1522
  %3297 = vmatprep.subr.bf16.mxu0 %v1527
  %3298 = vmatpush1.bf16.msra.mxu0 %v1526
  %3299 = vmatprep.subr.bf16.mxu0 %v1531
  %3300 = vmatpush1.bf16.msra.mxu0 %v1530
  %3301 = vmatprep.subr.bf16.mxu0 %v1535
  %3302 = vmatpush1.bf16.msra.mxu0 %v1534
  %3303 = vmatprep.subr.bf16.mxu0 0
  %3304 = vmatpush1.bf16.msra.mxu0 0
  %3305 = vmatprep.subr.bf16.mxu0 0
  %3306 = vmatpush1.bf16.msra.mxu0 0
  %3307 = vmatprep.subr.bf16.mxu0 0
  %3308 = vmatpush1.bf16.msra.mxu0 0
  %3309 = vmatprep.subr.bf16.mxu0 0
  %3310 = vmatpush1.bf16.msra.mxu0 0
  %3311 = vmatprep.subr.bf16.mxu0 0
  %3312 = vmatpush1.bf16.msra.mxu0 0
  %3313 = vmatprep.subr.bf16.mxu0 0
  %3314 = vmatpush1.bf16.msra.mxu0 0
  %3315 = vmatprep.subr.bf16.mxu0 0
  %3316 = vmatpush1.bf16.msra.mxu0 0
  %3317 = vmatprep.subr.bf16.mxu0 0
  %3318 = vmatpush1.bf16.msra.mxu0 0
  %3319 = vmatprep.mubr.bf16.mxu0 0
  %3320 = vmatmul.mubr.bf16.gmra.mrb[0].mxu0 %v3245
  %v3321 = vpop.f32.mrb[0].mxu0
  %v3322 = vadd.f32 0.0, %v3321
  %v3323 = vpop.f32.mrb[0].mxu0
  %v3324 = vadd.f32 0.0, %v3323
  %v3325 = vpop.f32.mrb[0].mxu0
  %v3326 = vpop.f32.mrb[0].mxu0
  %3327 = vdwg.mxu0
  %3328 = vmatprep.subr.bf16.mxu0 %v1747
  %3329 = vmatpush1.bf16.msra.mxu0 %v1746
  %3330 = vmatprep.subr.bf16.mxu0 %v1751
  %3331 = vmatpush1.bf16.msra.mxu0 %v1750
  %3332 = vmatprep.subr.bf16.mxu0 %v1755
  %3333 = vmatpush1.bf16.msra.mxu0 %v1754
  %3334 = vmatprep.subr.bf16.mxu0 %v1759
  %3335 = vmatpush1.bf16.msra.mxu0 %v1758
  %3336 = vmatprep.subr.bf16.mxu0 %v1763
  %3337 = vmatpush1.bf16.msra.mxu0 %v1762
  %3338 = vmatprep.subr.bf16.mxu0 %v1767
  %3339 = vmatpush1.bf16.msra.mxu0 %v1766
  %3340 = vmatprep.subr.bf16.mxu0 %v1771
  %3341 = vmatpush1.bf16.msra.mxu0 %v1770
  %3342 = vmatprep.subr.bf16.mxu0 %v1775
  %3343 = vmatpush1.bf16.msra.mxu0 %v1774
  %3344 = vmatprep.subr.bf16.mxu0 0
  %3345 = vmatpush1.bf16.msra.mxu0 0
  %3346 = vmatprep.subr.bf16.mxu0 0
  %3347 = vmatpush1.bf16.msra.mxu0 0
  %3348 = vmatprep.subr.bf16.mxu0 0
  %3349 = vmatpush1.bf16.msra.mxu0 0
  %3350 = vmatprep.subr.bf16.mxu0 0
  %3351 = vmatpush1.bf16.msra.mxu0 0
  %3352 = vmatprep.subr.bf16.mxu0 0
  %3353 = vmatpush1.bf16.msra.mxu0 0
  %3354 = vmatprep.subr.bf16.mxu0 0
  %3355 = vmatpush1.bf16.msra.mxu0 0
  %3356 = vmatprep.subr.bf16.mxu0 0
  %3357 = vmatpush1.bf16.msra.mxu0 0
  %3358 = vmatprep.subr.bf16.mxu0 0
  %3359 = vmatpush1.bf16.msra.mxu0 0
  %3360 = vmatprep.mubr.bf16.mxu0 0
  %3361 = vmatmul.mubr.bf16.gmra.mrb[0].mxu0 %v3244
  %v3362 = vpop.f32.mrb[0].mxu0
  %v3363 = vadd.f32 %v3281, %v3362
  %v3364 = vpop.f32.mrb[0].mxu0
  %v3365 = vadd.f32 %v3283, %v3364
  %v3366 = vpop.f32.mrb[0].mxu0
  %v3367 = vpop.f32.mrb[0].mxu0
  %3368 = vdwg.mxu0
  %3369 = vmatprep.subr.bf16.mxu0 %v1749
  %3370 = vmatpush1.bf16.msra.mxu0 %v1748
  %3371 = vmatprep.subr.bf16.mxu0 %v1753
  %3372 = vmatpush1.bf16.msra.mxu0 %v1752
  %3373 = vmatprep.subr.bf16.mxu0 %v1757
  %3374 = vmatpush1.bf16.msra.mxu0 %v1756
  %3375 = vmatprep.subr.bf16.mxu0 %v1761
  %3376 = vmatpush1.bf16.msra.mxu0 %v1760
  %3377 = vmatprep.subr.bf16.mxu0 %v1765
  %3378 = vmatpush1.bf16.msra.mxu0 %v1764
  %3379 = vmatprep.subr.bf16.mxu0 %v1769
  %3380 = vmatpush1.bf16.msra.mxu0 %v1768
  %3381 = vmatprep.subr.bf16.mxu0 %v1773
  %3382 = vmatpush1.bf16.msra.mxu0 %v1772
  %3383 = vmatprep.subr.bf16.mxu0 %v1777
  %3384 = vmatpush1.bf16.msra.mxu0 %v1776
  %3385 = vmatprep.subr.bf16.mxu0 0
  %3386 = vmatpush1.bf16.msra.mxu0 0
  %3387 = vmatprep.subr.bf16.mxu0 0
  %3388 = vmatpush1.bf16.msra.mxu0 0
  %3389 = vmatprep.subr.bf16.mxu0 0
  %3390 = vmatpush1.bf16.msra.mxu0 0
  %3391 = vmatprep.subr.bf16.mxu0 0
  %3392 = vmatpush1.bf16.msra.mxu0 0
  %3393 = vmatprep.subr.bf16.mxu0 0
  %3394 = vmatpush1.bf16.msra.mxu0 0
  %3395 = vmatprep.subr.bf16.mxu0 0
  %3396 = vmatpush1.bf16.msra.mxu0 0
  %3397 = vmatprep.subr.bf16.mxu0 0
  %3398 = vmatpush1.bf16.msra.mxu0 0
  %3399 = vmatprep.subr.bf16.mxu0 0
  %3400 = vmatpush1.bf16.msra.mxu0 0
  %3401 = vmatprep.mubr.bf16.mxu0 0
  %3402 = vmatmul.mubr.bf16.gmra.mrb[0].mxu0 %v3244
  %v3403 = vpop.f32.mrb[0].mxu0
  %v3404 = vadd.f32 %v3322, %v3403
  %v3405 = vpop.f32.mrb[0].mxu0
  %v3406 = vadd.f32 %v3324, %v3405
  %v3407 = vpop.f32.mrb[0].mxu0
  %v3408 = vpop.f32.mrb[0].mxu0
  %3409 = vdwg.mxu0
  %v3410 = vadd.f32 %v3363, %v50
  %v3411 = vadd.f32 %v3365, %v51
  %v3412 = vadd.f32 %v3404, %v52
  %v3413 = vadd.f32 %v3406, %v53
  %v3414 = vxor.u32 %v3410, 2147483648
  %v3415 = vmul.f32 %v3414, 1.442695
  %v3416 = vpow.pop %v3415
  %v3417 = vadd.f32 %v3416, 1.0
  %v3418 = vrcp.pop %v3417
  %v3419 = vmul.f32 1.0, %v3418
  %v3420 = vxor.u32 %v3411, 2147483648
  %v3421 = vmul.f32 %v3420, 1.442695
  %v3422 = vpow.pop %v3421
  %v3423 = vadd.f32 %v3422, 1.0
  %v3424 = vrcp.pop %v3423
  %v3425 = vmul.f32 1.0, %v3424
  %v3426 = vtanh.pop %v3412
  %v3427 = vxor.u32 %v3413, 2147483648
  %v3428 = vmul.f32 %v3427, 1.442695
  %v3429 = vpow.pop %v3428
  %v3430 = vadd.f32 %v3429, 1.0
  %v3431 = vrcp.pop %v3430
  %v3432 = vmul.f32 1.0, %v3431
  %v3433 = vmul.f32 %v3425, %v2929
  %v3434 = vmul.f32 %v3419, %v3426
  %v3435 = vadd.f32 %v3433, %v3434
  %v3436 = vtanh.pop %v3435
  %v3437 = vmul.f32 %v3432, %v3436
  %s3438 = scalar_lea.vmem [#allocation2], 128
  %v3439 = vld [vmem:[%s3438] sm:$0xff]
  %v3440 = vld [vmem:[%s3438 + $0x8] sm:$0xff]
  %v3441 = vld [vmem:[%s3438 + $0x10] sm:$0xff]
  %v3442 = vld [vmem:[%s3438 + $0x18] sm:$0xff]
  %3443 = vmatprep.subr.bf16.mxu0 %v589
  %3444 = vmatpush1.bf16.msra.mxu0 %v588
  %3445 = vmatprep.subr.bf16.mxu0 %v593
  %3446 = vmatpush1.bf16.msra.mxu0 %v592
  %3447 = vmatprep.subr.bf16.mxu0 %v597
  %3448 = vmatpush1.bf16.msra.mxu0 %v596
  %3449 = vmatprep.subr.bf16.mxu0 %v601
  %3450 = vmatpush1.bf16.msra.mxu0 %v600
  %3451 = vmatprep.subr.bf16.mxu0 %v605
  %3452 = vmatpush1.bf16.msra.mxu0 %v604
  %3453 = vmatprep.subr.bf16.mxu0 %v609
  %3454 = vmatpush1.bf16.msra.mxu0 %v608
  %3455 = vmatprep.subr.bf16.mxu0 %v613
  %3456 = vmatpush1.bf16.msra.mxu0 %v612
  %3457 = vmatprep.subr.bf16.mxu0 %v617
  %3458 = vmatpush1.bf16.msra.mxu0 %v616
  %3459 = vmatprep.subr.bf16.mxu0 0
  %3460 = vmatpush1.bf16.msra.mxu0 0
  %3461 = vmatprep.subr.bf16.mxu0 0
  %3462 = vmatpush1.bf16.msra.mxu0 0
  %3463 = vmatprep.subr.bf16.mxu0 0
  %3464 = vmatpush1.bf16.msra.mxu0 0
  %3465 = vmatprep.subr.bf16.mxu0 0
  %3466 = vmatpush1.bf16.msra.mxu0 0
  %3467 = vmatprep.subr.bf16.mxu0 0
  %3468 = vmatpush1.bf16.msra.mxu0 0
  %3469 = vmatprep.subr.bf16.mxu0 0
  %3470 = vmatpush1.bf16.msra.mxu0 0
  %3471 = vmatprep.subr.bf16.mxu0 0
  %3472 = vmatpush1.bf16.msra.mxu0 0
  %3473 = vmatprep.subr.bf16.mxu0 0
  %3474 = vmatpush1.bf16.msra.mxu0 0
  %3475 = vmatprep.mubr.bf16.mxu0 0
  %3476 = vmatmul.mubr.bf16.gmra.mrb[0].mxu0 %v3051
  %v3477 = vpop.f32.mrb[0].mxu0
  %v3478 = vadd.f32 0.0, %v3477
  %v3479 = vpop.f32.mrb[0].mxu0
  %v3480 = vadd.f32 0.0, %v3479
  %v3481 = vpop.f32.mrb[0].mxu0
  %v3482 = vpop.f32.mrb[0].mxu0
  %3483 = vdwg.mxu0
  %3484 = vmatprep.subr.bf16.mxu0 %v591
  %3485 = vmatpush1.bf16.msra.mxu0 %v590
  %3486 = vmatprep.subr.bf16.mxu0 %v595
  %3487 = vmatpush1.bf16.msra.mxu0 %v594
  %3488 = vmatprep.subr.bf16.mxu0 %v599
  %3489 = vmatpush1.bf16.msra.mxu0 %v598
  %3490 = vmatprep.subr.bf16.mxu0 %v603
  %3491 = vmatpush1.bf16.msra.mxu0 %v602
  %3492 = vmatprep.subr.bf16.mxu0 %v607
  %3493 = vmatpush1.bf16.msra.mxu0 %v606
  %3494 = vmatprep.subr.bf16.mxu0 %v611
  %3495 = vmatpush1.bf16.msra.mxu0 %v610
  %3496 = vmatprep.subr.bf16.mxu0 %v615
  %3497 = vmatpush1.bf16.msra.mxu0 %v614
  %3498 = vmatprep.subr.bf16.mxu0 %v619
  %3499 = vmatpush1.bf16.msra.mxu0 %v618
  %3500 = vmatprep.subr.bf16.mxu0 0
  %3501 = vmatpush1.bf16.msra.mxu0 0
  %3502 = vmatprep.subr.bf16.mxu0 0
  %3503 = vmatpush1.bf16.msra.mxu0 0
  %3504 = vmatprep.subr.bf16.mxu0 0
  %3505 = vmatpush1.bf16.msra.mxu0 0
  %3506 = vmatprep.subr.bf16.mxu0 0
  %3507 = vmatpush1.bf16.msra.mxu0 0
  %3508 = vmatprep.subr.bf16.mxu0 0
  %3509 = vmatpush1.bf16.msra.mxu0 0
  %3510 = vmatprep.subr.bf16.mxu0 0
  %3511 = vmatpush1.bf16.msra.mxu0 0
  %3512 = vmatprep.subr.bf16.mxu0 0
  %3513 = vmatpush1.bf16.msra.mxu0 0
  %3514 = vmatprep.subr.bf16.mxu0 0
  %3515 = vmatpush1.bf16.msra.mxu0 0
  %3516 = vmatprep.mubr.bf16.mxu0 0
  %3517 = vmatmul.mubr.bf16.gmra.mrb[0].mxu0 %v3051
  %v3518 = vpop.f32.mrb[0].mxu0
  %v3519 = vadd.f32 0.0, %v3518
  %v3520 = vpop.f32.mrb[0].mxu0
  %v3521 = vadd.f32 0.0, %v3520
  %v3522 = vpop.f32.mrb[0].mxu0
  %v3523 = vpop.f32.mrb[0].mxu0
  %3524 = vdwg.mxu0
  %v3525 = vadd.f32 %v3439, %v3478
  %v3526 = vadd.f32 %v3440, %v3480
  %v3527 = vadd.f32 %v3441, %v3519
  %v3528 = vadd.f32 %v3442, %v3521
  %v3529 = vadd.f32 %v3525, %v42
  %v3530 = vadd.f32 %v3526, %v43
  %v3531 = vadd.f32 %v3527, %v44
  %v3532 = vadd.f32 %v3528, %v45
  %v3533 = vxor.u32 %v3529, 2147483648
  %v3534 = vmul.f32 %v3533, 1.442695
  %v3535 = vpow.pop %v3534
  %v3536 = vadd.f32 %v3535, 1.0
  %v3537 = vrcp.pop %v3536
  %v3538 = vmul.f32 1.0, %v3537
  %v3539 = vxor.u32 %v3530, 2147483648
  %v3540 = vmul.f32 %v3539, 1.442695
  %v3541 = vpow.pop %v3540
  %v3542 = vadd.f32 %v3541, 1.0
  %v3543 = vrcp.pop %v3542
  %v3544 = vmul.f32 1.0, %v3543
  %v3545 = vtanh.pop %v3531
  %v3546 = vxor.u32 %v3532, 2147483648
  %v3547 = vmul.f32 %v3546, 1.442695
  %v3548 = vpow.pop %v3547
  %v3549 = vadd.f32 %v3548, 1.0
  %v3550 = vrcp.pop %v3549
  %v3551 = vmul.f32 1.0, %v3550
  %v3552 = vmul.f32 %v3544, %v3048
  %v3553 = vmul.f32 %v3538, %v3545
  %v3554 = vadd.f32 %v3552, %v3553
  %v3555 = vtanh.pop %v3554
  %v3556 = vmul.f32 %v3551, %v3555
  %v3557 = vpack.c.bf16 %v3556, %v3556
  %3558 = vmatprep.subr.bf16.mxu0 %v928
  %3559 = vmatpush1.bf16.msra.mxu0 %v927
  %3560 = vmatprep.subr.bf16.mxu0 %v932
  %3561 = vmatpush1.bf16.msra.mxu0 %v931
  %3562 = vmatprep.subr.bf16.mxu0 %v936
  %3563 = vmatpush1.bf16.msra.mxu0 %v935
  %3564 = vmatprep.subr.bf16.mxu0 %v940
  %3565 = vmatpush1.bf16.msra.mxu0 %v939
  %3566 = vmatprep.subr.bf16.mxu0 %v944
  %3567 = vmatpush1.bf16.msra.mxu0 %v943
  %3568 = vmatprep.subr.bf16.mxu0 %v948
  %3569 = vmatpush1.bf16.msra.mxu0 %v947
  %3570 = vmatprep.subr.bf16.mxu0 %v952
  %3571 = vmatpush1.bf16.msra.mxu0 %v951
  %3572 = vmatprep.subr.bf16.mxu0 %v956
  %3573 = vmatpush1.bf16.msra.mxu0 %v955
  %3574 = vmatprep.subr.bf16.mxu0 0
  %3575 = vmatpush1.bf16.msra.mxu0 0
  %3576 = vmatprep.subr.bf16.mxu0 0
  %3577 = vmatpush1.bf16.msra.mxu0 0
  %3578 = vmatprep.subr.bf16.mxu0 0
  %3579 = vmatpush1.bf16.msra.mxu0 0
  %3580 = vmatprep.subr.bf16.mxu0 0
  %3581 = vmatpush1.bf16.msra.mxu0 0
  %3582 = vmatprep.subr.bf16.mxu0 0
  %3583 = vmatpush1.bf16.msra.mxu0 0
  %3584 = vmatprep.subr.bf16.mxu0 0
  %3585 = vmatpush1.bf16.msra.mxu0 0
  %3586 = vmatprep.subr.bf16.mxu0 0
  %3587 = vmatpush1.bf16.msra.mxu0 0
  %3588 = vmatprep.subr.bf16.mxu0 0
  %3589 = vmatpush1.bf16.msra.mxu0 0
  %3590 = vmatprep.mubr.bf16.mxu0 0
  %3591 = vmatmul.mubr.bf16.gmra.mrb[0].mxu0 %v3244
  %v3592 = vpop.f32.mrb[0].mxu0
  %v3593 = vadd.f32 0.0, %v3592
  %v3594 = vpop.f32.mrb[0].mxu0
  %v3595 = vadd.f32 0.0, %v3594
  %v3596 = vpop.f32.mrb[0].mxu0
  %v3597 = vpop.f32.mrb[0].mxu0
  %3598 = vdwg.mxu0
  %3599 = vmatprep.subr.bf16.mxu0 %v930
  %3600 = vmatpush1.bf16.msra.mxu0 %v929
  %3601 = vmatprep.subr.bf16.mxu0 %v934
  %3602 = vmatpush1.bf16.msra.mxu0 %v933
  %3603 = vmatprep.subr.bf16.mxu0 %v938
  %3604 = vmatpush1.bf16.msra.mxu0 %v937
  %3605 = vmatprep.subr.bf16.mxu0 %v942
  %3606 = vmatpush1.bf16.msra.mxu0 %v941
  %3607 = vmatprep.subr.bf16.mxu0 %v946
  %3608 = vmatpush1.bf16.msra.mxu0 %v945
  %3609 = vmatprep.subr.bf16.mxu0 %v950
  %3610 = vmatpush1.bf16.msra.mxu0 %v949
  %3611 = vmatprep.subr.bf16.mxu0 %v954
  %3612 = vmatpush1.bf16.msra.mxu0 %v953
  %3613 = vmatprep.subr.bf16.mxu0 %v958
  %3614 = vmatpush1.bf16.msra.mxu0 %v957
  %3615 = vmatprep.subr.bf16.mxu0 0
  %3616 = vmatpush1.bf16.msra.mxu0 0
  %3617 = vmatprep.subr.bf16.mxu0 0
  %3618 = vmatpush1.bf16.msra.mxu0 0
  %3619 = vmatprep.subr.bf16.mxu0 0
  %3620 = vmatpush1.bf16.msra.mxu0 0
  %3621 = vmatprep.subr.bf16.mxu0 0
  %3622 = vmatpush1.bf16.msra.mxu0 0
  %3623 = vmatprep.subr.bf16.mxu0 0
  %3624 = vmatpush1.bf16.msra.mxu0 0
  %3625 = vmatprep.subr.bf16.mxu0 0
  %3626 = vmatpush1.bf16.msra.mxu0 0
  %3627 = vmatprep.subr.bf16.mxu0 0
  %3628 = vmatpush1.bf16.msra.mxu0 0
  %3629 = vmatprep.subr.bf16.mxu0 0
  %3630 = vmatpush1.bf16.msra.mxu0 0
  %3631 = vmatprep.mubr.bf16.mxu0 0
  %3632 = vmatmul.mubr.bf16.gmra.mrb[0].mxu0 %v3244
  %v3633 = vpop.f32.mrb[0].mxu0
  %v3634 = vadd.f32 0.0, %v3633
  %v3635 = vpop.f32.mrb[0].mxu0
  %v3636 = vadd.f32 0.0, %v3635
  %v3637 = vpop.f32.mrb[0].mxu0
  %v3638 = vpop.f32.mrb[0].mxu0
  %3639 = vdwg.mxu0
  %3640 = vmatprep.subr.bf16.mxu0 %v1170
  %3641 = vmatpush1.bf16.msra.mxu0 %v1169
  %3642 = vmatprep.subr.bf16.mxu0 %v1174
  %3643 = vmatpush1.bf16.msra.mxu0 %v1173
  %3644 = vmatprep.subr.bf16.mxu0 %v1178
  %3645 = vmatpush1.bf16.msra.mxu0 %v1177
  %3646 = vmatprep.subr.bf16.mxu0 %v1182
  %3647 = vmatpush1.bf16.msra.mxu0 %v1181
  %3648 = vmatprep.subr.bf16.mxu0 %v1186
  %3649 = vmatpush1.bf16.msra.mxu0 %v1185
  %3650 = vmatprep.subr.bf16.mxu0 %v1190
  %3651 = vmatpush1.bf16.msra.mxu0 %v1189
  %3652 = vmatprep.subr.bf16.mxu0 %v1194
  %3653 = vmatpush1.bf16.msra.mxu0 %v1193
  %3654 = vmatprep.subr.bf16.mxu0 %v1198
  %3655 = vmatpush1.bf16.msra.mxu0 %v1197
  %3656 = vmatprep.subr.bf16.mxu0 0
  %3657 = vmatpush1.bf16.msra.mxu0 0
  %3658 = vmatprep.subr.bf16.mxu0 0
  %3659 = vmatpush1.bf16.msra.mxu0 0
  %3660 = vmatprep.subr.bf16.mxu0 0
  %3661 = vmatpush1.bf16.msra.mxu0 0
  %3662 = vmatprep.subr.bf16.mxu0 0
  %3663 = vmatpush1.bf16.msra.mxu0 0
  %3664 = vmatprep.subr.bf16.mxu0 0
  %3665 = vmatpush1.bf16.msra.mxu0 0
  %3666 = vmatprep.subr.bf16.mxu0 0
  %3667 = vmatpush1.bf16.msra.mxu0 0
  %3668 = vmatprep.subr.bf16.mxu0 0
  %3669 = vmatpush1.bf16.msra.mxu0 0
  %3670 = vmatprep.subr.bf16.mxu0 0
  %3671 = vmatpush1.bf16.msra.mxu0 0
  %3672 = vmatprep.mubr.bf16.mxu0 0
  %3673 = vmatmul.mubr.bf16.gmra.mrb[0].mxu0 %v3557
  %v3674 = vpop.f32.mrb[0].mxu0
  %v3675 = vadd.f32 %v3593, %v3674
  %v3676 = vpop.f32.mrb[0].mxu0
  %v3677 = vadd.f32 %v3595, %v3676
  %v3678 = vpop.f32.mrb[0].mxu0
  %v3679 = vpop.f32.mrb[0].mxu0
  %3680 = vdwg.mxu0
  %3681 = vmatprep.subr.bf16.mxu0 %v1172
  %3682 = vmatpush1.bf16.msra.mxu0 %v1171
  %3683 = vmatprep.subr.bf16.mxu0 %v1176
  %3684 = vmatpush1.bf16.msra.mxu0 %v1175
  %3685 = vmatprep.subr.bf16.mxu0 %v1180
  %3686 = vmatpush1.bf16.msra.mxu0 %v1179
  %3687 = vmatprep.subr.bf16.mxu0 %v1184
  %3688 = vmatpush1.bf16.msra.mxu0 %v1183
  %3689 = vmatprep.subr.bf16.mxu0 %v1188
  %3690 = vmatpush1.bf16.msra.mxu0 %v1187
  %3691 = vmatprep.subr.bf16.mxu0 %v1192
  %3692 = vmatpush1.bf16.msra.mxu0 %v1191
  %3693 = vmatprep.subr.bf16.mxu0 %v1196
  %3694 = vmatpush1.bf16.msra.mxu0 %v1195
  %3695 = vmatprep.subr.bf16.mxu0 %v1200
  %3696 = vmatpush1.bf16.msra.mxu0 %v1199
  %3697 = vmatprep.subr.bf16.mxu0 0
  %3698 = vmatpush1.bf16.msra.mxu0 0
  %3699 = vmatprep.subr.bf16.mxu0 0
  %3700 = vmatpush1.bf16.msra.mxu0 0
  %3701 = vmatprep.subr.bf16.mxu0 0
  %3702 = vmatpush1.bf16.msra.mxu0 0
  %3703 = vmatprep.subr.bf16.mxu0 0
  %3704 = vmatpush1.bf16.msra.mxu0 0
  %3705 = vmatprep.subr.bf16.mxu0 0
  %3706 = vmatpush1.bf16.msra.mxu0 0
  %3707 = vmatprep.subr.bf16.mxu0 0
  %3708 = vmatpush1.bf16.msra.mxu0 0
  %3709 = vmatprep.subr.bf16.mxu0 0
  %3710 = vmatpush1.bf16.msra.mxu0 0
  %3711 = vmatprep.subr.bf16.mxu0 0
  %3712 = vmatpush1.bf16.msra.mxu0 0
  %3713 = vmatprep.mubr.bf16.mxu0 0
  %3714 = vmatmul.mubr.bf16.gmra.mrb[0].mxu0 %v3557
  %v3715 = vpop.f32.mrb[0].mxu0
  %v3716 = vadd.f32 %v3634, %v3715
  %v3717 = vpop.f32.mrb[0].mxu0
  %v3718 = vadd.f32 %v3636, %v3717
  %v3719 = vpop.f32.mrb[0].mxu0
  %v3720 = vpop.f32.mrb[0].mxu0
  %3721 = vdwg.mxu0
  %v3722 = vadd.f32 %v3675, %v46
  %v3723 = vadd.f32 %v3677, %v47
  %v3724 = vadd.f32 %v3716, %v48
  %v3725 = vadd.f32 %v3718, %v49
  %v3726 = vxor.u32 %v3722, 2147483648
  %v3727 = vmul.f32 %v3726, 1.442695
  %v3728 = vpow.pop %v3727
  %v3729 = vadd.f32 %v3728, 1.0
  %v3730 = vrcp.pop %v3729
  %v3731 = vmul.f32 1.0, %v3730
  %v3732 = vxor.u32 %v3723, 2147483648
  %v3733 = vmul.f32 %v3732, 1.442695
  %v3734 = vpow.pop %v3733
  %v3735 = vadd.f32 %v3734, 1.0
  %v3736 = vrcp.pop %v3735
  %v3737 = vmul.f32 1.0, %v3736
  %v3738 = vtanh.pop %v3724
  %v3739 = vxor.u32 %v3725, 2147483648
  %v3740 = vmul.f32 %v3739, 1.442695
  %v3741 = vpow.pop %v3740
  %v3742 = vadd.f32 %v3741, 1.0
  %v3743 = vrcp.pop %v3742
  %v3744 = vmul.f32 1.0, %v3743
  %v3745 = vmul.f32 %v3737, %v3241
  %v3746 = vmul.f32 %v3731, %v3738
  %v3747 = vadd.f32 %v3745, %v3746
  %v3748 = vtanh.pop %v3747
  %v3749 = vmul.f32 %v3744, %v3748
  %v3750 = vpack.c.bf16 %v3749, %v3749
  %v3751 = vpack.c.bf16 %v3437, %v3437
  %3752 = vmatprep.subr.bf16.mxu0 %v1505
  %3753 = vmatpush1.bf16.msra.mxu0 %v1504
  %3754 = vmatprep.subr.bf16.mxu0 %v1509
  %3755 = vmatpush1.bf16.msra.mxu0 %v1508
  %3756 = vmatprep.subr.bf16.mxu0 %v1513
  %3757 = vmatpush1.bf16.msra.mxu0 %v1512
  %3758 = vmatprep.subr.bf16.mxu0 %v1517
  %3759 = vmatpush1.bf16.msra.mxu0 %v1516
  %3760 = vmatprep.subr.bf16.mxu0 %v1521
  %3761 = vmatpush1.bf16.msra.mxu0 %v1520
  %3762 = vmatprep.subr.bf16.mxu0 %v1525
  %3763 = vmatpush1.bf16.msra.mxu0 %v1524
  %3764 = vmatprep.subr.bf16.mxu0 %v1529
  %3765 = vmatpush1.bf16.msra.mxu0 %v1528
  %3766 = vmatprep.subr.bf16.mxu0 %v1533
  %3767 = vmatpush1.bf16.msra.mxu0 %v1532
  %3768 = vmatprep.subr.bf16.mxu0 0
  %3769 = vmatpush1.bf16.msra.mxu0 0
  %3770 = vmatprep.subr.bf16.mxu0 0
  %3771 = vmatpush1.bf16.msra.mxu0 0
  %3772 = vmatprep.subr.bf16.mxu0 0
  %3773 = vmatpush1.bf16.msra.mxu0 0
  %3774 = vmatprep.subr.bf16.mxu0 0
  %3775 = vmatpush1.bf16.msra.mxu0 0
  %3776 = vmatprep.subr.bf16.mxu0 0
  %3777 = vmatpush1.bf16.msra.mxu0 0
  %3778 = vmatprep.subr.bf16.mxu0 0
  %3779 = vmatpush1.bf16.msra.mxu0 0
  %3780 = vmatprep.subr.bf16.mxu0 0
  %3781 = vmatpush1.bf16.msra.mxu0 0
  %3782 = vmatprep.subr.bf16.mxu0 0
  %3783 = vmatpush1.bf16.msra.mxu0 0
  %3784 = vmatprep.mubr.bf16.mxu0 0
  %3785 = vmatmul.mubr.bf16.gmra.mrb[0].mxu0 %v3751
  %v3786 = vpop.f32.mrb[0].mxu0
  %v3787 = vadd.f32 0.0, %v3786
  %v3788 = vpop.f32.mrb[0].mxu0
  %v3789 = vadd.f32 0.0, %v3788
  %v3790 = vpop.f32.mrb[0].mxu0
  %v3791 = vpop.f32.mrb[0].mxu0
  %3792 = vdwg.mxu0
  %3793 = vmatprep.subr.bf16.mxu0 %v1507
  %3794 = vmatpush1.bf16.msra.mxu0 %v1506
  %3795 = vmatprep.subr.bf16.mxu0 %v1511
  %3796 = vmatpush1.bf16.msra.mxu0 %v1510
  %3797 = vmatprep.subr.bf16.mxu0 %v1515
  %3798 = vmatpush1.bf16.msra.mxu0 %v1514
  %3799 = vmatprep.subr.bf16.mxu0 %v1519
  %3800 = vmatpush1.bf16.msra.mxu0 %v1518
  %3801 = vmatprep.subr.bf16.mxu0 %v1523
  %3802 = vmatpush1.bf16.msra.mxu0 %v1522
  %3803 = vmatprep.subr.bf16.mxu0 %v1527
  %3804 = vmatpush1.bf16.msra.mxu0 %v1526
  %3805 = vmatprep.subr.bf16.mxu0 %v1531
  %3806 = vmatpush1.bf16.msra.mxu0 %v1530
  %3807 = vmatprep.subr.bf16.mxu0 %v1535
  %3808 = vmatpush1.bf16.msra.mxu0 %v1534
  %3809 = vmatprep.subr.bf16.mxu0 0
  %3810 = vmatpush1.bf16.msra.mxu0 0
  %3811 = vmatprep.subr.bf16.mxu0 0
  %3812 = vmatpush1.bf16.msra.mxu0 0
  %3813 = vmatprep.subr.bf16.mxu0 0
  %3814 = vmatpush1.bf16.msra.mxu0 0
  %3815 = vmatprep.subr.bf16.mxu0 0
  %3816 = vmatpush1.bf16.msra.mxu0 0
  %3817 = vmatprep.subr.bf16.mxu0 0
  %3818 = vmatpush1.bf16.msra.mxu0 0
  %3819 = vmatprep.subr.bf16.mxu0 0
  %3820 = vmatpush1.bf16.msra.mxu0 0
  %3821 = vmatprep.subr.bf16.mxu0 0
  %3822 = vmatpush1.bf16.msra.mxu0 0
  %3823 = vmatprep.subr.bf16.mxu0 0
  %3824 = vmatpush1.bf16.msra.mxu0 0
  %3825 = vmatprep.mubr.bf16.mxu0 0
  %3826 = vmatmul.mubr.bf16.gmra.mrb[0].mxu0 %v3751
  %v3827 = vpop.f32.mrb[0].mxu0
  %v3828 = vadd.f32 0.0, %v3827
  %v3829 = vpop.f32.mrb[0].mxu0
  %v3830 = vadd.f32 0.0, %v3829
  %v3831 = vpop.f32.mrb[0].mxu0
  %v3832 = vpop.f32.mrb[0].mxu0
  %3833 = vdwg.mxu0
  %3834 = vmatprep.subr.bf16.mxu0 %v1747
  %3835 = vmatpush1.bf16.msra.mxu0 %v1746
  %3836 = vmatprep.subr.bf16.mxu0 %v1751
  %3837 = vmatpush1.bf16.msra.mxu0 %v1750
  %3838 = vmatprep.subr.bf16.mxu0 %v1755
  %3839 = vmatpush1.bf16.msra.mxu0 %v1754
  %3840 = vmatprep.subr.bf16.mxu0 %v1759
  %3841 = vmatpush1.bf16.msra.mxu0 %v1758
  %3842 = vmatprep.subr.bf16.mxu0 %v1763
  %3843 = vmatpush1.bf16.msra.mxu0 %v1762
  %3844 = vmatprep.subr.bf16.mxu0 %v1767
  %3845 = vmatpush1.bf16.msra.mxu0 %v1766
  %3846 = vmatprep.subr.bf16.mxu0 %v1771
  %3847 = vmatpush1.bf16.msra.mxu0 %v1770
  %3848 = vmatprep.subr.bf16.mxu0 %v1775
  %3849 = vmatpush1.bf16.msra.mxu0 %v1774
  %3850 = vmatprep.subr.bf16.mxu0 0
  %3851 = vmatpush1.bf16.msra.mxu0 0
  %3852 = vmatprep.subr.bf16.mxu0 0
  %3853 = vmatpush1.bf16.msra.mxu0 0
  %3854 = vmatprep.subr.bf16.mxu0 0
  %3855 = vmatpush1.bf16.msra.mxu0 0
  %3856 = vmatprep.subr.bf16.mxu0 0
  %3857 = vmatpush1.bf16.msra.mxu0 0
  %3858 = vmatprep.subr.bf16.mxu0 0
  %3859 = vmatpush1.bf16.msra.mxu0 0
  %3860 = vmatprep.subr.bf16.mxu0 0
  %3861 = vmatpush1.bf16.msra.mxu0 0
  %3862 = vmatprep.subr.bf16.mxu0 0
  %3863 = vmatpush1.bf16.msra.mxu0 0
  %3864 = vmatprep.subr.bf16.mxu0 0
  %3865 = vmatpush1.bf16.msra.mxu0 0
  %3866 = vmatprep.mubr.bf16.mxu0 0
  %3867 = vmatmul.mubr.bf16.gmra.mrb[0].mxu0 %v3750
  %v3868 = vpop.f32.mrb[0].mxu0
  %v3869 = vadd.f32 %v3787, %v3868
  %v3870 = vpop.f32.mrb[0].mxu0
  %v3871 = vadd.f32 %v3789, %v3870
  %v3872 = vpop.f32.mrb[0].mxu0
  %v3873 = vpop.f32.mrb[0].mxu0
  %3874 = vdwg.mxu0
  %3875 = vmatprep.subr.bf16.mxu0 %v1749
  %3876 = vmatpush1.bf16.msra.mxu0 %v1748
  %3877 = vmatprep.subr.bf16.mxu0 %v1753
  %3878 = vmatpush1.bf16.msra.mxu0 %v1752
  %3879 = vmatprep.subr.bf16.mxu0 %v1757
  %3880 = vmatpush1.bf16.msra.mxu0 %v1756
  %3881 = vmatprep.subr.bf16.mxu0 %v1761
  %3882 = vmatpush1.bf16.msra.mxu0 %v1760
  %3883 = vmatprep.subr.bf16.mxu0 %v1765
  %3884 = vmatpush1.bf16.msra.mxu0 %v1764
  %3885 = vmatprep.subr.bf16.mxu0 %v1769
  %3886 = vmatpush1.bf16.msra.mxu0 %v1768
  %3887 = vmatprep.subr.bf16.mxu0 %v1773
  %3888 = vmatpush1.bf16.msra.mxu0 %v1772
  %3889 = vmatprep.subr.bf16.mxu0 %v1777
  %3890 = vmatpush1.bf16.msra.mxu0 %v1776
  %3891 = vmatprep.subr.bf16.mxu0 0
  %3892 = vmatpush1.bf16.msra.mxu0 0
  %3893 = vmatprep.subr.bf16.mxu0 0
  %3894 = vmatpush1.bf16.msra.mxu0 0
  %3895 = vmatprep.subr.bf16.mxu0 0
  %3896 = vmatpush1.bf16.msra.mxu0 0
  %3897 = vmatprep.subr.bf16.mxu0 0
  %3898 = vmatpush1.bf16.msra.mxu0 0
  %3899 = vmatprep.subr.bf16.mxu0 0
  %3900 = vmatpush1.bf16.msra.mxu0 0
  %3901 = vmatprep.subr.bf16.mxu0 0
  %3902 = vmatpush1.bf16.msra.mxu0 0
  %3903 = vmatprep.subr.bf16.mxu0 0
  %3904 = vmatpush1.bf16.msra.mxu0 0
  %3905 = vmatprep.subr.bf16.mxu0 0
  %3906 = vmatpush1.bf16.msra.mxu0 0
  %3907 = vmatprep.mubr.bf16.mxu0 0
  %3908 = vmatmul.mubr.bf16.gmra.mrb[0].mxu0 %v3750
  %v3909 = vpop.f32.mrb[0].mxu0
  %v3910 = vadd.f32 %v3828, %v3909
  %v3911 = vpop.f32.mrb[0].mxu0
  %v3912 = vadd.f32 %v3830, %v3911
  %v3913 = vpop.f32.mrb[0].mxu0
  %v3914 = vpop.f32.mrb[0].mxu0
  %3915 = vdwg.mxu0
  %v3916 = vadd.f32 %v3869, %v50
  %v3917 = vadd.f32 %v3871, %v51
  %v3918 = vadd.f32 %v3910, %v52
  %v3919 = vadd.f32 %v3912, %v53
  %v3920 = vxor.u32 %v3916, 2147483648
  %v3921 = vmul.f32 %v3920, 1.442695
  %v3922 = vpow.pop %v3921
  %v3923 = vadd.f32 %v3922, 1.0
  %v3924 = vrcp.pop %v3923
  %v3925 = vmul.f32 1.0, %v3924
  %v3926 = vxor.u32 %v3917, 2147483648
  %v3927 = vmul.f32 %v3926, 1.442695
  %v3928 = vpow.pop %v3927
  %v3929 = vadd.f32 %v3928, 1.0
  %v3930 = vrcp.pop %v3929
  %v3931 = vmul.f32 1.0, %v3930
  %v3932 = vtanh.pop %v3918
  %v3933 = vxor.u32 %v3919, 2147483648
  %v3934 = vmul.f32 %v3933, 1.442695
  %v3935 = vpow.pop %v3934
  %v3936 = vadd.f32 %v3935, 1.0
  %v3937 = vrcp.pop %v3936
  %v3938 = vmul.f32 1.0, %v3937
  %v3939 = vmul.f32 %v3931, %v3435
  %v3940 = vmul.f32 %v3925, %v3932
  %v3941 = vadd.f32 %v3939, %v3940
  %v3942 = vtanh.pop %v3941
  %v3943 = vmul.f32 %v3938, %v3942
  %s3944 = scalar_lea.vmem [#allocation2], 160
  %v3945 = vld [vmem:[%s3944] sm:$0xff]
  %v3946 = vld [vmem:[%s3944 + $0x8] sm:$0xff]
  %v3947 = vld [vmem:[%s3944 + $0x10] sm:$0xff]
  %v3948 = vld [vmem:[%s3944 + $0x18] sm:$0xff]
  %3949 = vmatprep.subr.bf16.mxu0 %v589
  %3950 = vmatpush1.bf16.msra.mxu0 %v588
  %3951 = vmatprep.subr.bf16.mxu0 %v593
  %3952 = vmatpush1.bf16.msra.mxu0 %v592
  %3953 = vmatprep.subr.bf16.mxu0 %v597
  %3954 = vmatpush1.bf16.msra.mxu0 %v596
  %3955 = vmatprep.subr.bf16.mxu0 %v601
  %3956 = vmatpush1.bf16.msra.mxu0 %v600
  %3957 = vmatprep.subr.bf16.mxu0 %v605
  %3958 = vmatpush1.bf16.msra.mxu0 %v604
  %3959 = vmatprep.subr.bf16.mxu0 %v609
  %3960 = vmatpush1.bf16.msra.mxu0 %v608
  %3961 = vmatprep.subr.bf16.mxu0 %v613
  %3962 = vmatpush1.bf16.msra.mxu0 %v612
  %3963 = vmatprep.subr.bf16.mxu0 %v617
  %3964 = vmatpush1.bf16.msra.mxu0 %v616
  %3965 = vmatprep.subr.bf16.mxu0 0
  %3966 = vmatpush1.bf16.msra.mxu0 0
  %3967 = vmatprep.subr.bf16.mxu0 0
  %3968 = vmatpush1.bf16.msra.mxu0 0
  %3969 = vmatprep.subr.bf16.mxu0 0
  %3970 = vmatpush1.bf16.msra.mxu0 0
  %3971 = vmatprep.subr.bf16.mxu0 0
  %3972 = vmatpush1.bf16.msra.mxu0 0
  %3973 = vmatprep.subr.bf16.mxu0 0
  %3974 = vmatpush1.bf16.msra.mxu0 0
  %3975 = vmatprep.subr.bf16.mxu0 0
  %3976 = vmatpush1.bf16.msra.mxu0 0
  %3977 = vmatprep.subr.bf16.mxu0 0
  %3978 = vmatpush1.bf16.msra.mxu0 0
  %3979 = vmatprep.subr.bf16.mxu0 0
  %3980 = vmatpush1.bf16.msra.mxu0 0
  %3981 = vmatprep.mubr.bf16.mxu0 0
  %3982 = vmatmul.mubr.bf16.gmra.mrb[0].mxu0 %v3557
  %v3983 = vpop.f32.mrb[0].mxu0
  %v3984 = vadd.f32 0.0, %v3983
  %v3985 = vpop.f32.mrb[0].mxu0
  %v3986 = vadd.f32 0.0, %v3985
  %v3987 = vpop.f32.mrb[0].mxu0
  %v3988 = vpop.f32.mrb[0].mxu0
  %3989 = vdwg.mxu0
  %3990 = vmatprep.subr.bf16.mxu0 %v591
  %3991 = vmatpush1.bf16.msra.mxu0 %v590
  %3992 = vmatprep.subr.bf16.mxu0 %v595
  %3993 = vmatpush1.bf16.msra.mxu0 %v594
  %3994 = vmatprep.subr.bf16.mxu0 %v599
  %3995 = vmatpush1.bf16.msra.mxu0 %v598
  %3996 = vmatprep.subr.bf16.mxu0 %v603
  %3997 = vmatpush1.bf16.msra.mxu0 %v602
  %3998 = vmatprep.subr.bf16.mxu0 %v607
  %3999 = vmatpush1.bf16.msra.mxu0 %v606
  %4000 = vmatprep.subr.bf16.mxu0 %v611
  %4001 = vmatpush1.bf16.msra.mxu0 %v610
  %4002 = vmatprep.subr.bf16.mxu0 %v615
  %4003 = vmatpush1.bf16.msra.mxu0 %v614
  %4004 = vmatprep.subr.bf16.mxu0 %v619
  %4005 = vmatpush1.bf16.msra.mxu0 %v618
  %4006 = vmatprep.subr.bf16.mxu0 0
  %4007 = vmatpush1.bf16.msra.mxu0 0
  %4008 = vmatprep.subr.bf16.mxu0 0
  %4009 = vmatpush1.bf16.msra.mxu0 0
  %4010 = vmatprep.subr.bf16.mxu0 0
  %4011 = vmatpush1.bf16.msra.mxu0 0
  %4012 = vmatprep.subr.bf16.mxu0 0
  %4013 = vmatpush1.bf16.msra.mxu0 0
  %4014 = vmatprep.subr.bf16.mxu0 0
  %4015 = vmatpush1.bf16.msra.mxu0 0
  %4016 = vmatprep.subr.bf16.mxu0 0
  %4017 = vmatpush1.bf16.msra.mxu0 0
  %4018 = vmatprep.subr.bf16.mxu0 0
  %4019 = vmatpush1.bf16.msra.mxu0 0
  %4020 = vmatprep.subr.bf16.mxu0 0
  %4021 = vmatpush1.bf16.msra.mxu0 0
  %4022 = vmatprep.mubr.bf16.mxu0 0
  %4023 = vmatmul.mubr.bf16.gmra.mrb[0].mxu0 %v3557
  %v4024 = vpop.f32.mrb[0].mxu0
  %v4025 = vadd.f32 0.0, %v4024
  %v4026 = vpop.f32.mrb[0].mxu0
  %v4027 = vadd.f32 0.0, %v4026
  %v4028 = vpop.f32.mrb[0].mxu0
  %v4029 = vpop.f32.mrb[0].mxu0
  %4030 = vdwg.mxu0
  %v4031 = vadd.f32 %v3945, %v3984
  %v4032 = vadd.f32 %v3946, %v3986
  %v4033 = vadd.f32 %v3947, %v4025
  %v4034 = vadd.f32 %v3948, %v4027
  %v4035 = vadd.f32 %v4031, %v42
  %v4036 = vadd.f32 %v4032, %v43
  %v4037 = vadd.f32 %v4033, %v44
  %v4038 = vadd.f32 %v4034, %v45
  %v4039 = vxor.u32 %v4035, 2147483648
  %v4040 = vmul.f32 %v4039, 1.442695
  %v4041 = vpow.pop %v4040
  %v4042 = vadd.f32 %v4041, 1.0
  %v4043 = vrcp.pop %v4042
  %v4044 = vmul.f32 1.0, %v4043
  %v4045 = vxor.u32 %v4036, 2147483648
  %v4046 = vmul.f32 %v4045, 1.442695
  %v4047 = vpow.pop %v4046
  %v4048 = vadd.f32 %v4047, 1.0
  %v4049 = vrcp.pop %v4048
  %v4050 = vmul.f32 1.0, %v4049
  %v4051 = vtanh.pop %v4037
  %v4052 = vxor.u32 %v4038, 2147483648
  %v4053 = vmul.f32 %v4052, 1.442695
  %v4054 = vpow.pop %v4053
  %v4055 = vadd.f32 %v4054, 1.0
  %v4056 = vrcp.pop %v4055
  %v4057 = vmul.f32 1.0, %v4056
  %v4058 = vmul.f32 %v4050, %v3554
  %v4059 = vmul.f32 %v4044, %v4051
  %v4060 = vadd.f32 %v4058, %v4059
  %v4061 = vtanh.pop %v4060
  %v4062 = vmul.f32 %v4057, %v4061
  %v4063 = vpack.c.bf16 %v4062, %v4062
  %4064 = vmatprep.subr.bf16.mxu0 %v928
  %4065 = vmatpush1.bf16.msra.mxu0 %v927
  %4066 = vmatprep.subr.bf16.mxu0 %v932
  %4067 = vmatpush1.bf16.msra.mxu0 %v931
  %4068 = vmatprep.subr.bf16.mxu0 %v936
  %4069 = vmatpush1.bf16.msra.mxu0 %v935
  %4070 = vmatprep.subr.bf16.mxu0 %v940
  %4071 = vmatpush1.bf16.msra.mxu0 %v939
  %4072 = vmatprep.subr.bf16.mxu0 %v944
  %4073 = vmatpush1.bf16.msra.mxu0 %v943
  %4074 = vmatprep.subr.bf16.mxu0 %v948
  %4075 = vmatpush1.bf16.msra.mxu0 %v947
  %4076 = vmatprep.subr.bf16.mxu0 %v952
  %4077 = vmatpush1.bf16.msra.mxu0 %v951
  %4078 = vmatprep.subr.bf16.mxu0 %v956
  %4079 = vmatpush1.bf16.msra.mxu0 %v955
  %4080 = vmatprep.subr.bf16.mxu0 0
  %4081 = vmatpush1.bf16.msra.mxu0 0
  %4082 = vmatprep.subr.bf16.mxu0 0
  %4083 = vmatpush1.bf16.msra.mxu0 0
  %4084 = vmatprep.subr.bf16.mxu0 0
  %4085 = vmatpush1.bf16.msra.mxu0 0
  %4086 = vmatprep.subr.bf16.mxu0 0
  %4087 = vmatpush1.bf16.msra.mxu0 0
  %4088 = vmatprep.subr.bf16.mxu0 0
  %4089 = vmatpush1.bf16.msra.mxu0 0
  %4090 = vmatprep.subr.bf16.mxu0 0
  %4091 = vmatpush1.bf16.msra.mxu0 0
  %4092 = vmatprep.subr.bf16.mxu0 0
  %4093 = vmatpush1.bf16.msra.mxu0 0
  %4094 = vmatprep.subr.bf16.mxu0 0
  %4095 = vmatpush1.bf16.msra.mxu0 0
  %4096 = vmatprep.mubr.bf16.mxu0 0
  %4097 = vmatmul.mubr.bf16.gmra.mrb[0].mxu0 %v3750
  %v4098 = vpop.f32.mrb[0].mxu0
  %v4099 = vadd.f32 0.0, %v4098
  %v4100 = vpop.f32.mrb[0].mxu0
  %v4101 = vadd.f32 0.0, %v4100
  %v4102 = vpop.f32.mrb[0].mxu0
  %v4103 = vpop.f32.mrb[0].mxu0
  %4104 = vdwg.mxu0
  %4105 = vmatprep.subr.bf16.mxu0 %v930
  %4106 = vmatpush1.bf16.msra.mxu0 %v929
  %4107 = vmatprep.subr.bf16.mxu0 %v934
  %4108 = vmatpush1.bf16.msra.mxu0 %v933
  %4109 = vmatprep.subr.bf16.mxu0 %v938
  %4110 = vmatpush1.bf16.msra.mxu0 %v937
  %4111 = vmatprep.subr.bf16.mxu0 %v942
  %4112 = vmatpush1.bf16.msra.mxu0 %v941
  %4113 = vmatprep.subr.bf16.mxu0 %v946
  %4114 = vmatpush1.bf16.msra.mxu0 %v945
  %4115 = vmatprep.subr.bf16.mxu0 %v950
  %4116 = vmatpush1.bf16.msra.mxu0 %v949
  %4117 = vmatprep.subr.bf16.mxu0 %v954
  %4118 = vmatpush1.bf16.msra.mxu0 %v953
  %4119 = vmatprep.subr.bf16.mxu0 %v958
  %4120 = vmatpush1.bf16.msra.mxu0 %v957
  %4121 = vmatprep.subr.bf16.mxu0 0
  %4122 = vmatpush1.bf16.msra.mxu0 0
  %4123 = vmatprep.subr.bf16.mxu0 0
  %4124 = vmatpush1.bf16.msra.mxu0 0
  %4125 = vmatprep.subr.bf16.mxu0 0
  %4126 = vmatpush1.bf16.msra.mxu0 0
  %4127 = vmatprep.subr.bf16.mxu0 0
  %4128 = vmatpush1.bf16.msra.mxu0 0
  %4129 = vmatprep.subr.bf16.mxu0 0
  %4130 = vmatpush1.bf16.msra.mxu0 0
  %4131 = vmatprep.subr.bf16.mxu0 0
  %4132 = vmatpush1.bf16.msra.mxu0 0
  %4133 = vmatprep.subr.bf16.mxu0 0
  %4134 = vmatpush1.bf16.msra.mxu0 0
  %4135 = vmatprep.subr.bf16.mxu0 0
  %4136 = vmatpush1.bf16.msra.mxu0 0
  %4137 = vmatprep.mubr.bf16.mxu0 0
  %4138 = vmatmul.mubr.bf16.gmra.mrb[0].mxu0 %v3750
  %v4139 = vpop.f32.mrb[0].mxu0
  %v4140 = vadd.f32 0.0, %v4139
  %v4141 = vpop.f32.mrb[0].mxu0
  %v4142 = vadd.f32 0.0, %v4141
  %v4143 = vpop.f32.mrb[0].mxu0
  %v4144 = vpop.f32.mrb[0].mxu0
  %4145 = vdwg.mxu0
  %4146 = vmatprep.subr.bf16.mxu0 %v1170
  %4147 = vmatpush1.bf16.msra.mxu0 %v1169
  %4148 = vmatprep.subr.bf16.mxu0 %v1174
  %4149 = vmatpush1.bf16.msra.mxu0 %v1173
  %4150 = vmatprep.subr.bf16.mxu0 %v1178
  %4151 = vmatpush1.bf16.msra.mxu0 %v1177
  %4152 = vmatprep.subr.bf16.mxu0 %v1182
  %4153 = vmatpush1.bf16.msra.mxu0 %v1181
  %4154 = vmatprep.subr.bf16.mxu0 %v1186
  %4155 = vmatpush1.bf16.msra.mxu0 %v1185
  %4156 = vmatprep.subr.bf16.mxu0 %v1190
  %4157 = vmatpush1.bf16.msra.mxu0 %v1189
  %4158 = vmatprep.subr.bf16.mxu0 %v1194
  %4159 = vmatpush1.bf16.msra.mxu0 %v1193
  %4160 = vmatprep.subr.bf16.mxu0 %v1198
  %4161 = vmatpush1.bf16.msra.mxu0 %v1197
  %4162 = vmatprep.subr.bf16.mxu0 0
  %4163 = vmatpush1.bf16.msra.mxu0 0
  %4164 = vmatprep.subr.bf16.mxu0 0
  %4165 = vmatpush1.bf16.msra.mxu0 0
  %4166 = vmatprep.subr.bf16.mxu0 0
  %4167 = vmatpush1.bf16.msra.mxu0 0
  %4168 = vmatprep.subr.bf16.mxu0 0
  %4169 = vmatpush1.bf16.msra.mxu0 0
  %4170 = vmatprep.subr.bf16.mxu0 0
  %4171 = vmatpush1.bf16.msra.mxu0 0
  %4172 = vmatprep.subr.bf16.mxu0 0
  %4173 = vmatpush1.bf16.msra.mxu0 0
  %4174 = vmatprep.subr.bf16.mxu0 0
  %4175 = vmatpush1.bf16.msra.mxu0 0
  %4176 = vmatprep.subr.bf16.mxu0 0
  %4177 = vmatpush1.bf16.msra.mxu0 0
  %4178 = vmatprep.mubr.bf16.mxu0 0
  %4179 = vmatmul.mubr.bf16.gmra.mrb[0].mxu0 %v4063
  %v4180 = vpop.f32.mrb[0].mxu0
  %v4181 = vadd.f32 %v4099, %v4180
  %v4182 = vpop.f32.mrb[0].mxu0
  %v4183 = vadd.f32 %v4101, %v4182
  %v4184 = vpop.f32.mrb[0].mxu0
  %v4185 = vpop.f32.mrb[0].mxu0
  %4186 = vdwg.mxu0
  %4187 = vmatprep.subr.bf16.mxu0 %v1172
  %4188 = vmatpush1.bf16.msra.mxu0 %v1171
  %4189 = vmatprep.subr.bf16.mxu0 %v1176
  %4190 = vmatpush1.bf16.msra.mxu0 %v1175
  %4191 = vmatprep.subr.bf16.mxu0 %v1180
  %4192 = vmatpush1.bf16.msra.mxu0 %v1179
  %4193 = vmatprep.subr.bf16.mxu0 %v1184
  %4194 = vmatpush1.bf16.msra.mxu0 %v1183
  %4195 = vmatprep.subr.bf16.mxu0 %v1188
  %4196 = vmatpush1.bf16.msra.mxu0 %v1187
  %4197 = vmatprep.subr.bf16.mxu0 %v1192
  %4198 = vmatpush1.bf16.msra.mxu0 %v1191
  %4199 = vmatprep.subr.bf16.mxu0 %v1196
  %4200 = vmatpush1.bf16.msra.mxu0 %v1195
  %4201 = vmatprep.subr.bf16.mxu0 %v1200
  %4202 = vmatpush1.bf16.msra.mxu0 %v1199
  %4203 = vmatprep.subr.bf16.mxu0 0
  %4204 = vmatpush1.bf16.msra.mxu0 0
  %4205 = vmatprep.subr.bf16.mxu0 0
  %4206 = vmatpush1.bf16.msra.mxu0 0
  %4207 = vmatprep.subr.bf16.mxu0 0
  %4208 = vmatpush1.bf16.msra.mxu0 0
  %4209 = vmatprep.subr.bf16.mxu0 0
  %4210 = vmatpush1.bf16.msra.mxu0 0
  %4211 = vmatprep.subr.bf16.mxu0 0
  %4212 = vmatpush1.bf16.msra.mxu0 0
  %4213 = vmatprep.subr.bf16.mxu0 0
  %4214 = vmatpush1.bf16.msra.mxu0 0
  %4215 = vmatprep.subr.bf16.mxu0 0
  %4216 = vmatpush1.bf16.msra.mxu0 0
  %4217 = vmatprep.subr.bf16.mxu0 0
  %4218 = vmatpush1.bf16.msra.mxu0 0
  %4219 = vmatprep.mubr.bf16.mxu0 0
  %4220 = vmatmul.mubr.bf16.gmra.mrb[0].mxu0 %v4063
  %v4221 = vpop.f32.mrb[0].mxu0
  %v4222 = vadd.f32 %v4140, %v4221
  %v4223 = vpop.f32.mrb[0].mxu0
  %v4224 = vadd.f32 %v4142, %v4223
  %v4225 = vpop.f32.mrb[0].mxu0
  %v4226 = vpop.f32.mrb[0].mxu0
  %4227 = vdwg.mxu0
  %v4228 = vadd.f32 %v4181, %v46
  %v4229 = vadd.f32 %v4183, %v47
  %v4230 = vadd.f32 %v4222, %v48
  %v4231 = vadd.f32 %v4224, %v49
  %v4232 = vxor.u32 %v4228, 2147483648
  %v4233 = vmul.f32 %v4232, 1.442695
  %v4234 = vpow.pop %v4233
  %v4235 = vadd.f32 %v4234, 1.0
  %v4236 = vrcp.pop %v4235
  %v4237 = vmul.f32 1.0, %v4236
  %v4238 = vxor.u32 %v4229, 2147483648
  %v4239 = vmul.f32 %v4238, 1.442695
  %v4240 = vpow.pop %v4239
  %v4241 = vadd.f32 %v4240, 1.0
  %v4242 = vrcp.pop %v4241
  %v4243 = vmul.f32 1.0, %v4242
  %v4244 = vtanh.pop %v4230
  %v4245 = vxor.u32 %v4231, 2147483648
  %v4246 = vmul.f32 %v4245, 1.442695
  %v4247 = vpow.pop %v4246
  %v4248 = vadd.f32 %v4247, 1.0
  %v4249 = vrcp.pop %v4248
  %v4250 = vmul.f32 1.0, %v4249
  %v4251 = vmul.f32 %v4243, %v3747
  %v4252 = vmul.f32 %v4237, %v4244
  %v4253 = vadd.f32 %v4251, %v4252
  %v4254 = vtanh.pop %v4253
  %v4255 = vmul.f32 %v4250, %v4254
  %v4256 = vpack.c.bf16 %v4255, %v4255
  %v4257 = vpack.c.bf16 %v3943, %v3943
  %4258 = vmatprep.subr.bf16.mxu0 %v1505
  %4259 = vmatpush1.bf16.msra.mxu0 %v1504
  %4260 = vmatprep.subr.bf16.mxu0 %v1509
  %4261 = vmatpush1.bf16.msra.mxu0 %v1508
  %4262 = vmatprep.subr.bf16.mxu0 %v1513
  %4263 = vmatpush1.bf16.msra.mxu0 %v1512
  %4264 = vmatprep.subr.bf16.mxu0 %v1517
  %4265 = vmatpush1.bf16.msra.mxu0 %v1516
  %4266 = vmatprep.subr.bf16.mxu0 %v1521
  %4267 = vmatpush1.bf16.msra.mxu0 %v1520
  %4268 = vmatprep.subr.bf16.mxu0 %v1525
  %4269 = vmatpush1.bf16.msra.mxu0 %v1524
  %4270 = vmatprep.subr.bf16.mxu0 %v1529
  %4271 = vmatpush1.bf16.msra.mxu0 %v1528
  %4272 = vmatprep.subr.bf16.mxu0 %v1533
  %4273 = vmatpush1.bf16.msra.mxu0 %v1532
  %4274 = vmatprep.subr.bf16.mxu0 0
  %4275 = vmatpush1.bf16.msra.mxu0 0
  %4276 = vmatprep.subr.bf16.mxu0 0
  %4277 = vmatpush1.bf16.msra.mxu0 0
  %4278 = vmatprep.subr.bf16.mxu0 0
  %4279 = vmatpush1.bf16.msra.mxu0 0
  %4280 = vmatprep.subr.bf16.mxu0 0
  %4281 = vmatpush1.bf16.msra.mxu0 0
  %4282 = vmatprep.subr.bf16.mxu0 0
  %4283 = vmatpush1.bf16.msra.mxu0 0
  %4284 = vmatprep.subr.bf16.mxu0 0
  %4285 = vmatpush1.bf16.msra.mxu0 0
  %4286 = vmatprep.subr.bf16.mxu0 0
  %4287 = vmatpush1.bf16.msra.mxu0 0
  %4288 = vmatprep.subr.bf16.mxu0 0
  %4289 = vmatpush1.bf16.msra.mxu0 0
  %4290 = vmatprep.mubr.bf16.mxu0 0
  %4291 = vmatmul.mubr.bf16.gmra.mrb[0].mxu0 %v4257
  %v4292 = vpop.f32.mrb[0].mxu0
  %v4293 = vadd.f32 0.0, %v4292
  %v4294 = vpop.f32.mrb[0].mxu0
  %v4295 = vadd.f32 0.0, %v4294
  %v4296 = vpop.f32.mrb[0].mxu0
  %v4297 = vpop.f32.mrb[0].mxu0
  %4298 = vdwg.mxu0
  %4299 = vmatprep.subr.bf16.mxu0 %v1507
  %4300 = vmatpush1.bf16.msra.mxu0 %v1506
  %4301 = vmatprep.subr.bf16.mxu0 %v1511
  %4302 = vmatpush1.bf16.msra.mxu0 %v1510
  %4303 = vmatprep.subr.bf16.mxu0 %v1515
  %4304 = vmatpush1.bf16.msra.mxu0 %v1514
  %4305 = vmatprep.subr.bf16.mxu0 %v1519
  %4306 = vmatpush1.bf16.msra.mxu0 %v1518
  %4307 = vmatprep.subr.bf16.mxu0 %v1523
  %4308 = vmatpush1.bf16.msra.mxu0 %v1522
  %4309 = vmatprep.subr.bf16.mxu0 %v1527
  %4310 = vmatpush1.bf16.msra.mxu0 %v1526
  %4311 = vmatprep.subr.bf16.mxu0 %v1531
  %4312 = vmatpush1.bf16.msra.mxu0 %v1530
  %4313 = vmatprep.subr.bf16.mxu0 %v1535
  %4314 = vmatpush1.bf16.msra.mxu0 %v1534
  %4315 = vmatprep.subr.bf16.mxu0 0
  %4316 = vmatpush1.bf16.msra.mxu0 0
  %4317 = vmatprep.subr.bf16.mxu0 0
  %4318 = vmatpush1.bf16.msra.mxu0 0
  %4319 = vmatprep.subr.bf16.mxu0 0
  %4320 = vmatpush1.bf16.msra.mxu0 0
  %4321 = vmatprep.subr.bf16.mxu0 0
  %4322 = vmatpush1.bf16.msra.mxu0 0
  %4323 = vmatprep.subr.bf16.mxu0 0
  %4324 = vmatpush1.bf16.msra.mxu0 0
  %4325 = vmatprep.subr.bf16.mxu0 0
  %4326 = vmatpush1.bf16.msra.mxu0 0
  %4327 = vmatprep.subr.bf16.mxu0 0
  %4328 = vmatpush1.bf16.msra.mxu0 0
  %4329 = vmatprep.subr.bf16.mxu0 0
  %4330 = vmatpush1.bf16.msra.mxu0 0
  %4331 = vmatprep.mubr.bf16.mxu0 0
  %4332 = vmatmul.mubr.bf16.gmra.mrb[0].mxu0 %v4257
  %v4333 = vpop.f32.mrb[0].mxu0
  %v4334 = vadd.f32 0.0, %v4333
  %v4335 = vpop.f32.mrb[0].mxu0
  %v4336 = vadd.f32 0.0, %v4335
  %v4337 = vpop.f32.mrb[0].mxu0
  %v4338 = vpop.f32.mrb[0].mxu0
  %4339 = vdwg.mxu0
  %4340 = vmatprep.subr.bf16.mxu0 %v1747
  %4341 = vmatpush1.bf16.msra.mxu0 %v1746
  %4342 = vmatprep.subr.bf16.mxu0 %v1751
  %4343 = vmatpush1.bf16.msra.mxu0 %v1750
  %4344 = vmatprep.subr.bf16.mxu0 %v1755
  %4345 = vmatpush1.bf16.msra.mxu0 %v1754
  %4346 = vmatprep.subr.bf16.mxu0 %v1759
  %4347 = vmatpush1.bf16.msra.mxu0 %v1758
  %4348 = vmatprep.subr.bf16.mxu0 %v1763
  %4349 = vmatpush1.bf16.msra.mxu0 %v1762
  %4350 = vmatprep.subr.bf16.mxu0 %v1767
  %4351 = vmatpush1.bf16.msra.mxu0 %v1766
  %4352 = vmatprep.subr.bf16.mxu0 %v1771
  %4353 = vmatpush1.bf16.msra.mxu0 %v1770
  %4354 = vmatprep.subr.bf16.mxu0 %v1775
  %4355 = vmatpush1.bf16.msra.mxu0 %v1774
  %4356 = vmatprep.subr.bf16.mxu0 0
  %4357 = vmatpush1.bf16.msra.mxu0 0
  %4358 = vmatprep.subr.bf16.mxu0 0
  %4359 = vmatpush1.bf16.msra.mxu0 0
  %4360 = vmatprep.subr.bf16.mxu0 0
  %4361 = vmatpush1.bf16.msra.mxu0 0
  %4362 = vmatprep.subr.bf16.mxu0 0
  %4363 = vmatpush1.bf16.msra.mxu0 0
  %4364 = vmatprep.subr.bf16.mxu0 0
  %4365 = vmatpush1.bf16.msra.mxu0 0
  %4366 = vmatprep.subr.bf16.mxu0 0
  %4367 = vmatpush1.bf16.msra.mxu0 0
  %4368 = vmatprep.subr.bf16.mxu0 0
  %4369 = vmatpush1.bf16.msra.mxu0 0
  %4370 = vmatprep.subr.bf16.mxu0 0
  %4371 = vmatpush1.bf16.msra.mxu0 0
  %4372 = vmatprep.mubr.bf16.mxu0 0
  %4373 = vmatmul.mubr.bf16.gmra.mrb[0].mxu0 %v4256
  %v4374 = vpop.f32.mrb[0].mxu0
  %v4375 = vadd.f32 %v4293, %v4374
  %v4376 = vpop.f32.mrb[0].mxu0
  %v4377 = vadd.f32 %v4295, %v4376
  %v4378 = vpop.f32.mrb[0].mxu0
  %v4379 = vpop.f32.mrb[0].mxu0
  %4380 = vdwg.mxu0
  %4381 = vmatprep.subr.bf16.mxu0 %v1749
  %4382 = vmatpush1.bf16.msra.mxu0 %v1748
  %4383 = vmatprep.subr.bf16.mxu0 %v1753
  %4384 = vmatpush1.bf16.msra.mxu0 %v1752
  %4385 = vmatprep.subr.bf16.mxu0 %v1757
  %4386 = vmatpush1.bf16.msra.mxu0 %v1756
  %4387 = vmatprep.subr.bf16.mxu0 %v1761
  %4388 = vmatpush1.bf16.msra.mxu0 %v1760
  %4389 = vmatprep.subr.bf16.mxu0 %v1765
  %4390 = vmatpush1.bf16.msra.mxu0 %v1764
  %4391 = vmatprep.subr.bf16.mxu0 %v1769
  %4392 = vmatpush1.bf16.msra.mxu0 %v1768
  %4393 = vmatprep.subr.bf16.mxu0 %v1773
  %4394 = vmatpush1.bf16.msra.mxu0 %v1772
  %4395 = vmatprep.subr.bf16.mxu0 %v1777
  %4396 = vmatpush1.bf16.msra.mxu0 %v1776
  %4397 = vmatprep.subr.bf16.mxu0 0
  %4398 = vmatpush1.bf16.msra.mxu0 0
  %4399 = vmatprep.subr.bf16.mxu0 0
  %4400 = vmatpush1.bf16.msra.mxu0 0
  %4401 = vmatprep.subr.bf16.mxu0 0
  %4402 = vmatpush1.bf16.msra.mxu0 0
  %4403 = vmatprep.subr.bf16.mxu0 0
  %4404 = vmatpush1.bf16.msra.mxu0 0
  %4405 = vmatprep.subr.bf16.mxu0 0
  %4406 = vmatpush1.bf16.msra.mxu0 0
  %4407 = vmatprep.subr.bf16.mxu0 0
  %4408 = vmatpush1.bf16.msra.mxu0 0
  %4409 = vmatprep.subr.bf16.mxu0 0
  %4410 = vmatpush1.bf16.msra.mxu0 0
  %4411 = vmatprep.subr.bf16.mxu0 0
  %4412 = vmatpush1.bf16.msra.mxu0 0
  %4413 = vmatprep.mubr.bf16.mxu0 0
  %4414 = vmatmul.mubr.bf16.gmra.mrb[0].mxu0 %v4256
  %v4415 = vpop.f32.mrb[0].mxu0
  %v4416 = vadd.f32 %v4334, %v4415
  %v4417 = vpop.f32.mrb[0].mxu0
  %v4418 = vadd.f32 %v4336, %v4417
  %v4419 = vpop.f32.mrb[0].mxu0
  %v4420 = vpop.f32.mrb[0].mxu0
  %4421 = vdwg.mxu0
  %v4422 = vadd.f32 %v4375, %v50
  %v4423 = vadd.f32 %v4377, %v51
  %v4424 = vadd.f32 %v4416, %v52
  %v4425 = vadd.f32 %v4418, %v53
  %v4426 = vxor.u32 %v4422, 2147483648
  %v4427 = vmul.f32 %v4426, 1.442695
  %v4428 = vpow.pop %v4427
  %v4429 = vadd.f32 %v4428, 1.0
  %v4430 = vrcp.pop %v4429
  %v4431 = vmul.f32 1.0, %v4430
  %v4432 = vxor.u32 %v4423, 2147483648
  %v4433 = vmul.f32 %v4432, 1.442695
  %v4434 = vpow.pop %v4433
  %v4435 = vadd.f32 %v4434, 1.0
  %v4436 = vrcp.pop %v4435
  %v4437 = vmul.f32 1.0, %v4436
  %v4438 = vtanh.pop %v4424
  %v4439 = vxor.u32 %v4425, 2147483648
  %v4440 = vmul.f32 %v4439, 1.442695
  %v4441 = vpow.pop %v4440
  %v4442 = vadd.f32 %v4441, 1.0
  %v4443 = vrcp.pop %v4442
  %v4444 = vmul.f32 1.0, %v4443
  %v4445 = vmul.f32 %v4437, %v3941
  %v4446 = vmul.f32 %v4431, %v4438
  %v4447 = vadd.f32 %v4445, %v4446
  %v4448 = vtanh.pop %v4447
  %v4449 = vmul.f32 %v4444, %v4448
  %s4450 = scalar_lea.vmem [#allocation2], 192
  %v4451 = vld [vmem:[%s4450] sm:$0xff]
  %v4452 = vld [vmem:[%s4450 + $0x8] sm:$0xff]
  %v4453 = vld [vmem:[%s4450 + $0x10] sm:$0xff]
  %v4454 = vld [vmem:[%s4450 + $0x18] sm:$0xff]
  %4455 = vmatprep.subr.bf16.mxu0 %v589
  %4456 = vmatpush1.bf16.msra.mxu0 %v588
  %4457 = vmatprep.subr.bf16.mxu0 %v593
  %4458 = vmatpush1.bf16.msra.mxu0 %v592
  %4459 = vmatprep.subr.bf16.mxu0 %v597
  %4460 = vmatpush1.bf16.msra.mxu0 %v596
  %4461 = vmatprep.subr.bf16.mxu0 %v601
  %4462 = vmatpush1.bf16.msra.mxu0 %v600
  %4463 = vmatprep.subr.bf16.mxu0 %v605
  %4464 = vmatpush1.bf16.msra.mxu0 %v604
  %4465 = vmatprep.subr.bf16.mxu0 %v609
  %4466 = vmatpush1.bf16.msra.mxu0 %v608
  %4467 = vmatprep.subr.bf16.mxu0 %v613
  %4468 = vmatpush1.bf16.msra.mxu0 %v612
  %4469 = vmatprep.subr.bf16.mxu0 %v617
  %4470 = vmatpush1.bf16.msra.mxu0 %v616
  %4471 = vmatprep.subr.bf16.mxu0 0
  %4472 = vmatpush1.bf16.msra.mxu0 0
  %4473 = vmatprep.subr.bf16.mxu0 0
  %4474 = vmatpush1.bf16.msra.mxu0 0
  %4475 = vmatprep.subr.bf16.mxu0 0
  %4476 = vmatpush1.bf16.msra.mxu0 0
  %4477 = vmatprep.subr.bf16.mxu0 0
  %4478 = vmatpush1.bf16.msra.mxu0 0
  %4479 = vmatprep.subr.bf16.mxu0 0
  %4480 = vmatpush1.bf16.msra.mxu0 0
  %4481 = vmatprep.subr.bf16.mxu0 0
  %4482 = vmatpush1.bf16.msra.mxu0 0
  %4483 = vmatprep.subr.bf16.mxu0 0
  %4484 = vmatpush1.bf16.msra.mxu0 0
  %4485 = vmatprep.subr.bf16.mxu0 0
  %4486 = vmatpush1.bf16.msra.mxu0 0
  %4487 = vmatprep.mubr.bf16.mxu0 0
  %4488 = vmatmul.mubr.bf16.gmra.mrb[0].mxu0 %v4063
  %v4489 = vpop.f32.mrb[0].mxu0
  %v4490 = vadd.f32 0.0, %v4489
  %v4491 = vpop.f32.mrb[0].mxu0
  %v4492 = vadd.f32 0.0, %v4491
  %v4493 = vpop.f32.mrb[0].mxu0
  %v4494 = vpop.f32.mrb[0].mxu0
  %4495 = vdwg.mxu0
  %4496 = vmatprep.subr.bf16.mxu0 %v591
  %4497 = vmatpush1.bf16.msra.mxu0 %v590
  %4498 = vmatprep.subr.bf16.mxu0 %v595
  %4499 = vmatpush1.bf16.msra.mxu0 %v594
  %4500 = vmatprep.subr.bf16.mxu0 %v599
  %4501 = vmatpush1.bf16.msra.mxu0 %v598
  %4502 = vmatprep.subr.bf16.mxu0 %v603
  %4503 = vmatpush1.bf16.msra.mxu0 %v602
  %4504 = vmatprep.subr.bf16.mxu0 %v607
  %4505 = vmatpush1.bf16.msra.mxu0 %v606
  %4506 = vmatprep.subr.bf16.mxu0 %v611
  %4507 = vmatpush1.bf16.msra.mxu0 %v610
  %4508 = vmatprep.subr.bf16.mxu0 %v615
  %4509 = vmatpush1.bf16.msra.mxu0 %v614
  %4510 = vmatprep.subr.bf16.mxu0 %v619
  %4511 = vmatpush1.bf16.msra.mxu0 %v618
  %4512 = vmatprep.subr.bf16.mxu0 0
  %4513 = vmatpush1.bf16.msra.mxu0 0
  %4514 = vmatprep.subr.bf16.mxu0 0
  %4515 = vmatpush1.bf16.msra.mxu0 0
  %4516 = vmatprep.subr.bf16.mxu0 0
  %4517 = vmatpush1.bf16.msra.mxu0 0
  %4518 = vmatprep.subr.bf16.mxu0 0
  %4519 = vmatpush1.bf16.msra.mxu0 0
  %4520 = vmatprep.subr.bf16.mxu0 0
  %4521 = vmatpush1.bf16.msra.mxu0 0
  %4522 = vmatprep.subr.bf16.mxu0 0
  %4523 = vmatpush1.bf16.msra.mxu0 0
  %4524 = vmatprep.subr.bf16.mxu0 0
  %4525 = vmatpush1.bf16.msra.mxu0 0
  %4526 = vmatprep.subr.bf16.mxu0 0
  %4527 = vmatpush1.bf16.msra.mxu0 0
  %4528 = vmatprep.mubr.bf16.mxu0 0
  %4529 = vmatmul.mubr.bf16.gmra.mrb[0].mxu0 %v4063
  %v4530 = vpop.f32.mrb[0].mxu0
  %v4531 = vadd.f32 0.0, %v4530
  %v4532 = vpop.f32.mrb[0].mxu0
  %v4533 = vadd.f32 0.0, %v4532
  %v4534 = vpop.f32.mrb[0].mxu0
  %v4535 = vpop.f32.mrb[0].mxu0
  %4536 = vdwg.mxu0
  %v4537 = vadd.f32 %v4451, %v4490
  %v4538 = vadd.f32 %v4452, %v4492
  %v4539 = vadd.f32 %v4453, %v4531
  %v4540 = vadd.f32 %v4454, %v4533
  %v4541 = vadd.f32 %v4537, %v42
  %v4542 = vadd.f32 %v4538, %v43
  %v4543 = vadd.f32 %v4539, %v44
  %v4544 = vadd.f32 %v4540, %v45
  %v4545 = vxor.u32 %v4541, 2147483648
  %v4546 = vmul.f32 %v4545, 1.442695
  %v4547 = vpow.pop %v4546
  %v4548 = vadd.f32 %v4547, 1.0
  %v4549 = vrcp.pop %v4548
  %v4550 = vmul.f32 1.0, %v4549
  %v4551 = vxor.u32 %v4542, 2147483648
  %v4552 = vmul.f32 %v4551, 1.442695
  %v4553 = vpow.pop %v4552
  %v4554 = vadd.f32 %v4553, 1.0
  %v4555 = vrcp.pop %v4554
  %v4556 = vmul.f32 1.0, %v4555
  %v4557 = vtanh.pop %v4543
  %v4558 = vxor.u32 %v4544, 2147483648
  %v4559 = vmul.f32 %v4558, 1.442695
  %v4560 = vpow.pop %v4559
  %v4561 = vadd.f32 %v4560, 1.0
  %v4562 = vrcp.pop %v4561
  %v4563 = vmul.f32 1.0, %v4562
  %v4564 = vmul.f32 %v4556, %v4060
  %v4565 = vmul.f32 %v4550, %v4557
  %v4566 = vadd.f32 %v4564, %v4565
  %v4567 = vtanh.pop %v4566
  %v4568 = vmul.f32 %v4563, %v4567
  %v4569 = vpack.c.bf16 %v4568, %v4568
  %4570 = vmatprep.subr.bf16.mxu0 %v928
  %4571 = vmatpush1.bf16.msra.mxu0 %v927
  %4572 = vmatprep.subr.bf16.mxu0 %v932
  %4573 = vmatpush1.bf16.msra.mxu0 %v931
  %4574 = vmatprep.subr.bf16.mxu0 %v936
  %4575 = vmatpush1.bf16.msra.mxu0 %v935
  %4576 = vmatprep.subr.bf16.mxu0 %v940
  %4577 = vmatpush1.bf16.msra.mxu0 %v939
  %4578 = vmatprep.subr.bf16.mxu0 %v944
  %4579 = vmatpush1.bf16.msra.mxu0 %v943
  %4580 = vmatprep.subr.bf16.mxu0 %v948
  %4581 = vmatpush1.bf16.msra.mxu0 %v947
  %4582 = vmatprep.subr.bf16.mxu0 %v952
  %4583 = vmatpush1.bf16.msra.mxu0 %v951
  %4584 = vmatprep.subr.bf16.mxu0 %v956
  %4585 = vmatpush1.bf16.msra.mxu0 %v955
  %4586 = vmatprep.subr.bf16.mxu0 0
  %4587 = vmatpush1.bf16.msra.mxu0 0
  %4588 = vmatprep.subr.bf16.mxu0 0
  %4589 = vmatpush1.bf16.msra.mxu0 0
  %4590 = vmatprep.subr.bf16.mxu0 0
  %4591 = vmatpush1.bf16.msra.mxu0 0
  %4592 = vmatprep.subr.bf16.mxu0 0
  %4593 = vmatpush1.bf16.msra.mxu0 0
  %4594 = vmatprep.subr.bf16.mxu0 0
  %4595 = vmatpush1.bf16.msra.mxu0 0
  %4596 = vmatprep.subr.bf16.mxu0 0
  %4597 = vmatpush1.bf16.msra.mxu0 0
  %4598 = vmatprep.subr.bf16.mxu0 0
  %4599 = vmatpush1.bf16.msra.mxu0 0
  %4600 = vmatprep.subr.bf16.mxu0 0
  %4601 = vmatpush1.bf16.msra.mxu0 0
  %4602 = vmatprep.mubr.bf16.mxu0 0
  %4603 = vmatmul.mubr.bf16.gmra.mrb[0].mxu0 %v4256
  %v4604 = vpop.f32.mrb[0].mxu0
  %v4605 = vadd.f32 0.0, %v4604
  %v4606 = vpop.f32.mrb[0].mxu0
  %v4607 = vadd.f32 0.0, %v4606
  %v4608 = vpop.f32.mrb[0].mxu0
  %v4609 = vpop.f32.mrb[0].mxu0
  %4610 = vdwg.mxu0
  %4611 = vmatprep.subr.bf16.mxu0 %v930
  %4612 = vmatpush1.bf16.msra.mxu0 %v929
  %4613 = vmatprep.subr.bf16.mxu0 %v934
  %4614 = vmatpush1.bf16.msra.mxu0 %v933
  %4615 = vmatprep.subr.bf16.mxu0 %v938
  %4616 = vmatpush1.bf16.msra.mxu0 %v937
  %4617 = vmatprep.subr.bf16.mxu0 %v942
  %4618 = vmatpush1.bf16.msra.mxu0 %v941
  %4619 = vmatprep.subr.bf16.mxu0 %v946
  %4620 = vmatpush1.bf16.msra.mxu0 %v945
  %4621 = vmatprep.subr.bf16.mxu0 %v950
  %4622 = vmatpush1.bf16.msra.mxu0 %v949
  %4623 = vmatprep.subr.bf16.mxu0 %v954
  %4624 = vmatpush1.bf16.msra.mxu0 %v953
  %4625 = vmatprep.subr.bf16.mxu0 %v958
  %4626 = vmatpush1.bf16.msra.mxu0 %v957
  %4627 = vmatprep.subr.bf16.mxu0 0
  %4628 = vmatpush1.bf16.msra.mxu0 0
  %4629 = vmatprep.subr.bf16.mxu0 0
  %4630 = vmatpush1.bf16.msra.mxu0 0
  %4631 = vmatprep.subr.bf16.mxu0 0
  %4632 = vmatpush1.bf16.msra.mxu0 0
  %4633 = vmatprep.subr.bf16.mxu0 0
  %4634 = vmatpush1.bf16.msra.mxu0 0
  %4635 = vmatprep.subr.bf16.mxu0 0
  %4636 = vmatpush1.bf16.msra.mxu0 0
  %4637 = vmatprep.subr.bf16.mxu0 0
  %4638 = vmatpush1.bf16.msra.mxu0 0
  %4639 = vmatprep.subr.bf16.mxu0 0
  %4640 = vmatpush1.bf16.msra.mxu0 0
  %4641 = vmatprep.subr.bf16.mxu0 0
  %4642 = vmatpush1.bf16.msra.mxu0 0
  %4643 = vmatprep.mubr.bf16.mxu0 0
  %4644 = vmatmul.mubr.bf16.gmra.mrb[0].mxu0 %v4256
  %v4645 = vpop.f32.mrb[0].mxu0
  %v4646 = vadd.f32 0.0, %v4645
  %v4647 = vpop.f32.mrb[0].mxu0
  %v4648 = vadd.f32 0.0, %v4647
  %v4649 = vpop.f32.mrb[0].mxu0
  %v4650 = vpop.f32.mrb[0].mxu0
  %4651 = vdwg.mxu0
  %4652 = vmatprep.subr.bf16.mxu0 %v1170
  %4653 = vmatpush1.bf16.msra.mxu0 %v1169
  %4654 = vmatprep.subr.bf16.mxu0 %v1174
  %4655 = vmatpush1.bf16.msra.mxu0 %v1173
  %4656 = vmatprep.subr.bf16.mxu0 %v1178
  %4657 = vmatpush1.bf16.msra.mxu0 %v1177
  %4658 = vmatprep.subr.bf16.mxu0 %v1182
  %4659 = vmatpush1.bf16.msra.mxu0 %v1181
  %4660 = vmatprep.subr.bf16.mxu0 %v1186
  %4661 = vmatpush1.bf16.msra.mxu0 %v1185
  %4662 = vmatprep.subr.bf16.mxu0 %v1190
  %4663 = vmatpush1.bf16.msra.mxu0 %v1189
  %4664 = vmatprep.subr.bf16.mxu0 %v1194
  %4665 = vmatpush1.bf16.msra.mxu0 %v1193
  %4666 = vmatprep.subr.bf16.mxu0 %v1198
  %4667 = vmatpush1.bf16.msra.mxu0 %v1197
  %4668 = vmatprep.subr.bf16.mxu0 0
  %4669 = vmatpush1.bf16.msra.mxu0 0
  %4670 = vmatprep.subr.bf16.mxu0 0
  %4671 = vmatpush1.bf16.msra.mxu0 0
  %4672 = vmatprep.subr.bf16.mxu0 0
  %4673 = vmatpush1.bf16.msra.mxu0 0
  %4674 = vmatprep.subr.bf16.mxu0 0
  %4675 = vmatpush1.bf16.msra.mxu0 0
  %4676 = vmatprep.subr.bf16.mxu0 0
  %4677 = vmatpush1.bf16.msra.mxu0 0
  %4678 = vmatprep.subr.bf16.mxu0 0
  %4679 = vmatpush1.bf16.msra.mxu0 0
  %4680 = vmatprep.subr.bf16.mxu0 0
  %4681 = vmatpush1.bf16.msra.mxu0 0
  %4682 = vmatprep.subr.bf16.mxu0 0
  %4683 = vmatpush1.bf16.msra.mxu0 0
  %4684 = vmatprep.mubr.bf16.mxu0 0
  %4685 = vmatmul.mubr.bf16.gmra.mrb[0].mxu0 %v4569
  %v4686 = vpop.f32.mrb[0].mxu0
  %v4687 = vadd.f32 %v4605, %v4686
  %v4688 = vpop.f32.mrb[0].mxu0
  %v4689 = vadd.f32 %v4607, %v4688
  %v4690 = vpop.f32.mrb[0].mxu0
  %v4691 = vpop.f32.mrb[0].mxu0
  %4692 = vdwg.mxu0
  %4693 = vmatprep.subr.bf16.mxu0 %v1172
  %4694 = vmatpush1.bf16.msra.mxu0 %v1171
  %4695 = vmatprep.subr.bf16.mxu0 %v1176
  %4696 = vmatpush1.bf16.msra.mxu0 %v1175
  %4697 = vmatprep.subr.bf16.mxu0 %v1180
  %4698 = vmatpush1.bf16.msra.mxu0 %v1179
  %4699 = vmatprep.subr.bf16.mxu0 %v1184
  %4700 = vmatpush1.bf16.msra.mxu0 %v1183
  %4701 = vmatprep.subr.bf16.mxu0 %v1188
  %4702 = vmatpush1.bf16.msra.mxu0 %v1187
  %4703 = vmatprep.subr.bf16.mxu0 %v1192
  %4704 = vmatpush1.bf16.msra.mxu0 %v1191
  %4705 = vmatprep.subr.bf16.mxu0 %v1196
  %4706 = vmatpush1.bf16.msra.mxu0 %v1195
  %4707 = vmatprep.subr.bf16.mxu0 %v1200
  %4708 = vmatpush1.bf16.msra.mxu0 %v1199
  %4709 = vmatprep.subr.bf16.mxu0 0
  %4710 = vmatpush1.bf16.msra.mxu0 0
  %4711 = vmatprep.subr.bf16.mxu0 0
  %4712 = vmatpush1.bf16.msra.mxu0 0
  %4713 = vmatprep.subr.bf16.mxu0 0
  %4714 = vmatpush1.bf16.msra.mxu0 0
  %4715 = vmatprep.subr.bf16.mxu0 0
  %4716 = vmatpush1.bf16.msra.mxu0 0
  %4717 = vmatprep.subr.bf16.mxu0 0
  %4718 = vmatpush1.bf16.msra.mxu0 0
  %4719 = vmatprep.subr.bf16.mxu0 0
  %4720 = vmatpush1.bf16.msra.mxu0 0
  %4721 = vmatprep.subr.bf16.mxu0 0
  %4722 = vmatpush1.bf16.msra.mxu0 0
  %4723 = vmatprep.subr.bf16.mxu0 0
  %4724 = vmatpush1.bf16.msra.mxu0 0
  %4725 = vmatprep.mubr.bf16.mxu0 0
  %4726 = vmatmul.mubr.bf16.gmra.mrb[0].mxu0 %v4569
  %v4727 = vpop.f32.mrb[0].mxu0
  %v4728 = vadd.f32 %v4646, %v4727
  %v4729 = vpop.f32.mrb[0].mxu0
  %v4730 = vadd.f32 %v4648, %v4729
  %v4731 = vpop.f32.mrb[0].mxu0
  %v4732 = vpop.f32.mrb[0].mxu0
  %4733 = vdwg.mxu0
  %v4734 = vadd.f32 %v4687, %v46
  %v4735 = vadd.f32 %v4689, %v47
  %v4736 = vadd.f32 %v4728, %v48
  %v4737 = vadd.f32 %v4730, %v49
  %v4738 = vxor.u32 %v4734, 2147483648
  %v4739 = vmul.f32 %v4738, 1.442695
  %v4740 = vpow.pop %v4739
  %v4741 = vadd.f32 %v4740, 1.0
  %v4742 = vrcp.pop %v4741
  %v4743 = vmul.f32 1.0, %v4742
  %v4744 = vxor.u32 %v4735, 2147483648
  %v4745 = vmul.f32 %v4744, 1.442695
  %v4746 = vpow.pop %v4745
  %v4747 = vadd.f32 %v4746, 1.0
  %v4748 = vrcp.pop %v4747
  %v4749 = vmul.f32 1.0, %v4748
  %v4750 = vtanh.pop %v4736
  %v4751 = vxor.u32 %v4737, 2147483648
  %v4752 = vmul.f32 %v4751, 1.442695
  %v4753 = vpow.pop %v4752
  %v4754 = vadd.f32 %v4753, 1.0
  %v4755 = vrcp.pop %v4754
  %v4756 = vmul.f32 1.0, %v4755
  %v4757 = vmul.f32 %v4749, %v4253
  %v4758 = vmul.f32 %v4743, %v4750
  %v4759 = vadd.f32 %v4757, %v4758
  %v4760 = vtanh.pop %v4759
  %v4761 = vmul.f32 %v4756, %v4760
  %v4762 = vpack.c.bf16 %v4761, %v4761
  %v4763 = vpack.c.bf16 %v4449, %v4449
  %4764 = vmatprep.subr.bf16.mxu0 %v1505
  %4765 = vmatpush1.bf16.msra.mxu0 %v1504
  %4766 = vmatprep.subr.bf16.mxu0 %v1509
  %4767 = vmatpush1.bf16.msra.mxu0 %v1508
  %4768 = vmatprep.subr.bf16.mxu0 %v1513
  %4769 = vmatpush1.bf16.msra.mxu0 %v1512
  %4770 = vmatprep.subr.bf16.mxu0 %v1517
  %4771 = vmatpush1.bf16.msra.mxu0 %v1516
  %4772 = vmatprep.subr.bf16.mxu0 %v1521
  %4773 = vmatpush1.bf16.msra.mxu0 %v1520
  %4774 = vmatprep.subr.bf16.mxu0 %v1525
  %4775 = vmatpush1.bf16.msra.mxu0 %v1524
  %4776 = vmatprep.subr.bf16.mxu0 %v1529
  %4777 = vmatpush1.bf16.msra.mxu0 %v1528
  %4778 = vmatprep.subr.bf16.mxu0 %v1533
  %4779 = vmatpush1.bf16.msra.mxu0 %v1532
  %4780 = vmatprep.subr.bf16.mxu0 0
  %4781 = vmatpush1.bf16.msra.mxu0 0
  %4782 = vmatprep.subr.bf16.mxu0 0
  %4783 = vmatpush1.bf16.msra.mxu0 0
  %4784 = vmatprep.subr.bf16.mxu0 0
  %4785 = vmatpush1.bf16.msra.mxu0 0
  %4786 = vmatprep.subr.bf16.mxu0 0
  %4787 = vmatpush1.bf16.msra.mxu0 0
  %4788 = vmatprep.subr.bf16.mxu0 0
  %4789 = vmatpush1.bf16.msra.mxu0 0
  %4790 = vmatprep.subr.bf16.mxu0 0
  %4791 = vmatpush1.bf16.msra.mxu0 0
  %4792 = vmatprep.subr.bf16.mxu0 0
  %4793 = vmatpush1.bf16.msra.mxu0 0
  %4794 = vmatprep.subr.bf16.mxu0 0
  %4795 = vmatpush1.bf16.msra.mxu0 0
  %4796 = vmatprep.mubr.bf16.mxu0 0
  %4797 = vmatmul.mubr.bf16.gmra.mrb[0].mxu0 %v4763
  %v4798 = vpop.f32.mrb[0].mxu0
  %v4799 = vadd.f32 0.0, %v4798
  %v4800 = vpop.f32.mrb[0].mxu0
  %v4801 = vadd.f32 0.0, %v4800
  %v4802 = vpop.f32.mrb[0].mxu0
  %v4803 = vpop.f32.mrb[0].mxu0
  %4804 = vdwg.mxu0
  %4805 = vmatprep.subr.bf16.mxu0 %v1507
  %4806 = vmatpush1.bf16.msra.mxu0 %v1506
  %4807 = vmatprep.subr.bf16.mxu0 %v1511
  %4808 = vmatpush1.bf16.msra.mxu0 %v1510
  %4809 = vmatprep.subr.bf16.mxu0 %v1515
  %4810 = vmatpush1.bf16.msra.mxu0 %v1514
  %4811 = vmatprep.subr.bf16.mxu0 %v1519
  %4812 = vmatpush1.bf16.msra.mxu0 %v1518
  %4813 = vmatprep.subr.bf16.mxu0 %v1523
  %4814 = vmatpush1.bf16.msra.mxu0 %v1522
  %4815 = vmatprep.subr.bf16.mxu0 %v1527
  %4816 = vmatpush1.bf16.msra.mxu0 %v1526
  %4817 = vmatprep.subr.bf16.mxu0 %v1531
  %4818 = vmatpush1.bf16.msra.mxu0 %v1530
  %4819 = vmatprep.subr.bf16.mxu0 %v1535
  %4820 = vmatpush1.bf16.msra.mxu0 %v1534
  %4821 = vmatprep.subr.bf16.mxu0 0
  %4822 = vmatpush1.bf16.msra.mxu0 0
  %4823 = vmatprep.subr.bf16.mxu0 0
  %4824 = vmatpush1.bf16.msra.mxu0 0
  %4825 = vmatprep.subr.bf16.mxu0 0
  %4826 = vmatpush1.bf16.msra.mxu0 0
  %4827 = vmatprep.subr.bf16.mxu0 0
  %4828 = vmatpush1.bf16.msra.mxu0 0
  %4829 = vmatprep.subr.bf16.mxu0 0
  %4830 = vmatpush1.bf16.msra.mxu0 0
  %4831 = vmatprep.subr.bf16.mxu0 0
  %4832 = vmatpush1.bf16.msra.mxu0 0
  %4833 = vmatprep.subr.bf16.mxu0 0
  %4834 = vmatpush1.bf16.msra.mxu0 0
  %4835 = vmatprep.subr.bf16.mxu0 0
  %4836 = vmatpush1.bf16.msra.mxu0 0
  %4837 = vmatprep.mubr.bf16.mxu0 0
  %4838 = vmatmul.mubr.bf16.gmra.mrb[0].mxu0 %v4763
  %v4839 = vpop.f32.mrb[0].mxu0
  %v4840 = vadd.f32 0.0, %v4839
  %v4841 = vpop.f32.mrb[0].mxu0
  %v4842 = vadd.f32 0.0, %v4841
  %v4843 = vpop.f32.mrb[0].mxu0
  %v4844 = vpop.f32.mrb[0].mxu0
  %4845 = vdwg.mxu0
  %4846 = vmatprep.subr.bf16.mxu0 %v1747
  %4847 = vmatpush1.bf16.msra.mxu0 %v1746
  %4848 = vmatprep.subr.bf16.mxu0 %v1751
  %4849 = vmatpush1.bf16.msra.mxu0 %v1750
  %4850 = vmatprep.subr.bf16.mxu0 %v1755
  %4851 = vmatpush1.bf16.msra.mxu0 %v1754
  %4852 = vmatprep.subr.bf16.mxu0 %v1759
  %4853 = vmatpush1.bf16.msra.mxu0 %v1758
  %4854 = vmatprep.subr.bf16.mxu0 %v1763
  %4855 = vmatpush1.bf16.msra.mxu0 %v1762
  %4856 = vmatprep.subr.bf16.mxu0 %v1767
  %4857 = vmatpush1.bf16.msra.mxu0 %v1766
  %4858 = vmatprep.subr.bf16.mxu0 %v1771
  %4859 = vmatpush1.bf16.msra.mxu0 %v1770
  %4860 = vmatprep.subr.bf16.mxu0 %v1775
  %4861 = vmatpush1.bf16.msra.mxu0 %v1774
  %4862 = vmatprep.subr.bf16.mxu0 0
  %4863 = vmatpush1.bf16.msra.mxu0 0
  %4864 = vmatprep.subr.bf16.mxu0 0
  %4865 = vmatpush1.bf16.msra.mxu0 0
  %4866 = vmatprep.subr.bf16.mxu0 0
  %4867 = vmatpush1.bf16.msra.mxu0 0
  %4868 = vmatprep.subr.bf16.mxu0 0
  %4869 = vmatpush1.bf16.msra.mxu0 0
  %4870 = vmatprep.subr.bf16.mxu0 0
  %4871 = vmatpush1.bf16.msra.mxu0 0
  %4872 = vmatprep.subr.bf16.mxu0 0
  %4873 = vmatpush1.bf16.msra.mxu0 0
  %4874 = vmatprep.subr.bf16.mxu0 0
  %4875 = vmatpush1.bf16.msra.mxu0 0
  %4876 = vmatprep.subr.bf16.mxu0 0
  %4877 = vmatpush1.bf16.msra.mxu0 0
  %4878 = vmatprep.mubr.bf16.mxu0 0
  %4879 = vmatmul.mubr.bf16.gmra.mrb[0].mxu0 %v4762
  %v4880 = vpop.f32.mrb[0].mxu0
  %v4881 = vadd.f32 %v4799, %v4880
  %v4882 = vpop.f32.mrb[0].mxu0
  %v4883 = vadd.f32 %v4801, %v4882
  %v4884 = vpop.f32.mrb[0].mxu0
  %v4885 = vpop.f32.mrb[0].mxu0
  %4886 = vdwg.mxu0
  %4887 = vmatprep.subr.bf16.mxu0 %v1749
  %4888 = vmatpush1.bf16.msra.mxu0 %v1748
  %4889 = vmatprep.subr.bf16.mxu0 %v1753
  %4890 = vmatpush1.bf16.msra.mxu0 %v1752
  %4891 = vmatprep.subr.bf16.mxu0 %v1757
  %4892 = vmatpush1.bf16.msra.mxu0 %v1756
  %4893 = vmatprep.subr.bf16.mxu0 %v1761
  %4894 = vmatpush1.bf16.msra.mxu0 %v1760
  %4895 = vmatprep.subr.bf16.mxu0 %v1765
  %4896 = vmatpush1.bf16.msra.mxu0 %v1764
  %4897 = vmatprep.subr.bf16.mxu0 %v1769
  %4898 = vmatpush1.bf16.msra.mxu0 %v1768
  %4899 = vmatprep.subr.bf16.mxu0 %v1773
  %4900 = vmatpush1.bf16.msra.mxu0 %v1772
  %4901 = vmatprep.subr.bf16.mxu0 %v1777
  %4902 = vmatpush1.bf16.msra.mxu0 %v1776
  %4903 = vmatprep.subr.bf16.mxu0 0
  %4904 = vmatpush1.bf16.msra.mxu0 0
  %4905 = vmatprep.subr.bf16.mxu0 0
  %4906 = vmatpush1.bf16.msra.mxu0 0
  %4907 = vmatprep.subr.bf16.mxu0 0
  %4908 = vmatpush1.bf16.msra.mxu0 0
  %4909 = vmatprep.subr.bf16.mxu0 0
  %4910 = vmatpush1.bf16.msra.mxu0 0
  %4911 = vmatprep.subr.bf16.mxu0 0
  %4912 = vmatpush1.bf16.msra.mxu0 0
  %4913 = vmatprep.subr.bf16.mxu0 0
  %4914 = vmatpush1.bf16.msra.mxu0 0
  %4915 = vmatprep.subr.bf16.mxu0 0
  %4916 = vmatpush1.bf16.msra.mxu0 0
  %4917 = vmatprep.subr.bf16.mxu0 0
  %4918 = vmatpush1.bf16.msra.mxu0 0
  %4919 = vmatprep.mubr.bf16.mxu0 0
  %4920 = vmatmul.mubr.bf16.gmra.mrb[0].mxu0 %v4762
  %v4921 = vpop.f32.mrb[0].mxu0
  %v4922 = vadd.f32 %v4840, %v4921
  %v4923 = vpop.f32.mrb[0].mxu0
  %v4924 = vadd.f32 %v4842, %v4923
  %v4925 = vpop.f32.mrb[0].mxu0
  %v4926 = vpop.f32.mrb[0].mxu0
  %4927 = vdwg.mxu0
  %v4928 = vadd.f32 %v4881, %v50
  %v4929 = vadd.f32 %v4883, %v51
  %v4930 = vadd.f32 %v4922, %v52
  %v4931 = vadd.f32 %v4924, %v53
  %v4932 = vxor.u32 %v4928, 2147483648
  %v4933 = vmul.f32 %v4932, 1.442695
  %v4934 = vpow.pop %v4933
  %v4935 = vadd.f32 %v4934, 1.0
  %v4936 = vrcp.pop %v4935
  %v4937 = vmul.f32 1.0, %v4936
  %v4938 = vxor.u32 %v4929, 2147483648
  %v4939 = vmul.f32 %v4938, 1.442695
  %v4940 = vpow.pop %v4939
  %v4941 = vadd.f32 %v4940, 1.0
  %v4942 = vrcp.pop %v4941
  %v4943 = vmul.f32 1.0, %v4942
  %v4944 = vtanh.pop %v4930
  %v4945 = vxor.u32 %v4931, 2147483648
  %v4946 = vmul.f32 %v4945, 1.442695
  %v4947 = vpow.pop %v4946
  %v4948 = vadd.f32 %v4947, 1.0
  %v4949 = vrcp.pop %v4948
  %v4950 = vmul.f32 1.0, %v4949
  %v4951 = vmul.f32 %v4943, %v4447
  %v4952 = vmul.f32 %v4937, %v4944
  %v4953 = vadd.f32 %v4951, %v4952
  %v4954 = vtanh.pop %v4953
  %v4955 = vmul.f32 %v4950, %v4954
  %s4956 = scalar_lea.vmem [#allocation2], 224
  %v4957 = vld [vmem:[%s4956] sm:$0xff]
  %v4958 = vld [vmem:[%s4956 + $0x8] sm:$0xff]
  %v4959 = vld [vmem:[%s4956 + $0x10] sm:$0xff]
  %v4960 = vld [vmem:[%s4956 + $0x18] sm:$0xff]
  %4961 = vmatprep.subr.bf16.mxu0 %v589
  %4962 = vmatpush1.bf16.msra.mxu0 %v588
  %4963 = vmatprep.subr.bf16.mxu0 %v593
  %4964 = vmatpush1.bf16.msra.mxu0 %v592
  %4965 = vmatprep.subr.bf16.mxu0 %v597
  %4966 = vmatpush1.bf16.msra.mxu0 %v596
  %4967 = vmatprep.subr.bf16.mxu0 %v601
  %4968 = vmatpush1.bf16.msra.mxu0 %v600
  %4969 = vmatprep.subr.bf16.mxu0 %v605
  %4970 = vmatpush1.bf16.msra.mxu0 %v604
  %4971 = vmatprep.subr.bf16.mxu0 %v609
  %4972 = vmatpush1.bf16.msra.mxu0 %v608
  %4973 = vmatprep.subr.bf16.mxu0 %v613
  %4974 = vmatpush1.bf16.msra.mxu0 %v612
  %4975 = vmatprep.subr.bf16.mxu0 %v617
  %4976 = vmatpush1.bf16.msra.mxu0 %v616
  %4977 = vmatprep.subr.bf16.mxu0 0
  %4978 = vmatpush1.bf16.msra.mxu0 0
  %4979 = vmatprep.subr.bf16.mxu0 0
  %4980 = vmatpush1.bf16.msra.mxu0 0
  %4981 = vmatprep.subr.bf16.mxu0 0
  %4982 = vmatpush1.bf16.msra.mxu0 0
  %4983 = vmatprep.subr.bf16.mxu0 0
  %4984 = vmatpush1.bf16.msra.mxu0 0
  %4985 = vmatprep.subr.bf16.mxu0 0
  %4986 = vmatpush1.bf16.msra.mxu0 0
  %4987 = vmatprep.subr.bf16.mxu0 0
  %4988 = vmatpush1.bf16.msra.mxu0 0
  %4989 = vmatprep.subr.bf16.mxu0 0
  %4990 = vmatpush1.bf16.msra.mxu0 0
  %4991 = vmatprep.subr.bf16.mxu0 0
  %4992 = vmatpush1.bf16.msra.mxu0 0
  %4993 = vmatprep.mubr.bf16.mxu0 0
  %4994 = vmatmul.mubr.bf16.gmra.mrb[0].mxu0 %v4569
  %v4995 = vpop.f32.mrb[0].mxu0
  %v4996 = vadd.f32 0.0, %v4995
  %v4997 = vpop.f32.mrb[0].mxu0
  %v4998 = vadd.f32 0.0, %v4997
  %v4999 = vpop.f32.mrb[0].mxu0
  %v5000 = vpop.f32.mrb[0].mxu0
  %5001 = vdwg.mxu0
  %5002 = vmatprep.subr.bf16.mxu0 %v591
  %5003 = vmatpush1.bf16.msra.mxu0 %v590
  %5004 = vmatprep.subr.bf16.mxu0 %v595
  %5005 = vmatpush1.bf16.msra.mxu0 %v594
  %5006 = vmatprep.subr.bf16.mxu0 %v599
  %5007 = vmatpush1.bf16.msra.mxu0 %v598
  %5008 = vmatprep.subr.bf16.mxu0 %v603
  %5009 = vmatpush1.bf16.msra.mxu0 %v602
  %5010 = vmatprep.subr.bf16.mxu0 %v607
  %5011 = vmatpush1.bf16.msra.mxu0 %v606
  %5012 = vmatprep.subr.bf16.mxu0 %v611
  %5013 = vmatpush1.bf16.msra.mxu0 %v610
  %5014 = vmatprep.subr.bf16.mxu0 %v615
  %5015 = vmatpush1.bf16.msra.mxu0 %v614
  %5016 = vmatprep.subr.bf16.mxu0 %v619
  %5017 = vmatpush1.bf16.msra.mxu0 %v618
  %5018 = vmatprep.subr.bf16.mxu0 0
  %5019 = vmatpush1.bf16.msra.mxu0 0
  %5020 = vmatprep.subr.bf16.mxu0 0
  %5021 = vmatpush1.bf16.msra.mxu0 0
  %5022 = vmatprep.subr.bf16.mxu0 0
  %5023 = vmatpush1.bf16.msra.mxu0 0
  %5024 = vmatprep.subr.bf16.mxu0 0
  %5025 = vmatpush1.bf16.msra.mxu0 0
  %5026 = vmatprep.subr.bf16.mxu0 0
  %5027 = vmatpush1.bf16.msra.mxu0 0
  %5028 = vmatprep.subr.bf16.mxu0 0
  %5029 = vmatpush1.bf16.msra.mxu0 0
  %5030 = vmatprep.subr.bf16.mxu0 0
  %5031 = vmatpush1.bf16.msra.mxu0 0
  %5032 = vmatprep.subr.bf16.mxu0 0
  %5033 = vmatpush1.bf16.msra.mxu0 0
  %5034 = vmatprep.mubr.bf16.mxu0 0
  %5035 = vmatmul.mubr.bf16.gmra.mrb[0].mxu0 %v4569
  %v5036 = vpop.f32.mrb[0].mxu0
  %v5037 = vadd.f32 0.0, %v5036
  %v5038 = vpop.f32.mrb[0].mxu0
  %v5039 = vadd.f32 0.0, %v5038
  %v5040 = vpop.f32.mrb[0].mxu0
  %v5041 = vpop.f32.mrb[0].mxu0
  %5042 = vdwg.mxu0
  %v5043 = vadd.f32 %v4957, %v4996
  %v5044 = vadd.f32 %v4958, %v4998
  %v5045 = vadd.f32 %v4959, %v5037
  %v5046 = vadd.f32 %v4960, %v5039
  %v5047 = vadd.f32 %v5043, %v42
  %v5048 = vadd.f32 %v5044, %v43
  %v5049 = vadd.f32 %v5045, %v44
  %v5050 = vadd.f32 %v5046, %v45
  %v5051 = vxor.u32 %v5047, 2147483648
  %v5052 = vmul.f32 %v5051, 1.442695
  %v5053 = vpow.pop %v5052
  %v5054 = vadd.f32 %v5053, 1.0
  %v5055 = vrcp.pop %v5054
  %v5056 = vmul.f32 1.0, %v5055
  %v5057 = vxor.u32 %v5048, 2147483648
  %v5058 = vmul.f32 %v5057, 1.442695
  %v5059 = vpow.pop %v5058
  %v5060 = vadd.f32 %v5059, 1.0
  %v5061 = vrcp.pop %v5060
  %v5062 = vmul.f32 1.0, %v5061
  %v5063 = vtanh.pop %v5049
  %v5064 = vxor.u32 %v5050, 2147483648
  %v5065 = vmul.f32 %v5064, 1.442695
  %v5066 = vpow.pop %v5065
  %v5067 = vadd.f32 %v5066, 1.0
  %v5068 = vrcp.pop %v5067
  %v5069 = vmul.f32 1.0, %v5068
  %v5070 = vmul.f32 %v5062, %v4566
  %v5071 = vmul.f32 %v5056, %v5063
  %v5072 = vadd.f32 %v5070, %v5071
  %v5073 = vtanh.pop %v5072
  %v5074 = vmul.f32 %v5069, %v5073
  %v5075 = vpack.c.bf16 %v5074, %v5074
  %5076 = vmatprep.subr.bf16.mxu0 %v928
  %5077 = vmatpush1.bf16.msra.mxu0 %v927
  %5078 = vmatprep.subr.bf16.mxu0 %v932
  %5079 = vmatpush1.bf16.msra.mxu0 %v931
  %5080 = vmatprep.subr.bf16.mxu0 %v936
  %5081 = vmatpush1.bf16.msra.mxu0 %v935
  %5082 = vmatprep.subr.bf16.mxu0 %v940
  %5083 = vmatpush1.bf16.msra.mxu0 %v939
  %5084 = vmatprep.subr.bf16.mxu0 %v944
  %5085 = vmatpush1.bf16.msra.mxu0 %v943
  %5086 = vmatprep.subr.bf16.mxu0 %v948
  %5087 = vmatpush1.bf16.msra.mxu0 %v947
  %5088 = vmatprep.subr.bf16.mxu0 %v952
  %5089 = vmatpush1.bf16.msra.mxu0 %v951
  %5090 = vmatprep.subr.bf16.mxu0 %v956
  %5091 = vmatpush1.bf16.msra.mxu0 %v955
  %5092 = vmatprep.subr.bf16.mxu0 0
  %5093 = vmatpush1.bf16.msra.mxu0 0
  %5094 = vmatprep.subr.bf16.mxu0 0
  %5095 = vmatpush1.bf16.msra.mxu0 0
  %5096 = vmatprep.subr.bf16.mxu0 0
  %5097 = vmatpush1.bf16.msra.mxu0 0
  %5098 = vmatprep.subr.bf16.mxu0 0
  %5099 = vmatpush1.bf16.msra.mxu0 0
  %5100 = vmatprep.subr.bf16.mxu0 0
  %5101 = vmatpush1.bf16.msra.mxu0 0
  %5102 = vmatprep.subr.bf16.mxu0 0
  %5103 = vmatpush1.bf16.msra.mxu0 0
  %5104 = vmatprep.subr.bf16.mxu0 0
  %5105 = vmatpush1.bf16.msra.mxu0 0
  %5106 = vmatprep.subr.bf16.mxu0 0
  %5107 = vmatpush1.bf16.msra.mxu0 0
  %5108 = vmatprep.mubr.bf16.mxu0 0
  %5109 = vmatmul.mubr.bf16.gmra.mrb[0].mxu0 %v4762
  %v5110 = vpop.f32.mrb[0].mxu0
  %v5111 = vadd.f32 0.0, %v5110
  %v5112 = vpop.f32.mrb[0].mxu0
  %v5113 = vadd.f32 0.0, %v5112
  %v5114 = vpop.f32.mrb[0].mxu0
  %v5115 = vpop.f32.mrb[0].mxu0
  %5116 = vdwg.mxu0
  %5117 = vmatprep.subr.bf16.mxu0 %v930
  %5118 = vmatpush1.bf16.msra.mxu0 %v929
  %5119 = vmatprep.subr.bf16.mxu0 %v934
  %5120 = vmatpush1.bf16.msra.mxu0 %v933
  %5121 = vmatprep.subr.bf16.mxu0 %v938
  %5122 = vmatpush1.bf16.msra.mxu0 %v937
  %5123 = vmatprep.subr.bf16.mxu0 %v942
  %5124 = vmatpush1.bf16.msra.mxu0 %v941
  %5125 = vmatprep.subr.bf16.mxu0 %v946
  %5126 = vmatpush1.bf16.msra.mxu0 %v945
  %5127 = vmatprep.subr.bf16.mxu0 %v950
  %5128 = vmatpush1.bf16.msra.mxu0 %v949
  %5129 = vmatprep.subr.bf16.mxu0 %v954
  %5130 = vmatpush1.bf16.msra.mxu0 %v953
  %5131 = vmatprep.subr.bf16.mxu0 %v958
  %5132 = vmatpush1.bf16.msra.mxu0 %v957
  %5133 = vmatprep.subr.bf16.mxu0 0
  %5134 = vmatpush1.bf16.msra.mxu0 0
  %5135 = vmatprep.subr.bf16.mxu0 0
  %5136 = vmatpush1.bf16.msra.mxu0 0
  %5137 = vmatprep.subr.bf16.mxu0 0
  %5138 = vmatpush1.bf16.msra.mxu0 0
  %5139 = vmatprep.subr.bf16.mxu0 0
  %5140 = vmatpush1.bf16.msra.mxu0 0
  %5141 = vmatprep.subr.bf16.mxu0 0
  %5142 = vmatpush1.bf16.msra.mxu0 0
  %5143 = vmatprep.subr.bf16.mxu0 0
  %5144 = vmatpush1.bf16.msra.mxu0 0
  %5145 = vmatprep.subr.bf16.mxu0 0
  %5146 = vmatpush1.bf16.msra.mxu0 0
  %5147 = vmatprep.subr.bf16.mxu0 0
  %5148 = vmatpush1.bf16.msra.mxu0 0
  %5149 = vmatprep.mubr.bf16.mxu0 0
  %5150 = vmatmul.mubr.bf16.gmra.mrb[0].mxu0 %v4762
  %v5151 = vpop.f32.mrb[0].mxu0
  %v5152 = vadd.f32 0.0, %v5151
  %v5153 = vpop.f32.mrb[0].mxu0
  %v5154 = vadd.f32 0.0, %v5153
  %v5155 = vpop.f32.mrb[0].mxu0
  %v5156 = vpop.f32.mrb[0].mxu0
  %5157 = vdwg.mxu0
  %5158 = vmatprep.subr.bf16.mxu0 %v1170
  %5159 = vmatpush1.bf16.msra.mxu0 %v1169
  %5160 = vmatprep.subr.bf16.mxu0 %v1174
  %5161 = vmatpush1.bf16.msra.mxu0 %v1173
  %5162 = vmatprep.subr.bf16.mxu0 %v1178
  %5163 = vmatpush1.bf16.msra.mxu0 %v1177
  %5164 = vmatprep.subr.bf16.mxu0 %v1182
  %5165 = vmatpush1.bf16.msra.mxu0 %v1181
  %5166 = vmatprep.subr.bf16.mxu0 %v1186
  %5167 = vmatpush1.bf16.msra.mxu0 %v1185
  %5168 = vmatprep.subr.bf16.mxu0 %v1190
  %5169 = vmatpush1.bf16.msra.mxu0 %v1189
  %5170 = vmatprep.subr.bf16.mxu0 %v1194
  %5171 = vmatpush1.bf16.msra.mxu0 %v1193
  %5172 = vmatprep.subr.bf16.mxu0 %v1198
  %5173 = vmatpush1.bf16.msra.mxu0 %v1197
  %5174 = vmatprep.subr.bf16.mxu0 0
  %5175 = vmatpush1.bf16.msra.mxu0 0
  %5176 = vmatprep.subr.bf16.mxu0 0
  %5177 = vmatpush1.bf16.msra.mxu0 0
  %5178 = vmatprep.subr.bf16.mxu0 0
  %5179 = vmatpush1.bf16.msra.mxu0 0
  %5180 = vmatprep.subr.bf16.mxu0 0
  %5181 = vmatpush1.bf16.msra.mxu0 0
  %5182 = vmatprep.subr.bf16.mxu0 0
  %5183 = vmatpush1.bf16.msra.mxu0 0
  %5184 = vmatprep.subr.bf16.mxu0 0
  %5185 = vmatpush1.bf16.msra.mxu0 0
  %5186 = vmatprep.subr.bf16.mxu0 0
  %5187 = vmatpush1.bf16.msra.mxu0 0
  %5188 = vmatprep.subr.bf16.mxu0 0
  %5189 = vmatpush1.bf16.msra.mxu0 0
  %5190 = vmatprep.mubr.bf16.mxu0 0
  %5191 = vmatmul.mubr.bf16.gmra.mrb[0].mxu0 %v5075
  %v5192 = vpop.f32.mrb[0].mxu0
  %v5193 = vadd.f32 %v5111, %v5192
  %v5194 = vpop.f32.mrb[0].mxu0
  %v5195 = vadd.f32 %v5113, %v5194
  %v5196 = vpop.f32.mrb[0].mxu0
  %v5197 = vpop.f32.mrb[0].mxu0
  %5198 = vdwg.mxu0
  %5199 = vmatprep.subr.bf16.mxu0 %v1172
  %5200 = vmatpush1.bf16.msra.mxu0 %v1171
  %5201 = vmatprep.subr.bf16.mxu0 %v1176
  %5202 = vmatpush1.bf16.msra.mxu0 %v1175
  %5203 = vmatprep.subr.bf16.mxu0 %v1180
  %5204 = vmatpush1.bf16.msra.mxu0 %v1179
  %5205 = vmatprep.subr.bf16.mxu0 %v1184
  %5206 = vmatpush1.bf16.msra.mxu0 %v1183
  %5207 = vmatprep.subr.bf16.mxu0 %v1188
  %5208 = vmatpush1.bf16.msra.mxu0 %v1187
  %5209 = vmatprep.subr.bf16.mxu0 %v1192
  %5210 = vmatpush1.bf16.msra.mxu0 %v1191
  %5211 = vmatprep.subr.bf16.mxu0 %v1196
  %5212 = vmatpush1.bf16.msra.mxu0 %v1195
  %5213 = vmatprep.subr.bf16.mxu0 %v1200
  %5214 = vmatpush1.bf16.msra.mxu0 %v1199
  %5215 = vmatprep.subr.bf16.mxu0 0
  %5216 = vmatpush1.bf16.msra.mxu0 0
  %5217 = vmatprep.subr.bf16.mxu0 0
  %5218 = vmatpush1.bf16.msra.mxu0 0
  %5219 = vmatprep.subr.bf16.mxu0 0
  %5220 = vmatpush1.bf16.msra.mxu0 0
  %5221 = vmatprep.subr.bf16.mxu0 0
  %5222 = vmatpush1.bf16.msra.mxu0 0
  %5223 = vmatprep.subr.bf16.mxu0 0
  %5224 = vmatpush1.bf16.msra.mxu0 0
  %5225 = vmatprep.subr.bf16.mxu0 0
  %5226 = vmatpush1.bf16.msra.mxu0 0
  %5227 = vmatprep.subr.bf16.mxu0 0
  %5228 = vmatpush1.bf16.msra.mxu0 0
  %5229 = vmatprep.subr.bf16.mxu0 0
  %5230 = vmatpush1.bf16.msra.mxu0 0
  %5231 = vmatprep.mubr.bf16.mxu0 0
  %5232 = vmatmul.mubr.bf16.gmra.mrb[0].mxu0 %v5075
  %v5233 = vpop.f32.mrb[0].mxu0
  %v5234 = vadd.f32 %v5152, %v5233
  %v5235 = vpop.f32.mrb[0].mxu0
  %v5236 = vadd.f32 %v5154, %v5235
  %v5237 = vpop.f32.mrb[0].mxu0
  %v5238 = vpop.f32.mrb[0].mxu0
  %5239 = vdwg.mxu0
  %v5240 = vadd.f32 %v5193, %v46
  %v5241 = vadd.f32 %v5195, %v47
  %v5242 = vadd.f32 %v5234, %v48
  %v5243 = vadd.f32 %v5236, %v49
  %v5244 = vxor.u32 %v5240, 2147483648
  %v5245 = vmul.f32 %v5244, 1.442695
  %v5246 = vpow.pop %v5245
  %v5247 = vadd.f32 %v5246, 1.0
  %v5248 = vrcp.pop %v5247
  %v5249 = vmul.f32 1.0, %v5248
  %v5250 = vxor.u32 %v5241, 2147483648
  %v5251 = vmul.f32 %v5250, 1.442695
  %v5252 = vpow.pop %v5251
  %v5253 = vadd.f32 %v5252, 1.0
  %v5254 = vrcp.pop %v5253
  %v5255 = vmul.f32 1.0, %v5254
  %v5256 = vtanh.pop %v5242
  %v5257 = vxor.u32 %v5243, 2147483648
  %v5258 = vmul.f32 %v5257, 1.442695
  %v5259 = vpow.pop %v5258
  %v5260 = vadd.f32 %v5259, 1.0
  %v5261 = vrcp.pop %v5260
  %v5262 = vmul.f32 1.0, %v5261
  %v5263 = vmul.f32 %v5255, %v4759
  %v5264 = vmul.f32 %v5249, %v5256
  %v5265 = vadd.f32 %v5263, %v5264
  %v5266 = vtanh.pop %v5265
  %v5267 = vmul.f32 %v5262, %v5266
  %v5268 = vpack.c.bf16 %v5267, %v5267
  %v5269 = vpack.c.bf16 %v4955, %v4955
  %5270 = vmatprep.subr.bf16.mxu0 %v1505
  %5271 = vmatpush1.bf16.msra.mxu0 %v1504
  %5272 = vmatprep.subr.bf16.mxu0 %v1509
  %5273 = vmatpush1.bf16.msra.mxu0 %v1508
  %5274 = vmatprep.subr.bf16.mxu0 %v1513
  %5275 = vmatpush1.bf16.msra.mxu0 %v1512
  %5276 = vmatprep.subr.bf16.mxu0 %v1517
  %5277 = vmatpush1.bf16.msra.mxu0 %v1516
  %5278 = vmatprep.subr.bf16.mxu0 %v1521
  %5279 = vmatpush1.bf16.msra.mxu0 %v1520
  %5280 = vmatprep.subr.bf16.mxu0 %v1525
  %5281 = vmatpush1.bf16.msra.mxu0 %v1524
  %5282 = vmatprep.subr.bf16.mxu0 %v1529
  %5283 = vmatpush1.bf16.msra.mxu0 %v1528
  %5284 = vmatprep.subr.bf16.mxu0 %v1533
  %5285 = vmatpush1.bf16.msra.mxu0 %v1532
  %5286 = vmatprep.subr.bf16.mxu0 0
  %5287 = vmatpush1.bf16.msra.mxu0 0
  %5288 = vmatprep.subr.bf16.mxu0 0
  %5289 = vmatpush1.bf16.msra.mxu0 0
  %5290 = vmatprep.subr.bf16.mxu0 0
  %5291 = vmatpush1.bf16.msra.mxu0 0
  %5292 = vmatprep.subr.bf16.mxu0 0
  %5293 = vmatpush1.bf16.msra.mxu0 0
  %5294 = vmatprep.subr.bf16.mxu0 0
  %5295 = vmatpush1.bf16.msra.mxu0 0
  %5296 = vmatprep.subr.bf16.mxu0 0
  %5297 = vmatpush1.bf16.msra.mxu0 0
  %5298 = vmatprep.subr.bf16.mxu0 0
  %5299 = vmatpush1.bf16.msra.mxu0 0
  %5300 = vmatprep.subr.bf16.mxu0 0
  %5301 = vmatpush1.bf16.msra.mxu0 0
  %5302 = vmatprep.mubr.bf16.mxu0 0
  %5303 = vmatmul.mubr.bf16.gmra.mrb[0].mxu0 %v5269
  %v5304 = vpop.f32.mrb[0].mxu0
  %v5305 = vadd.f32 0.0, %v5304
  %v5306 = vpop.f32.mrb[0].mxu0
  %v5307 = vadd.f32 0.0, %v5306
  %v5308 = vpop.f32.mrb[0].mxu0
  %v5309 = vpop.f32.mrb[0].mxu0
  %5310 = vdwg.mxu0
  %5311 = vmatprep.subr.bf16.mxu0 %v1507
  %5312 = vmatpush1.bf16.msra.mxu0 %v1506
  %5313 = vmatprep.subr.bf16.mxu0 %v1511
  %5314 = vmatpush1.bf16.msra.mxu0 %v1510
  %5315 = vmatprep.subr.bf16.mxu0 %v1515
  %5316 = vmatpush1.bf16.msra.mxu0 %v1514
  %5317 = vmatprep.subr.bf16.mxu0 %v1519
  %5318 = vmatpush1.bf16.msra.mxu0 %v1518
  %5319 = vmatprep.subr.bf16.mxu0 %v1523
  %5320 = vmatpush1.bf16.msra.mxu0 %v1522
  %5321 = vmatprep.subr.bf16.mxu0 %v1527
  %5322 = vmatpush1.bf16.msra.mxu0 %v1526
  %5323 = vmatprep.subr.bf16.mxu0 %v1531
  %5324 = vmatpush1.bf16.msra.mxu0 %v1530
  %5325 = vmatprep.subr.bf16.mxu0 %v1535
  %5326 = vmatpush1.bf16.msra.mxu0 %v1534
  %5327 = vmatprep.subr.bf16.mxu0 0
  %5328 = vmatpush1.bf16.msra.mxu0 0
  %5329 = vmatprep.subr.bf16.mxu0 0
  %5330 = vmatpush1.bf16.msra.mxu0 0
  %5331 = vmatprep.subr.bf16.mxu0 0
  %5332 = vmatpush1.bf16.msra.mxu0 0
  %5333 = vmatprep.subr.bf16.mxu0 0
  %5334 = vmatpush1.bf16.msra.mxu0 0
  %5335 = vmatprep.subr.bf16.mxu0 0
  %5336 = vmatpush1.bf16.msra.mxu0 0
  %5337 = vmatprep.subr.bf16.mxu0 0
  %5338 = vmatpush1.bf16.msra.mxu0 0
  %5339 = vmatprep.subr.bf16.mxu0 0
  %5340 = vmatpush1.bf16.msra.mxu0 0
  %5341 = vmatprep.subr.bf16.mxu0 0
  %5342 = vmatpush1.bf16.msra.mxu0 0
  %5343 = vmatprep.mubr.bf16.mxu0 0
  %5344 = vmatmul.mubr.bf16.gmra.mrb[0].mxu0 %v5269
  %v5345 = vpop.f32.mrb[0].mxu0
  %v5346 = vadd.f32 0.0, %v5345
  %v5347 = vpop.f32.mrb[0].mxu0
  %v5348 = vadd.f32 0.0, %v5347
  %v5349 = vpop.f32.mrb[0].mxu0
  %v5350 = vpop.f32.mrb[0].mxu0
  %5351 = vdwg.mxu0
  %5352 = vmatprep.subr.bf16.mxu0 %v1747
  %5353 = vmatpush1.bf16.msra.mxu0 %v1746
  %5354 = vmatprep.subr.bf16.mxu0 %v1751
  %5355 = vmatpush1.bf16.msra.mxu0 %v1750
  %5356 = vmatprep.subr.bf16.mxu0 %v1755
  %5357 = vmatpush1.bf16.msra.mxu0 %v1754
  %5358 = vmatprep.subr.bf16.mxu0 %v1759
  %5359 = vmatpush1.bf16.msra.mxu0 %v1758
  %5360 = vmatprep.subr.bf16.mxu0 %v1763
  %5361 = vmatpush1.bf16.msra.mxu0 %v1762
  %5362 = vmatprep.subr.bf16.mxu0 %v1767
  %5363 = vmatpush1.bf16.msra.mxu0 %v1766
  %5364 = vmatprep.subr.bf16.mxu0 %v1771
  %5365 = vmatpush1.bf16.msra.mxu0 %v1770
  %5366 = vmatprep.subr.bf16.mxu0 %v1775
  %5367 = vmatpush1.bf16.msra.mxu0 %v1774
  %5368 = vmatprep.subr.bf16.mxu0 0
  %5369 = vmatpush1.bf16.msra.mxu0 0
  %5370 = vmatprep.subr.bf16.mxu0 0
  %5371 = vmatpush1.bf16.msra.mxu0 0
  %5372 = vmatprep.subr.bf16.mxu0 0
  %5373 = vmatpush1.bf16.msra.mxu0 0
  %5374 = vmatprep.subr.bf16.mxu0 0
  %5375 = vmatpush1.bf16.msra.mxu0 0
  %5376 = vmatprep.subr.bf16.mxu0 0
  %5377 = vmatpush1.bf16.msra.mxu0 0
  %5378 = vmatprep.subr.bf16.mxu0 0
  %5379 = vmatpush1.bf16.msra.mxu0 0
  %5380 = vmatprep.subr.bf16.mxu0 0
  %5381 = vmatpush1.bf16.msra.mxu0 0
  %5382 = vmatprep.subr.bf16.mxu0 0
  %5383 = vmatpush1.bf16.msra.mxu0 0
  %5384 = vmatprep.mubr.bf16.mxu0 0
  %5385 = vmatmul.mubr.bf16.gmra.mrb[0].mxu0 %v5268
  %v5386 = vpop.f32.mrb[0].mxu0
  %v5387 = vadd.f32 %v5305, %v5386
  %v5388 = vpop.f32.mrb[0].mxu0
  %v5389 = vadd.f32 %v5307, %v5388
  %v5390 = vpop.f32.mrb[0].mxu0
  %v5391 = vpop.f32.mrb[0].mxu0
  %5392 = vdwg.mxu0
  %5393 = vmatprep.subr.bf16.mxu0 %v1749
  %5394 = vmatpush1.bf16.msra.mxu0 %v1748
  %5395 = vmatprep.subr.bf16.mxu0 %v1753
  %5396 = vmatpush1.bf16.msra.mxu0 %v1752
  %5397 = vmatprep.subr.bf16.mxu0 %v1757
  %5398 = vmatpush1.bf16.msra.mxu0 %v1756
  %5399 = vmatprep.subr.bf16.mxu0 %v1761
  %5400 = vmatpush1.bf16.msra.mxu0 %v1760
  %5401 = vmatprep.subr.bf16.mxu0 %v1765
  %5402 = vmatpush1.bf16.msra.mxu0 %v1764
  %5403 = vmatprep.subr.bf16.mxu0 %v1769
  %5404 = vmatpush1.bf16.msra.mxu0 %v1768
  %5405 = vmatprep.subr.bf16.mxu0 %v1773
  %5406 = vmatpush1.bf16.msra.mxu0 %v1772
  %5407 = vmatprep.subr.bf16.mxu0 %v1777
  %5408 = vmatpush1.bf16.msra.mxu0 %v1776
  %5409 = vmatprep.subr.bf16.mxu0 0
  %5410 = vmatpush1.bf16.msra.mxu0 0
  %5411 = vmatprep.subr.bf16.mxu0 0
  %5412 = vmatpush1.bf16.msra.mxu0 0
  %5413 = vmatprep.subr.bf16.mxu0 0
  %5414 = vmatpush1.bf16.msra.mxu0 0
  %5415 = vmatprep.subr.bf16.mxu0 0
  %5416 = vmatpush1.bf16.msra.mxu0 0
  %5417 = vmatprep.subr.bf16.mxu0 0
  %5418 = vmatpush1.bf16.msra.mxu0 0
  %5419 = vmatprep.subr.bf16.mxu0 0
  %5420 = vmatpush1.bf16.msra.mxu0 0
  %5421 = vmatprep.subr.bf16.mxu0 0
  %5422 = vmatpush1.bf16.msra.mxu0 0
  %5423 = vmatprep.subr.bf16.mxu0 0
  %5424 = vmatpush1.bf16.msra.mxu0 0
  %5425 = vmatprep.mubr.bf16.mxu0 0
  %5426 = vmatmul.mubr.bf16.gmra.mrb[0].mxu0 %v5268
  %v5427 = vpop.f32.mrb[0].mxu0
  %v5428 = vadd.f32 %v5346, %v5427
  %v5429 = vpop.f32.mrb[0].mxu0
  %v5430 = vadd.f32 %v5348, %v5429
  %v5431 = vpop.f32.mrb[0].mxu0
  %v5432 = vpop.f32.mrb[0].mxu0
  %5433 = vdwg.mxu0
  %v5434 = vadd.f32 %v5387, %v50
  %v5435 = vadd.f32 %v5389, %v51
  %v5436 = vadd.f32 %v5428, %v52
  %v5437 = vadd.f32 %v5430, %v53
  %v5438 = vxor.u32 %v5434, 2147483648
  %v5439 = vmul.f32 %v5438, 1.442695
  %v5440 = vpow.pop %v5439
  %v5441 = vadd.f32 %v5440, 1.0
  %v5442 = vrcp.pop %v5441
  %v5443 = vmul.f32 1.0, %v5442
  %v5444 = vxor.u32 %v5435, 2147483648
  %v5445 = vmul.f32 %v5444, 1.442695
  %v5446 = vpow.pop %v5445
  %v5447 = vadd.f32 %v5446, 1.0
  %v5448 = vrcp.pop %v5447
  %v5449 = vmul.f32 1.0, %v5448
  %v5450 = vtanh.pop %v5436
  %v5451 = vxor.u32 %v5437, 2147483648
  %v5452 = vmul.f32 %v5451, 1.442695
  %v5453 = vpow.pop %v5452
  %v5454 = vadd.f32 %v5453, 1.0
  %v5455 = vrcp.pop %v5454
  %v5456 = vmul.f32 1.0, %v5455
  %v5457 = vmul.f32 %v5449, %v4953
  %v5458 = vmul.f32 %v5443, %v5450
  %v5459 = vadd.f32 %v5457, %v5458
  %v5460 = vtanh.pop %v5459
  %v5461 = vmul.f32 %v5456, %v5460
  %v5462 = vpack.c.bf16 %v5461, %v5461
  %v5463 = vld [vmem:[%s10] sm:$0xf]
  %v5464 = vld [vmem:[%s10 + $0x4] sm:$0xf]
  %v5465 = vld [vmem:[%s10 + $0x8] sm:$0xf]
  %v5466 = vld [vmem:[%s10 + $0xc] sm:$0xf]
  %v5467 = vld [vmem:[%s10 + $0x10] sm:$0xf]
  %v5468 = vld [vmem:[%s10 + $0x14] sm:$0xf]
  %v5469 = vld [vmem:[%s10 + $0x18] sm:$0xf]
  %v5470 = vld [vmem:[%s10 + $0x1c] sm:$0xf]
  %v5471 = vld [vmem:[%s10 + $0x20] sm:$0xf]
  %v5472 = vld [vmem:[%s10 + $0x24] sm:$0xf]
  %v5473 = vld [vmem:[%s10 + $0x28] sm:$0xf]
  %v5474 = vld [vmem:[%s10 + $0x2c] sm:$0xf]
  %v5475 = vld [vmem:[%s10 + $0x30] sm:$0xf]
  %v5476 = vld [vmem:[%s10 + $0x34] sm:$0xf]
  %v5477 = vld [vmem:[%s10 + $0x38] sm:$0xf]
  %v5478 = vld [vmem:[%s10 + $0x3c] sm:$0xf]
  %v5479 = vld [vmem:[%s11] sm:$0xff]
  %v5496 = vunpack.c.l.b16 %v5463
  %v5497 = vunpack.c.l.b16 %v5464
  %v5498 = vunpack.c.l.b16 %v5465
  %v5499 = vunpack.c.l.b16 %v5466
  %v5500 = vunpack.c.l.b16 %v5467
  %v5501 = vunpack.c.l.b16 %v5468
  %v5502 = vunpack.c.l.b16 %v5469
  %v5503 = vunpack.c.l.b16 %v5470
  %v5504 = vunpack.c.l.b16 %v5471
  %v5505 = vunpack.c.l.b16 %v5472
  %v5506 = vunpack.c.l.b16 %v5473
  %v5507 = vunpack.c.l.b16 %v5474
  %v5508 = vunpack.c.l.b16 %v5475
  %v5509 = vunpack.c.l.b16 %v5476
  %v5510 = vunpack.c.l.b16 %v5477
  %v5511 = vunpack.c.l.b16 %v5478
  %v5512 = vpack.c.b16 %v5497, %v5496
  %v5513 = vpack.c.b16 %v5499, %v5498
  %v5514 = vpack.c.b16 %v5501, %v5500
  %v5515 = vpack.c.b16 %v5503, %v5502
  %v5516 = vpack.c.b16 %v5505, %v5504
  %v5517 = vpack.c.b16 %v5507, %v5506
  %v5518 = vpack.c.b16 %v5509, %v5508
  %v5519 = vpack.c.b16 %v5511, %v5510
  %5528 = vmatprep.subr.bf16.mxu0 0
  %5529 = vmatpush1.bf16.msra.mxu0 %v5512
  %5530 = vmatprep.subr.bf16.mxu0 0
  %5531 = vmatpush1.bf16.msra.mxu0 %v5513
  %5532 = vmatprep.subr.bf16.mxu0 0
  %5533 = vmatpush1.bf16.msra.mxu0 %v5514
  %5534 = vmatprep.subr.bf16.mxu0 0
  %5535 = vmatpush1.bf16.msra.mxu0 %v5515
  %5536 = vmatprep.subr.bf16.mxu0 0
  %5537 = vmatpush1.bf16.msra.mxu0 %v5516
  %5538 = vmatprep.subr.bf16.mxu0 0
  %5539 = vmatpush1.bf16.msra.mxu0 %v5517
  %5540 = vmatprep.subr.bf16.mxu0 0
  %5541 = vmatpush1.bf16.msra.mxu0 %v5518
  %5542 = vmatprep.subr.bf16.mxu0 0
  %5543 = vmatpush1.bf16.msra.mxu0 %v5519
  %5544 = vmatprep.subr.bf16.mxu0 0
  %5545 = vmatpush1.bf16.msra.mxu0 0
  %5546 = vmatprep.subr.bf16.mxu0 0
  %5547 = vmatpush1.bf16.msra.mxu0 0
  %5548 = vmatprep.subr.bf16.mxu0 0
  %5549 = vmatpush1.bf16.msra.mxu0 0
  %5550 = vmatprep.subr.bf16.mxu0 0
  %5551 = vmatpush1.bf16.msra.mxu0 0
  %5552 = vmatprep.subr.bf16.mxu0 0
  %5553 = vmatpush1.bf16.msra.mxu0 0
  %5554 = vmatprep.subr.bf16.mxu0 0
  %5555 = vmatpush1.bf16.msra.mxu0 0
  %5556 = vmatprep.subr.bf16.mxu0 0
  %5557 = vmatpush1.bf16.msra.mxu0 0
  %5558 = vmatprep.subr.bf16.mxu0 0
  %5559 = vmatpush1.bf16.msra.mxu0 0
  %5560 = vmatprep.mubr.bf16.mxu0 0
  %5561 = vmatmul.mubr.bf16.gmra.mrb[0].mxu0 %v5462
  %v5562 = vpop.f32.mrb[0].mxu0
  %v5563 = vadd.f32 %v5479, %v5562
  %v5564 = vpop.f32.mrb[0].mxu0
  %v5565 = vpop.f32.mrb[0].mxu0
  %v5566 = vpop.f32.mrb[0].mxu0
  %5567 = vdwg.mxu0
  %5568 = vst [vmem:[%s12] sm:$0xff] %v5563
  // Predicated region
  $region50: #{lstm_net_forward.1} parent=0 // pred_check
    _
  $region51: #{lstm_net_forward.1} parent=0 // pred_check_branch
    %5570 = sbr.rel (0) target = $region53
  $region52: #{lstm_net_forward.1} parent=0 // pred_region
    _
  $region53: #{lstm_net_forward.1} parent=0 // pred_fallthru
    _
  // Predicated region
  $region54: #{lstm_net_forward.1} parent=0 // pred_check
    _
  $region55: #{lstm_net_forward.1} parent=0 // pred_check_branch
    %5572 = sbr.rel (0) target = $region57
  $region56: #{lstm_net_forward.1} parent=0 // pred_region
    _
  $region57: #{lstm_net_forward.1} parent=0 // pred_fallthru
    _

</llo_original>
